<compile_context>
chip_gen: v7x
topology: tpu7x:2x2x1
jax: 0.10.0
libtpu: 0.0.40
codegen_flags: <defaults>
</compile_context>

<pallas_src>
import functools

import jax
import jax.numpy as jnp
from jax import lax
from jax.experimental import pallas as pl
from jax.experimental.pallas import tpu as pltpu

EPS = 1e-5
LANES = 128


def _round_up(x, m):
    return ((x + m - 1) // m) * m


def _pick_conv_th(H, W, cin_p, cout_p, budget_bytes=20 << 20):
    """Largest divisor of H whose conv working set fits a conservative VMEM
    budget (conservative enough for v7x's 64 MiB); larger TH also makes
    TW = TH*W a big multiple of 128/256 for the MXU and amortizes per-step
    pipeline overhead."""
    best = 1
    for th in range(1, H + 1):
        if H % th:
            continue
        est = (2 * th * W * cin_p * 2          # body block, double-buffered
               + 2 * 2 * W * cin_p * 2 * 2     # two halo row blocks, double-buffered
               + 2 * 9 * cin_p * cout_p * 2    # weights (double-buffered today)
               + 2 * th * W * cout_p * 2       # bf16 output block, double-buffered
               + 4 * (th + 2) * W * cin_p * 2  # x_ext / xl / xr / tap temporaries
               + th * W * cout_p * 4)          # f32 accumulator
        if est <= budget_bytes:
            best = th
    return best


def _pick_epilogue_th(H, W, c_p, budget_bytes=24 << 20):
    """Largest divisor of H whose block fits the budget and keeps the flattened
    lane dim (TH*W) a multiple of 128 (or the full H*W)."""
    legal = [th for th in range(1, H + 1)
             if H % th == 0 and ((th * W) % 128 == 0 or th == H)]
    for th in sorted(legal, reverse=True):
        est = 10 * th * W * c_p * 2            # rough: bf16 in (x2) + f32 temps
        if est <= budget_bytes:
            return th
    return legal[0]


# ----------------------------------------------------------------------------
# Kernel 1: 3x3 "same" conv (stride 1) over one (batch, H-tile) block.
#   - body tile and the two 1-row H-halos are auto-pipelined BlockSpec inputs
#     (halo row index clamped in the index_map, masked in-kernel)
#   - optional fused BatchNorm-apply + ReLU on the input values (layer-2 path)
#   - 9 accumulating K=Cin bf16 matmuls with a single f32 accumulator
#   - bf16 activations + per-block f32 sum / sum-of-squares for BN statistics
# ----------------------------------------------------------------------------
def _conv3x3_kernel(xb_ref, xt_ref, xbo_ref, w_ref, isc_ref, ish_ref,
                    y_ref, st_ref, *, fuse_in):
    t = pl.program_id(1)
    nt = pl.num_programs(1)

    _, TH, W, Cin = xb_ref.shape
    Cout = y_ref.shape[3]
    TW = TH * W

    sc = isc_ref[...]                      # (1, Cin) f32
    sh = ish_ref[...]

    def bn_relu(v):                        # bf16 (r, W, Cin) -> bf16
        a = v.astype(jnp.float32) * sc + sh
        return jnp.maximum(a, 0.0).astype(jnp.bfloat16)

    if fuse_in:
        body = bn_relu(xb_ref[0])          # (TH, W, Cin)
        top_v = bn_relu(xt_ref[0])         # (1, W, Cin)
        bot_v = bn_relu(xbo_ref[0])
    else:
        body = xb_ref[0]
        top_v = xt_ref[0]
        bot_v = xbo_ref[0]

    # Halo rows come from a clamped index_map; zero the conv "same" padding
    # rows as values (post-activation domain) — no scratch write-back.
    top = top_v * (t > 0).astype(top_v.dtype)
    bot = bot_v * (t < nt - 1).astype(bot_v.dtype)

    x_ext = jnp.concatenate([top, body, bot], axis=0)            # (TH+2, W, Cin)
    zcol = jnp.zeros((TH + 2, 1, Cin), x_ext.dtype)
    xl = jnp.concatenate([zcol, x_ext[:, :W - 1, :]], axis=1)    # value at w-1
    xr = jnp.concatenate([x_ext[:, 1:, :], zcol], axis=1)        # value at w+1

    # 9 accumulating K=Cin matmuls (no 9x im2col patch in VMEM).  The conv
    # bias is dropped: it cancels exactly against the following BatchNorm.
    acc = jnp.zeros((TW, Cout), jnp.float32)
    srcs = (xl, x_ext, xr)                                       # kx = 0, 1, 2
    for ky in range(3):
        for kx in range(3):
            tap = srcs[kx][ky:ky + TH].reshape(TW, Cin)
            w_k = w_ref[(ky * 3 + kx) * Cin:(ky * 3 + kx + 1) * Cin, :]
            acc = acc + jnp.dot(tap, w_k, preferred_element_type=jnp.float32)

    y_ref[...] = acc.astype(y_ref.dtype).reshape(1, TH, W, Cout)

    # per-block BN partial statistics (sum, sum of squares)
    ssum = jnp.sum(acc, axis=0, keepdims=True)                   # (1, Cout)
    ssq = jnp.sum(acc * acc, axis=0, keepdims=True)              # (1, Cout)
    st_ref[...] = jnp.concatenate(
        [ssum, ssq, jnp.zeros((6, Cout), jnp.float32)], axis=0
    ).reshape(1, 1, 8, Cout)


def _conv3x3(x, w_mat, in_scale, in_shift, *, fuse_in, th):
    """x: (N,H,W,Cin_p) bf16; w_mat: (9*Cin_p, Cout_p) bf16 -> bf16 y + stats."""
    N, H, W, Cin = x.shape
    Cout = w_mat.shape[1]
    assert H % th == 0
    nt = H // th

    kernel = functools.partial(_conv3x3_kernel, fuse_in=fuse_in)

    body_spec = pl.BlockSpec((1, th, W, Cin), lambda n, t: (n, t, 0, 0))
    # Halo rows are auto-pipelined too (clamped row index, masked in-kernel),
    # so there is no manual DMA and no exposed per-tile HBM latency.
    top_spec = pl.BlockSpec(
        (1, 1, W, Cin), lambda n, t: (n, jnp.maximum(t * th - 1, 0), 0, 0))
    bot_spec = pl.BlockSpec(
        (1, 1, W, Cin), lambda n, t: (n, jnp.minimum((t + 1) * th, H - 1), 0, 0))

    return pl.pallas_call(
        kernel,
        grid=(N, nt),
        in_specs=[
            body_spec, top_spec, bot_spec,
            pl.BlockSpec((9 * Cin, Cout), lambda n, t: (0, 0)),   # weights
            pl.BlockSpec((1, Cin), lambda n, t: (0, 0)),          # input BN scale
            pl.BlockSpec((1, Cin), lambda n, t: (0, 0)),          # input BN shift
        ],
        out_specs=[
            pl.BlockSpec((1, th, W, Cout), lambda n, t: (n, t, 0, 0)),
            pl.BlockSpec((1, 1, 8, Cout), lambda n, t: (n, t, 0, 0)),
        ],
        out_shape=[
            jax.ShapeDtypeStruct((N, H, W, Cout), jnp.bfloat16),
            jax.ShapeDtypeStruct((N, nt, 8, Cout), jnp.float32),
        ],
        compiler_params=pltpu.CompilerParams(
            dimension_semantics=("parallel", "parallel"),
            vmem_limit_bytes=48 * 1024 * 1024,
        ),
    )(x, x, x, w_mat, in_scale, in_shift)


# ----------------------------------------------------------------------------
# Kernel 2: final BatchNorm-apply + ReLU, fused with the channel slice and the
# NHWC -> NCHW transpose (lane-dense (cout, TH*W) f32 output blocks).
# ----------------------------------------------------------------------------
def _bn_relu_to_nchw_kernel(x_ref, sc_ref, sh_ref, o_ref):
    _, TH, W, C = x_ref.shape
    cout = o_ref.shape[1]
    y = x_ref[0].reshape(TH * W, C).astype(jnp.float32)
    a = jnp.maximum(y * sc_ref[...] + sh_ref[...], 0.0)          # (TH*W, C)
    at = jnp.transpose(a)                                        # (C, TH*W)
    o_ref[0] = at[:cout, :]


def _bn_relu_to_nchw(x, scale, shift, cout, *, th):
    N, H, W, C = x.shape
    nt = H // th
    out = pl.pallas_call(
        _bn_relu_to_nchw_kernel,
        grid=(N, nt),
        in_specs=[
            pl.BlockSpec((1, th, W, C), lambda n, t: (n, t, 0, 0)),
            pl.BlockSpec((1, C), lambda n, t: (0, 0)),
            pl.BlockSpec((1, C), lambda n, t: (0, 0)),
        ],
        out_specs=pl.BlockSpec((1, cout, th * W), lambda n, t: (n, 0, t)),
        out_shape=jax.ShapeDtypeStruct((N, cout, H * W), jnp.float32),
        compiler_params=pltpu.CompilerParams(
            dimension_semantics=("parallel", "parallel")),
    )(x, scale, shift)
    return out.reshape(N, cout, H, W)


# ----------------------------------------------------------------------------
# Boundary glue: nearest upsample + concat, weight packing, BN statistics.
# ----------------------------------------------------------------------------
def _upsample_concat_nhwc(x1_nchw, x2_nchw):
    x1 = jnp.transpose(x1_nchw, (0, 2, 3, 1)).astype(jnp.float32)
    x2 = jnp.transpose(x2_nchw, (0, 2, 3, 1)).astype(jnp.float32)
    x1 = jnp.repeat(jnp.repeat(x1, 2, axis=1), 2, axis=2)        # nearest, x2
    H, W = x2.shape[1], x2.shape[2]
    if x1.shape[1] != H or x1.shape[2] != W:                     # F.interpolate(nearest)
        hi = (jnp.arange(H) * x1.shape[1]) // H
        wi = (jnp.arange(W) * x1.shape[2]) // W
        x1 = x1[:, hi][:, :, wi]
    return jnp.concatenate([x1, x2], axis=-1)                    # (N,H,W,Cin+Cskip)


def _pack_conv_weight(w_oihw, cin_p, cout_p):
    cout, cin, kh, kw = w_oihw.shape
    w = jnp.transpose(w_oihw, (2, 3, 1, 0))                      # HWIO
    w = jnp.pad(w, ((0, 0), (0, 0), (0, cin_p - cin), (0, cout_p - cout)))
    return w.reshape(kh * kw * cin_p, cout_p).astype(jnp.bfloat16)


def _bn_scale_shift(stats, gamma, beta, count, c_pad):
    # stats: (N, NT, 8, Cp), row0 = sum(y), row1 = sum(y*y), computed in-kernel.
    tot = jnp.sum(stats, axis=(0, 1))                            # (8, Cp)
    c = gamma.shape[0]
    s = tot[0, :c]
    q = tot[1, :c]
    mean = s / count
    var = jnp.maximum(q / count - mean * mean, 0.0)              # biased variance
    scale = gamma * lax.rsqrt(var + EPS)
    shift = beta - mean * scale
    scale = jnp.pad(scale, (0, c_pad - c)).reshape(1, c_pad)
    shift = jnp.pad(shift, (0, c_pad - c)).reshape(1, c_pad)
    return scale, shift


# ----------------------------------------------------------------------------
# Up.forward (NCHW in, NCHW out) — matches the PyTorch module (bilinear=True).
# ----------------------------------------------------------------------------
def up_forward(x1_nchw, x2_nchw, params):
    # TODO(synk): fuse upsample + concat + channel-pad + bf16 cast into conv1's
    # input path; kept as XLA glue here for lowering robustness.
    x = _upsample_concat_nhwc(x1_nchw, x2_nchw)                  # (N,H,W,cin) f32
    N, H, W, cin = x.shape
    cmid = params["gamma1"].shape[0]
    cout = params["gamma2"].shape[0]
    cin_p = _round_up(cin, LANES)
    cmid_p = _round_up(cmid, LANES)
    cout_p = _round_up(cout, LANES)

    th1 = _pick_conv_th(H, W, cin_p, cmid_p)
    th2 = _pick_conv_th(H, W, cmid_p, cout_p)

    xin = jnp.pad(x, ((0, 0), (0, 0), (0, 0), (0, cin_p - cin))).astype(jnp.bfloat16)

    w1 = _pack_conv_weight(params["w1"], cin_p, cmid_p)
    w2 = _pack_conv_weight(params["w2"], cmid_p, cout_p)

    dummy_sc = jnp.zeros((1, cin_p), jnp.float32)
    dummy_sh = jnp.zeros((1, cin_p), jnp.float32)

    count = float(N * H * W)

    # conv1 (+ per-block BN1 partial stats); conv bias dropped — it cancels
    # exactly against the batch-norm mean subtraction.
    y1, st1 = _conv3x3(xin, w1, dummy_sc, dummy_sh, fuse_in=False, th=th1)
    sc1, sh1 = _bn_scale_shift(st1, params["gamma1"], params["beta1"], count, cmid_p)

    # conv2 with BN1-apply + ReLU fused onto its input, + per-block BN2 stats.
    y2, st2 = _conv3x3(y1, w2, sc1, sh1, fuse_in=True, th=th2)
    sc2, sh2 = _bn_scale_shift(st2, params["gamma2"], params["beta2"], count, cout_p)

    th_e = _pick_epilogue_th(H, W, cout_p)
    return _bn_relu_to_nchw(y2, sc2, sh2, cout, th=th_e)         # (N,cout,H,W) f32


# ----------------------------------------------------------------------------
# Pure-JAX references (f32, and a bf16-matmul-matched variant).
# ----------------------------------------------------------------------------
def reference_forward(x1_nchw, x2_nchw, params, *, bf16_matmul):
    x = _upsample_concat_nhwc(x1_nchw, x2_nchw)
    w1 = jnp.transpose(params["w1"], (2, 3, 1, 0))
    w2 = jnp.transpose(params["w2"], (2, 3, 1, 0))

    def conv(a, w, b):
        if bf16_matmul:
            a = a.astype(jnp.bfloat16)
            w = w.astype(jnp.bfloat16)
        y = lax.conv_general_dilated(
            a, w, window_strides=(1, 1), padding="SAME",
            dimension_numbers=("NHWC", "HWIO", "NHWC"),
            preferred_element_type=jnp.float32)
        # The matched variant mirrors the kernel and omits the conv bias
        # (it cancels against BatchNorm, so the f32 reference keeps it).
        return y if bf16_matmul else y + b

    def bn_relu(y, gamma, beta):
        mean = jnp.mean(y, axis=(0, 1, 2))
        var = jnp.mean(jnp.square(y - mean), axis=(0, 1, 2))
        scale = gamma * lax.rsqrt(var + EPS)
        shift = beta - mean * scale
        yq = y.astype(jnp.bfloat16).astype(jnp.float32) if bf16_matmul else y
        return jnp.maximum(yq * scale + shift, 0.0)

    y1 = conv(x, w1, params["b1"])
    a1 = bn_relu(y1, params["gamma1"], params["beta1"])
    y2 = conv(a1, w2, params["b2"])
    a2 = bn_relu(y2, params["gamma2"], params["beta2"])
    return jnp.transpose(a2, (0, 3, 1, 2))


# ----------------------------------------------------------------------------
# Deterministic parameter init (DoubleConv(in_ch+skip_ch, out_ch)).
# ----------------------------------------------------------------------------
def init_params(key, in_ch, out_ch, mid_ch=None):
    if mid_ch is None:
        mid_ch = out_ch
    ks = jax.random.split(key, 8)
    return {
        "w1": 0.1 * jax.random.normal(ks[0], (mid_ch, in_ch, 3, 3), jnp.float32),
        "b1": 0.1 * jax.random.normal(ks[1], (mid_ch,), jnp.float32),
        "gamma1": 1.0 + 0.1 * jax.random.normal(ks[2], (mid_ch,), jnp.float32),
        "beta1": 0.1 * jax.random.normal(ks[3], (mid_ch,), jnp.float32),
        "w2": 0.1 * jax.random.normal(ks[4], (out_ch, mid_ch, 3, 3), jnp.float32),
        "b2": 0.1 * jax.random.normal(ks[5], (out_ch,), jnp.float32),
        "gamma2": 1.0 + 0.1 * jax.random.normal(ks[6], (out_ch,), jnp.float32),
        "beta2": 0.1 * jax.random.normal(ks[7], (out_ch,), jnp.float32),
    }


if __name__ == "__main__":
    key = jax.random.PRNGKey(0)
    kx1, kx2, kp = jax.random.split(key, 3)

    N, in_ch, skip_ch, out_ch = 2, 4, 4, 8
    H, W = 16, 16
    x1 = jax.random.normal(kx1, (N, in_ch, H // 2, W // 2), jnp.float32)  # low-res
    x2 = jax.random.normal(kx2, (N, skip_ch, H, W), jnp.float32)          # skip
    params = init_params(kp, in_ch + skip_ch, out_ch)

    fwd = jax.jit(up_forward)
    out = jax.block_until_ready(fwd(x1, x2, params))

    ref_bf16 = jax.block_until_ready(
        reference_forward(x1, x2, params, bf16_matmul=True))
    ref_f32 = jax.block_until_ready(
        reference_forward(x1, x2, params, bf16_matmul=False))

    assert out.shape == (N, out_ch, H, W), out.shape
    err_matched = float(jnp.max(jnp.abs(out - ref_bf16)))
    err_f32 = float(jnp.max(jnp.abs(out - ref_f32)))
    assert err_matched < 2e-2, f"mismatch vs bf16-matched reference: {err_matched}"
    assert err_f32 < 1.5e-1, f"mismatch vs f32 reference: {err_f32}"
    print("KERNEL_OK")
</pallas_src>

<mosaic_0001>
module attributes {stable_mosaic.version = 11 : i64} {
  func.func @_conv3x3_kernel(%arg0: i32, %arg1: i32, %arg2: memref<1x16x16x128xbf16, #tpu.memory_space<vmem>>, %arg3: memref<1x1x16x128xbf16, #tpu.memory_space<vmem>>, %arg4: memref<1x1x16x128xbf16, #tpu.memory_space<vmem>>, %arg5: memref<1152x128xbf16, #tpu.memory_space<vmem>>, %arg6: memref<1x128xf32, #tpu.memory_space<vmem>>, %arg7: memref<1x128xf32, #tpu.memory_space<vmem>>, %arg8: memref<1x16x16x128xbf16, #tpu.memory_space<vmem>>, %arg9: memref<1x1x8x128xf32, #tpu.memory_space<vmem>>) attributes {dimension_semantics = [#tpu.dimension_semantics<parallel>, #tpu.dimension_semantics<parallel>], iteration_bounds = array<i64: 2, 1>, scalar_prefetch = 0 : i64, scratch_operands = 0 : i64, tpu.core_type = #tpu.core_type<tc>, window_params = [{transform_indices = @transform_0, window_bounds = array<i64: 1, 16, 16, 128>}, {transform_indices = @transform_1, window_bounds = array<i64: 1, 1, 16, 128>}, {transform_indices = @transform_2, window_bounds = array<i64: 1, 1, 16, 128>}, {pipeline_mode = #tpu.pipeline_mode<synchronous>, transform_indices = @transform_3, window_bounds = array<i64: 1152, 128>}, {pipeline_mode = #tpu.pipeline_mode<synchronous>, transform_indices = @transform_4, window_bounds = array<i64: 1, 128>}, {pipeline_mode = #tpu.pipeline_mode<synchronous>, transform_indices = @transform_5, window_bounds = array<i64: 1, 128>}, {transform_indices = @transform_6, window_bounds = array<i64: 1, 16, 16, 128>}, {transform_indices = @transform_7, window_bounds = array<i64: 1, 1, 8, 128>}]} {
    %c0 = arith.constant 0 : index
    %c0_0 = arith.constant 0 : index
    %c0_1 = arith.constant 0 : index
    %c0_2 = arith.constant 0 : index
    %0 = vector.load %arg2[%c0, %c0_0, %c0_1, %c0_2] : memref<1x16x16x128xbf16, #tpu.memory_space<vmem>>, vector<1x16x16x128xbf16>
    %1 = vector.shape_cast %0 : vector<1x16x16x128xbf16> to vector<16x16x128xbf16>
    %c0_3 = arith.constant 0 : index
    %c0_4 = arith.constant 0 : index
    %c0_5 = arith.constant 0 : index
    %c0_6 = arith.constant 0 : index
    %2 = vector.load %arg3[%c0_3, %c0_4, %c0_5, %c0_6] : memref<1x1x16x128xbf16, #tpu.memory_space<vmem>>, vector<1x1x16x128xbf16>
    %3 = vector.shape_cast %2 : vector<1x1x16x128xbf16> to vector<1x16x128xbf16>
    %c0_7 = arith.constant 0 : index
    %c0_8 = arith.constant 0 : index
    %c0_9 = arith.constant 0 : index
    %c0_10 = arith.constant 0 : index
    %4 = vector.load %arg4[%c0_7, %c0_8, %c0_9, %c0_10] : memref<1x1x16x128xbf16, #tpu.memory_space<vmem>>, vector<1x1x16x128xbf16>
    %5 = vector.shape_cast %4 : vector<1x1x16x128xbf16> to vector<1x16x128xbf16>
    %c0_i32 = arith.constant 0 : i32
    %6 = arith.cmpi sgt, %arg1, %c0_i32 : i32
    %7 = arith.extui %6 : i1 to i32
    %8 = arith.sitofp %7 : i32 to f32
    %9 = arith.truncf %8 : f32 to bf16
    %10 = vector.broadcast %9 : bf16 to vector<1x16x128xbf16>
    %11 = arith.mulf %3, %10 : vector<1x16x128xbf16>
    %c0_i32_11 = arith.constant 0 : i32
    %12 = arith.cmpi slt, %arg1, %c0_i32_11 : i32
    %13 = arith.extui %12 : i1 to i32
    %14 = arith.sitofp %13 : i32 to f32
    %15 = arith.truncf %14 : f32 to bf16
    %16 = vector.broadcast %15 : bf16 to vector<1x16x128xbf16>
    %17 = arith.mulf %5, %16 : vector<1x16x128xbf16>
    %18 = tpu.concatenate %11, %1, %17 in 0 : vector<1x16x128xbf16>, vector<16x16x128xbf16>, vector<1x16x128xbf16> -> vector<18x16x128xbf16>
    %cst = arith.constant 0.000000e+00 : bf16
    %19 = vector.broadcast %cst : bf16 to vector<18x1x128xbf16>
    %20 = vector.extract_strided_slice %18 {offsets = [0, 0, 0], sizes = [18, 15, 128], strides = [1, 1, 1]} : vector<18x16x128xbf16> to vector<18x15x128xbf16>
    %21 = tpu.concatenate %19, %20 in 1 : vector<18x1x128xbf16>, vector<18x15x128xbf16> -> vector<18x16x128xbf16>
    %22 = vector.extract_strided_slice %18 {offsets = [0, 1, 0], sizes = [18, 15, 128], strides = [1, 1, 1]} : vector<18x16x128xbf16> to vector<18x15x128xbf16>
    %23 = tpu.concatenate %22, %19 in 1 : vector<18x15x128xbf16>, vector<18x1x128xbf16> -> vector<18x16x128xbf16>
    %cst_12 = arith.constant 0.000000e+00 : f32
    %24 = vector.broadcast %cst_12 : f32 to vector<256x128xf32>
    %25 = vector.extract_strided_slice %21 {offsets = [0, 0, 0], sizes = [16, 16, 128], strides = [1, 1, 1]} : vector<18x16x128xbf16> to vector<16x16x128xbf16>
    %26 = vector.shape_cast %25 : vector<16x16x128xbf16> to vector<256x128xbf16>
    %c0_13 = arith.constant 0 : index
    %c0_14 = arith.constant 0 : index
    %27 = vector.load %arg5[%c0_13, %c0_14] : memref<1152x128xbf16, #tpu.memory_space<vmem>>, vector<128x128xbf16>
    %cst_15 = arith.constant dense<0.000000e+00> : vector<256x128xf32>
    %28 = tpu.matmul %26, %27, %cst_15 {dimension_numbers = #tpu.dot_dimension_numbers<[1], [0], [0], [1], [0, 0, 1, 1], [], []>} : vector<256x128xbf16>, vector<128x128xbf16>, vector<256x128xf32> -> vector<256x128xf32>
    %29 = arith.addf %24, %28 : vector<256x128xf32>
    %30 = vector.extract_strided_slice %18 {offsets = [0, 0, 0], sizes = [16, 16, 128], strides = [1, 1, 1]} : vector<18x16x128xbf16> to vector<16x16x128xbf16>
    %31 = vector.shape_cast %30 : vector<16x16x128xbf16> to vector<256x128xbf16>
    %c128 = arith.constant 128 : index
    %c0_16 = arith.constant 0 : index
    %32 = vector.load %arg5[%c128, %c0_16] : memref<1152x128xbf16, #tpu.memory_space<vmem>>, vector<128x128xbf16>
    %cst_17 = arith.constant dense<0.000000e+00> : vector<256x128xf32>
    %33 = tpu.matmul %31, %32, %cst_17 {dimension_numbers = #tpu.dot_dimension_numbers<[1], [0], [0], [1], [0, 0, 1, 1], [], []>} : vector<256x128xbf16>, vector<128x128xbf16>, vector<256x128xf32> -> vector<256x128xf32>
    %34 = arith.addf %29, %33 : vector<256x128xf32>
    %35 = vector.extract_strided_slice %23 {offsets = [0, 0, 0], sizes = [16, 16, 128], strides = [1, 1, 1]} : vector<18x16x128xbf16> to vector<16x16x128xbf16>
    %36 = vector.shape_cast %35 : vector<16x16x128xbf16> to vector<256x128xbf16>
    %c256 = arith.constant 256 : index
    %c0_18 = arith.constant 0 : index
    %37 = vector.load %arg5[%c256, %c0_18] : memref<1152x128xbf16, #tpu.memory_space<vmem>>, vector<128x128xbf16>
    %cst_19 = arith.constant dense<0.000000e+00> : vector<256x128xf32>
    %38 = tpu.matmul %36, %37, %cst_19 {dimension_numbers = #tpu.dot_dimension_numbers<[1], [0], [0], [1], [0, 0, 1, 1], [], []>} : vector<256x128xbf16>, vector<128x128xbf16>, vector<256x128xf32> -> vector<256x128xf32>
    %39 = arith.addf %34, %38 : vector<256x128xf32>
    %40 = vector.extract_strided_slice %21 {offsets = [1, 0, 0], sizes = [16, 16, 128], strides = [1, 1, 1]} : vector<18x16x128xbf16> to vector<16x16x128xbf16>
    %41 = vector.shape_cast %40 : vector<16x16x128xbf16> to vector<256x128xbf16>
    %c384 = arith.constant 384 : index
    %c0_20 = arith.constant 0 : index
    %42 = vector.load %arg5[%c384, %c0_20] : memref<1152x128xbf16, #tpu.memory_space<vmem>>, vector<128x128xbf16>
    %cst_21 = arith.constant dense<0.000000e+00> : vector<256x128xf32>
    %43 = tpu.matmul %41, %42, %cst_21 {dimension_numbers = #tpu.dot_dimension_numbers<[1], [0], [0], [1], [0, 0, 1, 1], [], []>} : vector<256x128xbf16>, vector<128x128xbf16>, vector<256x128xf32> -> vector<256x128xf32>
    %44 = arith.addf %39, %43 : vector<256x128xf32>
    %45 = vector.extract_strided_slice %18 {offsets = [1, 0, 0], sizes = [16, 16, 128], strides = [1, 1, 1]} : vector<18x16x128xbf16> to vector<16x16x128xbf16>
    %46 = vector.shape_cast %45 : vector<16x16x128xbf16> to vector<256x128xbf16>
    %c512 = arith.constant 512 : index
    %c0_22 = arith.constant 0 : index
    %47 = vector.load %arg5[%c512, %c0_22] : memref<1152x128xbf16, #tpu.memory_space<vmem>>, vector<128x128xbf16>
    %cst_23 = arith.constant dense<0.000000e+00> : vector<256x128xf32>
    %48 = tpu.matmul %46, %47, %cst_23 {dimension_numbers = #tpu.dot_dimension_numbers<[1], [0], [0], [1], [0, 0, 1, 1], [], []>} : vector<256x128xbf16>, vector<128x128xbf16>, vector<256x128xf32> -> vector<256x128xf32>
    %49 = arith.addf %44, %48 : vector<256x128xf32>
    %50 = vector.extract_strided_slice %23 {offsets = [1, 0, 0], sizes = [16, 16, 128], strides = [1, 1, 1]} : vector<18x16x128xbf16> to vector<16x16x128xbf16>
    %51 = vector.shape_cast %50 : vector<16x16x128xbf16> to vector<256x128xbf16>
    %c640 = arith.constant 640 : index
    %c0_24 = arith.constant 0 : index
    %52 = vector.load %arg5[%c640, %c0_24] : memref<1152x128xbf16, #tpu.memory_space<vmem>>, vector<128x128xbf16>
    %cst_25 = arith.constant dense<0.000000e+00> : vector<256x128xf32>
    %53 = tpu.matmul %51, %52, %cst_25 {dimension_numbers = #tpu.dot_dimension_numbers<[1], [0], [0], [1], [0, 0, 1, 1], [], []>} : vector<256x128xbf16>, vector<128x128xbf16>, vector<256x128xf32> -> vector<256x128xf32>
    %54 = arith.addf %49, %53 : vector<256x128xf32>
    %55 = vector.extract_strided_slice %21 {offsets = [2, 0, 0], sizes = [16, 16, 128], strides = [1, 1, 1]} : vector<18x16x128xbf16> to vector<16x16x128xbf16>
    %56 = vector.shape_cast %55 : vector<16x16x128xbf16> to vector<256x128xbf16>
    %c768 = arith.constant 768 : index
    %c0_26 = arith.constant 0 : index
    %57 = vector.load %arg5[%c768, %c0_26] : memref<1152x128xbf16, #tpu.memory_space<vmem>>, vector<128x128xbf16>
    %cst_27 = arith.constant dense<0.000000e+00> : vector<256x128xf32>
    %58 = tpu.matmul %56, %57, %cst_27 {dimension_numbers = #tpu.dot_dimension_numbers<[1], [0], [0], [1], [0, 0, 1, 1], [], []>} : vector<256x128xbf16>, vector<128x128xbf16>, vector<256x128xf32> -> vector<256x128xf32>
    %59 = arith.addf %54, %58 : vector<256x128xf32>
    %60 = vector.extract_strided_slice %18 {offsets = [2, 0, 0], sizes = [16, 16, 128], strides = [1, 1, 1]} : vector<18x16x128xbf16> to vector<16x16x128xbf16>
    %61 = vector.shape_cast %60 : vector<16x16x128xbf16> to vector<256x128xbf16>
    %c896 = arith.constant 896 : index
    %c0_28 = arith.constant 0 : index
    %62 = vector.load %arg5[%c896, %c0_28] : memref<1152x128xbf16, #tpu.memory_space<vmem>>, vector<128x128xbf16>
    %cst_29 = arith.constant dense<0.000000e+00> : vector<256x128xf32>
    %63 = tpu.matmul %61, %62, %cst_29 {dimension_numbers = #tpu.dot_dimension_numbers<[1], [0], [0], [1], [0, 0, 1, 1], [], []>} : vector<256x128xbf16>, vector<128x128xbf16>, vector<256x128xf32> -> vector<256x128xf32>
    %64 = arith.addf %59, %63 : vector<256x128xf32>
    %65 = vector.extract_strided_slice %23 {offsets = [2, 0, 0], sizes = [16, 16, 128], strides = [1, 1, 1]} : vector<18x16x128xbf16> to vector<16x16x128xbf16>
    %66 = vector.shape_cast %65 : vector<16x16x128xbf16> to vector<256x128xbf16>
    %c1024 = arith.constant 1024 : index
    %c0_30 = arith.constant 0 : index
    %67 = vector.load %arg5[%c1024, %c0_30] : memref<1152x128xbf16, #tpu.memory_space<vmem>>, vector<128x128xbf16>
    %cst_31 = arith.constant dense<0.000000e+00> : vector<256x128xf32>
    %68 = tpu.matmul %66, %67, %cst_31 {dimension_numbers = #tpu.dot_dimension_numbers<[1], [0], [0], [1], [0, 0, 1, 1], [], []>} : vector<256x128xbf16>, vector<128x128xbf16>, vector<256x128xf32> -> vector<256x128xf32>
    %69 = arith.addf %64, %68 : vector<256x128xf32>
    %70 = arith.truncf %69 : vector<256x128xf32> to vector<256x128xbf16>
    %71 = vector.shape_cast %70 : vector<256x128xbf16> to vector<1x16x16x128xbf16>
    %c0_32 = arith.constant 0 : index
    %c0_33 = arith.constant 0 : index
    %c0_34 = arith.constant 0 : index
    %c0_35 = arith.constant 0 : index
    %72 = vector.load %arg8[%c0_32, %c0_33, %c0_34, %c0_35] : memref<1x16x16x128xbf16, #tpu.memory_space<vmem>>, vector<1x16x16x128xbf16>
    tpu.vector_store %arg8[%c0_32, %c0_33, %c0_34, %c0_35], %71 {strides = array<i32>} : memref<1x16x16x128xbf16, #tpu.memory_space<vmem>>, vector<1x16x16x128xbf16>,
    %cst_36 = arith.constant dense<0.000000e+00> : vector<128xf32>
    %73 = vector.multi_reduction <add>, %69, %cst_36 [0] : vector<256x128xf32> to vector<128xf32>
    %74 = vector.shape_cast %73 : vector<128xf32> to vector<1x128xf32>
    %75 = arith.mulf %69, %69 : vector<256x128xf32>
    %cst_37 = arith.constant dense<0.000000e+00> : vector<128xf32>
    %76 = vector.multi_reduction <add>, %75, %cst_37 [0] : vector<256x128xf32> to vector<128xf32>
    %77 = vector.shape_cast %76 : vector<128xf32> to vector<1x128xf32>
    %cst_38 = arith.constant 0.000000e+00 : f32
    %78 = vector.broadcast %cst_38 : f32 to vector<6x128xf32>
    %79 = tpu.concatenate %74, %77, %78 in 0 : vector<1x128xf32>, vector<1x128xf32>, vector<6x128xf32> -> vector<8x128xf32>
    %80 = vector.shape_cast %79 : vector<8x128xf32> to vector<1x1x8x128xf32>
    %c0_39 = arith.constant 0 : index
    %c0_40 = arith.constant 0 : index
    %c0_41 = arith.constant 0 : index
    %c0_42 = arith.constant 0 : index
    %81 = vector.load %arg9[%c0_39, %c0_40, %c0_41, %c0_42] : memref<1x1x8x128xf32, #tpu.memory_space<vmem>>, vector<1x1x8x128xf32>
    tpu.vector_store %arg9[%c0_39, %c0_40, %c0_41, %c0_42], %80 {strides = array<i32>} : memref<1x1x8x128xf32, #tpu.memory_space<vmem>>, vector<1x1x8x128xf32>,
    return
  }
  func.func @transform_0(%arg0: i32, %arg1: i32) -> (i32, i32, i32, i32) {
    %c0_i32 = arith.constant 0 : i32
    %c0_i32_0 = arith.constant 0 : i32
    %c0_i32_1 = arith.constant 0 : i32
    return %arg0, %arg1, %c0_i32, %c0_i32_0 : i32, i32, i32, i32
  }
  func.func @transform_1(%arg0: i32, %arg1: i32) -> (i32, i32, i32, i32) {
    %c16_i32 = arith.constant 16 : i32
    %0 = arith.muli %arg1, %c16_i32 : i32
    %c1_i32 = arith.constant 1 : i32
    %1 = arith.subi %0, %c1_i32 : i32
    %c0_i32 = arith.constant 0 : i32
    %2 = arith.maxsi %1, %c0_i32 : i32
    %c0_i32_0 = arith.constant 0 : i32
    %c0_i32_1 = arith.constant 0 : i32
    %c0_i32_2 = arith.constant 0 : i32
    return %arg0, %2, %c0_i32_0, %c0_i32_1 : i32, i32, i32, i32
  }
  func.func @transform_2(%arg0: i32, %arg1: i32) -> (i32, i32, i32, i32) {
    %c1_i32 = arith.constant 1 : i32
    %0 = arith.addi %arg1, %c1_i32 : i32
    %c16_i32 = arith.constant 16 : i32
    %1 = arith.muli %0, %c16_i32 : i32
    %c15_i32 = arith.constant 15 : i32
    %2 = arith.minsi %1, %c15_i32 : i32
    %c0_i32 = arith.constant 0 : i32
    %c0_i32_0 = arith.constant 0 : i32
    %c0_i32_1 = arith.constant 0 : i32
    return %arg0, %2, %c0_i32, %c0_i32_0 : i32, i32, i32, i32
  }
  func.func @transform_3(%arg0: i32, %arg1: i32) -> (i32, i32) {
    %c0_i32 = arith.constant 0 : i32
    %c0_i32_0 = arith.constant 0 : i32
    %c0_i32_1 = arith.constant 0 : i32
    return %c0_i32, %c0_i32_0 : i32, i32
  }
  func.func @transform_4(%arg0: i32, %arg1: i32) -> (i32, i32) {
    %c0_i32 = arith.constant 0 : i32
    %c0_i32_0 = arith.constant 0 : i32
    %c0_i32_1 = arith.constant 0 : i32
    return %c0_i32, %c0_i32_0 : i32, i32
  }
  func.func @transform_5(%arg0: i32, %arg1: i32) -> (i32, i32) {
    %c0_i32 = arith.constant 0 : i32
    %c0_i32_0 = arith.constant 0 : i32
    %c0_i32_1 = arith.constant 0 : i32
    return %c0_i32, %c0_i32_0 : i32, i32
  }
  func.func @transform_6(%arg0: i32, %arg1: i32) -> (i32, i32, i32, i32) {
    %c0_i32 = arith.constant 0 : i32
    %c0_i32_0 = arith.constant 0 : i32
    %c0_i32_1 = arith.constant 0 : i32
    return %arg0, %arg1, %c0_i32, %c0_i32_0 : i32, i32, i32, i32
  }
  func.func @transform_7(%arg0: i32, %arg1: i32) -> (i32, i32, i32, i32) {
    %c0_i32 = arith.constant 0 : i32
    %c0_i32_0 = arith.constant 0 : i32
    %c0_i32_1 = arith.constant 0 : i32
    return %arg0, %arg1, %c0_i32, %c0_i32_0 : i32, i32, i32, i32
  }
}

module attributes {stable_mosaic.version = 11 : i64} {
  func.func @_bn_relu_to_nchw_kernel(%arg0: i32, %arg1: i32, %arg2: memref<1x16x16x128xbf16, #tpu.memory_space<vmem>>, %arg3: memref<1x128xf32, #tpu.memory_space<vmem>>, %arg4: memref<1x128xf32, #tpu.memory_space<vmem>>, %arg5: memref<1x8x256xf32, #tpu.memory_space<vmem>>) attributes {dimension_semantics = [#tpu.dimension_semantics<parallel>, #tpu.dimension_semantics<parallel>], iteration_bounds = array<i64: 2, 1>, scalar_prefetch = 0 : i64, scratch_operands = 0 : i64, tpu.core_type = #tpu.core_type<tc>, window_params = [{transform_indices = @transform_0, window_bounds = array<i64: 1, 16, 16, 128>}, {pipeline_mode = #tpu.pipeline_mode<synchronous>, transform_indices = @transform_1, window_bounds = array<i64: 1, 128>}, {pipeline_mode = #tpu.pipeline_mode<synchronous>, transform_indices = @transform_2, window_bounds = array<i64: 1, 128>}, {transform_indices = @transform_3, window_bounds = array<i64: 1, 8, 256>}]} {
    %c0 = arith.constant 0 : index
    %c0_0 = arith.constant 0 : index
    %c0_1 = arith.constant 0 : index
    %c0_2 = arith.constant 0 : index
    %0 = vector.load %arg2[%c0, %c0_0, %c0_1, %c0_2] : memref<1x16x16x128xbf16, #tpu.memory_space<vmem>>, vector<1x16x16x128xbf16>
    %1 = vector.shape_cast %0 : vector<1x16x16x128xbf16> to vector<16x16x128xbf16>
    %2 = vector.shape_cast %1 : vector<16x16x128xbf16> to vector<256x128xbf16>
    %3 = arith.extf %2 : vector<256x128xbf16> to vector<256x128xf32>
    %c0_3 = arith.constant 0 : index
    %c0_4 = arith.constant 0 : index
    %4 = vector.load %arg3[%c0_3, %c0_4] : memref<1x128xf32, #tpu.memory_space<vmem>>, vector<1x128xf32>
    %5 = vector.broadcast %4 : vector<1x128xf32> to vector<256x128xf32>
    %6 = arith.mulf %3, %5 : vector<256x128xf32>
    %c0_5 = arith.constant 0 : index
    %c0_6 = arith.constant 0 : index
    %7 = vector.load %arg4[%c0_5, %c0_6] : memref<1x128xf32, #tpu.memory_space<vmem>>, vector<1x128xf32>
    %8 = vector.broadcast %7 : vector<1x128xf32> to vector<256x128xf32>
    %9 = arith.addf %6, %8 : vector<256x128xf32>
    %cst = arith.constant 0.000000e+00 : f32
    %10 = vector.broadcast %cst : f32 to vector<256x128xf32>
    %11 = arith.maximumf %9, %10 : vector<256x128xf32>
    %12 = tpu.transpose %11, [1, 0] : vector<256x128xf32> -> vector<128x256xf32>
    %13 = vector.extract_strided_slice %12 {offsets = [0, 0], sizes = [8, 256], strides = [1, 1]} : vector<128x256xf32> to vector<8x256xf32>
    %c0_7 = arith.constant 0 : index
    %c0_8 = arith.constant 0 : index
    %c0_9 = arith.constant 0 : index
    %14 = vector.load %arg5[%c0_7, %c0_8, %c0_9] : memref<1x8x256xf32, #tpu.memory_space<vmem>>, vector<1x8x256xf32>
    %15 = vector.shape_cast %14 : vector<1x8x256xf32> to vector<8x256xf32>
    %16 = vector.shape_cast %13 : vector<8x256xf32> to vector<1x8x256xf32>
    tpu.vector_store %arg5[%c0_7, %c0_8, %c0_9], %16 {strides = array<i32>} : memref<1x8x256xf32, #tpu.memory_space<vmem>>, vector<1x8x256xf32>,
    return
  }
  func.func @transform_0(%arg0: i32, %arg1: i32) -> (i32, i32, i32, i32) {
    %c0_i32 = arith.constant 0 : i32
    %c0_i32_0 = arith.constant 0 : i32
    %c0_i32_1 = arith.constant 0 : i32
    return %arg0, %arg1, %c0_i32, %c0_i32_0 : i32, i32, i32, i32
  }
  func.func @transform_1(%arg0: i32, %arg1: i32) -> (i32, i32) {
    %c0_i32 = arith.constant 0 : i32
    %c0_i32_0 = arith.constant 0 : i32
    %c0_i32_1 = arith.constant 0 : i32
    return %c0_i32, %c0_i32_0 : i32, i32
  }
  func.func @transform_2(%arg0: i32, %arg1: i32) -> (i32, i32) {
    %c0_i32 = arith.constant 0 : i32
    %c0_i32_0 = arith.constant 0 : i32
    %c0_i32_1 = arith.constant 0 : i32
    return %c0_i32, %c0_i32_0 : i32, i32
  }
  func.func @transform_3(%arg0: i32, %arg1: i32) -> (i32, i32, i32) {
    %c0_i32 = arith.constant 0 : i32
    %c0_i32_0 = arith.constant 0 : i32
    return %arg0, %c0_i32, %arg1 : i32, i32, i32
  }
}

module attributes {stable_mosaic.version = 11 : i64} {
  func.func @_conv3x3_kernel(%arg0: i32, %arg1: i32, %arg2: memref<1x16x16x128xbf16, #tpu.memory_space<vmem>>, %arg3: memref<1x1x16x128xbf16, #tpu.memory_space<vmem>>, %arg4: memref<1x1x16x128xbf16, #tpu.memory_space<vmem>>, %arg5: memref<1152x128xbf16, #tpu.memory_space<vmem>>, %arg6: memref<1x128xf32, #tpu.memory_space<vmem>>, %arg7: memref<1x128xf32, #tpu.memory_space<vmem>>, %arg8: memref<1x16x16x128xbf16, #tpu.memory_space<vmem>>, %arg9: memref<1x1x8x128xf32, #tpu.memory_space<vmem>>) attributes {dimension_semantics = [#tpu.dimension_semantics<parallel>, #tpu.dimension_semantics<parallel>], iteration_bounds = array<i64: 2, 1>, scalar_prefetch = 0 : i64, scratch_operands = 0 : i64, tpu.core_type = #tpu.core_type<tc>, window_params = [{transform_indices = @transform_0, window_bounds = array<i64: 1, 16, 16, 128>}, {transform_indices = @transform_1, window_bounds = array<i64: 1, 1, 16, 128>}, {transform_indices = @transform_2, window_bounds = array<i64: 1, 1, 16, 128>}, {pipeline_mode = #tpu.pipeline_mode<synchronous>, transform_indices = @transform_3, window_bounds = array<i64: 1152, 128>}, {pipeline_mode = #tpu.pipeline_mode<synchronous>, transform_indices = @transform_4, window_bounds = array<i64: 1, 128>}, {pipeline_mode = #tpu.pipeline_mode<synchronous>, transform_indices = @transform_5, window_bounds = array<i64: 1, 128>}, {transform_indices = @transform_6, window_bounds = array<i64: 1, 16, 16, 128>}, {transform_indices = @transform_7, window_bounds = array<i64: 1, 1, 8, 128>}]} {
    %c0 = arith.constant 0 : index
    %c0_0 = arith.constant 0 : index
    %0 = vector.load %arg6[%c0, %c0_0] : memref<1x128xf32, #tpu.memory_space<vmem>>, vector<1x128xf32>
    %c0_1 = arith.constant 0 : index
    %c0_2 = arith.constant 0 : index
    %1 = vector.load %arg7[%c0_1, %c0_2] : memref<1x128xf32, #tpu.memory_space<vmem>>, vector<1x128xf32>
    %c0_3 = arith.constant 0 : index
    %c0_4 = arith.constant 0 : index
    %c0_5 = arith.constant 0 : index
    %c0_6 = arith.constant 0 : index
    %2 = vector.load %arg2[%c0_3, %c0_4, %c0_5, %c0_6] : memref<1x16x16x128xbf16, #tpu.memory_space<vmem>>, vector<1x16x16x128xbf16>
    %3 = vector.shape_cast %2 : vector<1x16x16x128xbf16> to vector<16x16x128xbf16>
    %4 = arith.extf %3 : vector<16x16x128xbf16> to vector<16x16x128xf32>
    %5 = vector.shape_cast %0 : vector<1x128xf32> to vector<1x1x128xf32>
    %6 = vector.broadcast %5 : vector<1x1x128xf32> to vector<16x16x128xf32>
    %7 = arith.mulf %4, %6 : vector<16x16x128xf32>
    %8 = vector.shape_cast %1 : vector<1x128xf32> to vector<1x1x128xf32>
    %9 = vector.broadcast %8 : vector<1x1x128xf32> to vector<16x16x128xf32>
    %10 = arith.addf %7, %9 : vector<16x16x128xf32>
    %cst = arith.constant 0.000000e+00 : f32
    %11 = vector.broadcast %cst : f32 to vector<16x16x128xf32>
    %12 = arith.maximumf %10, %11 : vector<16x16x128xf32>
    %13 = arith.truncf %12 : vector<16x16x128xf32> to vector<16x16x128xbf16>
    %c0_7 = arith.constant 0 : index
    %c0_8 = arith.constant 0 : index
    %c0_9 = arith.constant 0 : index
    %c0_10 = arith.constant 0 : index
    %14 = vector.load %arg3[%c0_7, %c0_8, %c0_9, %c0_10] : memref<1x1x16x128xbf16, #tpu.memory_space<vmem>>, vector<1x1x16x128xbf16>
    %15 = vector.shape_cast %14 : vector<1x1x16x128xbf16> to vector<1x16x128xbf16>
    %16 = arith.extf %15 : vector<1x16x128xbf16> to vector<1x16x128xf32>
    %17 = vector.shape_cast %0 : vector<1x128xf32> to vector<1x1x128xf32>
    %18 = vector.broadcast %17 : vector<1x1x128xf32> to vector<1x16x128xf32>
    %19 = arith.mulf %16, %18 : vector<1x16x128xf32>
    %20 = vector.shape_cast %1 : vector<1x128xf32> to vector<1x1x128xf32>
    %21 = vector.broadcast %20 : vector<1x1x128xf32> to vector<1x16x128xf32>
    %22 = arith.addf %19, %21 : vector<1x16x128xf32>
    %cst_11 = arith.constant 0.000000e+00 : f32
    %23 = vector.broadcast %cst_11 : f32 to vector<1x16x128xf32>
    %24 = arith.maximumf %22, %23 : vector<1x16x128xf32>
    %25 = arith.truncf %24 : vector<1x16x128xf32> to vector<1x16x128xbf16>
    %c0_12 = arith.constant 0 : index
    %c0_13 = arith.constant 0 : index
    %c0_14 = arith.constant 0 : index
    %c0_15 = arith.constant 0 : index
    %26 = vector.load %arg4[%c0_12, %c0_13, %c0_14, %c0_15] : memref<1x1x16x128xbf16, #tpu.memory_space<vmem>>, vector<1x1x16x128xbf16>
    %27 = vector.shape_cast %26 : vector<1x1x16x128xbf16> to vector<1x16x128xbf16>
    %28 = arith.extf %27 : vector<1x16x128xbf16> to vector<1x16x128xf32>
    %29 = vector.shape_cast %0 : vector<1x128xf32> to vector<1x1x128xf32>
    %30 = vector.broadcast %29 : vector<1x1x128xf32> to vector<1x16x128xf32>
    %31 = arith.mulf %28, %30 : vector<1x16x128xf32>
    %32 = vector.shape_cast %1 : vector<1x128xf32> to vector<1x1x128xf32>
    %33 = vector.broadcast %32 : vector<1x1x128xf32> to vector<1x16x128xf32>
    %34 = arith.addf %31, %33 : vector<1x16x128xf32>
    %cst_16 = arith.constant 0.000000e+00 : f32
    %35 = vector.broadcast %cst_16 : f32 to vector<1x16x128xf32>
    %36 = arith.maximumf %34, %35 : vector<1x16x128xf32>
    %37 = arith.truncf %36 : vector<1x16x128xf32> to vector<1x16x128xbf16>
    %c0_i32 = arith.constant 0 : i32
    %38 = arith.cmpi sgt, %arg1, %c0_i32 : i32
    %39 = arith.extui %38 : i1 to i32
    %40 = arith.sitofp %39 : i32 to f32
    %41 = arith.truncf %40 : f32 to bf16
    %42 = vector.broadcast %41 : bf16 to vector<1x16x128xbf16>
    %43 = arith.mulf %25, %42 : vector<1x16x128xbf16>
    %c0_i32_17 = arith.constant 0 : i32
    %44 = arith.cmpi slt, %arg1, %c0_i32_17 : i32
    %45 = arith.extui %44 : i1 to i32
    %46 = arith.sitofp %45 : i32 to f32
    %47 = arith.truncf %46 : f32 to bf16
    %48 = vector.broadcast %47 : bf16 to vector<1x16x128xbf16>
    %49 = arith.mulf %37, %48 : vector<1x16x128xbf16>
    %50 = tpu.concatenate %43, %13, %49 in 0 : vector<1x16x128xbf16>, vector<16x16x128xbf16>, vector<1x16x128xbf16> -> vector<18x16x128xbf16>
    %cst_18 = arith.constant 0.000000e+00 : bf16
    %51 = vector.broadcast %cst_18 : bf16 to vector<18x1x128xbf16>
    %52 = vector.extract_strided_slice %50 {offsets = [0, 0, 0], sizes = [18, 15, 128], strides = [1, 1, 1]} : vector<18x16x128xbf16> to vector<18x15x128xbf16>
    %53 = tpu.concatenate %51, %52 in 1 : vector<18x1x128xbf16>, vector<18x15x128xbf16> -> vector<18x16x128xbf16>
    %54 = vector.extract_strided_slice %50 {offsets = [0, 1, 0], sizes = [18, 15, 128], strides = [1, 1, 1]} : vector<18x16x128xbf16> to vector<18x15x128xbf16>
    %55 = tpu.concatenate %54, %51 in 1 : vector<18x15x128xbf16>, vector<18x1x128xbf16> -> vector<18x16x128xbf16>
    %cst_19 = arith.constant 0.000000e+00 : f32
    %56 = vector.broadcast %cst_19 : f32 to vector<256x128xf32>
    %57 = vector.extract_strided_slice %53 {offsets = [0, 0, 0], sizes = [16, 16, 128], strides = [1, 1, 1]} : vector<18x16x128xbf16> to vector<16x16x128xbf16>
    %58 = vector.shape_cast %57 : vector<16x16x128xbf16> to vector<256x128xbf16>
    %c0_20 = arith.constant 0 : index
    %c0_21 = arith.constant 0 : index
    %59 = vector.load %arg5[%c0_20, %c0_21] : memref<1152x128xbf16, #tpu.memory_space<vmem>>, vector<128x128xbf16>
    %cst_22 = arith.constant dense<0.000000e+00> : vector<256x128xf32>
    %60 = tpu.matmul %58, %59, %cst_22 {dimension_numbers = #tpu.dot_dimension_numbers<[1], [0], [0], [1], [0, 0, 1, 1], [], []>} : vector<256x128xbf16>, vector<128x128xbf16>, vector<256x128xf32> -> vector<256x128xf32>
    %61 = arith.addf %56, %60 : vector<256x128xf32>
    %62 = vector.extract_strided_slice %50 {offsets = [0, 0, 0], sizes = [16, 16, 128], strides = [1, 1, 1]} : vector<18x16x128xbf16> to vector<16x16x128xbf16>
    %63 = vector.shape_cast %62 : vector<16x16x128xbf16> to vector<256x128xbf16>
    %c128 = arith.constant 128 : index
    %c0_23 = arith.constant 0 : index
    %64 = vector.load %arg5[%c128, %c0_23] : memref<1152x128xbf16, #tpu.memory_space<vmem>>, vector<128x128xbf16>
    %cst_24 = arith.constant dense<0.000000e+00> : vector<256x128xf32>
    %65 = tpu.matmul %63, %64, %cst_24 {dimension_numbers = #tpu.dot_dimension_numbers<[1], [0], [0], [1], [0, 0, 1, 1], [], []>} : vector<256x128xbf16>, vector<128x128xbf16>, vector<256x128xf32> -> vector<256x128xf32>
    %66 = arith.addf %61, %65 : vector<256x128xf32>
    %67 = vector.extract_strided_slice %55 {offsets = [0, 0, 0], sizes = [16, 16, 128], strides = [1, 1, 1]} : vector<18x16x128xbf16> to vector<16x16x128xbf16>
    %68 = vector.shape_cast %67 : vector<16x16x128xbf16> to vector<256x128xbf16>
    %c256 = arith.constant 256 : index
    %c0_25 = arith.constant 0 : index
    %69 = vector.load %arg5[%c256, %c0_25] : memref<1152x128xbf16, #tpu.memory_space<vmem>>, vector<128x128xbf16>
    %cst_26 = arith.constant dense<0.000000e+00> : vector<256x128xf32>
    %70 = tpu.matmul %68, %69, %cst_26 {dimension_numbers = #tpu.dot_dimension_numbers<[1], [0], [0], [1], [0, 0, 1, 1], [], []>} : vector<256x128xbf16>, vector<128x128xbf16>, vector<256x128xf32> -> vector<256x128xf32>
    %71 = arith.addf %66, %70 : vector<256x128xf32>
    %72 = vector.extract_strided_slice %53 {offsets = [1, 0, 0], sizes = [16, 16, 128], strides = [1, 1, 1]} : vector<18x16x128xbf16> to vector<16x16x128xbf16>
    %73 = vector.shape_cast %72 : vector<16x16x128xbf16> to vector<256x128xbf16>
    %c384 = arith.constant 384 : index
    %c0_27 = arith.constant 0 : index
    %74 = vector.load %arg5[%c384, %c0_27] : memref<1152x128xbf16, #tpu.memory_space<vmem>>, vector<128x128xbf16>
    %cst_28 = arith.constant dense<0.000000e+00> : vector<256x128xf32>
    %75 = tpu.matmul %73, %74, %cst_28 {dimension_numbers = #tpu.dot_dimension_numbers<[1], [0], [0], [1], [0, 0, 1, 1], [], []>} : vector<256x128xbf16>, vector<128x128xbf16>, vector<256x128xf32> -> vector<256x128xf32>
    %76 = arith.addf %71, %75 : vector<256x128xf32>
    %77 = vector.extract_strided_slice %50 {offsets = [1, 0, 0], sizes = [16, 16, 128], strides = [1, 1, 1]} : vector<18x16x128xbf16> to vector<16x16x128xbf16>
    %78 = vector.shape_cast %77 : vector<16x16x128xbf16> to vector<256x128xbf16>
    %c512 = arith.constant 512 : index
    %c0_29 = arith.constant 0 : index
    %79 = vector.load %arg5[%c512, %c0_29] : memref<1152x128xbf16, #tpu.memory_space<vmem>>, vector<128x128xbf16>
    %cst_30 = arith.constant dense<0.000000e+00> : vector<256x128xf32>
    %80 = tpu.matmul %78, %79, %cst_30 {dimension_numbers = #tpu.dot_dimension_numbers<[1], [0], [0], [1], [0, 0, 1, 1], [], []>} : vector<256x128xbf16>, vector<128x128xbf16>, vector<256x128xf32> -> vector<256x128xf32>
    %81 = arith.addf %76, %80 : vector<256x128xf32>
    %82 = vector.extract_strided_slice %55 {offsets = [1, 0, 0], sizes = [16, 16, 128], strides = [1, 1, 1]} : vector<18x16x128xbf16> to vector<16x16x128xbf16>
    %83 = vector.shape_cast %82 : vector<16x16x128xbf16> to vector<256x128xbf16>
    %c640 = arith.constant 640 : index
    %c0_31 = arith.constant 0 : index
    %84 = vector.load %arg5[%c640, %c0_31] : memref<1152x128xbf16, #tpu.memory_space<vmem>>, vector<128x128xbf16>
    %cst_32 = arith.constant dense<0.000000e+00> : vector<256x128xf32>
    %85 = tpu.matmul %83, %84, %cst_32 {dimension_numbers = #tpu.dot_dimension_numbers<[1], [0], [0], [1], [0, 0, 1, 1], [], []>} : vector<256x128xbf16>, vector<128x128xbf16>, vector<256x128xf32> -> vector<256x128xf32>
    %86 = arith.addf %81, %85 : vector<256x128xf32>
    %87 = vector.extract_strided_slice %53 {offsets = [2, 0, 0], sizes = [16, 16, 128], strides = [1, 1, 1]} : vector<18x16x128xbf16> to vector<16x16x128xbf16>
    %88 = vector.shape_cast %87 : vector<16x16x128xbf16> to vector<256x128xbf16>
    %c768 = arith.constant 768 : index
    %c0_33 = arith.constant 0 : index
    %89 = vector.load %arg5[%c768, %c0_33] : memref<1152x128xbf16, #tpu.memory_space<vmem>>, vector<128x128xbf16>
    %cst_34 = arith.constant dense<0.000000e+00> : vector<256x128xf32>
    %90 = tpu.matmul %88, %89, %cst_34 {dimension_numbers = #tpu.dot_dimension_numbers<[1], [0], [0], [1], [0, 0, 1, 1], [], []>} : vector<256x128xbf16>, vector<128x128xbf16>, vector<256x128xf32> -> vector<256x128xf32>
    %91 = arith.addf %86, %90 : vector<256x128xf32>
    %92 = vector.extract_strided_slice %50 {offsets = [2, 0, 0], sizes = [16, 16, 128], strides = [1, 1, 1]} : vector<18x16x128xbf16> to vector<16x16x128xbf16>
    %93 = vector.shape_cast %92 : vector<16x16x128xbf16> to vector<256x128xbf16>
    %c896 = arith.constant 896 : index
    %c0_35 = arith.constant 0 : index
    %94 = vector.load %arg5[%c896, %c0_35] : memref<1152x128xbf16, #tpu.memory_space<vmem>>, vector<128x128xbf16>
    %cst_36 = arith.constant dense<0.000000e+00> : vector<256x128xf32>
    %95 = tpu.matmul %93, %94, %cst_36 {dimension_numbers = #tpu.dot_dimension_numbers<[1], [0], [0], [1], [0, 0, 1, 1], [], []>} : vector<256x128xbf16>, vector<128x128xbf16>, vector<256x128xf32> -> vector<256x128xf32>
    %96 = arith.addf %91, %95 : vector<256x128xf32>
    %97 = vector.extract_strided_slice %55 {offsets = [2, 0, 0], sizes = [16, 16, 128], strides = [1, 1, 1]} : vector<18x16x128xbf16> to vector<16x16x128xbf16>
    %98 = vector.shape_cast %97 : vector<16x16x128xbf16> to vector<256x128xbf16>
    %c1024 = arith.constant 1024 : index
    %c0_37 = arith.constant 0 : index
    %99 = vector.load %arg5[%c1024, %c0_37] : memref<1152x128xbf16, #tpu.memory_space<vmem>>, vector<128x128xbf16>
    %cst_38 = arith.constant dense<0.000000e+00> : vector<256x128xf32>
    %100 = tpu.matmul %98, %99, %cst_38 {dimension_numbers = #tpu.dot_dimension_numbers<[1], [0], [0], [1], [0, 0, 1, 1], [], []>} : vector<256x128xbf16>, vector<128x128xbf16>, vector<256x128xf32> -> vector<256x128xf32>
    %101 = arith.addf %96, %100 : vector<256x128xf32>
    %102 = arith.truncf %101 : vector<256x128xf32> to vector<256x128xbf16>
    %103 = vector.shape_cast %102 : vector<256x128xbf16> to vector<1x16x16x128xbf16>
    %c0_39 = arith.constant 0 : index
    %c0_40 = arith.constant 0 : index
    %c0_41 = arith.constant 0 : index
    %c0_42 = arith.constant 0 : index
    %104 = vector.load %arg8[%c0_39, %c0_40, %c0_41, %c0_42] : memref<1x16x16x128xbf16, #tpu.memory_space<vmem>>, vector<1x16x16x128xbf16>
    tpu.vector_store %arg8[%c0_39, %c0_40, %c0_41, %c0_42], %103 {strides = array<i32>} : memref<1x16x16x128xbf16, #tpu.memory_space<vmem>>, vector<1x16x16x128xbf16>,
    %cst_43 = arith.constant dense<0.000000e+00> : vector<128xf32>
    %105 = vector.multi_reduction <add>, %101, %cst_43 [0] : vector<256x128xf32> to vector<128xf32>
    %106 = vector.shape_cast %105 : vector<128xf32> to vector<1x128xf32>
    %107 = arith.mulf %101, %101 : vector<256x128xf32>
    %cst_44 = arith.constant dense<0.000000e+00> : vector<128xf32>
    %108 = vector.multi_reduction <add>, %107, %cst_44 [0] : vector<256x128xf32> to vector<128xf32>
    %109 = vector.shape_cast %108 : vector<128xf32> to vector<1x128xf32>
    %cst_45 = arith.constant 0.000000e+00 : f32
    %110 = vector.broadcast %cst_45 : f32 to vector<6x128xf32>
    %111 = tpu.concatenate %106, %109, %110 in 0 : vector<1x128xf32>, vector<1x128xf32>, vector<6x128xf32> -> vector<8x128xf32>
    %112 = vector.shape_cast %111 : vector<8x128xf32> to vector<1x1x8x128xf32>
    %c0_46 = arith.constant 0 : index
    %c0_47 = arith.constant 0 : index
    %c0_48 = arith.constant 0 : index
    %c0_49 = arith.constant 0 : index
    %113 = vector.load %arg9[%c0_46, %c0_47, %c0_48, %c0_49] : memref<1x1x8x128xf32, #tpu.memory_space<vmem>>, vector<1x1x8x128xf32>
    tpu.vector_store %arg9[%c0_46, %c0_47, %c0_48, %c0_49], %112 {strides = array<i32>} : memref<1x1x8x128xf32, #tpu.memory_space<vmem>>, vector<1x1x8x128xf32>,
    return
  }
  func.func @transform_0(%arg0: i32, %arg1: i32) -> (i32, i32, i32, i32) {
    %c0_i32 = arith.constant 0 : i32
    %c0_i32_0 = arith.constant 0 : i32
    %c0_i32_1 = arith.constant 0 : i32
    return %arg0, %arg1, %c0_i32, %c0_i32_0 : i32, i32, i32, i32
  }
  func.func @transform_1(%arg0: i32, %arg1: i32) -> (i32, i32, i32, i32) {
    %c16_i32 = arith.constant 16 : i32
    %0 = arith.muli %arg1, %c16_i32 : i32
    %c1_i32 = arith.constant 1 : i32
    %1 = arith.subi %0, %c1_i32 : i32
    %c0_i32 = arith.constant 0 : i32
    %2 = arith.maxsi %1, %c0_i32 : i32
    %c0_i32_0 = arith.constant 0 : i32
    %c0_i32_1 = arith.constant 0 : i32
    %c0_i32_2 = arith.constant 0 : i32
    return %arg0, %2, %c0_i32_0, %c0_i32_1 : i32, i32, i32, i32
  }
  func.func @transform_2(%arg0: i32, %arg1: i32) -> (i32, i32, i32, i32) {
    %c1_i32 = arith.constant 1 : i32
    %0 = arith.addi %arg1, %c1_i32 : i32
    %c16_i32 = arith.constant 16 : i32
    %1 = arith.muli %0, %c16_i32 : i32
    %c15_i32 = arith.constant 15 : i32
    %2 = arith.minsi %1, %c15_i32 : i32
    %c0_i32 = arith.constant 0 : i32
    %c0_i32_0 = arith.constant 0 : i32
    %c0_i32_1 = arith.constant 0 : i32
    return %arg0, %2, %c0_i32, %c0_i32_0 : i32, i32, i32, i32
  }
  func.func @transform_3(%arg0: i32, %arg1: i32) -> (i32, i32) {
    %c0_i32 = arith.constant 0 : i32
    %c0_i32_0 = arith.constant 0 : i32
    %c0_i32_1 = arith.constant 0 : i32
    return %c0_i32, %c0_i32_0 : i32, i32
  }
  func.func @transform_4(%arg0: i32, %arg1: i32) -> (i32, i32) {
    %c0_i32 = arith.constant 0 : i32
    %c0_i32_0 = arith.constant 0 : i32
    %c0_i32_1 = arith.constant 0 : i32
    return %c0_i32, %c0_i32_0 : i32, i32
  }
  func.func @transform_5(%arg0: i32, %arg1: i32) -> (i32, i32) {
    %c0_i32 = arith.constant 0 : i32
    %c0_i32_0 = arith.constant 0 : i32
    %c0_i32_1 = arith.constant 0 : i32
    return %c0_i32, %c0_i32_0 : i32, i32
  }
  func.func @transform_6(%arg0: i32, %arg1: i32) -> (i32, i32, i32, i32) {
    %c0_i32 = arith.constant 0 : i32
    %c0_i32_0 = arith.constant 0 : i32
    %c0_i32_1 = arith.constant 0 : i32
    return %arg0, %arg1, %c0_i32, %c0_i32_0 : i32, i32, i32, i32
  }
  func.func @transform_7(%arg0: i32, %arg1: i32) -> (i32, i32, i32, i32) {
    %c0_i32 = arith.constant 0 : i32
    %c0_i32_0 = arith.constant 0 : i32
    %c0_i32_1 = arith.constant 0 : i32
    return %arg0, %arg1, %c0_i32, %c0_i32_0 : i32, i32, i32, i32
  }
}

</mosaic_0001>

<llo_original>
// kernel: up_forward.5
$region0: #{up_forward.5}
  #allocation0 [shape = 'u32[]', space=smem, size = 0x4, offset = 0x4, fixed_abs, tag = 'smem constant byte address 0x4 - core index']
  #allocation1 [shape = 'u32[144,128]{1,0:T(1,128)}', space=vmem, size = 0x12000, scoped, tag = 'internal scratch']
  %s0 = inlined_call_operand.vmem [shape: bf16[2,16,16,128], index: 0, kind: input, shape index: {}]
  %s1 = inlined_call_operand.vmem [shape: f32[1,128], index: 1, kind: input, shape index: {}]
  %s2 = inlined_call_operand.vmem [shape: f32[1,128], index: 2, kind: input, shape index: {}]
  %s3 = inlined_call_operand.vmem [shape: f32[2,8,256], index: 3, kind: output, shape index: {}]
  %s4 = sld [smem:[#allocation0]]
  $region45: #{up_forward.5} parent=0
    _
  %s6 = ssub.s32 1, %s4
  %s7 = scalar_select 0, %s6, %s4
  loop: start=0, step=1, limit=4
  $region2: #{up_forward.5} parent=0 // loop_pre_header
    _
  $region3: #{up_forward.5} parent=0 // loop_header
    %s9 = sphi 0, %s13
    %p10 = scmp.ge.s32.totalorder %s9, 4
    %s16 = sphi 0, %s28
    %s17 = sphi 0, %s24
    %s18 = sphi 0, %s16
    %s19 = sphi 0, %s17
    %s20 = sphi 0, %s18
    %s21 = sphi 0, %s19
    %s33 = sphi 0, %s35
    %s36 = sphi 0, %s33
    %s37 = sphi 0, %s36
    %s53 = sphi 0, %s37
    %s57 = sphi 0, %s57
    %s59 = sphi 0, %s57
    %s60 = sphi 0, %s59
    %s74 = sphi 0, %s60
    %s78 = sphi 0, %s78
    %s80 = sphi 0, %s78
    %s81 = sphi 0, %s80
    %s95 = sphi 0, %s81
    %s103 = sphi 0, %s105
    %s106 = sphi 0, %s103
    %s107 = sphi 0, %s106
    %s123 = sphi 0, %s107
  $region4: #{up_forward.5} parent=0 // loop_header_branch
    %12 = sbr.rel (%p10) target = $region8
  $region5: #{up_forward.5} parent=0 // loop_body
    %s14 = ssub.s32 %s9, 1
    %s15 = ssub.s32 %s9, 2
    %s22 = sadd.s32 1, %s17
    %p23 = scmp.ge.s32.totalorder %s22, 1
    %s24 = scalar_select %p23, 0, %s22
    %s25 = sadd.s32 1, %s16
    %s26 = scalar_select %p23, %s25, %s16
    %p27 = scmp.ge.s32.totalorder %s26, 2
    %s28 = scalar_select %p27, 0, %s26
    %s29 = ssub.s32 %s16, %s28
    %s30 = ssub.s32 %s17, %s24
    %s31 = sor.u32 %s29, %s30
    %p32 = scmp.eq.s32.totalorder %s31, 0
    %s34 = sadd.s32 %s33, 1
    %s35 = scalar_select %p32, %s33, %s34
    %p38 = pneg %p32
    %p39 = scmp.eq.s32.totalorder %s9, 1
    %p40 = por %p38, %p39
    %p41 = scmp.ne.s32.totalorder %s33, %s36
    %p42 = scmp.eq.s32.totalorder %s9, 0
    %p43 = por %p41, %p42
    %p44 = scmp.ne.s32.totalorder %s33, %s36
    %p45 = scmp.eq.s32.totalorder %s14, 1
    %p46 = por %p44, %p45
    %p47 = scmp.ne.s32.totalorder %s36, %s37
    %p48 = scmp.eq.s32.totalorder %s14, 0
    %p49 = por %p47, %p48
    %p50 = scmp.ne.s32.totalorder %s36, %s37
    %p51 = scmp.eq.s32.totalorder %s15, 1
    %p52 = por %p50, %p51
    %p54 = scmp.ne.s32.totalorder %s37, %s53
    %p55 = scmp.eq.s32.totalorder %s15, 0
    %p56 = por %p54, %p55
    %s58 = sadd.s32 %s57, 1
    %p61 = scmp.eq.s32.totalorder %s9, 1
    %p62 = scmp.ne.s32.totalorder %s57, %s59
    %p63 = scmp.eq.s32.totalorder %s9, 0
    %p64 = por %p62, %p63
    %p65 = scmp.ne.s32.totalorder %s57, %s59
    %p66 = scmp.eq.s32.totalorder %s14, 1
    %p67 = por %p65, %p66
    %p68 = scmp.ne.s32.totalorder %s59, %s60
    %p69 = scmp.eq.s32.totalorder %s14, 0
    %p70 = por %p68, %p69
    %p71 = scmp.ne.s32.totalorder %s59, %s60
    %p72 = scmp.eq.s32.totalorder %s15, 1
    %p73 = por %p71, %p72
    %p75 = scmp.ne.s32.totalorder %s60, %s74
    %p76 = scmp.eq.s32.totalorder %s15, 0
    %p77 = por %p75, %p76
    %s79 = sadd.s32 %s78, 1
    %p82 = scmp.eq.s32.totalorder %s9, 1
    %p83 = scmp.ne.s32.totalorder %s78, %s80
    %p84 = scmp.eq.s32.totalorder %s9, 0
    %p85 = por %p83, %p84
    %p86 = scmp.ne.s32.totalorder %s78, %s80
    %p87 = scmp.eq.s32.totalorder %s14, 1
    %p88 = por %p86, %p87
    %p89 = scmp.ne.s32.totalorder %s80, %s81
    %p90 = scmp.eq.s32.totalorder %s14, 0
    %p91 = por %p89, %p90
    %p92 = scmp.ne.s32.totalorder %s80, %s81
    %p93 = scmp.eq.s32.totalorder %s15, 1
    %p94 = por %p92, %p93
    %p96 = scmp.ne.s32.totalorder %s81, %s95
    %p97 = scmp.eq.s32.totalorder %s15, 0
    %p98 = por %p96, %p97
    %s99 = ssub.s32 %s16, %s28
    %s100 = ssub.s32 %s17, %s24
    %s101 = sor.u32 %s99, %s100
    %p102 = scmp.eq.s32.totalorder %s101, 0
    %s104 = sadd.s32 %s103, 1
    %s105 = scalar_select %p102, %s103, %s104
    %p108 = pneg %p102
    %p109 = scmp.eq.s32.totalorder %s9, 1
    %p110 = por %p108, %p109
    %p111 = scmp.ne.s32.totalorder %s103, %s106
    %p112 = scmp.eq.s32.totalorder %s9, 0
    %p113 = por %p111, %p112
    %p114 = scmp.ne.s32.totalorder %s103, %s106
    %p115 = scmp.eq.s32.totalorder %s14, 1
    %p116 = por %p114, %p115
    %p117 = scmp.ne.s32.totalorder %s106, %s107
    %p118 = scmp.eq.s32.totalorder %s14, 0
    %p119 = por %p117, %p118
    %p120 = scmp.ne.s32.totalorder %s106, %s107
    %p121 = scmp.eq.s32.totalorder %s15, 1
    %p122 = por %p120, %p121
    %p124 = scmp.ne.s32.totalorder %s107, %s123
    %p125 = scmp.eq.s32.totalorder %s15, 0
    %p126 = por %p124, %p125
    %p127 = scmp.le.s32.totalorder 1, %s9
    %p128 = scmp.lt.s32.totalorder %s9, 3
    %p129 = pnand %p127, %p128
    %p130 = pneg %p129
    // Predicated region
    $region9: #{up_forward.5} parent=5 // pred_check
      _
    $region10: #{up_forward.5} parent=5 // pred_check_branch
      %132 = sbr.rel (%p129) target = $region12
    $region11: #{up_forward.5} parent=5 // pred_region
      %s133 = ssub.s32 %s9, 1
      // Predicated region
      $region13: #{up_forward.5} parent=11 // pred_check
        %p134 = pneg %p70
      $region14: #{up_forward.5} parent=11 // pred_check_branch
        %136 = sbr.rel (%p134) target = $region16
      $region15: #{up_forward.5} parent=11 // pred_region
        _
      $region16: #{up_forward.5} parent=11 // pred_fallthru
        _
      // Predicated region
      $region17: #{up_forward.5} parent=11 // pred_check
        %p137 = pneg %p91
      $region18: #{up_forward.5} parent=11 // pred_check_branch
        %139 = sbr.rel (%p137) target = $region20
      $region19: #{up_forward.5} parent=11 // pred_region
        _
      $region20: #{up_forward.5} parent=11 // pred_fallthru
        _
    $region12: #{up_forward.5} parent=5 // pred_fallthru
      _
    %p140 = scmp.lt.s32.totalorder %s9, 2
    // Predicated region
    $region21: #{up_forward.5} parent=5 // pred_check
      %p141 = pneg %p140
    $region22: #{up_forward.5} parent=5 // pred_check_branch
      %143 = sbr.rel (%p141) target = $region24
    $region23: #{up_forward.5} parent=5 // pred_region
      // Predicated region
      $region25: #{up_forward.5} parent=23 // pred_check
        %p144 = pneg %p43
      $region26: #{up_forward.5} parent=23 // pred_check_branch
        %146 = sbr.rel (%p144) target = $region28
      $region27: #{up_forward.5} parent=23 // pred_region
        %s147 = smul.u32 16, %s17
        %p148 = scmp.lt.s32.totalorder %s16, 1
        %s149 = scalar_select %p148, %s16, 1
        %p150 = scmp.lt.s32.totalorder %s147, 15
        %s151 = scalar_select %p150, %s147, 15
        %s152 = smul.addr %s151, 2
        %s153 = smul.addr %s149, 32
        %s154 = sadd.s32 %s152, %s153
        %s155 = smul.addr %s154, 4
        %s156 = scalar_lea.vmem %s0, %s155
        %s157 = smul.u32 16, %s17
      $region28: #{up_forward.5} parent=23 // pred_fallthru
        _
    $region24: #{up_forward.5} parent=5 // pred_fallthru
      _
    %p158 = scmp.le.s32.totalorder 1, %s9
    %p159 = scmp.lt.s32.totalorder %s9, 3
    %p160 = pnand %p158, %p159
    %p161 = pneg %p160
    // Predicated region
    $region29: #{up_forward.5} parent=5 // pred_check
      _
    $region30: #{up_forward.5} parent=5 // pred_check_branch
      %163 = sbr.rel (%p160) target = $region32
    $region31: #{up_forward.5} parent=5 // pred_region
      %s164 = ssub.s32 %s9, 1
      %s165 = smul.u32 16, %s19
      %p166 = scmp.lt.s32.totalorder %s18, 1
      %s167 = scalar_select %p166, %s18, 1
      %p168 = scmp.lt.s32.totalorder %s165, 15
      %s169 = scalar_select %p168, %s165, 15
      %s170 = smul.addr %s169, 2
      %s171 = smul.addr %s167, 32
      %s172 = sadd.s32 %s170, %s171
      %s173 = smul.addr %s172, 4
      %s174 = scalar_lea.vmem %s0, %s173
      %p175 = pneg %p49
      %p176 = pneg %p46
      %p177 = pneg %p70
      %p178 = pneg %p67
      %p179 = pneg %p91
      %p180 = pneg %p88
      %p181 = pneg %p119
      %p182 = pneg %p116
      %s183 = smul.u32 2, %s19
      %p184 = scmp.lt.s32.totalorder %s18, 1
      %s185 = scalar_select %p184, %s18, 1
      %p186 = scmp.lt.s32.totalorder %s183, 1
      %s187 = scalar_select %p186, %s183, 1
      %s188 = smul.addr %s185, 2
      %s189 = sadd.s32 %s187, %s188
      %s190 = smul.addr %s189, 8
      %s191 = scalar_lea.vmem %s3, %s190
      %s192 = smul.u32 16, %s19
      %p193 = scmp.lt.s32.totalorder %s18, 1
      %s194 = scalar_select %p193, %s18, 1
      %p195 = scmp.lt.s32.totalorder %s192, 15
      %s196 = scalar_select %p195, %s192, 15
      %s197 = smul.addr %s196, 2
      %s198 = smul.addr %s194, 32
      %s199 = sadd.s32 %s197, %s198
      %s200 = smul.addr %s199, 4
      %s201 = scalar_lea.vmem %s0, %s200
      %s202 = smul.u32 16, %s19
      %s203 = smul.u32 2, %s19
      %p204 = scmp.lt.s32.totalorder %s18, 1
      %s205 = scalar_select %p204, %s18, 1
      %p206 = scmp.lt.s32.totalorder %s203, 1
      %s207 = scalar_select %p206, %s203, 1
      %s208 = smul.addr %s205, 2
      %s209 = sadd.s32 %s207, %s208
      %s210 = smul.addr %s209, 8
      %s211 = scalar_lea.vmem %s3, %s210
      %s212 = smul.u32 2, %s19
      %v213 = vld [vmem:[%s201] sm:$0xf]
      %v214 = vld [vmem:[%s201 + $0x4] sm:$0xf]
      %v215 = vld [vmem:[%s201 + $0x8] sm:$0xf]
      %v216 = vld [vmem:[%s201 + $0xc] sm:$0xf]
      %v217 = vld [vmem:[%s201 + $0x10] sm:$0xf]
      %v218 = vld [vmem:[%s201 + $0x14] sm:$0xf]
      %v219 = vld [vmem:[%s201 + $0x18] sm:$0xf]
      %v220 = vld [vmem:[%s201 + $0x1c] sm:$0xf]
      %v221 = vld [vmem:[%s201 + $0x20] sm:$0xf]
      %v222 = vld [vmem:[%s201 + $0x24] sm:$0xf]
      %v223 = vld [vmem:[%s201 + $0x28] sm:$0xf]
      %v224 = vld [vmem:[%s201 + $0x2c] sm:$0xf]
      %v225 = vld [vmem:[%s201 + $0x30] sm:$0xf]
      %v226 = vld [vmem:[%s201 + $0x34] sm:$0xf]
      %v227 = vld [vmem:[%s201 + $0x38] sm:$0xf]
      %v228 = vld [vmem:[%s201 + $0x3c] sm:$0xf]
      %v229 = vld [vmem:[%s201 + $0x40] sm:$0xf]
      %v230 = vld [vmem:[%s201 + $0x44] sm:$0xf]
      %v231 = vld [vmem:[%s201 + $0x48] sm:$0xf]
      %v232 = vld [vmem:[%s201 + $0x4c] sm:$0xf]
      %v233 = vld [vmem:[%s201 + $0x50] sm:$0xf]
      %v234 = vld [vmem:[%s201 + $0x54] sm:$0xf]
      %v235 = vld [vmem:[%s201 + $0x58] sm:$0xf]
      %v236 = vld [vmem:[%s201 + $0x5c] sm:$0xf]
      %v237 = vld [vmem:[%s201 + $0x60] sm:$0xf]
      %v238 = vld [vmem:[%s201 + $0x64] sm:$0xf]
      %v239 = vld [vmem:[%s201 + $0x68] sm:$0xf]
      %v240 = vld [vmem:[%s201 + $0x6c] sm:$0xf]
      %v241 = vld [vmem:[%s201 + $0x70] sm:$0xf]
      %v242 = vld [vmem:[%s201 + $0x74] sm:$0xf]
      %v243 = vld [vmem:[%s201 + $0x78] sm:$0xf]
      %v244 = vld [vmem:[%s201 + $0x7c] sm:$0xf]
      %v245 = vunpack.c.l.bf16 %v213
      %v246 = vunpack.c.l.bf16 %v214
      %v247 = vunpack.c.l.bf16 %v215
      %v248 = vunpack.c.l.bf16 %v216
      %v249 = vunpack.c.l.bf16 %v217
      %v250 = vunpack.c.l.bf16 %v218
      %v251 = vunpack.c.l.bf16 %v219
      %v252 = vunpack.c.l.bf16 %v220
      %v253 = vunpack.c.l.bf16 %v221
      %v254 = vunpack.c.l.bf16 %v222
      %v255 = vunpack.c.l.bf16 %v223
      %v256 = vunpack.c.l.bf16 %v224
      %v257 = vunpack.c.l.bf16 %v225
      %v258 = vunpack.c.l.bf16 %v226
      %v259 = vunpack.c.l.bf16 %v227
      %v260 = vunpack.c.l.bf16 %v228
      %v261 = vunpack.c.l.bf16 %v229
      %v262 = vunpack.c.l.bf16 %v230
      %v263 = vunpack.c.l.bf16 %v231
      %v264 = vunpack.c.l.bf16 %v232
      %v265 = vunpack.c.l.bf16 %v233
      %v266 = vunpack.c.l.bf16 %v234
      %v267 = vunpack.c.l.bf16 %v235
      %v268 = vunpack.c.l.bf16 %v236
      %v269 = vunpack.c.l.bf16 %v237
      %v270 = vunpack.c.l.bf16 %v238
      %v271 = vunpack.c.l.bf16 %v239
      %v272 = vunpack.c.l.bf16 %v240
      %v273 = vunpack.c.l.bf16 %v241
      %v274 = vunpack.c.l.bf16 %v242
      %v275 = vunpack.c.l.bf16 %v243
      %v276 = vunpack.c.l.bf16 %v244
      %v277 = vld [vmem:[%s1] sm:$0x1]
      %v279 = vlaneseq
      %v280 = vshrl.u32 %v279, 7
      %v281 = vsub.s32 0, %v280
      %v282 = vrot.slane %v277, %v281
      %v284 = vmul.f32 %v245, %v282
      %v285 = vmul.f32 %v246, %v282
      %v286 = vmul.f32 %v247, %v282
      %v287 = vmul.f32 %v248, %v282
      %v288 = vmul.f32 %v249, %v282
      %v289 = vmul.f32 %v250, %v282
      %v290 = vmul.f32 %v251, %v282
      %v291 = vmul.f32 %v252, %v282
      %v292 = vmul.f32 %v253, %v282
      %v293 = vmul.f32 %v254, %v282
      %v294 = vmul.f32 %v255, %v282
      %v295 = vmul.f32 %v256, %v282
      %v296 = vmul.f32 %v257, %v282
      %v297 = vmul.f32 %v258, %v282
      %v298 = vmul.f32 %v259, %v282
      %v299 = vmul.f32 %v260, %v282
      %v300 = vmul.f32 %v261, %v282
      %v301 = vmul.f32 %v262, %v282
      %v302 = vmul.f32 %v263, %v282
      %v303 = vmul.f32 %v264, %v282
      %v304 = vmul.f32 %v265, %v282
      %v305 = vmul.f32 %v266, %v282
      %v306 = vmul.f32 %v267, %v282
      %v307 = vmul.f32 %v268, %v282
      %v308 = vmul.f32 %v269, %v282
      %v309 = vmul.f32 %v270, %v282
      %v310 = vmul.f32 %v271, %v282
      %v311 = vmul.f32 %v272, %v282
      %v312 = vmul.f32 %v273, %v282
      %v313 = vmul.f32 %v274, %v282
      %v314 = vmul.f32 %v275, %v282
      %v315 = vmul.f32 %v276, %v282
      %v316 = vld [vmem:[%s2] sm:$0x1]
      %v318 = vlaneseq
      %v319 = vshrl.u32 %v318, 7
      %v320 = vsub.s32 0, %v319
      %v321 = vrot.slane %v316, %v320
      %v323 = vadd.f32 %v284, %v321
      %v324 = vadd.f32 %v285, %v321
      %v325 = vadd.f32 %v286, %v321
      %v326 = vadd.f32 %v287, %v321
      %v327 = vadd.f32 %v288, %v321
      %v328 = vadd.f32 %v289, %v321
      %v329 = vadd.f32 %v290, %v321
      %v330 = vadd.f32 %v291, %v321
      %v331 = vadd.f32 %v292, %v321
      %v332 = vadd.f32 %v293, %v321
      %v333 = vadd.f32 %v294, %v321
      %v334 = vadd.f32 %v295, %v321
      %v335 = vadd.f32 %v296, %v321
      %v336 = vadd.f32 %v297, %v321
      %v337 = vadd.f32 %v298, %v321
      %v338 = vadd.f32 %v299, %v321
      %v339 = vadd.f32 %v300, %v321
      %v340 = vadd.f32 %v301, %v321
      %v341 = vadd.f32 %v302, %v321
      %v342 = vadd.f32 %v303, %v321
      %v343 = vadd.f32 %v304, %v321
      %v344 = vadd.f32 %v305, %v321
      %v345 = vadd.f32 %v306, %v321
      %v346 = vadd.f32 %v307, %v321
      %v347 = vadd.f32 %v308, %v321
      %v348 = vadd.f32 %v309, %v321
      %v349 = vadd.f32 %v310, %v321
      %v350 = vadd.f32 %v311, %v321
      %v351 = vadd.f32 %v312, %v321
      %v352 = vadd.f32 %v313, %v321
      %v353 = vadd.f32 %v314, %v321
      %v354 = vadd.f32 %v315, %v321
      %v355 = vmax.f32 %v323, 0.0
      %v356 = vmax.f32 %v324, 0.0
      %v357 = vmax.f32 %v325, 0.0
      %v358 = vmax.f32 %v326, 0.0
      %v359 = vmax.f32 %v327, 0.0
      %v360 = vmax.f32 %v328, 0.0
      %v361 = vmax.f32 %v329, 0.0
      %v362 = vmax.f32 %v330, 0.0
      %v363 = vmax.f32 %v331, 0.0
      %v364 = vmax.f32 %v332, 0.0
      %v365 = vmax.f32 %v333, 0.0
      %v366 = vmax.f32 %v334, 0.0
      %v367 = vmax.f32 %v335, 0.0
      %v368 = vmax.f32 %v336, 0.0
      %v369 = vmax.f32 %v337, 0.0
      %v370 = vmax.f32 %v338, 0.0
      %v371 = vmax.f32 %v339, 0.0
      %v372 = vmax.f32 %v340, 0.0
      %v373 = vmax.f32 %v341, 0.0
      %v374 = vmax.f32 %v342, 0.0
      %v375 = vmax.f32 %v343, 0.0
      %v376 = vmax.f32 %v344, 0.0
      %v377 = vmax.f32 %v345, 0.0
      %v378 = vmax.f32 %v346, 0.0
      %v379 = vmax.f32 %v347, 0.0
      %v380 = vmax.f32 %v348, 0.0
      %v381 = vmax.f32 %v349, 0.0
      %v382 = vmax.f32 %v350, 0.0
      %v383 = vmax.f32 %v351, 0.0
      %v384 = vmax.f32 %v352, 0.0
      %v385 = vmax.f32 %v353, 0.0
      %v386 = vmax.f32 %v354, 0.0
      %387 = vxpose.xlu0.b32.start [1/16] %v355, 128
      %388 = vxpose.xlu0.b32.cont [2/16] %v356, 128
      %389 = vxpose.xlu0.b32.cont [3/16] %v357, 128
      %390 = vxpose.xlu0.b32.cont [4/16] %v358, 128
      %391 = vxpose.xlu0.b32.cont [5/16] %v359, 128
      %392 = vxpose.xlu0.b32.cont [6/16] %v360, 128
      %393 = vxpose.xlu0.b32.cont [7/16] %v361, 128
      %394 = vxpose.xlu0.b32.cont [8/16] %v362, 128
      %395 = vxpose.xlu0.b32.cont [9/16] %v363, 128
      %396 = vxpose.xlu0.b32.cont [10/16] %v364, 128
      %397 = vxpose.xlu0.b32.cont [11/16] %v365, 128
      %398 = vxpose.xlu0.b32.cont [12/16] %v366, 128
      %399 = vxpose.xlu0.b32.cont [13/16] %v367, 128
      %400 = vxpose.xlu0.b32.cont [14/16] %v368, 128
      %401 = vxpose.xlu0.b32.cont [15/16] %v369, 128
      %402 = vxpose.xlu0.b32.end [16/16] %v370, 128
      %v403 = vpop.trf.xlu0
      %v404 = vpop.trf.xlu0
      %v405 = vpop.trf.xlu0
      %v406 = vpop.trf.xlu0
      %v407 = vpop.trf.xlu0
      %v408 = vpop.trf.xlu0
      %v409 = vpop.trf.xlu0
      %v410 = vpop.trf.xlu0
      %v411 = vpop.trf.xlu0
      %v412 = vpop.trf.xlu0
      %v413 = vpop.trf.xlu0
      %v414 = vpop.trf.xlu0
      %v415 = vpop.trf.xlu0
      %v416 = vpop.trf.xlu0
      %v417 = vpop.trf.xlu0
      %v418 = vpop.trf.xlu0
      %419 = vxpose.xlu0.b32.start [1/16] %v371, 128
      %420 = vxpose.xlu0.b32.cont [2/16] %v372, 128
      %421 = vxpose.xlu0.b32.cont [3/16] %v373, 128
      %422 = vxpose.xlu0.b32.cont [4/16] %v374, 128
      %423 = vxpose.xlu0.b32.cont [5/16] %v375, 128
      %424 = vxpose.xlu0.b32.cont [6/16] %v376, 128
      %425 = vxpose.xlu0.b32.cont [7/16] %v377, 128
      %426 = vxpose.xlu0.b32.cont [8/16] %v378, 128
      %427 = vxpose.xlu0.b32.cont [9/16] %v379, 128
      %428 = vxpose.xlu0.b32.cont [10/16] %v380, 128
      %429 = vxpose.xlu0.b32.cont [11/16] %v381, 128
      %430 = vxpose.xlu0.b32.cont [12/16] %v382, 128
      %431 = vxpose.xlu0.b32.cont [13/16] %v383, 128
      %432 = vxpose.xlu0.b32.cont [14/16] %v384, 128
      %433 = vxpose.xlu0.b32.cont [15/16] %v385, 128
      %434 = vxpose.xlu0.b32.end [16/16] %v386, 128
      %v435 = vpop.trf.xlu0
      %v436 = vpop.trf.xlu0
      %v437 = vpop.trf.xlu0
      %v438 = vpop.trf.xlu0
      %v439 = vpop.trf.xlu0
      %v440 = vpop.trf.xlu0
      %v441 = vpop.trf.xlu0
      %v442 = vpop.trf.xlu0
      %v443 = vpop.trf.xlu0
      %v444 = vpop.trf.xlu0
      %v445 = vpop.trf.xlu0
      %v446 = vpop.trf.xlu0
      %v447 = vpop.trf.xlu0
      %v448 = vpop.trf.xlu0
      %v449 = vpop.trf.xlu0
      %v450 = vpop.trf.xlu0
      %451 = vst [vmem:[%s211] sm:$0xff] %v403
      %452 = vst [vmem:[%s211 + $0x8] sm:$0xff] %v435
      %s453 = smul.u32 2, %s19
      %p454 = scmp.lt.s32.totalorder %s18, 1
      %s455 = scalar_select %p454, %s18, 1
      %p456 = scmp.lt.s32.totalorder %s453, 1
      %s457 = scalar_select %p456, %s453, 1
      %s458 = smul.addr %s455, 2
      %s459 = sadd.s32 %s457, %s458
      %s460 = smul.addr %s459, 8
      %s461 = scalar_lea.vmem %s3, %s460
      // Predicated region
      $region33: #{up_forward.5} parent=31 // pred_check
        %p462 = pneg %p116
      $region34: #{up_forward.5} parent=31 // pred_check_branch
        %464 = sbr.rel (%p462) target = $region36
      $region35: #{up_forward.5} parent=31 // pred_region
        %s465 = smul.u32 2, %s19
      $region36: #{up_forward.5} parent=31 // pred_fallthru
        _
    $region32: #{up_forward.5} parent=5 // pred_fallthru
      _
    %p466 = scmp.le.s32.totalorder 2, %s9
    // Predicated region
    $region37: #{up_forward.5} parent=5 // pred_check
      %p467 = pneg %p466
    $region38: #{up_forward.5} parent=5 // pred_check_branch
      %469 = sbr.rel (%p467) target = $region40
    $region39: #{up_forward.5} parent=5 // pred_region
      %s470 = ssub.s32 %s9, 2
      // Predicated region
      $region41: #{up_forward.5} parent=39 // pred_check
        %p471 = pneg %p122
      $region42: #{up_forward.5} parent=39 // pred_check_branch
        %473 = sbr.rel (%p471) target = $region44
      $region43: #{up_forward.5} parent=39 // pred_region
        %s474 = smul.u32 2, %s21
        %p475 = scmp.lt.s32.totalorder %s20, 1
        %s476 = scalar_select %p475, %s20, 1
        %p477 = scmp.lt.s32.totalorder %s474, 1
        %s478 = scalar_select %p477, %s474, 1
        %s479 = smul.addr %s476, 2
        %s480 = sadd.s32 %s478, %s479
        %s481 = smul.addr %s480, 8
        %s482 = scalar_lea.vmem %s3, %s481
      $region44: #{up_forward.5} parent=39 // pred_fallthru
        _
    $region40: #{up_forward.5} parent=5 // pred_fallthru
      _
  $region6: #{up_forward.5} parent=0 // loop_footer
    %s13 = sadd.s32 1, %s9
  $region7: #{up_forward.5} parent=0 // loop_footer_branch
    %8 = sbr.rel target = $region3
  $region8: #{up_forward.5} parent=0 // loop_exit
    _

// kernel: up_forward.3
$region0: #{up_forward.3}
  #allocation0 [shape = 'u32[]', space=smem, size = 0x4, offset = 0x4, fixed_abs, tag = 'smem constant byte address 0x4 - core index']
  #allocation1 [shape = 'u32[144,128]{1,0:T(1,128)}', space=vmem, size = 0x12000, scoped, tag = 'internal scratch']
  %s0 = inlined_call_operand.vmem [shape: bf16[2,16,16,128], index: 0, kind: input, shape index: {}, may-alias: {0,1,2}]
  %s1 = inlined_call_operand.vmem [shape: bf16[2,16,16,128], index: 1, kind: input, shape index: {}, may-alias: {0,1,2}]
  %s2 = inlined_call_operand.vmem [shape: bf16[2,16,16,128], index: 2, kind: input, shape index: {}, may-alias: {0,1,2}]
  %s3 = inlined_call_operand.vmem [shape: bf16[1152,128], index: 3, kind: input, shape index: {}]
  %s4 = inlined_call_operand.vmem [shape: f32[1,128], index: 4, kind: input, shape index: {}, may-alias: {4,5}]
  %s5 = inlined_call_operand.vmem [shape: f32[1,128], index: 5, kind: input, shape index: {}, may-alias: {4,5}]
  %s6 = inlined_call_operand.vmem [shape: bf16[2,16,16,128], index: 6, kind: output, shape index: {0}]
  %s7 = inlined_call_operand.vmem [shape: f32[2,1,8,128], index: 7, kind: output, shape index: {1}]
  %8 = xla_tuple %s6, %s7
  %s9 = sld [smem:[#allocation0]]
  $region65: #{up_forward.3} parent=0
    _
  %s11 = ssub.s32 1, %s9
  %s12 = scalar_select 0, %s11, %s9
  loop: start=0, step=1, limit=4
  $region2: #{up_forward.3} parent=0 // loop_pre_header
    _
  $region3: #{up_forward.3} parent=0 // loop_header
    %s14 = sphi 0, %s18
    %p15 = scmp.ge.s32.totalorder %s14, 4
    %s21 = sphi 0, %s33
    %s22 = sphi 0, %s29
    %s23 = sphi 0, %s21
    %s24 = sphi 0, %s22
    %s25 = sphi 0, %s23
    %s26 = sphi 0, %s24
    %s38 = sphi 0, %s40
    %s41 = sphi 0, %s38
    %s42 = sphi 0, %s41
    %s58 = sphi 0, %s42
    %s74 = sphi 0, %s76
    %s77 = sphi 0, %s74
    %s78 = sphi 0, %s77
    %s94 = sphi 0, %s78
    %s110 = sphi 0, %s112
    %s113 = sphi 0, %s110
    %s114 = sphi 0, %s113
    %s130 = sphi 0, %s114
    %s134 = sphi 0, %s134
    %s136 = sphi 0, %s134
    %s137 = sphi 0, %s136
    %s151 = sphi 0, %s137
    %s155 = sphi 0, %s155
    %s157 = sphi 0, %s155
    %s158 = sphi 0, %s157
    %s172 = sphi 0, %s158
    %s176 = sphi 0, %s176
    %s178 = sphi 0, %s176
    %s179 = sphi 0, %s178
    %s193 = sphi 0, %s179
    %s201 = sphi 0, %s203
    %s204 = sphi 0, %s201
    %s205 = sphi 0, %s204
    %s221 = sphi 0, %s205
    %s229 = sphi 0, %s231
    %s232 = sphi 0, %s229
    %s233 = sphi 0, %s232
    %s249 = sphi 0, %s233
  $region4: #{up_forward.3} parent=0 // loop_header_branch
    %17 = sbr.rel (%p15) target = $region8
  $region5: #{up_forward.3} parent=0 // loop_body
    %s19 = ssub.s32 %s14, 1
    %s20 = ssub.s32 %s14, 2
    %s27 = sadd.s32 1, %s22
    %p28 = scmp.ge.s32.totalorder %s27, 1
    %s29 = scalar_select %p28, 0, %s27
    %s30 = sadd.s32 1, %s21
    %s31 = scalar_select %p28, %s30, %s21
    %p32 = scmp.ge.s32.totalorder %s31, 2
    %s33 = scalar_select %p32, 0, %s31
    %s34 = ssub.s32 %s21, %s33
    %s35 = ssub.s32 %s22, %s29
    %s36 = sor.u32 %s34, %s35
    %p37 = scmp.eq.s32.totalorder %s36, 0
    %s39 = sadd.s32 %s38, 1
    %s40 = scalar_select %p37, %s38, %s39
    %p43 = pneg %p37
    %p44 = scmp.eq.s32.totalorder %s14, 1
    %p45 = por %p43, %p44
    %p46 = scmp.ne.s32.totalorder %s38, %s41
    %p47 = scmp.eq.s32.totalorder %s14, 0
    %p48 = por %p46, %p47
    %p49 = scmp.ne.s32.totalorder %s38, %s41
    %p50 = scmp.eq.s32.totalorder %s19, 1
    %p51 = por %p49, %p50
    %p52 = scmp.ne.s32.totalorder %s41, %s42
    %p53 = scmp.eq.s32.totalorder %s19, 0
    %p54 = por %p52, %p53
    %p55 = scmp.ne.s32.totalorder %s41, %s42
    %p56 = scmp.eq.s32.totalorder %s20, 1
    %p57 = por %p55, %p56
    %p59 = scmp.ne.s32.totalorder %s42, %s58
    %p60 = scmp.eq.s32.totalorder %s20, 0
    %p61 = por %p59, %p60
    %s62 = smul.u32 %s22, 16
    %s63 = ssub.s32 %s62, 1
    %p64 = scmp.gt.s32.totalorder %s63, 0
    %s65 = scalar_select %p64, %s63, 0
    %s66 = smul.u32 %s29, 16
    %s67 = ssub.s32 %s66, 1
    %p68 = scmp.gt.s32.totalorder %s67, 0
    %s69 = scalar_select %p68, %s67, 0
    %s70 = ssub.s32 %s21, %s33
    %s71 = ssub.s32 %s65, %s69
    %s72 = sor.u32 %s70, %s71
    %p73 = scmp.eq.s32.totalorder %s72, 0
    %s75 = sadd.s32 %s74, 1
    %s76 = scalar_select %p73, %s74, %s75
    %p79 = pneg %p73
    %p80 = scmp.eq.s32.totalorder %s14, 1
    %p81 = por %p79, %p80
    %p82 = scmp.ne.s32.totalorder %s74, %s77
    %p83 = scmp.eq.s32.totalorder %s14, 0
    %p84 = por %p82, %p83
    %p85 = scmp.ne.s32.totalorder %s74, %s77
    %p86 = scmp.eq.s32.totalorder %s19, 1
    %p87 = por %p85, %p86
    %p88 = scmp.ne.s32.totalorder %s77, %s78
    %p89 = scmp.eq.s32.totalorder %s19, 0
    %p90 = por %p88, %p89
    %p91 = scmp.ne.s32.totalorder %s77, %s78
    %p92 = scmp.eq.s32.totalorder %s20, 1
    %p93 = por %p91, %p92
    %p95 = scmp.ne.s32.totalorder %s78, %s94
    %p96 = scmp.eq.s32.totalorder %s20, 0
    %p97 = por %p95, %p96
    %s98 = sadd.s32 %s22, 1
    %s99 = smul.u32 %s98, 16
    %p100 = scmp.lt.s32.totalorder %s99, 15
    %s101 = scalar_select %p100, %s99, 15
    %s102 = sadd.s32 %s29, 1
    %s103 = smul.u32 %s102, 16
    %p104 = scmp.lt.s32.totalorder %s103, 15
    %s105 = scalar_select %p104, %s103, 15
    %s106 = ssub.s32 %s21, %s33
    %s107 = ssub.s32 %s101, %s105
    %s108 = sor.u32 %s106, %s107
    %p109 = scmp.eq.s32.totalorder %s108, 0
    %s111 = sadd.s32 %s110, 1
    %s112 = scalar_select %p109, %s110, %s111
    %p115 = pneg %p109
    %p116 = scmp.eq.s32.totalorder %s14, 1
    %p117 = por %p115, %p116
    %p118 = scmp.ne.s32.totalorder %s110, %s113
    %p119 = scmp.eq.s32.totalorder %s14, 0
    %p120 = por %p118, %p119
    %p121 = scmp.ne.s32.totalorder %s110, %s113
    %p122 = scmp.eq.s32.totalorder %s19, 1
    %p123 = por %p121, %p122
    %p124 = scmp.ne.s32.totalorder %s113, %s114
    %p125 = scmp.eq.s32.totalorder %s19, 0
    %p126 = por %p124, %p125
    %p127 = scmp.ne.s32.totalorder %s113, %s114
    %p128 = scmp.eq.s32.totalorder %s20, 1
    %p129 = por %p127, %p128
    %p131 = scmp.ne.s32.totalorder %s114, %s130
    %p132 = scmp.eq.s32.totalorder %s20, 0
    %p133 = por %p131, %p132
    %s135 = sadd.s32 %s134, 1
    %p138 = scmp.eq.s32.totalorder %s14, 1
    %p139 = scmp.ne.s32.totalorder %s134, %s136
    %p140 = scmp.eq.s32.totalorder %s14, 0
    %p141 = por %p139, %p140
    %p142 = scmp.ne.s32.totalorder %s134, %s136
    %p143 = scmp.eq.s32.totalorder %s19, 1
    %p144 = por %p142, %p143
    %p145 = scmp.ne.s32.totalorder %s136, %s137
    %p146 = scmp.eq.s32.totalorder %s19, 0
    %p147 = por %p145, %p146
    %p148 = scmp.ne.s32.totalorder %s136, %s137
    %p149 = scmp.eq.s32.totalorder %s20, 1
    %p150 = por %p148, %p149
    %p152 = scmp.ne.s32.totalorder %s137, %s151
    %p153 = scmp.eq.s32.totalorder %s20, 0
    %p154 = por %p152, %p153
    %s156 = sadd.s32 %s155, 1
    %p159 = scmp.eq.s32.totalorder %s14, 1
    %p160 = scmp.ne.s32.totalorder %s155, %s157
    %p161 = scmp.eq.s32.totalorder %s14, 0
    %p162 = por %p160, %p161
    %p163 = scmp.ne.s32.totalorder %s155, %s157
    %p164 = scmp.eq.s32.totalorder %s19, 1
    %p165 = por %p163, %p164
    %p166 = scmp.ne.s32.totalorder %s157, %s158
    %p167 = scmp.eq.s32.totalorder %s19, 0
    %p168 = por %p166, %p167
    %p169 = scmp.ne.s32.totalorder %s157, %s158
    %p170 = scmp.eq.s32.totalorder %s20, 1
    %p171 = por %p169, %p170
    %p173 = scmp.ne.s32.totalorder %s158, %s172
    %p174 = scmp.eq.s32.totalorder %s20, 0
    %p175 = por %p173, %p174
    %s177 = sadd.s32 %s176, 1
    %p180 = scmp.eq.s32.totalorder %s14, 1
    %p181 = scmp.ne.s32.totalorder %s176, %s178
    %p182 = scmp.eq.s32.totalorder %s14, 0
    %p183 = por %p181, %p182
    %p184 = scmp.ne.s32.totalorder %s176, %s178
    %p185 = scmp.eq.s32.totalorder %s19, 1
    %p186 = por %p184, %p185
    %p187 = scmp.ne.s32.totalorder %s178, %s179
    %p188 = scmp.eq.s32.totalorder %s19, 0
    %p189 = por %p187, %p188
    %p190 = scmp.ne.s32.totalorder %s178, %s179
    %p191 = scmp.eq.s32.totalorder %s20, 1
    %p192 = por %p190, %p191
    %p194 = scmp.ne.s32.totalorder %s179, %s193
    %p195 = scmp.eq.s32.totalorder %s20, 0
    %p196 = por %p194, %p195
    %s197 = ssub.s32 %s21, %s33
    %s198 = ssub.s32 %s22, %s29
    %s199 = sor.u32 %s197, %s198
    %p200 = scmp.eq.s32.totalorder %s199, 0
    %s202 = sadd.s32 %s201, 1
    %s203 = scalar_select %p200, %s201, %s202
    %p206 = pneg %p200
    %p207 = scmp.eq.s32.totalorder %s14, 1
    %p208 = por %p206, %p207
    %p209 = scmp.ne.s32.totalorder %s201, %s204
    %p210 = scmp.eq.s32.totalorder %s14, 0
    %p211 = por %p209, %p210
    %p212 = scmp.ne.s32.totalorder %s201, %s204
    %p213 = scmp.eq.s32.totalorder %s19, 1
    %p214 = por %p212, %p213
    %p215 = scmp.ne.s32.totalorder %s204, %s205
    %p216 = scmp.eq.s32.totalorder %s19, 0
    %p217 = por %p215, %p216
    %p218 = scmp.ne.s32.totalorder %s204, %s205
    %p219 = scmp.eq.s32.totalorder %s20, 1
    %p220 = por %p218, %p219
    %p222 = scmp.ne.s32.totalorder %s205, %s221
    %p223 = scmp.eq.s32.totalorder %s20, 0
    %p224 = por %p222, %p223
    %s225 = ssub.s32 %s21, %s33
    %s226 = ssub.s32 %s22, %s29
    %s227 = sor.u32 %s225, %s226
    %p228 = scmp.eq.s32.totalorder %s227, 0
    %s230 = sadd.s32 %s229, 1
    %s231 = scalar_select %p228, %s229, %s230
    %p234 = pneg %p228
    %p235 = scmp.eq.s32.totalorder %s14, 1
    %p236 = por %p234, %p235
    %p237 = scmp.ne.s32.totalorder %s229, %s232
    %p238 = scmp.eq.s32.totalorder %s14, 0
    %p239 = por %p237, %p238
    %p240 = scmp.ne.s32.totalorder %s229, %s232
    %p241 = scmp.eq.s32.totalorder %s19, 1
    %p242 = por %p240, %p241
    %p243 = scmp.ne.s32.totalorder %s232, %s233
    %p244 = scmp.eq.s32.totalorder %s19, 0
    %p245 = por %p243, %p244
    %p246 = scmp.ne.s32.totalorder %s232, %s233
    %p247 = scmp.eq.s32.totalorder %s20, 1
    %p248 = por %p246, %p247
    %p250 = scmp.ne.s32.totalorder %s233, %s249
    %p251 = scmp.eq.s32.totalorder %s20, 0
    %p252 = por %p250, %p251
    %p253 = scmp.le.s32.totalorder 1, %s14
    %p254 = scmp.lt.s32.totalorder %s14, 3
    %p255 = pnand %p253, %p254
    %p256 = pneg %p255
    // Predicated region
    $region9: #{up_forward.3} parent=5 // pred_check
      _
    $region10: #{up_forward.3} parent=5 // pred_check_branch
      %258 = sbr.rel (%p255) target = $region12
    $region11: #{up_forward.3} parent=5 // pred_region
      %s259 = ssub.s32 %s14, 1
      // Predicated region
      $region13: #{up_forward.3} parent=11 // pred_check
        %p260 = pneg %p147
      $region14: #{up_forward.3} parent=11 // pred_check_branch
        %262 = sbr.rel (%p260) target = $region16
      $region15: #{up_forward.3} parent=11 // pred_region
        _
      $region16: #{up_forward.3} parent=11 // pred_fallthru
        _
      // Predicated region
      $region17: #{up_forward.3} parent=11 // pred_check
        %p263 = pneg %p168
      $region18: #{up_forward.3} parent=11 // pred_check_branch
        %265 = sbr.rel (%p263) target = $region20
      $region19: #{up_forward.3} parent=11 // pred_region
        _
      $region20: #{up_forward.3} parent=11 // pred_fallthru
        _
      // Predicated region
      $region21: #{up_forward.3} parent=11 // pred_check
        %p266 = pneg %p189
      $region22: #{up_forward.3} parent=11 // pred_check_branch
        %268 = sbr.rel (%p266) target = $region24
      $region23: #{up_forward.3} parent=11 // pred_region
        _
      $region24: #{up_forward.3} parent=11 // pred_fallthru
        _
    $region12: #{up_forward.3} parent=5 // pred_fallthru
      _
    %p269 = scmp.lt.s32.totalorder %s14, 2
    // Predicated region
    $region25: #{up_forward.3} parent=5 // pred_check
      %p270 = pneg %p269
    $region26: #{up_forward.3} parent=5 // pred_check_branch
      %272 = sbr.rel (%p270) target = $region28
    $region27: #{up_forward.3} parent=5 // pred_region
      // Predicated region
      $region29: #{up_forward.3} parent=27 // pred_check
        %p273 = pneg %p48
      $region30: #{up_forward.3} parent=27 // pred_check_branch
        %275 = sbr.rel (%p273) target = $region32
      $region31: #{up_forward.3} parent=27 // pred_region
        %s276 = smul.u32 16, %s22
        %p277 = scmp.lt.s32.totalorder %s21, 1
        %s278 = scalar_select %p277, %s21, 1
        %p279 = scmp.lt.s32.totalorder %s276, 15
        %s280 = scalar_select %p279, %s276, 15
        %s281 = smul.addr %s280, 2
        %s282 = smul.addr %s278, 32
        %s283 = sadd.s32 %s281, %s282
        %s284 = smul.addr %s283, 4
        %s285 = scalar_lea.vmem %s0, %s284
        %s286 = smul.u32 16, %s22
      $region32: #{up_forward.3} parent=27 // pred_fallthru
        _
      // Predicated region
      $region33: #{up_forward.3} parent=27 // pred_check
        %p287 = pneg %p84
      $region34: #{up_forward.3} parent=27 // pred_check_branch
        %289 = sbr.rel (%p287) target = $region36
      $region35: #{up_forward.3} parent=27 // pred_region
        %s290 = smul.u32 %s22, 16
        %s291 = ssub.s32 %s290, 1
        %p292 = scmp.gt.s32.totalorder %s291, 0
        %s293 = scalar_select %p292, %s291, 0
        %p294 = scmp.lt.s32.totalorder %s21, 1
        %s295 = scalar_select %p294, %s21, 1
        %p296 = scmp.lt.s32.totalorder %s293, 15
        %s297 = scalar_select %p296, %s293, 15
        %s298 = smul.addr %s297, 2
        %s299 = smul.addr %s295, 32
        %s300 = sadd.s32 %s298, %s299
        %s301 = smul.addr %s300, 4
        %s302 = scalar_lea.vmem %s1, %s301
        %s303 = smul.u32 %s22, 16
        %s304 = ssub.s32 %s303, 1
        %p305 = scmp.gt.s32.totalorder %s304, 0
        %s306 = scalar_select %p305, %s304, 0
      $region36: #{up_forward.3} parent=27 // pred_fallthru
        _
      // Predicated region
      $region37: #{up_forward.3} parent=27 // pred_check
        %p307 = pneg %p120
      $region38: #{up_forward.3} parent=27 // pred_check_branch
        %309 = sbr.rel (%p307) target = $region40
      $region39: #{up_forward.3} parent=27 // pred_region
        %s310 = sadd.s32 %s22, 1
        %s311 = smul.u32 %s310, 16
        %p312 = scmp.lt.s32.totalorder %s311, 15
        %s313 = scalar_select %p312, %s311, 15
        %p314 = scmp.lt.s32.totalorder %s21, 1
        %s315 = scalar_select %p314, %s21, 1
        %p316 = scmp.lt.s32.totalorder %s313, 15
        %s317 = scalar_select %p316, %s313, 15
        %s318 = smul.addr %s317, 2
        %s319 = smul.addr %s315, 32
        %s320 = sadd.s32 %s318, %s319
        %s321 = smul.addr %s320, 4
        %s322 = scalar_lea.vmem %s2, %s321
        %s323 = sadd.s32 %s22, 1
        %s324 = smul.u32 %s323, 16
        %p325 = scmp.lt.s32.totalorder %s324, 15
        %s326 = scalar_select %p325, %s324, 15
      $region40: #{up_forward.3} parent=27 // pred_fallthru
        _
    $region28: #{up_forward.3} parent=5 // pred_fallthru
      _
    %p327 = scmp.le.s32.totalorder 1, %s14
    %p328 = scmp.lt.s32.totalorder %s14, 3
    %p329 = pnand %p327, %p328
    %p330 = pneg %p329
    // Predicated region
    $region41: #{up_forward.3} parent=5 // pred_check
      _
    $region42: #{up_forward.3} parent=5 // pred_check_branch
      %332 = sbr.rel (%p329) target = $region44
    $region43: #{up_forward.3} parent=5 // pred_region
      %s333 = ssub.s32 %s14, 1
      %s334 = smul.u32 16, %s24
      %p335 = scmp.lt.s32.totalorder %s23, 1
      %s336 = scalar_select %p335, %s23, 1
      %p337 = scmp.lt.s32.totalorder %s334, 15
      %s338 = scalar_select %p337, %s334, 15
      %s339 = smul.addr %s338, 2
      %s340 = smul.addr %s336, 32
      %s341 = sadd.s32 %s339, %s340
      %s342 = smul.addr %s341, 4
      %s343 = scalar_lea.vmem %s0, %s342
      %p344 = pneg %p54
      %p345 = pneg %p51
      %s346 = smul.u32 %s24, 16
      %s347 = ssub.s32 %s346, 1
      %p348 = scmp.gt.s32.totalorder %s347, 0
      %s349 = scalar_select %p348, %s347, 0
      %p350 = scmp.lt.s32.totalorder %s23, 1
      %s351 = scalar_select %p350, %s23, 1
      %p352 = scmp.lt.s32.totalorder %s349, 15
      %s353 = scalar_select %p352, %s349, 15
      %s354 = smul.addr %s353, 2
      %s355 = smul.addr %s351, 32
      %s356 = sadd.s32 %s354, %s355
      %s357 = smul.addr %s356, 4
      %s358 = scalar_lea.vmem %s1, %s357
      %p359 = pneg %p90
      %p360 = pneg %p87
      %s361 = sadd.s32 %s24, 1
      %s362 = smul.u32 %s361, 16
      %p363 = scmp.lt.s32.totalorder %s362, 15
      %s364 = scalar_select %p363, %s362, 15
      %p365 = scmp.lt.s32.totalorder %s23, 1
      %s366 = scalar_select %p365, %s23, 1
      %p367 = scmp.lt.s32.totalorder %s364, 15
      %s368 = scalar_select %p367, %s364, 15
      %s369 = smul.addr %s368, 2
      %s370 = smul.addr %s366, 32
      %s371 = sadd.s32 %s369, %s370
      %s372 = smul.addr %s371, 4
      %s373 = scalar_lea.vmem %s2, %s372
      %p374 = pneg %p126
      %p375 = pneg %p123
      %p376 = pneg %p147
      %p377 = pneg %p144
      %p378 = pneg %p168
      %p379 = pneg %p165
      %p380 = pneg %p189
      %p381 = pneg %p186
      %p382 = pneg %p217
      %p383 = pneg %p214
      %s384 = smul.u32 16, %s24
      %p385 = scmp.lt.s32.totalorder %s23, 1
      %s386 = scalar_select %p385, %s23, 1
      %p387 = scmp.lt.s32.totalorder %s384, 15
      %s388 = scalar_select %p387, %s384, 15
      %s389 = smul.addr %s388, 2
      %s390 = smul.addr %s386, 32
      %s391 = sadd.s32 %s389, %s390
      %s392 = smul.addr %s391, 4
      %s393 = scalar_lea.vmem %s6, %s392
      %p394 = pneg %p245
      %p395 = pneg %p242
      %p396 = scmp.lt.s32.totalorder %s23, 1
      %s397 = scalar_select %p396, %s23, 1
      %p398 = scmp.lt.s32.totalorder %s24, 0
      %s399 = scalar_select %p398, %s24, 0
      %s400 = sadd.s32 %s399, %s397
      %s401 = smul.addr %s400, 8
      %s402 = scalar_lea.vmem %s7, %s401
      %s403 = smul.u32 16, %s24
      %p404 = scmp.lt.s32.totalorder %s23, 1
      %s405 = scalar_select %p404, %s23, 1
      %p406 = scmp.lt.s32.totalorder %s403, 15
      %s407 = scalar_select %p406, %s403, 15
      %s408 = smul.addr %s407, 2
      %s409 = smul.addr %s405, 32
      %s410 = sadd.s32 %s408, %s409
      %s411 = smul.addr %s410, 4
      %s412 = scalar_lea.vmem %s0, %s411
      %s413 = smul.u32 16, %s24
      %s414 = smul.u32 %s24, 16
      %s415 = ssub.s32 %s414, 1
      %p416 = scmp.gt.s32.totalorder %s415, 0
      %s417 = scalar_select %p416, %s415, 0
      %p418 = scmp.lt.s32.totalorder %s23, 1
      %s419 = scalar_select %p418, %s23, 1
      %p420 = scmp.lt.s32.totalorder %s417, 15
      %s421 = scalar_select %p420, %s417, 15
      %s422 = smul.addr %s421, 2
      %s423 = smul.addr %s419, 32
      %s424 = sadd.s32 %s422, %s423
      %s425 = smul.addr %s424, 4
      %s426 = scalar_lea.vmem %s1, %s425
      %s427 = smul.u32 %s24, 16
      %s428 = ssub.s32 %s427, 1
      %p429 = scmp.gt.s32.totalorder %s428, 0
      %s430 = scalar_select %p429, %s428, 0
      %s431 = sadd.s32 %s24, 1
      %s432 = smul.u32 %s431, 16
      %p433 = scmp.lt.s32.totalorder %s432, 15
      %s434 = scalar_select %p433, %s432, 15
      %p435 = scmp.lt.s32.totalorder %s23, 1
      %s436 = scalar_select %p435, %s23, 1
      %p437 = scmp.lt.s32.totalorder %s434, 15
      %s438 = scalar_select %p437, %s434, 15
      %s439 = smul.addr %s438, 2
      %s440 = smul.addr %s436, 32
      %s441 = sadd.s32 %s439, %s440
      %s442 = smul.addr %s441, 4
      %s443 = scalar_lea.vmem %s2, %s442
      %s444 = sadd.s32 %s24, 1
      %s445 = smul.u32 %s444, 16
      %p446 = scmp.lt.s32.totalorder %s445, 15
      %s447 = scalar_select %p446, %s445, 15
      %s448 = smul.u32 16, %s24
      %p449 = scmp.lt.s32.totalorder %s23, 1
      %s450 = scalar_select %p449, %s23, 1
      %p451 = scmp.lt.s32.totalorder %s448, 15
      %s452 = scalar_select %p451, %s448, 15
      %s453 = smul.addr %s452, 2
      %s454 = smul.addr %s450, 32
      %s455 = sadd.s32 %s453, %s454
      %s456 = smul.addr %s455, 4
      %s457 = scalar_lea.vmem %s6, %s456
      %s458 = smul.u32 16, %s24
      %p459 = scmp.lt.s32.totalorder %s23, 1
      %s460 = scalar_select %p459, %s23, 1
      %p461 = scmp.lt.s32.totalorder %s24, 0
      %s462 = scalar_select %p461, %s24, 0
      %s463 = sadd.s32 %s462, %s460
      %s464 = smul.addr %s463, 8
      %s465 = scalar_lea.vmem %s7, %s464
      %v467 = vld [vmem:[%s412] sm:$0xf]
      %v468 = vld [vmem:[%s412 + $0x4] sm:$0xf]
      %v469 = vld [vmem:[%s412 + $0x8] sm:$0xf]
      %v470 = vld [vmem:[%s412 + $0xc] sm:$0xf]
      %v471 = vld [vmem:[%s412 + $0x10] sm:$0xf]
      %v472 = vld [vmem:[%s412 + $0x14] sm:$0xf]
      %v473 = vld [vmem:[%s412 + $0x18] sm:$0xf]
      %v474 = vld [vmem:[%s412 + $0x1c] sm:$0xf]
      %v475 = vld [vmem:[%s412 + $0x20] sm:$0xf]
      %v476 = vld [vmem:[%s412 + $0x24] sm:$0xf]
      %v477 = vld [vmem:[%s412 + $0x28] sm:$0xf]
      %v478 = vld [vmem:[%s412 + $0x2c] sm:$0xf]
      %v479 = vld [vmem:[%s412 + $0x30] sm:$0xf]
      %v480 = vld [vmem:[%s412 + $0x34] sm:$0xf]
      %v481 = vld [vmem:[%s412 + $0x38] sm:$0xf]
      %v482 = vld [vmem:[%s412 + $0x3c] sm:$0xf]
      %v483 = vld [vmem:[%s412 + $0x40] sm:$0xf]
      %v484 = vld [vmem:[%s412 + $0x44] sm:$0xf]
      %v485 = vld [vmem:[%s412 + $0x48] sm:$0xf]
      %v486 = vld [vmem:[%s412 + $0x4c] sm:$0xf]
      %v487 = vld [vmem:[%s412 + $0x50] sm:$0xf]
      %v488 = vld [vmem:[%s412 + $0x54] sm:$0xf]
      %v489 = vld [vmem:[%s412 + $0x58] sm:$0xf]
      %v490 = vld [vmem:[%s412 + $0x5c] sm:$0xf]
      %v491 = vld [vmem:[%s412 + $0x60] sm:$0xf]
      %v492 = vld [vmem:[%s412 + $0x64] sm:$0xf]
      %v493 = vld [vmem:[%s412 + $0x68] sm:$0xf]
      %v494 = vld [vmem:[%s412 + $0x6c] sm:$0xf]
      %v495 = vld [vmem:[%s412 + $0x70] sm:$0xf]
      %v496 = vld [vmem:[%s412 + $0x74] sm:$0xf]
      %v497 = vld [vmem:[%s412 + $0x78] sm:$0xf]
      %v498 = vld [vmem:[%s412 + $0x7c] sm:$0xf]
      %v499 = vld [vmem:[%s426] sm:$0xf]
      %v500 = vld [vmem:[%s426 + $0x4] sm:$0xf]
      %v501 = vld [vmem:[%s443] sm:$0xf]
      %v502 = vld [vmem:[%s443 + $0x4] sm:$0xf]
      %p503 = scmp.gt.s32.totalorder %s24, 0
      %s504 = scalar_select %p503, 1, 0
      %s505 = scvt.s32.f32 %s504
      %p507 = scmp.ne.f32.partialorder %s505, %s505
      %s508 = sshrl.u32 %s505, 16
      %s509 = sand.u32 %s508, 1
      %s510 = sadd.s32 32767, %s509
      %s511 = sadd.s32 %s505, %s510
      %s512 = sand.u32 %s511, 4294901760
      %s513 = scalar_select %p507, 2143289344, %s512
      %s515 = sshrl.u32 %s513, 16
      %s516 = sshll.u32 %s515, 16
      %s517 = sor.u32 %s515, %s516
      %v518 = vstv %s517
      %v520 = vmul.bf16 %v499, %v518
      %v521 = vmul.bf16 %v500, %v518
      %p522 = scmp.lt.s32.totalorder %s24, 0
      %s523 = scalar_select %p522, 1, 0
      %s524 = scvt.s32.f32 %s523
      %p526 = scmp.ne.f32.partialorder %s524, %s524
      %s527 = sshrl.u32 %s524, 16
      %s528 = sand.u32 %s527, 1
      %s529 = sadd.s32 32767, %s528
      %s530 = sadd.s32 %s524, %s529
      %s531 = sand.u32 %s530, 4294901760
      %s532 = scalar_select %p526, 2143289344, %s531
      %s534 = sshrl.u32 %s532, 16
      %s535 = sshll.u32 %s534, 16
      %s536 = sor.u32 %s534, %s535
      %v537 = vstv %s536
      %v539 = vmul.bf16 %v501, %v537
      %v540 = vmul.bf16 %v502, %v537
      %v577 = vunpack.c.l.b16 %v520
      %v578 = vunpack.c.l.b16 %v521
      %v579 = vunpack.c.l.b16 %v467
      %v580 = vunpack.c.l.b16 %v468
      %v581 = vunpack.c.l.b16 %v469
      %v582 = vunpack.c.l.b16 %v470
      %v583 = vunpack.c.l.b16 %v471
      %v584 = vunpack.c.l.b16 %v472
      %v585 = vunpack.c.l.b16 %v473
      %v586 = vunpack.c.l.b16 %v474
      %v587 = vunpack.c.l.b16 %v475
      %v588 = vunpack.c.l.b16 %v476
      %v589 = vunpack.c.l.b16 %v477
      %v590 = vunpack.c.l.b16 %v478
      %v591 = vunpack.c.l.b16 %v479
      %v592 = vunpack.c.l.b16 %v480
      %v593 = vunpack.c.l.b16 %v481
      %v594 = vunpack.c.l.b16 %v482
      %v595 = vunpack.c.l.b16 %v483
      %v596 = vunpack.c.l.b16 %v484
      %v597 = vunpack.c.l.b16 %v485
      %v598 = vunpack.c.l.b16 %v486
      %v599 = vunpack.c.l.b16 %v487
      %v600 = vunpack.c.l.b16 %v488
      %v601 = vunpack.c.l.b16 %v489
      %v602 = vunpack.c.l.b16 %v490
      %v603 = vunpack.c.l.b16 %v491
      %v604 = vunpack.c.l.b16 %v492
      %v605 = vunpack.c.l.b16 %v493
      %v606 = vunpack.c.l.b16 %v494
      %v607 = vunpack.c.l.b16 %v495
      %v608 = vunpack.c.l.b16 %v496
      %v609 = vunpack.c.l.b16 %v497
      %v610 = vunpack.c.l.b16 %v498
      %v611 = vunpack.c.l.b16 %v539
      %v612 = vunpack.c.l.b16 %v540
      %v613 = vpack.c.b16 %v578, %v577
      %v614 = vpack.c.b16 %v580, %v579
      %v615 = vpack.c.b16 %v582, %v581
      %v616 = vpack.c.b16 %v584, %v583
      %v617 = vpack.c.b16 %v586, %v585
      %v618 = vpack.c.b16 %v588, %v587
      %v619 = vpack.c.b16 %v590, %v589
      %v620 = vpack.c.b16 %v592, %v591
      %v621 = vpack.c.b16 %v594, %v593
      %v622 = vpack.c.b16 %v596, %v595
      %v623 = vpack.c.b16 %v598, %v597
      %v624 = vpack.c.b16 %v600, %v599
      %v625 = vpack.c.b16 %v602, %v601
      %v626 = vpack.c.b16 %v604, %v603
      %v627 = vpack.c.b16 %v606, %v605
      %v628 = vpack.c.b16 %v608, %v607
      %v629 = vpack.c.b16 %v610, %v609
      %v630 = vpack.c.b16 %v612, %v611
      %v632 = vshrl.u32 %v613, 16
      %v634 = vrot.slane %v632, 7
      %v635 = vshll.u32 %v613, 16
      %v637 = vor.u32 %v634, %v635
      %v639 = vshrl.u32 %v614, 16
      %v641 = vrot.slane %v639, 7
      %v642 = vshll.u32 %v614, 16
      %v644 = vor.u32 %v641, %v642
      %v646 = vshrl.u32 %v615, 16
      %v648 = vrot.slane %v646, 7
      %v649 = vshll.u32 %v615, 16
      %v651 = vor.u32 %v648, %v649
      %v653 = vshrl.u32 %v616, 16
      %v655 = vrot.slane %v653, 7
      %v656 = vshll.u32 %v616, 16
      %v658 = vor.u32 %v655, %v656
      %v660 = vshrl.u32 %v617, 16
      %v662 = vrot.slane %v660, 7
      %v663 = vshll.u32 %v617, 16
      %v665 = vor.u32 %v662, %v663
      %v667 = vshrl.u32 %v618, 16
      %v669 = vrot.slane %v667, 7
      %v670 = vshll.u32 %v618, 16
      %v672 = vor.u32 %v669, %v670
      %v674 = vshrl.u32 %v619, 16
      %v676 = vrot.slane %v674, 7
      %v677 = vshll.u32 %v619, 16
      %v679 = vor.u32 %v676, %v677
      %v681 = vshrl.u32 %v620, 16
      %v683 = vrot.slane %v681, 7
      %v684 = vshll.u32 %v620, 16
      %v686 = vor.u32 %v683, %v684
      %v688 = vshrl.u32 %v621, 16
      %v690 = vrot.slane %v688, 7
      %v691 = vshll.u32 %v621, 16
      %v693 = vor.u32 %v690, %v691
      %v695 = vshrl.u32 %v622, 16
      %v697 = vrot.slane %v695, 7
      %v698 = vshll.u32 %v622, 16
      %v700 = vor.u32 %v697, %v698
      %v702 = vshrl.u32 %v623, 16
      %v704 = vrot.slane %v702, 7
      %v705 = vshll.u32 %v623, 16
      %v707 = vor.u32 %v704, %v705
      %v709 = vshrl.u32 %v624, 16
      %v711 = vrot.slane %v709, 7
      %v712 = vshll.u32 %v624, 16
      %v714 = vor.u32 %v711, %v712
      %v716 = vshrl.u32 %v625, 16
      %v718 = vrot.slane %v716, 7
      %v719 = vshll.u32 %v625, 16
      %v721 = vor.u32 %v718, %v719
      %v723 = vshrl.u32 %v626, 16
      %v725 = vrot.slane %v723, 7
      %v726 = vshll.u32 %v626, 16
      %v728 = vor.u32 %v725, %v726
      %v730 = vshrl.u32 %v627, 16
      %v732 = vrot.slane %v730, 7
      %v733 = vshll.u32 %v627, 16
      %v735 = vor.u32 %v732, %v733
      %v737 = vshrl.u32 %v628, 16
      %v739 = vrot.slane %v737, 7
      %v740 = vshll.u32 %v628, 16
      %v742 = vor.u32 %v739, %v740
      %v744 = vshrl.u32 %v629, 16
      %v746 = vrot.slane %v744, 7
      %v747 = vshll.u32 %v629, 16
      %v749 = vor.u32 %v746, %v747
      %v751 = vshrl.u32 %v630, 16
      %v753 = vrot.slane %v751, 7
      %v754 = vshll.u32 %v630, 16
      %v756 = vor.u32 %v753, %v754
      %vm775 = vcmask 1040384
      %vm776 = vsmask.f32 256
      %vm777 = vmand %vm775, %vm776
      %v778 = vsel %vm777, 0, %v637
      %v779 = vsel %vm777, 0, %v644
      %v780 = vsel %vm777, 0, %v651
      %v781 = vsel %vm777, 0, %v658
      %v782 = vsel %vm777, 0, %v665
      %v783 = vsel %vm777, 0, %v672
      %v784 = vsel %vm777, 0, %v679
      %v785 = vsel %vm777, 0, %v686
      %v786 = vsel %vm777, 0, %v693
      %v787 = vsel %vm777, 0, %v700
      %v788 = vsel %vm777, 0, %v707
      %v789 = vsel %vm777, 0, %v714
      %v790 = vsel %vm777, 0, %v721
      %v791 = vsel %vm777, 0, %v728
      %v792 = vsel %vm777, 0, %v735
      %v793 = vsel %vm777, 0, %v742
      %v794 = vsel %vm777, 0, %v749
      %v795 = vsel %vm777, 0, %v756
      %v796 = vrot.slane %v635, 1
      %v797 = vor.u32 %v632, %v796
      %v798 = vrot.slane %v642, 1
      %v799 = vor.u32 %v639, %v798
      %v800 = vrot.slane %v649, 1
      %v801 = vor.u32 %v646, %v800
      %v802 = vrot.slane %v656, 1
      %v803 = vor.u32 %v653, %v802
      %v804 = vrot.slane %v663, 1
      %v805 = vor.u32 %v660, %v804
      %v806 = vrot.slane %v670, 1
      %v807 = vor.u32 %v667, %v806
      %v808 = vrot.slane %v677, 1
      %v809 = vor.u32 %v674, %v808
      %v810 = vrot.slane %v684, 1
      %v811 = vor.u32 %v681, %v810
      %v812 = vrot.slane %v691, 1
      %v813 = vor.u32 %v688, %v812
      %v814 = vrot.slane %v698, 1
      %v815 = vor.u32 %v695, %v814
      %v816 = vrot.slane %v705, 1
      %v817 = vor.u32 %v702, %v816
      %v818 = vrot.slane %v712, 1
      %v819 = vor.u32 %v709, %v818
      %v820 = vrot.slane %v719, 1
      %v821 = vor.u32 %v716, %v820
      %v822 = vrot.slane %v726, 1
      %v823 = vor.u32 %v723, %v822
      %v824 = vrot.slane %v733, 1
      %v825 = vor.u32 %v730, %v824
      %v826 = vrot.slane %v740, 1
      %v827 = vor.u32 %v737, %v826
      %v828 = vrot.slane %v747, 1
      %v829 = vor.u32 %v744, %v828
      %v830 = vrot.slane %v754, 1
      %v831 = vor.u32 %v751, %v830
      %vm850 = vcmask 1047552
      %vm851 = vsmask.f32 7424
      %vm852 = vmand %vm850, %vm851
      %v853 = vsel %vm852, %v797, 0
      %v854 = vsel %vm852, %v799, 0
      %v855 = vsel %vm852, %v801, 0
      %v856 = vsel %vm852, %v803, 0
      %v857 = vsel %vm852, %v805, 0
      %v858 = vsel %vm852, %v807, 0
      %v859 = vsel %vm852, %v809, 0
      %v860 = vsel %vm852, %v811, 0
      %v861 = vsel %vm852, %v813, 0
      %v862 = vsel %vm852, %v815, 0
      %v863 = vsel %vm852, %v817, 0
      %v864 = vsel %vm852, %v819, 0
      %v865 = vsel %vm852, %v821, 0
      %v866 = vsel %vm852, %v823, 0
      %v867 = vsel %vm852, %v825, 0
      %v868 = vsel %vm852, %v827, 0
      %v869 = vsel %vm852, %v829, 0
      %v870 = vsel %vm852, %v831, 0
      %v871 = vld [vmem:[%s3] sm:$0xf]
      %v872 = vld [vmem:[%s3 + $0x4] sm:$0xf]
      %v873 = vld [vmem:[%s3 + $0x8] sm:$0xf]
      %v874 = vld [vmem:[%s3 + $0xc] sm:$0xf]
      %v875 = vld [vmem:[%s3 + $0x10] sm:$0xf]
      %v876 = vld [vmem:[%s3 + $0x14] sm:$0xf]
      %v877 = vld [vmem:[%s3 + $0x18] sm:$0xf]
      %v878 = vld [vmem:[%s3 + $0x1c] sm:$0xf]
      %v879 = vld [vmem:[%s3 + $0x20] sm:$0xf]
      %v880 = vld [vmem:[%s3 + $0x24] sm:$0xf]
      %v881 = vld [vmem:[%s3 + $0x28] sm:$0xf]
      %v882 = vld [vmem:[%s3 + $0x2c] sm:$0xf]
      %v883 = vld [vmem:[%s3 + $0x30] sm:$0xf]
      %v884 = vld [vmem:[%s3 + $0x34] sm:$0xf]
      %v885 = vld [vmem:[%s3 + $0x38] sm:$0xf]
      %v886 = vld [vmem:[%s3 + $0x3c] sm:$0xf]
      %v887 = vld [vmem:[%s3 + $0x40] sm:$0xf]
      %v888 = vld [vmem:[%s3 + $0x44] sm:$0xf]
      %v889 = vld [vmem:[%s3 + $0x48] sm:$0xf]
      %v890 = vld [vmem:[%s3 + $0x4c] sm:$0xf]
      %v891 = vld [vmem:[%s3 + $0x50] sm:$0xf]
      %v892 = vld [vmem:[%s3 + $0x54] sm:$0xf]
      %v893 = vld [vmem:[%s3 + $0x58] sm:$0xf]
      %v894 = vld [vmem:[%s3 + $0x5c] sm:$0xf]
      %v895 = vld [vmem:[%s3 + $0x60] sm:$0xf]
      %v896 = vld [vmem:[%s3 + $0x64] sm:$0xf]
      %v897 = vld [vmem:[%s3 + $0x68] sm:$0xf]
      %v898 = vld [vmem:[%s3 + $0x6c] sm:$0xf]
      %v899 = vld [vmem:[%s3 + $0x70] sm:$0xf]
      %v900 = vld [vmem:[%s3 + $0x74] sm:$0xf]
      %v901 = vld [vmem:[%s3 + $0x78] sm:$0xf]
      %v902 = vld [vmem:[%s3 + $0x7c] sm:$0xf]
      %v935 = vunpack.c.l.b16 %v887
      %v936 = vunpack.c.l.b16 %v888
      %v937 = vunpack.c.l.b16 %v889
      %v938 = vunpack.c.l.b16 %v890
      %v939 = vunpack.c.l.b16 %v891
      %v940 = vunpack.c.l.b16 %v892
      %v941 = vunpack.c.l.b16 %v893
      %v942 = vunpack.c.l.b16 %v894
      %v943 = vunpack.c.l.b16 %v895
      %v944 = vunpack.c.l.b16 %v896
      %v945 = vunpack.c.l.b16 %v897
      %v946 = vunpack.c.l.b16 %v898
      %v947 = vunpack.c.l.b16 %v899
      %v948 = vunpack.c.l.b16 %v900
      %v949 = vunpack.c.l.b16 %v901
      %v950 = vunpack.c.l.b16 %v902
      %v951 = vpack.c.b16 %v936, %v935
      %v952 = vpack.c.b16 %v938, %v937
      %v953 = vpack.c.b16 %v940, %v939
      %v954 = vpack.c.b16 %v942, %v941
      %v955 = vpack.c.b16 %v944, %v943
      %v956 = vpack.c.b16 %v946, %v945
      %v957 = vpack.c.b16 %v948, %v947
      %v958 = vpack.c.b16 %v950, %v949
      %967 = vmatprep.subr.bf16.mxu0 0
      %968 = vmatpush1.bf16.msra.mxu0 %v951
      %969 = vmatprep.subr.bf16.mxu0 0
      %970 = vmatpush1.bf16.msra.mxu0 %v952
      %971 = vmatprep.subr.bf16.mxu0 0
      %972 = vmatpush1.bf16.msra.mxu0 %v953
      %973 = vmatprep.subr.bf16.mxu0 0
      %974 = vmatpush1.bf16.msra.mxu0 %v954
      %975 = vmatprep.subr.bf16.mxu0 0
      %976 = vmatpush1.bf16.msra.mxu0 %v955
      %977 = vmatprep.subr.bf16.mxu0 0
      %978 = vmatpush1.bf16.msra.mxu0 %v956
      %979 = vmatprep.subr.bf16.mxu0 0
      %980 = vmatpush1.bf16.msra.mxu0 %v957
      %981 = vmatprep.subr.bf16.mxu0 0
      %982 = vmatpush1.bf16.msra.mxu0 %v958
      %983 = vmatprep.subr.bf16.mxu0 0
      %984 = vmatpush1.bf16.msra.mxu0 0
      %985 = vmatprep.subr.bf16.mxu0 0
      %986 = vmatpush1.bf16.msra.mxu0 0
      %987 = vmatprep.subr.bf16.mxu0 0
      %988 = vmatpush1.bf16.msra.mxu0 0
      %989 = vmatprep.subr.bf16.mxu0 0
      %990 = vmatpush1.bf16.msra.mxu0 0
      %991 = vmatprep.subr.bf16.mxu0 0
      %992 = vmatpush1.bf16.msra.mxu0 0
      %993 = vmatprep.subr.bf16.mxu0 0
      %994 = vmatpush1.bf16.msra.mxu0 0
      %995 = vmatprep.subr.bf16.mxu0 0
      %996 = vmatpush1.bf16.msra.mxu0 0
      %997 = vmatprep.subr.bf16.mxu0 0
      %998 = vmatpush1.bf16.msra.mxu0 0
      %999 = vmatprep.mubr.bf16.mxu0 0
      %1000 = vmatmul.mubr.bf16.gmra.mrb[0].mxu0 %v613
      %v1001 = vpop.f32.mrb[0].mxu0
      %v1002 = vadd.f32 0.0, %v1001
      %v1003 = vpop.f32.mrb[0].mxu0
      %v1004 = vpop.f32.mrb[0].mxu0
      %v1005 = vadd.f32 0.0, %v1004
      %v1006 = vpop.f32.mrb[0].mxu0
      %1007 = vmatprep.mubr.bf16.mxu0 0
      %1008 = vmatmul.mubr.bf16.gmra.mrb[0].mxu0 %v614
      %v1009 = vpop.f32.mrb[0].mxu0
      %v1010 = vadd.f32 0.0, %v1009
      %v1011 = vpop.f32.mrb[0].mxu0
      %v1012 = vpop.f32.mrb[0].mxu0
      %v1013 = vadd.f32 0.0, %v1012
      %v1014 = vpop.f32.mrb[0].mxu0
      %1015 = vmatprep.mubr.bf16.mxu0 0
      %1016 = vmatmul.mubr.bf16.gmra.mrb[0].mxu0 %v615
      %v1017 = vpop.f32.mrb[0].mxu0
      %v1018 = vadd.f32 0.0, %v1017
      %v1019 = vpop.f32.mrb[0].mxu0
      %v1020 = vpop.f32.mrb[0].mxu0
      %v1021 = vadd.f32 0.0, %v1020
      %v1022 = vpop.f32.mrb[0].mxu0
      %1023 = vmatprep.mubr.bf16.mxu0 0
      %1024 = vmatmul.mubr.bf16.gmra.mrb[0].mxu0 %v616
      %v1025 = vpop.f32.mrb[0].mxu0
      %v1026 = vadd.f32 0.0, %v1025
      %v1027 = vpop.f32.mrb[0].mxu0
      %v1028 = vpop.f32.mrb[0].mxu0
      %v1029 = vadd.f32 0.0, %v1028
      %v1030 = vpop.f32.mrb[0].mxu0
      %1031 = vmatprep.mubr.bf16.mxu0 0
      %1032 = vmatmul.mubr.bf16.gmra.mrb[0].mxu0 %v617
      %v1033 = vpop.f32.mrb[0].mxu0
      %v1034 = vadd.f32 0.0, %v1033
      %v1035 = vpop.f32.mrb[0].mxu0
      %v1036 = vpop.f32.mrb[0].mxu0
      %v1037 = vadd.f32 0.0, %v1036
      %v1038 = vpop.f32.mrb[0].mxu0
      %1039 = vmatprep.mubr.bf16.mxu0 0
      %1040 = vmatmul.mubr.bf16.gmra.mrb[0].mxu0 %v618
      %v1041 = vpop.f32.mrb[0].mxu0
      %v1042 = vadd.f32 0.0, %v1041
      %v1043 = vpop.f32.mrb[0].mxu0
      %v1044 = vpop.f32.mrb[0].mxu0
      %v1045 = vadd.f32 0.0, %v1044
      %v1046 = vpop.f32.mrb[0].mxu0
      %1047 = vmatprep.mubr.bf16.mxu0 0
      %1048 = vmatmul.mubr.bf16.gmra.mrb[0].mxu0 %v619
      %v1049 = vpop.f32.mrb[0].mxu0
      %v1050 = vadd.f32 0.0, %v1049
      %v1051 = vpop.f32.mrb[0].mxu0
      %v1052 = vpop.f32.mrb[0].mxu0
      %v1053 = vadd.f32 0.0, %v1052
      %v1054 = vpop.f32.mrb[0].mxu0
      %1055 = vmatprep.mubr.bf16.mxu0 0
      %1056 = vmatmul.mubr.bf16.gmra.mrb[0].mxu0 %v620
      %v1057 = vpop.f32.mrb[0].mxu0
      %v1058 = vadd.f32 0.0, %v1057
      %v1059 = vpop.f32.mrb[0].mxu0
      %v1060 = vpop.f32.mrb[0].mxu0
      %v1061 = vadd.f32 0.0, %v1060
      %v1062 = vpop.f32.mrb[0].mxu0
      %1063 = vmatprep.mubr.bf16.mxu0 0
      %1064 = vmatmul.mubr.bf16.gmra.mrb[0].mxu0 %v621
      %v1065 = vpop.f32.mrb[0].mxu0
      %v1066 = vadd.f32 0.0, %v1065
      %v1067 = vpop.f32.mrb[0].mxu0
      %v1068 = vpop.f32.mrb[0].mxu0
      %v1069 = vadd.f32 0.0, %v1068
      %v1070 = vpop.f32.mrb[0].mxu0
      %1071 = vmatprep.mubr.bf16.mxu0 0
      %1072 = vmatmul.mubr.bf16.gmra.mrb[0].mxu0 %v622
      %v1073 = vpop.f32.mrb[0].mxu0
      %v1074 = vadd.f32 0.0, %v1073
      %v1075 = vpop.f32.mrb[0].mxu0
      %v1076 = vpop.f32.mrb[0].mxu0
      %v1077 = vadd.f32 0.0, %v1076
      %v1078 = vpop.f32.mrb[0].mxu0
      %1079 = vmatprep.mubr.bf16.mxu0 0
      %1080 = vmatmul.mubr.bf16.gmra.mrb[0].mxu0 %v623
      %v1081 = vpop.f32.mrb[0].mxu0
      %v1082 = vadd.f32 0.0, %v1081
      %v1083 = vpop.f32.mrb[0].mxu0
      %v1084 = vpop.f32.mrb[0].mxu0
      %v1085 = vadd.f32 0.0, %v1084
      %v1086 = vpop.f32.mrb[0].mxu0
      %1087 = vmatprep.mubr.bf16.mxu0 0
      %1088 = vmatmul.mubr.bf16.gmra.mrb[0].mxu0 %v624
      %v1089 = vpop.f32.mrb[0].mxu0
      %v1090 = vadd.f32 0.0, %v1089
      %v1091 = vpop.f32.mrb[0].mxu0
      %v1092 = vpop.f32.mrb[0].mxu0
      %v1093 = vadd.f32 0.0, %v1092
      %v1094 = vpop.f32.mrb[0].mxu0
      %1095 = vmatprep.mubr.bf16.mxu0 0
      %1096 = vmatmul.mubr.bf16.gmra.mrb[0].mxu0 %v625
      %v1097 = vpop.f32.mrb[0].mxu0
      %v1098 = vadd.f32 0.0, %v1097
      %v1099 = vpop.f32.mrb[0].mxu0
      %v1100 = vpop.f32.mrb[0].mxu0
      %v1101 = vadd.f32 0.0, %v1100
      %v1102 = vpop.f32.mrb[0].mxu0
      %1103 = vmatprep.mubr.bf16.mxu0 0
      %1104 = vmatmul.mubr.bf16.gmra.mrb[0].mxu0 %v626
      %v1105 = vpop.f32.mrb[0].mxu0
      %v1106 = vadd.f32 0.0, %v1105
      %v1107 = vpop.f32.mrb[0].mxu0
      %v1108 = vpop.f32.mrb[0].mxu0
      %v1109 = vadd.f32 0.0, %v1108
      %v1110 = vpop.f32.mrb[0].mxu0
      %1111 = vmatprep.mubr.bf16.mxu0 0
      %1112 = vmatmul.mubr.bf16.gmra.mrb[0].mxu0 %v627
      %v1113 = vpop.f32.mrb[0].mxu0
      %v1114 = vadd.f32 0.0, %v1113
      %v1115 = vpop.f32.mrb[0].mxu0
      %v1116 = vpop.f32.mrb[0].mxu0
      %v1117 = vadd.f32 0.0, %v1116
      %v1118 = vpop.f32.mrb[0].mxu0
      %1119 = vmatprep.mubr.bf16.mxu0 0
      %1120 = vmatmul.mubr.bf16.gmra.mrb[0].mxu0 %v628
      %v1121 = vpop.f32.mrb[0].mxu0
      %v1122 = vadd.f32 0.0, %v1121
      %v1123 = vpop.f32.mrb[0].mxu0
      %v1124 = vpop.f32.mrb[0].mxu0
      %v1125 = vadd.f32 0.0, %v1124
      %v1126 = vpop.f32.mrb[0].mxu0
      %1127 = vdwg.mxu0
      %v1144 = vunpack.c.l.b16 %v871
      %v1145 = vunpack.c.l.b16 %v872
      %v1146 = vunpack.c.l.b16 %v873
      %v1147 = vunpack.c.l.b16 %v874
      %v1148 = vunpack.c.l.b16 %v875
      %v1149 = vunpack.c.l.b16 %v876
      %v1150 = vunpack.c.l.b16 %v877
      %v1151 = vunpack.c.l.b16 %v878
      %v1152 = vunpack.c.l.b16 %v879
      %v1153 = vunpack.c.l.b16 %v880
      %v1154 = vunpack.c.l.b16 %v881
      %v1155 = vunpack.c.l.b16 %v882
      %v1156 = vunpack.c.l.b16 %v883
      %v1157 = vunpack.c.l.b16 %v884
      %v1158 = vunpack.c.l.b16 %v885
      %v1159 = vunpack.c.l.b16 %v886
      %v1160 = vpack.c.b16 %v1145, %v1144
      %v1161 = vpack.c.b16 %v1147, %v1146
      %v1162 = vpack.c.b16 %v1149, %v1148
      %v1163 = vpack.c.b16 %v1151, %v1150
      %v1164 = vpack.c.b16 %v1153, %v1152
      %v1165 = vpack.c.b16 %v1155, %v1154
      %v1166 = vpack.c.b16 %v1157, %v1156
      %v1167 = vpack.c.b16 %v1159, %v1158
      %1176 = vmatprep.subr.bf16.mxu0 0
      %1177 = vmatpush1.bf16.msra.mxu0 %v1160
      %1178 = vmatprep.subr.bf16.mxu0 0
      %1179 = vmatpush1.bf16.msra.mxu0 %v1161
      %1180 = vmatprep.subr.bf16.mxu0 0
      %1181 = vmatpush1.bf16.msra.mxu0 %v1162
      %1182 = vmatprep.subr.bf16.mxu0 0
      %1183 = vmatpush1.bf16.msra.mxu0 %v1163
      %1184 = vmatprep.subr.bf16.mxu0 0
      %1185 = vmatpush1.bf16.msra.mxu0 %v1164
      %1186 = vmatprep.subr.bf16.mxu0 0
      %1187 = vmatpush1.bf16.msra.mxu0 %v1165
      %1188 = vmatprep.subr.bf16.mxu0 0
      %1189 = vmatpush1.bf16.msra.mxu0 %v1166
      %1190 = vmatprep.subr.bf16.mxu0 0
      %1191 = vmatpush1.bf16.msra.mxu0 %v1167
      %1192 = vmatprep.subr.bf16.mxu0 0
      %1193 = vmatpush1.bf16.msra.mxu0 0
      %1194 = vmatprep.subr.bf16.mxu0 0
      %1195 = vmatpush1.bf16.msra.mxu0 0
      %1196 = vmatprep.subr.bf16.mxu0 0
      %1197 = vmatpush1.bf16.msra.mxu0 0
      %1198 = vmatprep.subr.bf16.mxu0 0
      %1199 = vmatpush1.bf16.msra.mxu0 0
      %1200 = vmatprep.subr.bf16.mxu0 0
      %1201 = vmatpush1.bf16.msra.mxu0 0
      %1202 = vmatprep.subr.bf16.mxu0 0
      %1203 = vmatpush1.bf16.msra.mxu0 0
      %1204 = vmatprep.subr.bf16.mxu0 0
      %1205 = vmatpush1.bf16.msra.mxu0 0
      %1206 = vmatprep.subr.bf16.mxu0 0
      %1207 = vmatpush1.bf16.msra.mxu0 0
      %1208 = vmatprep.mubr.bf16.mxu0 0
      %1209 = vmatmul.mubr.bf16.gmra.mrb[0].mxu0 %v778
      %v1210 = vpop.f32.mrb[0].mxu0
      %v1211 = vadd.f32 %v1002, %v1210
      %v1212 = vpop.f32.mrb[0].mxu0
      %v1213 = vpop.f32.mrb[0].mxu0
      %v1214 = vadd.f32 %v1005, %v1213
      %v1215 = vpop.f32.mrb[0].mxu0
      %1216 = vmatprep.mubr.bf16.mxu0 0
      %1217 = vmatmul.mubr.bf16.gmra.mrb[0].mxu0 %v779
      %v1218 = vpop.f32.mrb[0].mxu0
      %v1219 = vadd.f32 %v1010, %v1218
      %v1220 = vpop.f32.mrb[0].mxu0
      %v1221 = vpop.f32.mrb[0].mxu0
      %v1222 = vadd.f32 %v1013, %v1221
      %v1223 = vpop.f32.mrb[0].mxu0
      %1224 = vmatprep.mubr.bf16.mxu0 0
      %1225 = vmatmul.mubr.bf16.gmra.mrb[0].mxu0 %v780
      %v1226 = vpop.f32.mrb[0].mxu0
      %v1227 = vadd.f32 %v1018, %v1226
      %v1228 = vpop.f32.mrb[0].mxu0
      %v1229 = vpop.f32.mrb[0].mxu0
      %v1230 = vadd.f32 %v1021, %v1229
      %v1231 = vpop.f32.mrb[0].mxu0
      %1232 = vmatprep.mubr.bf16.mxu0 0
      %1233 = vmatmul.mubr.bf16.gmra.mrb[0].mxu0 %v781
      %v1234 = vpop.f32.mrb[0].mxu0
      %v1235 = vadd.f32 %v1026, %v1234
      %v1236 = vpop.f32.mrb[0].mxu0
      %v1237 = vpop.f32.mrb[0].mxu0
      %v1238 = vadd.f32 %v1029, %v1237
      %v1239 = vpop.f32.mrb[0].mxu0
      %1240 = vmatprep.mubr.bf16.mxu0 0
      %1241 = vmatmul.mubr.bf16.gmra.mrb[0].mxu0 %v782
      %v1242 = vpop.f32.mrb[0].mxu0
      %v1243 = vadd.f32 %v1034, %v1242
      %v1244 = vpop.f32.mrb[0].mxu0
      %v1245 = vpop.f32.mrb[0].mxu0
      %v1246 = vadd.f32 %v1037, %v1245
      %v1247 = vpop.f32.mrb[0].mxu0
      %1248 = vmatprep.mubr.bf16.mxu0 0
      %1249 = vmatmul.mubr.bf16.gmra.mrb[0].mxu0 %v783
      %v1250 = vpop.f32.mrb[0].mxu0
      %v1251 = vadd.f32 %v1042, %v1250
      %v1252 = vpop.f32.mrb[0].mxu0
      %v1253 = vpop.f32.mrb[0].mxu0
      %v1254 = vadd.f32 %v1045, %v1253
      %v1255 = vpop.f32.mrb[0].mxu0
      %1256 = vmatprep.mubr.bf16.mxu0 0
      %1257 = vmatmul.mubr.bf16.gmra.mrb[0].mxu0 %v784
      %v1258 = vpop.f32.mrb[0].mxu0
      %v1259 = vadd.f32 %v1050, %v1258
      %v1260 = vpop.f32.mrb[0].mxu0
      %v1261 = vpop.f32.mrb[0].mxu0
      %v1262 = vadd.f32 %v1053, %v1261
      %v1263 = vpop.f32.mrb[0].mxu0
      %1264 = vmatprep.mubr.bf16.mxu0 0
      %1265 = vmatmul.mubr.bf16.gmra.mrb[0].mxu0 %v785
      %v1266 = vpop.f32.mrb[0].mxu0
      %v1267 = vadd.f32 %v1058, %v1266
      %v1268 = vpop.f32.mrb[0].mxu0
      %v1269 = vpop.f32.mrb[0].mxu0
      %v1270 = vadd.f32 %v1061, %v1269
      %v1271 = vpop.f32.mrb[0].mxu0
      %1272 = vmatprep.mubr.bf16.mxu0 0
      %1273 = vmatmul.mubr.bf16.gmra.mrb[0].mxu0 %v786
      %v1274 = vpop.f32.mrb[0].mxu0
      %v1275 = vadd.f32 %v1066, %v1274
      %v1276 = vpop.f32.mrb[0].mxu0
      %v1277 = vpop.f32.mrb[0].mxu0
      %v1278 = vadd.f32 %v1069, %v1277
      %v1279 = vpop.f32.mrb[0].mxu0
      %1280 = vmatprep.mubr.bf16.mxu0 0
      %1281 = vmatmul.mubr.bf16.gmra.mrb[0].mxu0 %v787
      %v1282 = vpop.f32.mrb[0].mxu0
      %v1283 = vadd.f32 %v1074, %v1282
      %v1284 = vpop.f32.mrb[0].mxu0
      %v1285 = vpop.f32.mrb[0].mxu0
      %v1286 = vadd.f32 %v1077, %v1285
      %v1287 = vpop.f32.mrb[0].mxu0
      %1288 = vmatprep.mubr.bf16.mxu0 0
      %1289 = vmatmul.mubr.bf16.gmra.mrb[0].mxu0 %v788
      %v1290 = vpop.f32.mrb[0].mxu0
      %v1291 = vadd.f32 %v1082, %v1290
      %v1292 = vpop.f32.mrb[0].mxu0
      %v1293 = vpop.f32.mrb[0].mxu0
      %v1294 = vadd.f32 %v1085, %v1293
      %v1295 = vpop.f32.mrb[0].mxu0
      %1296 = vmatprep.mubr.bf16.mxu0 0
      %1297 = vmatmul.mubr.bf16.gmra.mrb[0].mxu0 %v789
      %v1298 = vpop.f32.mrb[0].mxu0
      %v1299 = vadd.f32 %v1090, %v1298
      %v1300 = vpop.f32.mrb[0].mxu0
      %v1301 = vpop.f32.mrb[0].mxu0
      %v1302 = vadd.f32 %v1093, %v1301
      %v1303 = vpop.f32.mrb[0].mxu0
      %1304 = vmatprep.mubr.bf16.mxu0 0
      %1305 = vmatmul.mubr.bf16.gmra.mrb[0].mxu0 %v790
      %v1306 = vpop.f32.mrb[0].mxu0
      %v1307 = vadd.f32 %v1098, %v1306
      %v1308 = vpop.f32.mrb[0].mxu0
      %v1309 = vpop.f32.mrb[0].mxu0
      %v1310 = vadd.f32 %v1101, %v1309
      %v1311 = vpop.f32.mrb[0].mxu0
      %1312 = vmatprep.mubr.bf16.mxu0 0
      %1313 = vmatmul.mubr.bf16.gmra.mrb[0].mxu0 %v791
      %v1314 = vpop.f32.mrb[0].mxu0
      %v1315 = vadd.f32 %v1106, %v1314
      %v1316 = vpop.f32.mrb[0].mxu0
      %v1317 = vpop.f32.mrb[0].mxu0
      %v1318 = vadd.f32 %v1109, %v1317
      %v1319 = vpop.f32.mrb[0].mxu0
      %1320 = vmatprep.mubr.bf16.mxu0 0
      %1321 = vmatmul.mubr.bf16.gmra.mrb[0].mxu0 %v792
      %v1322 = vpop.f32.mrb[0].mxu0
      %v1323 = vadd.f32 %v1114, %v1322
      %v1324 = vpop.f32.mrb[0].mxu0
      %v1325 = vpop.f32.mrb[0].mxu0
      %v1326 = vadd.f32 %v1117, %v1325
      %v1327 = vpop.f32.mrb[0].mxu0
      %1328 = vmatprep.mubr.bf16.mxu0 0
      %1329 = vmatmul.mubr.bf16.gmra.mrb[0].mxu0 %v793
      %v1330 = vpop.f32.mrb[0].mxu0
      %v1331 = vadd.f32 %v1122, %v1330
      %v1332 = vpop.f32.mrb[0].mxu0
      %v1333 = vpop.f32.mrb[0].mxu0
      %v1334 = vadd.f32 %v1125, %v1333
      %v1335 = vpop.f32.mrb[0].mxu0
      %1336 = vdwg.mxu0
      %v1337 = vld [vmem:[%s3 + $0x80] sm:$0xf]
      %v1338 = vld [vmem:[%s3 + $0x84] sm:$0xf]
      %v1339 = vld [vmem:[%s3 + $0x88] sm:$0xf]
      %v1340 = vld [vmem:[%s3 + $0x8c] sm:$0xf]
      %v1341 = vld [vmem:[%s3 + $0x90] sm:$0xf]
      %v1342 = vld [vmem:[%s3 + $0x94] sm:$0xf]
      %v1343 = vld [vmem:[%s3 + $0x98] sm:$0xf]
      %v1344 = vld [vmem:[%s3 + $0x9c] sm:$0xf]
      %v1345 = vld [vmem:[%s3 + $0xa0] sm:$0xf]
      %v1346 = vld [vmem:[%s3 + $0xa4] sm:$0xf]
      %v1347 = vld [vmem:[%s3 + $0xa8] sm:$0xf]
      %v1348 = vld [vmem:[%s3 + $0xac] sm:$0xf]
      %v1349 = vld [vmem:[%s3 + $0xb0] sm:$0xf]
      %v1350 = vld [vmem:[%s3 + $0xb4] sm:$0xf]
      %v1351 = vld [vmem:[%s3 + $0xb8] sm:$0xf]
      %v1352 = vld [vmem:[%s3 + $0xbc] sm:$0xf]
      %v1369 = vunpack.c.l.b16 %v1337
      %v1370 = vunpack.c.l.b16 %v1338
      %v1371 = vunpack.c.l.b16 %v1339
      %v1372 = vunpack.c.l.b16 %v1340
      %v1373 = vunpack.c.l.b16 %v1341
      %v1374 = vunpack.c.l.b16 %v1342
      %v1375 = vunpack.c.l.b16 %v1343
      %v1376 = vunpack.c.l.b16 %v1344
      %v1377 = vunpack.c.l.b16 %v1345
      %v1378 = vunpack.c.l.b16 %v1346
      %v1379 = vunpack.c.l.b16 %v1347
      %v1380 = vunpack.c.l.b16 %v1348
      %v1381 = vunpack.c.l.b16 %v1349
      %v1382 = vunpack.c.l.b16 %v1350
      %v1383 = vunpack.c.l.b16 %v1351
      %v1384 = vunpack.c.l.b16 %v1352
      %v1385 = vpack.c.b16 %v1370, %v1369
      %v1386 = vpack.c.b16 %v1372, %v1371
      %v1387 = vpack.c.b16 %v1374, %v1373
      %v1388 = vpack.c.b16 %v1376, %v1375
      %v1389 = vpack.c.b16 %v1378, %v1377
      %v1390 = vpack.c.b16 %v1380, %v1379
      %v1391 = vpack.c.b16 %v1382, %v1381
      %v1392 = vpack.c.b16 %v1384, %v1383
      %1401 = vmatprep.subr.bf16.mxu0 0
      %1402 = vmatpush1.bf16.msra.mxu0 %v1385
      %1403 = vmatprep.subr.bf16.mxu0 0
      %1404 = vmatpush1.bf16.msra.mxu0 %v1386
      %1405 = vmatprep.subr.bf16.mxu0 0
      %1406 = vmatpush1.bf16.msra.mxu0 %v1387
      %1407 = vmatprep.subr.bf16.mxu0 0
      %1408 = vmatpush1.bf16.msra.mxu0 %v1388
      %1409 = vmatprep.subr.bf16.mxu0 0
      %1410 = vmatpush1.bf16.msra.mxu0 %v1389
      %1411 = vmatprep.subr.bf16.mxu0 0
      %1412 = vmatpush1.bf16.msra.mxu0 %v1390
      %1413 = vmatprep.subr.bf16.mxu0 0
      %1414 = vmatpush1.bf16.msra.mxu0 %v1391
      %1415 = vmatprep.subr.bf16.mxu0 0
      %1416 = vmatpush1.bf16.msra.mxu0 %v1392
      %1417 = vmatprep.subr.bf16.mxu0 0
      %1418 = vmatpush1.bf16.msra.mxu0 0
      %1419 = vmatprep.subr.bf16.mxu0 0
      %1420 = vmatpush1.bf16.msra.mxu0 0
      %1421 = vmatprep.subr.bf16.mxu0 0
      %1422 = vmatpush1.bf16.msra.mxu0 0
      %1423 = vmatprep.subr.bf16.mxu0 0
      %1424 = vmatpush1.bf16.msra.mxu0 0
      %1425 = vmatprep.subr.bf16.mxu0 0
      %1426 = vmatpush1.bf16.msra.mxu0 0
      %1427 = vmatprep.subr.bf16.mxu0 0
      %1428 = vmatpush1.bf16.msra.mxu0 0
      %1429 = vmatprep.subr.bf16.mxu0 0
      %1430 = vmatpush1.bf16.msra.mxu0 0
      %1431 = vmatprep.subr.bf16.mxu0 0
      %1432 = vmatpush1.bf16.msra.mxu0 0
      %1433 = vmatprep.mubr.bf16.mxu0 0
      %1434 = vmatmul.mubr.bf16.gmra.mrb[0].mxu0 %v853
      %v1435 = vpop.f32.mrb[0].mxu0
      %v1436 = vadd.f32 0.0, %v1435
      %v1437 = vpop.f32.mrb[0].mxu0
      %v1438 = vpop.f32.mrb[0].mxu0
      %v1439 = vadd.f32 0.0, %v1438
      %v1440 = vpop.f32.mrb[0].mxu0
      %1441 = vmatprep.mubr.bf16.mxu0 0
      %1442 = vmatmul.mubr.bf16.gmra.mrb[0].mxu0 %v854
      %v1443 = vpop.f32.mrb[0].mxu0
      %v1444 = vadd.f32 0.0, %v1443
      %v1445 = vpop.f32.mrb[0].mxu0
      %v1446 = vpop.f32.mrb[0].mxu0
      %v1447 = vadd.f32 0.0, %v1446
      %v1448 = vpop.f32.mrb[0].mxu0
      %1449 = vmatprep.mubr.bf16.mxu0 0
      %1450 = vmatmul.mubr.bf16.gmra.mrb[0].mxu0 %v855
      %v1451 = vpop.f32.mrb[0].mxu0
      %v1452 = vadd.f32 0.0, %v1451
      %v1453 = vpop.f32.mrb[0].mxu0
      %v1454 = vpop.f32.mrb[0].mxu0
      %v1455 = vadd.f32 0.0, %v1454
      %v1456 = vpop.f32.mrb[0].mxu0
      %1457 = vmatprep.mubr.bf16.mxu0 0
      %1458 = vmatmul.mubr.bf16.gmra.mrb[0].mxu0 %v856
      %v1459 = vpop.f32.mrb[0].mxu0
      %v1460 = vadd.f32 0.0, %v1459
      %v1461 = vpop.f32.mrb[0].mxu0
      %v1462 = vpop.f32.mrb[0].mxu0
      %v1463 = vadd.f32 0.0, %v1462
      %v1464 = vpop.f32.mrb[0].mxu0
      %1465 = vmatprep.mubr.bf16.mxu0 0
      %1466 = vmatmul.mubr.bf16.gmra.mrb[0].mxu0 %v857
      %v1467 = vpop.f32.mrb[0].mxu0
      %v1468 = vadd.f32 0.0, %v1467
      %v1469 = vpop.f32.mrb[0].mxu0
      %v1470 = vpop.f32.mrb[0].mxu0
      %v1471 = vadd.f32 0.0, %v1470
      %v1472 = vpop.f32.mrb[0].mxu0
      %1473 = vmatprep.mubr.bf16.mxu0 0
      %1474 = vmatmul.mubr.bf16.gmra.mrb[0].mxu0 %v858
      %v1475 = vpop.f32.mrb[0].mxu0
      %v1476 = vadd.f32 0.0, %v1475
      %v1477 = vpop.f32.mrb[0].mxu0
      %v1478 = vpop.f32.mrb[0].mxu0
      %v1479 = vadd.f32 0.0, %v1478
      %v1480 = vpop.f32.mrb[0].mxu0
      %1481 = vmatprep.mubr.bf16.mxu0 0
      %1482 = vmatmul.mubr.bf16.gmra.mrb[0].mxu0 %v859
      %v1483 = vpop.f32.mrb[0].mxu0
      %v1484 = vadd.f32 0.0, %v1483
      %v1485 = vpop.f32.mrb[0].mxu0
      %v1486 = vpop.f32.mrb[0].mxu0
      %v1487 = vadd.f32 0.0, %v1486
      %v1488 = vpop.f32.mrb[0].mxu0
      %1489 = vmatprep.mubr.bf16.mxu0 0
      %1490 = vmatmul.mubr.bf16.gmra.mrb[0].mxu0 %v860
      %v1491 = vpop.f32.mrb[0].mxu0
      %v1492 = vadd.f32 0.0, %v1491
      %v1493 = vpop.f32.mrb[0].mxu0
      %v1494 = vpop.f32.mrb[0].mxu0
      %v1495 = vadd.f32 0.0, %v1494
      %v1496 = vpop.f32.mrb[0].mxu0
      %1497 = vmatprep.mubr.bf16.mxu0 0
      %1498 = vmatmul.mubr.bf16.gmra.mrb[0].mxu0 %v861
      %v1499 = vpop.f32.mrb[0].mxu0
      %v1500 = vadd.f32 0.0, %v1499
      %v1501 = vpop.f32.mrb[0].mxu0
      %v1502 = vpop.f32.mrb[0].mxu0
      %v1503 = vadd.f32 0.0, %v1502
      %v1504 = vpop.f32.mrb[0].mxu0
      %1505 = vmatprep.mubr.bf16.mxu0 0
      %1506 = vmatmul.mubr.bf16.gmra.mrb[0].mxu0 %v862
      %v1507 = vpop.f32.mrb[0].mxu0
      %v1508 = vadd.f32 0.0, %v1507
      %v1509 = vpop.f32.mrb[0].mxu0
      %v1510 = vpop.f32.mrb[0].mxu0
      %v1511 = vadd.f32 0.0, %v1510
      %v1512 = vpop.f32.mrb[0].mxu0
      %1513 = vmatprep.mubr.bf16.mxu0 0
      %1514 = vmatmul.mubr.bf16.gmra.mrb[0].mxu0 %v863
      %v1515 = vpop.f32.mrb[0].mxu0
      %v1516 = vadd.f32 0.0, %v1515
      %v1517 = vpop.f32.mrb[0].mxu0
      %v1518 = vpop.f32.mrb[0].mxu0
      %v1519 = vadd.f32 0.0, %v1518
      %v1520 = vpop.f32.mrb[0].mxu0
      %1521 = vmatprep.mubr.bf16.mxu0 0
      %1522 = vmatmul.mubr.bf16.gmra.mrb[0].mxu0 %v864
      %v1523 = vpop.f32.mrb[0].mxu0
      %v1524 = vadd.f32 0.0, %v1523
      %v1525 = vpop.f32.mrb[0].mxu0
      %v1526 = vpop.f32.mrb[0].mxu0
      %v1527 = vadd.f32 0.0, %v1526
      %v1528 = vpop.f32.mrb[0].mxu0
      %1529 = vmatprep.mubr.bf16.mxu0 0
      %1530 = vmatmul.mubr.bf16.gmra.mrb[0].mxu0 %v865
      %v1531 = vpop.f32.mrb[0].mxu0
      %v1532 = vadd.f32 0.0, %v1531
      %v1533 = vpop.f32.mrb[0].mxu0
      %v1534 = vpop.f32.mrb[0].mxu0
      %v1535 = vadd.f32 0.0, %v1534
      %v1536 = vpop.f32.mrb[0].mxu0
      %1537 = vmatprep.mubr.bf16.mxu0 0
      %1538 = vmatmul.mubr.bf16.gmra.mrb[0].mxu0 %v866
      %v1539 = vpop.f32.mrb[0].mxu0
      %v1540 = vadd.f32 0.0, %v1539
      %v1541 = vpop.f32.mrb[0].mxu0
      %v1542 = vpop.f32.mrb[0].mxu0
      %v1543 = vadd.f32 0.0, %v1542
      %v1544 = vpop.f32.mrb[0].mxu0
      %1545 = vmatprep.mubr.bf16.mxu0 0
      %1546 = vmatmul.mubr.bf16.gmra.mrb[0].mxu0 %v867
      %v1547 = vpop.f32.mrb[0].mxu0
      %v1548 = vadd.f32 0.0, %v1547
      %v1549 = vpop.f32.mrb[0].mxu0
      %v1550 = vpop.f32.mrb[0].mxu0
      %v1551 = vadd.f32 0.0, %v1550
      %v1552 = vpop.f32.mrb[0].mxu0
      %1553 = vmatprep.mubr.bf16.mxu0 0
      %1554 = vmatmul.mubr.bf16.gmra.mrb[0].mxu0 %v868
      %v1555 = vpop.f32.mrb[0].mxu0
      %v1556 = vadd.f32 0.0, %v1555
      %v1557 = vpop.f32.mrb[0].mxu0
      %v1558 = vpop.f32.mrb[0].mxu0
      %v1559 = vadd.f32 0.0, %v1558
      %v1560 = vpop.f32.mrb[0].mxu0
      %1561 = vdwg.mxu0
      %v1562 = vadd.f32 %v1211, %v1436
      %v1563 = vadd.f32 %v1214, %v1439
      %v1564 = vadd.f32 %v1219, %v1444
      %v1565 = vadd.f32 %v1222, %v1447
      %v1566 = vadd.f32 %v1227, %v1452
      %v1567 = vadd.f32 %v1230, %v1455
      %v1568 = vadd.f32 %v1235, %v1460
      %v1569 = vadd.f32 %v1238, %v1463
      %v1570 = vadd.f32 %v1243, %v1468
      %v1571 = vadd.f32 %v1246, %v1471
      %v1572 = vadd.f32 %v1251, %v1476
      %v1573 = vadd.f32 %v1254, %v1479
      %v1574 = vadd.f32 %v1259, %v1484
      %v1575 = vadd.f32 %v1262, %v1487
      %v1576 = vadd.f32 %v1267, %v1492
      %v1577 = vadd.f32 %v1270, %v1495
      %v1578 = vadd.f32 %v1275, %v1500
      %v1579 = vadd.f32 %v1278, %v1503
      %v1580 = vadd.f32 %v1283, %v1508
      %v1581 = vadd.f32 %v1286, %v1511
      %v1582 = vadd.f32 %v1291, %v1516
      %v1583 = vadd.f32 %v1294, %v1519
      %v1584 = vadd.f32 %v1299, %v1524
      %v1585 = vadd.f32 %v1302, %v1527
      %v1586 = vadd.f32 %v1307, %v1532
      %v1587 = vadd.f32 %v1310, %v1535
      %v1588 = vadd.f32 %v1315, %v1540
      %v1589 = vadd.f32 %v1318, %v1543
      %v1590 = vadd.f32 %v1323, %v1548
      %v1591 = vadd.f32 %v1326, %v1551
      %v1592 = vadd.f32 %v1331, %v1556
      %v1593 = vadd.f32 %v1334, %v1559
      %v1594 = vld [vmem:[%s3 + $0xc0] sm:$0xf]
      %v1595 = vld [vmem:[%s3 + $0xc4] sm:$0xf]
      %v1596 = vld [vmem:[%s3 + $0xc8] sm:$0xf]
      %v1597 = vld [vmem:[%s3 + $0xcc] sm:$0xf]
      %v1598 = vld [vmem:[%s3 + $0xd0] sm:$0xf]
      %v1599 = vld [vmem:[%s3 + $0xd4] sm:$0xf]
      %v1600 = vld [vmem:[%s3 + $0xd8] sm:$0xf]
      %v1601 = vld [vmem:[%s3 + $0xdc] sm:$0xf]
      %v1602 = vld [vmem:[%s3 + $0xe0] sm:$0xf]
      %v1603 = vld [vmem:[%s3 + $0xe4] sm:$0xf]
      %v1604 = vld [vmem:[%s3 + $0xe8] sm:$0xf]
      %v1605 = vld [vmem:[%s3 + $0xec] sm:$0xf]
      %v1606 = vld [vmem:[%s3 + $0xf0] sm:$0xf]
      %v1607 = vld [vmem:[%s3 + $0xf4] sm:$0xf]
      %v1608 = vld [vmem:[%s3 + $0xf8] sm:$0xf]
      %v1609 = vld [vmem:[%s3 + $0xfc] sm:$0xf]
      %v1626 = vunpack.c.l.b16 %v1594
      %v1627 = vunpack.c.l.b16 %v1595
      %v1628 = vunpack.c.l.b16 %v1596
      %v1629 = vunpack.c.l.b16 %v1597
      %v1630 = vunpack.c.l.b16 %v1598
      %v1631 = vunpack.c.l.b16 %v1599
      %v1632 = vunpack.c.l.b16 %v1600
      %v1633 = vunpack.c.l.b16 %v1601
      %v1634 = vunpack.c.l.b16 %v1602
      %v1635 = vunpack.c.l.b16 %v1603
      %v1636 = vunpack.c.l.b16 %v1604
      %v1637 = vunpack.c.l.b16 %v1605
      %v1638 = vunpack.c.l.b16 %v1606
      %v1639 = vunpack.c.l.b16 %v1607
      %v1640 = vunpack.c.l.b16 %v1608
      %v1641 = vunpack.c.l.b16 %v1609
      %v1642 = vpack.c.b16 %v1627, %v1626
      %v1643 = vpack.c.b16 %v1629, %v1628
      %v1644 = vpack.c.b16 %v1631, %v1630
      %v1645 = vpack.c.b16 %v1633, %v1632
      %v1646 = vpack.c.b16 %v1635, %v1634
      %v1647 = vpack.c.b16 %v1637, %v1636
      %v1648 = vpack.c.b16 %v1639, %v1638
      %v1649 = vpack.c.b16 %v1641, %v1640
      %1658 = vmatprep.subr.bf16.mxu0 0
      %1659 = vmatpush1.bf16.msra.mxu0 %v1642
      %1660 = vmatprep.subr.bf16.mxu0 0
      %1661 = vmatpush1.bf16.msra.mxu0 %v1643
      %1662 = vmatprep.subr.bf16.mxu0 0
      %1663 = vmatpush1.bf16.msra.mxu0 %v1644
      %1664 = vmatprep.subr.bf16.mxu0 0
      %1665 = vmatpush1.bf16.msra.mxu0 %v1645
      %1666 = vmatprep.subr.bf16.mxu0 0
      %1667 = vmatpush1.bf16.msra.mxu0 %v1646
      %1668 = vmatprep.subr.bf16.mxu0 0
      %1669 = vmatpush1.bf16.msra.mxu0 %v1647
      %1670 = vmatprep.subr.bf16.mxu0 0
      %1671 = vmatpush1.bf16.msra.mxu0 %v1648
      %1672 = vmatprep.subr.bf16.mxu0 0
      %1673 = vmatpush1.bf16.msra.mxu0 %v1649
      %1674 = vmatprep.subr.bf16.mxu0 0
      %1675 = vmatpush1.bf16.msra.mxu0 0
      %1676 = vmatprep.subr.bf16.mxu0 0
      %1677 = vmatpush1.bf16.msra.mxu0 0
      %1678 = vmatprep.subr.bf16.mxu0 0
      %1679 = vmatpush1.bf16.msra.mxu0 0
      %1680 = vmatprep.subr.bf16.mxu0 0
      %1681 = vmatpush1.bf16.msra.mxu0 0
      %1682 = vmatprep.subr.bf16.mxu0 0
      %1683 = vmatpush1.bf16.msra.mxu0 0
      %1684 = vmatprep.subr.bf16.mxu0 0
      %1685 = vmatpush1.bf16.msra.mxu0 0
      %1686 = vmatprep.subr.bf16.mxu0 0
      %1687 = vmatpush1.bf16.msra.mxu0 0
      %1688 = vmatprep.subr.bf16.mxu0 0
      %1689 = vmatpush1.bf16.msra.mxu0 0
      %1690 = vmatprep.mubr.bf16.mxu0 0
      %1691 = vmatmul.mubr.bf16.gmra.mrb[0].mxu0 %v779
      %v1692 = vpop.f32.mrb[0].mxu0
      %v1693 = vadd.f32 0.0, %v1692
      %v1694 = vpop.f32.mrb[0].mxu0
      %v1695 = vpop.f32.mrb[0].mxu0
      %v1696 = vadd.f32 0.0, %v1695
      %v1697 = vpop.f32.mrb[0].mxu0
      %1698 = vmatprep.mubr.bf16.mxu0 0
      %1699 = vmatmul.mubr.bf16.gmra.mrb[0].mxu0 %v780
      %v1700 = vpop.f32.mrb[0].mxu0
      %v1701 = vadd.f32 0.0, %v1700
      %v1702 = vpop.f32.mrb[0].mxu0
      %v1703 = vpop.f32.mrb[0].mxu0
      %v1704 = vadd.f32 0.0, %v1703
      %v1705 = vpop.f32.mrb[0].mxu0
      %1706 = vmatprep.mubr.bf16.mxu0 0
      %1707 = vmatmul.mubr.bf16.gmra.mrb[0].mxu0 %v781
      %v1708 = vpop.f32.mrb[0].mxu0
      %v1709 = vadd.f32 0.0, %v1708
      %v1710 = vpop.f32.mrb[0].mxu0
      %v1711 = vpop.f32.mrb[0].mxu0
      %v1712 = vadd.f32 0.0, %v1711
      %v1713 = vpop.f32.mrb[0].mxu0
      %1714 = vmatprep.mubr.bf16.mxu0 0
      %1715 = vmatmul.mubr.bf16.gmra.mrb[0].mxu0 %v782
      %v1716 = vpop.f32.mrb[0].mxu0
      %v1717 = vadd.f32 0.0, %v1716
      %v1718 = vpop.f32.mrb[0].mxu0
      %v1719 = vpop.f32.mrb[0].mxu0
      %v1720 = vadd.f32 0.0, %v1719
      %v1721 = vpop.f32.mrb[0].mxu0
      %1722 = vmatprep.mubr.bf16.mxu0 0
      %1723 = vmatmul.mubr.bf16.gmra.mrb[0].mxu0 %v783
      %v1724 = vpop.f32.mrb[0].mxu0
      %v1725 = vadd.f32 0.0, %v1724
      %v1726 = vpop.f32.mrb[0].mxu0
      %v1727 = vpop.f32.mrb[0].mxu0
      %v1728 = vadd.f32 0.0, %v1727
      %v1729 = vpop.f32.mrb[0].mxu0
      %1730 = vmatprep.mubr.bf16.mxu0 0
      %1731 = vmatmul.mubr.bf16.gmra.mrb[0].mxu0 %v784
      %v1732 = vpop.f32.mrb[0].mxu0
      %v1733 = vadd.f32 0.0, %v1732
      %v1734 = vpop.f32.mrb[0].mxu0
      %v1735 = vpop.f32.mrb[0].mxu0
      %v1736 = vadd.f32 0.0, %v1735
      %v1737 = vpop.f32.mrb[0].mxu0
      %1738 = vmatprep.mubr.bf16.mxu0 0
      %1739 = vmatmul.mubr.bf16.gmra.mrb[0].mxu0 %v785
      %v1740 = vpop.f32.mrb[0].mxu0
      %v1741 = vadd.f32 0.0, %v1740
      %v1742 = vpop.f32.mrb[0].mxu0
      %v1743 = vpop.f32.mrb[0].mxu0
      %v1744 = vadd.f32 0.0, %v1743
      %v1745 = vpop.f32.mrb[0].mxu0
      %1746 = vmatprep.mubr.bf16.mxu0 0
      %1747 = vmatmul.mubr.bf16.gmra.mrb[0].mxu0 %v786
      %v1748 = vpop.f32.mrb[0].mxu0
      %v1749 = vadd.f32 0.0, %v1748
      %v1750 = vpop.f32.mrb[0].mxu0
      %v1751 = vpop.f32.mrb[0].mxu0
      %v1752 = vadd.f32 0.0, %v1751
      %v1753 = vpop.f32.mrb[0].mxu0
      %1754 = vmatprep.mubr.bf16.mxu0 0
      %1755 = vmatmul.mubr.bf16.gmra.mrb[0].mxu0 %v787
      %v1756 = vpop.f32.mrb[0].mxu0
      %v1757 = vadd.f32 0.0, %v1756
      %v1758 = vpop.f32.mrb[0].mxu0
      %v1759 = vpop.f32.mrb[0].mxu0
      %v1760 = vadd.f32 0.0, %v1759
      %v1761 = vpop.f32.mrb[0].mxu0
      %1762 = vmatprep.mubr.bf16.mxu0 0
      %1763 = vmatmul.mubr.bf16.gmra.mrb[0].mxu0 %v788
      %v1764 = vpop.f32.mrb[0].mxu0
      %v1765 = vadd.f32 0.0, %v1764
      %v1766 = vpop.f32.mrb[0].mxu0
      %v1767 = vpop.f32.mrb[0].mxu0
      %v1768 = vadd.f32 0.0, %v1767
      %v1769 = vpop.f32.mrb[0].mxu0
      %1770 = vmatprep.mubr.bf16.mxu0 0
      %1771 = vmatmul.mubr.bf16.gmra.mrb[0].mxu0 %v789
      %v1772 = vpop.f32.mrb[0].mxu0
      %v1773 = vadd.f32 0.0, %v1772
      %v1774 = vpop.f32.mrb[0].mxu0
      %v1775 = vpop.f32.mrb[0].mxu0
      %v1776 = vadd.f32 0.0, %v1775
      %v1777 = vpop.f32.mrb[0].mxu0
      %1778 = vmatprep.mubr.bf16.mxu0 0
      %1779 = vmatmul.mubr.bf16.gmra.mrb[0].mxu0 %v790
      %v1780 = vpop.f32.mrb[0].mxu0
      %v1781 = vadd.f32 0.0, %v1780
      %v1782 = vpop.f32.mrb[0].mxu0
      %v1783 = vpop.f32.mrb[0].mxu0
      %v1784 = vadd.f32 0.0, %v1783
      %v1785 = vpop.f32.mrb[0].mxu0
      %1786 = vmatprep.mubr.bf16.mxu0 0
      %1787 = vmatmul.mubr.bf16.gmra.mrb[0].mxu0 %v791
      %v1788 = vpop.f32.mrb[0].mxu0
      %v1789 = vadd.f32 0.0, %v1788
      %v1790 = vpop.f32.mrb[0].mxu0
      %v1791 = vpop.f32.mrb[0].mxu0
      %v1792 = vadd.f32 0.0, %v1791
      %v1793 = vpop.f32.mrb[0].mxu0
      %1794 = vmatprep.mubr.bf16.mxu0 0
      %1795 = vmatmul.mubr.bf16.gmra.mrb[0].mxu0 %v792
      %v1796 = vpop.f32.mrb[0].mxu0
      %v1797 = vadd.f32 0.0, %v1796
      %v1798 = vpop.f32.mrb[0].mxu0
      %v1799 = vpop.f32.mrb[0].mxu0
      %v1800 = vadd.f32 0.0, %v1799
      %v1801 = vpop.f32.mrb[0].mxu0
      %1802 = vmatprep.mubr.bf16.mxu0 0
      %1803 = vmatmul.mubr.bf16.gmra.mrb[0].mxu0 %v793
      %v1804 = vpop.f32.mrb[0].mxu0
      %v1805 = vadd.f32 0.0, %v1804
      %v1806 = vpop.f32.mrb[0].mxu0
      %v1807 = vpop.f32.mrb[0].mxu0
      %v1808 = vadd.f32 0.0, %v1807
      %v1809 = vpop.f32.mrb[0].mxu0
      %1810 = vmatprep.mubr.bf16.mxu0 0
      %1811 = vmatmul.mubr.bf16.gmra.mrb[0].mxu0 %v794
      %v1812 = vpop.f32.mrb[0].mxu0
      %v1813 = vadd.f32 0.0, %v1812
      %v1814 = vpop.f32.mrb[0].mxu0
      %v1815 = vpop.f32.mrb[0].mxu0
      %v1816 = vadd.f32 0.0, %v1815
      %v1817 = vpop.f32.mrb[0].mxu0
      %1818 = vdwg.mxu0
      %v1819 = vadd.f32 %v1562, %v1693
      %v1820 = vadd.f32 %v1563, %v1696
      %v1821 = vadd.f32 %v1564, %v1701
      %v1822 = vadd.f32 %v1565, %v1704
      %v1823 = vadd.f32 %v1566, %v1709
      %v1824 = vadd.f32 %v1567, %v1712
      %v1825 = vadd.f32 %v1568, %v1717
      %v1826 = vadd.f32 %v1569, %v1720
      %v1827 = vadd.f32 %v1570, %v1725
      %v1828 = vadd.f32 %v1571, %v1728
      %v1829 = vadd.f32 %v1572, %v1733
      %v1830 = vadd.f32 %v1573, %v1736
      %v1831 = vadd.f32 %v1574, %v1741
      %v1832 = vadd.f32 %v1575, %v1744
      %v1833 = vadd.f32 %v1576, %v1749
      %v1834 = vadd.f32 %v1577, %v1752
      %v1835 = vadd.f32 %v1578, %v1757
      %v1836 = vadd.f32 %v1579, %v1760
      %v1837 = vadd.f32 %v1580, %v1765
      %v1838 = vadd.f32 %v1581, %v1768
      %v1839 = vadd.f32 %v1582, %v1773
      %v1840 = vadd.f32 %v1583, %v1776
      %v1841 = vadd.f32 %v1584, %v1781
      %v1842 = vadd.f32 %v1585, %v1784
      %v1843 = vadd.f32 %v1586, %v1789
      %v1844 = vadd.f32 %v1587, %v1792
      %v1845 = vadd.f32 %v1588, %v1797
      %v1846 = vadd.f32 %v1589, %v1800
      %v1847 = vadd.f32 %v1590, %v1805
      %v1848 = vadd.f32 %v1591, %v1808
      %v1849 = vadd.f32 %v1592, %v1813
      %v1850 = vadd.f32 %v1593, %v1816
      %v1851 = vld [vmem:[%s3 + $0x100] sm:$0xf]
      %v1852 = vld [vmem:[%s3 + $0x104] sm:$0xf]
      %v1853 = vld [vmem:[%s3 + $0x108] sm:$0xf]
      %v1854 = vld [vmem:[%s3 + $0x10c] sm:$0xf]
      %v1855 = vld [vmem:[%s3 + $0x110] sm:$0xf]
      %v1856 = vld [vmem:[%s3 + $0x114] sm:$0xf]
      %v1857 = vld [vmem:[%s3 + $0x118] sm:$0xf]
      %v1858 = vld [vmem:[%s3 + $0x11c] sm:$0xf]
      %v1859 = vld [vmem:[%s3 + $0x120] sm:$0xf]
      %v1860 = vld [vmem:[%s3 + $0x124] sm:$0xf]
      %v1861 = vld [vmem:[%s3 + $0x128] sm:$0xf]
      %v1862 = vld [vmem:[%s3 + $0x12c] sm:$0xf]
      %v1863 = vld [vmem:[%s3 + $0x130] sm:$0xf]
      %v1864 = vld [vmem:[%s3 + $0x134] sm:$0xf]
      %v1865 = vld [vmem:[%s3 + $0x138] sm:$0xf]
      %v1866 = vld [vmem:[%s3 + $0x13c] sm:$0xf]
      %v1884 = vunpack.c.l.b16 %v1851
      %v1885 = vunpack.c.l.b16 %v1852
      %v1886 = vunpack.c.l.b16 %v1853
      %v1887 = vunpack.c.l.b16 %v1854
      %v1888 = vunpack.c.l.b16 %v1855
      %v1889 = vunpack.c.l.b16 %v1856
      %v1890 = vunpack.c.l.b16 %v1857
      %v1891 = vunpack.c.l.b16 %v1858
      %v1892 = vunpack.c.l.b16 %v1859
      %v1893 = vunpack.c.l.b16 %v1860
      %v1894 = vunpack.c.l.b16 %v1861
      %v1895 = vunpack.c.l.b16 %v1862
      %v1896 = vunpack.c.l.b16 %v1863
      %v1897 = vunpack.c.l.b16 %v1864
      %v1898 = vunpack.c.l.b16 %v1865
      %v1899 = vunpack.c.l.b16 %v1866
      %v1900 = vpack.c.b16 %v1885, %v1884
      %v1901 = vpack.c.b16 %v1887, %v1886
      %v1902 = vpack.c.b16 %v1889, %v1888
      %v1903 = vpack.c.b16 %v1891, %v1890
      %v1904 = vpack.c.b16 %v1893, %v1892
      %v1905 = vpack.c.b16 %v1895, %v1894
      %v1906 = vpack.c.b16 %v1897, %v1896
      %v1907 = vpack.c.b16 %v1899, %v1898
      %1916 = vmatprep.subr.bf16.mxu0 0
      %1917 = vmatpush1.bf16.msra.mxu0 %v1900
      %1918 = vmatprep.subr.bf16.mxu0 0
      %1919 = vmatpush1.bf16.msra.mxu0 %v1901
      %1920 = vmatprep.subr.bf16.mxu0 0
      %1921 = vmatpush1.bf16.msra.mxu0 %v1902
      %1922 = vmatprep.subr.bf16.mxu0 0
      %1923 = vmatpush1.bf16.msra.mxu0 %v1903
      %1924 = vmatprep.subr.bf16.mxu0 0
      %1925 = vmatpush1.bf16.msra.mxu0 %v1904
      %1926 = vmatprep.subr.bf16.mxu0 0
      %1927 = vmatpush1.bf16.msra.mxu0 %v1905
      %1928 = vmatprep.subr.bf16.mxu0 0
      %1929 = vmatpush1.bf16.msra.mxu0 %v1906
      %1930 = vmatprep.subr.bf16.mxu0 0
      %1931 = vmatpush1.bf16.msra.mxu0 %v1907
      %1932 = vmatprep.subr.bf16.mxu0 0
      %1933 = vmatpush1.bf16.msra.mxu0 0
      %1934 = vmatprep.subr.bf16.mxu0 0
      %1935 = vmatpush1.bf16.msra.mxu0 0
      %1936 = vmatprep.subr.bf16.mxu0 0
      %1937 = vmatpush1.bf16.msra.mxu0 0
      %1938 = vmatprep.subr.bf16.mxu0 0
      %1939 = vmatpush1.bf16.msra.mxu0 0
      %1940 = vmatprep.subr.bf16.mxu0 0
      %1941 = vmatpush1.bf16.msra.mxu0 0
      %1942 = vmatprep.subr.bf16.mxu0 0
      %1943 = vmatpush1.bf16.msra.mxu0 0
      %1944 = vmatprep.subr.bf16.mxu0 0
      %1945 = vmatpush1.bf16.msra.mxu0 0
      %1946 = vmatprep.subr.bf16.mxu0 0
      %1947 = vmatpush1.bf16.msra.mxu0 0
      %1948 = vmatprep.mubr.bf16.mxu0 0
      %1949 = vmatmul.mubr.bf16.gmra.mrb[0].mxu0 %v614
      %v1950 = vpop.f32.mrb[0].mxu0
      %v1951 = vadd.f32 0.0, %v1950
      %v1952 = vpop.f32.mrb[0].mxu0
      %v1953 = vpop.f32.mrb[0].mxu0
      %v1954 = vadd.f32 0.0, %v1953
      %v1955 = vpop.f32.mrb[0].mxu0
      %1956 = vmatprep.mubr.bf16.mxu0 0
      %1957 = vmatmul.mubr.bf16.gmra.mrb[0].mxu0 %v615
      %v1958 = vpop.f32.mrb[0].mxu0
      %v1959 = vadd.f32 0.0, %v1958
      %v1960 = vpop.f32.mrb[0].mxu0
      %v1961 = vpop.f32.mrb[0].mxu0
      %v1962 = vadd.f32 0.0, %v1961
      %v1963 = vpop.f32.mrb[0].mxu0
      %1964 = vmatprep.mubr.bf16.mxu0 0
      %1965 = vmatmul.mubr.bf16.gmra.mrb[0].mxu0 %v616
      %v1966 = vpop.f32.mrb[0].mxu0
      %v1967 = vadd.f32 0.0, %v1966
      %v1968 = vpop.f32.mrb[0].mxu0
      %v1969 = vpop.f32.mrb[0].mxu0
      %v1970 = vadd.f32 0.0, %v1969
      %v1971 = vpop.f32.mrb[0].mxu0
      %1972 = vmatprep.mubr.bf16.mxu0 0
      %1973 = vmatmul.mubr.bf16.gmra.mrb[0].mxu0 %v617
      %v1974 = vpop.f32.mrb[0].mxu0
      %v1975 = vadd.f32 0.0, %v1974
      %v1976 = vpop.f32.mrb[0].mxu0
      %v1977 = vpop.f32.mrb[0].mxu0
      %v1978 = vadd.f32 0.0, %v1977
      %v1979 = vpop.f32.mrb[0].mxu0
      %1980 = vmatprep.mubr.bf16.mxu0 0
      %1981 = vmatmul.mubr.bf16.gmra.mrb[0].mxu0 %v618
      %v1982 = vpop.f32.mrb[0].mxu0
      %v1983 = vadd.f32 0.0, %v1982
      %v1984 = vpop.f32.mrb[0].mxu0
      %v1985 = vpop.f32.mrb[0].mxu0
      %v1986 = vadd.f32 0.0, %v1985
      %v1987 = vpop.f32.mrb[0].mxu0
      %1988 = vmatprep.mubr.bf16.mxu0 0
      %1989 = vmatmul.mubr.bf16.gmra.mrb[0].mxu0 %v619
      %v1990 = vpop.f32.mrb[0].mxu0
      %v1991 = vadd.f32 0.0, %v1990
      %v1992 = vpop.f32.mrb[0].mxu0
      %v1993 = vpop.f32.mrb[0].mxu0
      %v1994 = vadd.f32 0.0, %v1993
      %v1995 = vpop.f32.mrb[0].mxu0
      %1996 = vmatprep.mubr.bf16.mxu0 0
      %1997 = vmatmul.mubr.bf16.gmra.mrb[0].mxu0 %v620
      %v1998 = vpop.f32.mrb[0].mxu0
      %v1999 = vadd.f32 0.0, %v1998
      %v2000 = vpop.f32.mrb[0].mxu0
      %v2001 = vpop.f32.mrb[0].mxu0
      %v2002 = vadd.f32 0.0, %v2001
      %v2003 = vpop.f32.mrb[0].mxu0
      %2004 = vmatprep.mubr.bf16.mxu0 0
      %2005 = vmatmul.mubr.bf16.gmra.mrb[0].mxu0 %v621
      %v2006 = vpop.f32.mrb[0].mxu0
      %v2007 = vadd.f32 0.0, %v2006
      %v2008 = vpop.f32.mrb[0].mxu0
      %v2009 = vpop.f32.mrb[0].mxu0
      %v2010 = vadd.f32 0.0, %v2009
      %v2011 = vpop.f32.mrb[0].mxu0
      %2012 = vmatprep.mubr.bf16.mxu0 0
      %2013 = vmatmul.mubr.bf16.gmra.mrb[0].mxu0 %v622
      %v2014 = vpop.f32.mrb[0].mxu0
      %v2015 = vadd.f32 0.0, %v2014
      %v2016 = vpop.f32.mrb[0].mxu0
      %v2017 = vpop.f32.mrb[0].mxu0
      %v2018 = vadd.f32 0.0, %v2017
      %v2019 = vpop.f32.mrb[0].mxu0
      %2020 = vmatprep.mubr.bf16.mxu0 0
      %2021 = vmatmul.mubr.bf16.gmra.mrb[0].mxu0 %v623
      %v2022 = vpop.f32.mrb[0].mxu0
      %v2023 = vadd.f32 0.0, %v2022
      %v2024 = vpop.f32.mrb[0].mxu0
      %v2025 = vpop.f32.mrb[0].mxu0
      %v2026 = vadd.f32 0.0, %v2025
      %v2027 = vpop.f32.mrb[0].mxu0
      %2028 = vmatprep.mubr.bf16.mxu0 0
      %2029 = vmatmul.mubr.bf16.gmra.mrb[0].mxu0 %v624
      %v2030 = vpop.f32.mrb[0].mxu0
      %v2031 = vadd.f32 0.0, %v2030
      %v2032 = vpop.f32.mrb[0].mxu0
      %v2033 = vpop.f32.mrb[0].mxu0
      %v2034 = vadd.f32 0.0, %v2033
      %v2035 = vpop.f32.mrb[0].mxu0
      %2036 = vmatprep.mubr.bf16.mxu0 0
      %2037 = vmatmul.mubr.bf16.gmra.mrb[0].mxu0 %v625
      %v2038 = vpop.f32.mrb[0].mxu0
      %v2039 = vadd.f32 0.0, %v2038
      %v2040 = vpop.f32.mrb[0].mxu0
      %v2041 = vpop.f32.mrb[0].mxu0
      %v2042 = vadd.f32 0.0, %v2041
      %v2043 = vpop.f32.mrb[0].mxu0
      %2044 = vmatprep.mubr.bf16.mxu0 0
      %2045 = vmatmul.mubr.bf16.gmra.mrb[0].mxu0 %v626
      %v2046 = vpop.f32.mrb[0].mxu0
      %v2047 = vadd.f32 0.0, %v2046
      %v2048 = vpop.f32.mrb[0].mxu0
      %v2049 = vpop.f32.mrb[0].mxu0
      %v2050 = vadd.f32 0.0, %v2049
      %v2051 = vpop.f32.mrb[0].mxu0
      %2052 = vmatprep.mubr.bf16.mxu0 0
      %2053 = vmatmul.mubr.bf16.gmra.mrb[0].mxu0 %v627
      %v2054 = vpop.f32.mrb[0].mxu0
      %v2055 = vadd.f32 0.0, %v2054
      %v2056 = vpop.f32.mrb[0].mxu0
      %v2057 = vpop.f32.mrb[0].mxu0
      %v2058 = vadd.f32 0.0, %v2057
      %v2059 = vpop.f32.mrb[0].mxu0
      %2060 = vmatprep.mubr.bf16.mxu0 0
      %2061 = vmatmul.mubr.bf16.gmra.mrb[0].mxu0 %v628
      %v2062 = vpop.f32.mrb[0].mxu0
      %v2063 = vadd.f32 0.0, %v2062
      %v2064 = vpop.f32.mrb[0].mxu0
      %v2065 = vpop.f32.mrb[0].mxu0
      %v2066 = vadd.f32 0.0, %v2065
      %v2067 = vpop.f32.mrb[0].mxu0
      %2068 = vmatprep.mubr.bf16.mxu0 0
      %2069 = vmatmul.mubr.bf16.gmra.mrb[0].mxu0 %v629
      %v2070 = vpop.f32.mrb[0].mxu0
      %v2071 = vadd.f32 0.0, %v2070
      %v2072 = vpop.f32.mrb[0].mxu0
      %v2073 = vpop.f32.mrb[0].mxu0
      %v2074 = vadd.f32 0.0, %v2073
      %v2075 = vpop.f32.mrb[0].mxu0
      %2076 = vdwg.mxu0
      %v2077 = vadd.f32 %v1819, %v1951
      %v2078 = vadd.f32 %v1820, %v1954
      %v2079 = vadd.f32 %v1821, %v1959
      %v2080 = vadd.f32 %v1822, %v1962
      %v2081 = vadd.f32 %v1823, %v1967
      %v2082 = vadd.f32 %v1824, %v1970
      %v2083 = vadd.f32 %v1825, %v1975
      %v2084 = vadd.f32 %v1826, %v1978
      %v2085 = vadd.f32 %v1827, %v1983
      %v2086 = vadd.f32 %v1828, %v1986
      %v2087 = vadd.f32 %v1829, %v1991
      %v2088 = vadd.f32 %v1830, %v1994
      %v2089 = vadd.f32 %v1831, %v1999
      %v2090 = vadd.f32 %v1832, %v2002
      %v2091 = vadd.f32 %v1833, %v2007
      %v2092 = vadd.f32 %v1834, %v2010
      %v2093 = vadd.f32 %v1835, %v2015
      %v2094 = vadd.f32 %v1836, %v2018
      %v2095 = vadd.f32 %v1837, %v2023
      %v2096 = vadd.f32 %v1838, %v2026
      %v2097 = vadd.f32 %v1839, %v2031
      %v2098 = vadd.f32 %v1840, %v2034
      %v2099 = vadd.f32 %v1841, %v2039
      %v2100 = vadd.f32 %v1842, %v2042
      %v2101 = vadd.f32 %v1843, %v2047
      %v2102 = vadd.f32 %v1844, %v2050
      %v2103 = vadd.f32 %v1845, %v2055
      %v2104 = vadd.f32 %v1846, %v2058
      %v2105 = vadd.f32 %v1847, %v2063
      %v2106 = vadd.f32 %v1848, %v2066
      %v2107 = vadd.f32 %v1849, %v2071
      %v2108 = vadd.f32 %v1850, %v2074
      %v2109 = vld [vmem:[%s3 + $0x140] sm:$0xf]
      %v2110 = vld [vmem:[%s3 + $0x144] sm:$0xf]
      %v2111 = vld [vmem:[%s3 + $0x148] sm:$0xf]
      %v2112 = vld [vmem:[%s3 + $0x14c] sm:$0xf]
      %v2113 = vld [vmem:[%s3 + $0x150] sm:$0xf]
      %v2114 = vld [vmem:[%s3 + $0x154] sm:$0xf]
      %v2115 = vld [vmem:[%s3 + $0x158] sm:$0xf]
      %v2116 = vld [vmem:[%s3 + $0x15c] sm:$0xf]
      %v2117 = vld [vmem:[%s3 + $0x160] sm:$0xf]
      %v2118 = vld [vmem:[%s3 + $0x164] sm:$0xf]
      %v2119 = vld [vmem:[%s3 + $0x168] sm:$0xf]
      %v2120 = vld [vmem:[%s3 + $0x16c] sm:$0xf]
      %v2121 = vld [vmem:[%s3 + $0x170] sm:$0xf]
      %v2122 = vld [vmem:[%s3 + $0x174] sm:$0xf]
      %v2123 = vld [vmem:[%s3 + $0x178] sm:$0xf]
      %v2124 = vld [vmem:[%s3 + $0x17c] sm:$0xf]
      %v2141 = vunpack.c.l.b16 %v2109
      %v2142 = vunpack.c.l.b16 %v2110
      %v2143 = vunpack.c.l.b16 %v2111
      %v2144 = vunpack.c.l.b16 %v2112
      %v2145 = vunpack.c.l.b16 %v2113
      %v2146 = vunpack.c.l.b16 %v2114
      %v2147 = vunpack.c.l.b16 %v2115
      %v2148 = vunpack.c.l.b16 %v2116
      %v2149 = vunpack.c.l.b16 %v2117
      %v2150 = vunpack.c.l.b16 %v2118
      %v2151 = vunpack.c.l.b16 %v2119
      %v2152 = vunpack.c.l.b16 %v2120
      %v2153 = vunpack.c.l.b16 %v2121
      %v2154 = vunpack.c.l.b16 %v2122
      %v2155 = vunpack.c.l.b16 %v2123
      %v2156 = vunpack.c.l.b16 %v2124
      %v2157 = vpack.c.b16 %v2142, %v2141
      %v2158 = vpack.c.b16 %v2144, %v2143
      %v2159 = vpack.c.b16 %v2146, %v2145
      %v2160 = vpack.c.b16 %v2148, %v2147
      %v2161 = vpack.c.b16 %v2150, %v2149
      %v2162 = vpack.c.b16 %v2152, %v2151
      %v2163 = vpack.c.b16 %v2154, %v2153
      %v2164 = vpack.c.b16 %v2156, %v2155
      %2173 = vmatprep.subr.bf16.mxu0 0
      %2174 = vmatpush1.bf16.msra.mxu0 %v2157
      %2175 = vmatprep.subr.bf16.mxu0 0
      %2176 = vmatpush1.bf16.msra.mxu0 %v2158
      %2177 = vmatprep.subr.bf16.mxu0 0
      %2178 = vmatpush1.bf16.msra.mxu0 %v2159
      %2179 = vmatprep.subr.bf16.mxu0 0
      %2180 = vmatpush1.bf16.msra.mxu0 %v2160
      %2181 = vmatprep.subr.bf16.mxu0 0
      %2182 = vmatpush1.bf16.msra.mxu0 %v2161
      %2183 = vmatprep.subr.bf16.mxu0 0
      %2184 = vmatpush1.bf16.msra.mxu0 %v2162
      %2185 = vmatprep.subr.bf16.mxu0 0
      %2186 = vmatpush1.bf16.msra.mxu0 %v2163
      %2187 = vmatprep.subr.bf16.mxu0 0
      %2188 = vmatpush1.bf16.msra.mxu0 %v2164
      %2189 = vmatprep.subr.bf16.mxu0 0
      %2190 = vmatpush1.bf16.msra.mxu0 0
      %2191 = vmatprep.subr.bf16.mxu0 0
      %2192 = vmatpush1.bf16.msra.mxu0 0
      %2193 = vmatprep.subr.bf16.mxu0 0
      %2194 = vmatpush1.bf16.msra.mxu0 0
      %2195 = vmatprep.subr.bf16.mxu0 0
      %2196 = vmatpush1.bf16.msra.mxu0 0
      %2197 = vmatprep.subr.bf16.mxu0 0
      %2198 = vmatpush1.bf16.msra.mxu0 0
      %2199 = vmatprep.subr.bf16.mxu0 0
      %2200 = vmatpush1.bf16.msra.mxu0 0
      %2201 = vmatprep.subr.bf16.mxu0 0
      %2202 = vmatpush1.bf16.msra.mxu0 0
      %2203 = vmatprep.subr.bf16.mxu0 0
      %2204 = vmatpush1.bf16.msra.mxu0 0
      %2205 = vmatprep.mubr.bf16.mxu0 0
      %2206 = vmatmul.mubr.bf16.gmra.mrb[0].mxu0 %v854
      %v2207 = vpop.f32.mrb[0].mxu0
      %v2208 = vadd.f32 0.0, %v2207
      %v2209 = vpop.f32.mrb[0].mxu0
      %v2210 = vpop.f32.mrb[0].mxu0
      %v2211 = vadd.f32 0.0, %v2210
      %v2212 = vpop.f32.mrb[0].mxu0
      %2213 = vmatprep.mubr.bf16.mxu0 0
      %2214 = vmatmul.mubr.bf16.gmra.mrb[0].mxu0 %v855
      %v2215 = vpop.f32.mrb[0].mxu0
      %v2216 = vadd.f32 0.0, %v2215
      %v2217 = vpop.f32.mrb[0].mxu0
      %v2218 = vpop.f32.mrb[0].mxu0
      %v2219 = vadd.f32 0.0, %v2218
      %v2220 = vpop.f32.mrb[0].mxu0
      %2221 = vmatprep.mubr.bf16.mxu0 0
      %2222 = vmatmul.mubr.bf16.gmra.mrb[0].mxu0 %v856
      %v2223 = vpop.f32.mrb[0].mxu0
      %v2224 = vadd.f32 0.0, %v2223
      %v2225 = vpop.f32.mrb[0].mxu0
      %v2226 = vpop.f32.mrb[0].mxu0
      %v2227 = vadd.f32 0.0, %v2226
      %v2228 = vpop.f32.mrb[0].mxu0
      %2229 = vmatprep.mubr.bf16.mxu0 0
      %2230 = vmatmul.mubr.bf16.gmra.mrb[0].mxu0 %v857
      %v2231 = vpop.f32.mrb[0].mxu0
      %v2232 = vadd.f32 0.0, %v2231
      %v2233 = vpop.f32.mrb[0].mxu0
      %v2234 = vpop.f32.mrb[0].mxu0
      %v2235 = vadd.f32 0.0, %v2234
      %v2236 = vpop.f32.mrb[0].mxu0
      %2237 = vmatprep.mubr.bf16.mxu0 0
      %2238 = vmatmul.mubr.bf16.gmra.mrb[0].mxu0 %v858
      %v2239 = vpop.f32.mrb[0].mxu0
      %v2240 = vadd.f32 0.0, %v2239
      %v2241 = vpop.f32.mrb[0].mxu0
      %v2242 = vpop.f32.mrb[0].mxu0
      %v2243 = vadd.f32 0.0, %v2242
      %v2244 = vpop.f32.mrb[0].mxu0
      %2245 = vmatprep.mubr.bf16.mxu0 0
      %2246 = vmatmul.mubr.bf16.gmra.mrb[0].mxu0 %v859
      %v2247 = vpop.f32.mrb[0].mxu0
      %v2248 = vadd.f32 0.0, %v2247
      %v2249 = vpop.f32.mrb[0].mxu0
      %v2250 = vpop.f32.mrb[0].mxu0
      %v2251 = vadd.f32 0.0, %v2250
      %v2252 = vpop.f32.mrb[0].mxu0
      %2253 = vmatprep.mubr.bf16.mxu0 0
      %2254 = vmatmul.mubr.bf16.gmra.mrb[0].mxu0 %v860
      %v2255 = vpop.f32.mrb[0].mxu0
      %v2256 = vadd.f32 0.0, %v2255
      %v2257 = vpop.f32.mrb[0].mxu0
      %v2258 = vpop.f32.mrb[0].mxu0
      %v2259 = vadd.f32 0.0, %v2258
      %v2260 = vpop.f32.mrb[0].mxu0
      %2261 = vmatprep.mubr.bf16.mxu0 0
      %2262 = vmatmul.mubr.bf16.gmra.mrb[0].mxu0 %v861
      %v2263 = vpop.f32.mrb[0].mxu0
      %v2264 = vadd.f32 0.0, %v2263
      %v2265 = vpop.f32.mrb[0].mxu0
      %v2266 = vpop.f32.mrb[0].mxu0
      %v2267 = vadd.f32 0.0, %v2266
      %v2268 = vpop.f32.mrb[0].mxu0
      %2269 = vmatprep.mubr.bf16.mxu0 0
      %2270 = vmatmul.mubr.bf16.gmra.mrb[0].mxu0 %v862
      %v2271 = vpop.f32.mrb[0].mxu0
      %v2272 = vadd.f32 0.0, %v2271
      %v2273 = vpop.f32.mrb[0].mxu0
      %v2274 = vpop.f32.mrb[0].mxu0
      %v2275 = vadd.f32 0.0, %v2274
      %v2276 = vpop.f32.mrb[0].mxu0
      %2277 = vmatprep.mubr.bf16.mxu0 0
      %2278 = vmatmul.mubr.bf16.gmra.mrb[0].mxu0 %v863
      %v2279 = vpop.f32.mrb[0].mxu0
      %v2280 = vadd.f32 0.0, %v2279
      %v2281 = vpop.f32.mrb[0].mxu0
      %v2282 = vpop.f32.mrb[0].mxu0
      %v2283 = vadd.f32 0.0, %v2282
      %v2284 = vpop.f32.mrb[0].mxu0
      %2285 = vmatprep.mubr.bf16.mxu0 0
      %2286 = vmatmul.mubr.bf16.gmra.mrb[0].mxu0 %v864
      %v2287 = vpop.f32.mrb[0].mxu0
      %v2288 = vadd.f32 0.0, %v2287
      %v2289 = vpop.f32.mrb[0].mxu0
      %v2290 = vpop.f32.mrb[0].mxu0
      %v2291 = vadd.f32 0.0, %v2290
      %v2292 = vpop.f32.mrb[0].mxu0
      %2293 = vmatprep.mubr.bf16.mxu0 0
      %2294 = vmatmul.mubr.bf16.gmra.mrb[0].mxu0 %v865
      %v2295 = vpop.f32.mrb[0].mxu0
      %v2296 = vadd.f32 0.0, %v2295
      %v2297 = vpop.f32.mrb[0].mxu0
      %v2298 = vpop.f32.mrb[0].mxu0
      %v2299 = vadd.f32 0.0, %v2298
      %v2300 = vpop.f32.mrb[0].mxu0
      %2301 = vmatprep.mubr.bf16.mxu0 0
      %2302 = vmatmul.mubr.bf16.gmra.mrb[0].mxu0 %v866
      %v2303 = vpop.f32.mrb[0].mxu0
      %v2304 = vadd.f32 0.0, %v2303
      %v2305 = vpop.f32.mrb[0].mxu0
      %v2306 = vpop.f32.mrb[0].mxu0
      %v2307 = vadd.f32 0.0, %v2306
      %v2308 = vpop.f32.mrb[0].mxu0
      %2309 = vmatprep.mubr.bf16.mxu0 0
      %2310 = vmatmul.mubr.bf16.gmra.mrb[0].mxu0 %v867
      %v2311 = vpop.f32.mrb[0].mxu0
      %v2312 = vadd.f32 0.0, %v2311
      %v2313 = vpop.f32.mrb[0].mxu0
      %v2314 = vpop.f32.mrb[0].mxu0
      %v2315 = vadd.f32 0.0, %v2314
      %v2316 = vpop.f32.mrb[0].mxu0
      %2317 = vmatprep.mubr.bf16.mxu0 0
      %2318 = vmatmul.mubr.bf16.gmra.mrb[0].mxu0 %v868
      %v2319 = vpop.f32.mrb[0].mxu0
      %v2320 = vadd.f32 0.0, %v2319
      %v2321 = vpop.f32.mrb[0].mxu0
      %v2322 = vpop.f32.mrb[0].mxu0
      %v2323 = vadd.f32 0.0, %v2322
      %v2324 = vpop.f32.mrb[0].mxu0
      %2325 = vmatprep.mubr.bf16.mxu0 0
      %2326 = vmatmul.mubr.bf16.gmra.mrb[0].mxu0 %v869
      %v2327 = vpop.f32.mrb[0].mxu0
      %v2328 = vadd.f32 0.0, %v2327
      %v2329 = vpop.f32.mrb[0].mxu0
      %v2330 = vpop.f32.mrb[0].mxu0
      %v2331 = vadd.f32 0.0, %v2330
      %v2332 = vpop.f32.mrb[0].mxu0
      %2333 = vdwg.mxu0
      %v2334 = vadd.f32 %v2077, %v2208
      %v2335 = vadd.f32 %v2078, %v2211
      %v2336 = vadd.f32 %v2079, %v2216
      %v2337 = vadd.f32 %v2080, %v2219
      %v2338 = vadd.f32 %v2081, %v2224
      %v2339 = vadd.f32 %v2082, %v2227
      %v2340 = vadd.f32 %v2083, %v2232
      %v2341 = vadd.f32 %v2084, %v2235
      %v2342 = vadd.f32 %v2085, %v2240
      %v2343 = vadd.f32 %v2086, %v2243
      %v2344 = vadd.f32 %v2087, %v2248
      %v2345 = vadd.f32 %v2088, %v2251
      %v2346 = vadd.f32 %v2089, %v2256
      %v2347 = vadd.f32 %v2090, %v2259
      %v2348 = vadd.f32 %v2091, %v2264
      %v2349 = vadd.f32 %v2092, %v2267
      %v2350 = vadd.f32 %v2093, %v2272
      %v2351 = vadd.f32 %v2094, %v2275
      %v2352 = vadd.f32 %v2095, %v2280
      %v2353 = vadd.f32 %v2096, %v2283
      %v2354 = vadd.f32 %v2097, %v2288
      %v2355 = vadd.f32 %v2098, %v2291
      %v2356 = vadd.f32 %v2099, %v2296
      %v2357 = vadd.f32 %v2100, %v2299
      %v2358 = vadd.f32 %v2101, %v2304
      %v2359 = vadd.f32 %v2102, %v2307
      %v2360 = vadd.f32 %v2103, %v2312
      %v2361 = vadd.f32 %v2104, %v2315
      %v2362 = vadd.f32 %v2105, %v2320
      %v2363 = vadd.f32 %v2106, %v2323
      %v2364 = vadd.f32 %v2107, %v2328
      %v2365 = vadd.f32 %v2108, %v2331
      %v2366 = vld [vmem:[%s3 + $0x180] sm:$0xf]
      %v2367 = vld [vmem:[%s3 + $0x184] sm:$0xf]
      %v2368 = vld [vmem:[%s3 + $0x188] sm:$0xf]
      %v2369 = vld [vmem:[%s3 + $0x18c] sm:$0xf]
      %v2370 = vld [vmem:[%s3 + $0x190] sm:$0xf]
      %v2371 = vld [vmem:[%s3 + $0x194] sm:$0xf]
      %v2372 = vld [vmem:[%s3 + $0x198] sm:$0xf]
      %v2373 = vld [vmem:[%s3 + $0x19c] sm:$0xf]
      %v2374 = vld [vmem:[%s3 + $0x1a0] sm:$0xf]
      %v2375 = vld [vmem:[%s3 + $0x1a4] sm:$0xf]
      %v2376 = vld [vmem:[%s3 + $0x1a8] sm:$0xf]
      %v2377 = vld [vmem:[%s3 + $0x1ac] sm:$0xf]
      %v2378 = vld [vmem:[%s3 + $0x1b0] sm:$0xf]
      %v2379 = vld [vmem:[%s3 + $0x1b4] sm:$0xf]
      %v2380 = vld [vmem:[%s3 + $0x1b8] sm:$0xf]
      %v2381 = vld [vmem:[%s3 + $0x1bc] sm:$0xf]
      %v2398 = vunpack.c.l.b16 %v2366
      %v2399 = vunpack.c.l.b16 %v2367
      %v2400 = vunpack.c.l.b16 %v2368
      %v2401 = vunpack.c.l.b16 %v2369
      %v2402 = vunpack.c.l.b16 %v2370
      %v2403 = vunpack.c.l.b16 %v2371
      %v2404 = vunpack.c.l.b16 %v2372
      %v2405 = vunpack.c.l.b16 %v2373
      %v2406 = vunpack.c.l.b16 %v2374
      %v2407 = vunpack.c.l.b16 %v2375
      %v2408 = vunpack.c.l.b16 %v2376
      %v2409 = vunpack.c.l.b16 %v2377
      %v2410 = vunpack.c.l.b16 %v2378
      %v2411 = vunpack.c.l.b16 %v2379
      %v2412 = vunpack.c.l.b16 %v2380
      %v2413 = vunpack.c.l.b16 %v2381
      %v2414 = vpack.c.b16 %v2399, %v2398
      %v2415 = vpack.c.b16 %v2401, %v2400
      %v2416 = vpack.c.b16 %v2403, %v2402
      %v2417 = vpack.c.b16 %v2405, %v2404
      %v2418 = vpack.c.b16 %v2407, %v2406
      %v2419 = vpack.c.b16 %v2409, %v2408
      %v2420 = vpack.c.b16 %v2411, %v2410
      %v2421 = vpack.c.b16 %v2413, %v2412
      %2430 = vmatprep.subr.bf16.mxu0 0
      %2431 = vmatpush1.bf16.msra.mxu0 %v2414
      %2432 = vmatprep.subr.bf16.mxu0 0
      %2433 = vmatpush1.bf16.msra.mxu0 %v2415
      %2434 = vmatprep.subr.bf16.mxu0 0
      %2435 = vmatpush1.bf16.msra.mxu0 %v2416
      %2436 = vmatprep.subr.bf16.mxu0 0
      %2437 = vmatpush1.bf16.msra.mxu0 %v2417
      %2438 = vmatprep.subr.bf16.mxu0 0
      %2439 = vmatpush1.bf16.msra.mxu0 %v2418
      %2440 = vmatprep.subr.bf16.mxu0 0
      %2441 = vmatpush1.bf16.msra.mxu0 %v2419
      %2442 = vmatprep.subr.bf16.mxu0 0
      %2443 = vmatpush1.bf16.msra.mxu0 %v2420
      %2444 = vmatprep.subr.bf16.mxu0 0
      %2445 = vmatpush1.bf16.msra.mxu0 %v2421
      %2446 = vmatprep.subr.bf16.mxu0 0
      %2447 = vmatpush1.bf16.msra.mxu0 0
      %2448 = vmatprep.subr.bf16.mxu0 0
      %2449 = vmatpush1.bf16.msra.mxu0 0
      %2450 = vmatprep.subr.bf16.mxu0 0
      %2451 = vmatpush1.bf16.msra.mxu0 0
      %2452 = vmatprep.subr.bf16.mxu0 0
      %2453 = vmatpush1.bf16.msra.mxu0 0
      %2454 = vmatprep.subr.bf16.mxu0 0
      %2455 = vmatpush1.bf16.msra.mxu0 0
      %2456 = vmatprep.subr.bf16.mxu0 0
      %2457 = vmatpush1.bf16.msra.mxu0 0
      %2458 = vmatprep.subr.bf16.mxu0 0
      %2459 = vmatpush1.bf16.msra.mxu0 0
      %2460 = vmatprep.subr.bf16.mxu0 0
      %2461 = vmatpush1.bf16.msra.mxu0 0
      %2462 = vmatprep.mubr.bf16.mxu0 0
      %2463 = vmatmul.mubr.bf16.gmra.mrb[0].mxu0 %v780
      %v2464 = vpop.f32.mrb[0].mxu0
      %v2465 = vadd.f32 0.0, %v2464
      %v2466 = vpop.f32.mrb[0].mxu0
      %v2467 = vpop.f32.mrb[0].mxu0
      %v2468 = vadd.f32 0.0, %v2467
      %v2469 = vpop.f32.mrb[0].mxu0
      %2470 = vmatprep.mubr.bf16.mxu0 0
      %2471 = vmatmul.mubr.bf16.gmra.mrb[0].mxu0 %v781
      %v2472 = vpop.f32.mrb[0].mxu0
      %v2473 = vadd.f32 0.0, %v2472
      %v2474 = vpop.f32.mrb[0].mxu0
      %v2475 = vpop.f32.mrb[0].mxu0
      %v2476 = vadd.f32 0.0, %v2475
      %v2477 = vpop.f32.mrb[0].mxu0
      %2478 = vmatprep.mubr.bf16.mxu0 0
      %2479 = vmatmul.mubr.bf16.gmra.mrb[0].mxu0 %v782
      %v2480 = vpop.f32.mrb[0].mxu0
      %v2481 = vadd.f32 0.0, %v2480
      %v2482 = vpop.f32.mrb[0].mxu0
      %v2483 = vpop.f32.mrb[0].mxu0
      %v2484 = vadd.f32 0.0, %v2483
      %v2485 = vpop.f32.mrb[0].mxu0
      %2486 = vmatprep.mubr.bf16.mxu0 0
      %2487 = vmatmul.mubr.bf16.gmra.mrb[0].mxu0 %v783
      %v2488 = vpop.f32.mrb[0].mxu0
      %v2489 = vadd.f32 0.0, %v2488
      %v2490 = vpop.f32.mrb[0].mxu0
      %v2491 = vpop.f32.mrb[0].mxu0
      %v2492 = vadd.f32 0.0, %v2491
      %v2493 = vpop.f32.mrb[0].mxu0
      %2494 = vmatprep.mubr.bf16.mxu0 0
      %2495 = vmatmul.mubr.bf16.gmra.mrb[0].mxu0 %v784
      %v2496 = vpop.f32.mrb[0].mxu0
      %v2497 = vadd.f32 0.0, %v2496
      %v2498 = vpop.f32.mrb[0].mxu0
      %v2499 = vpop.f32.mrb[0].mxu0
      %v2500 = vadd.f32 0.0, %v2499
      %v2501 = vpop.f32.mrb[0].mxu0
      %2502 = vmatprep.mubr.bf16.mxu0 0
      %2503 = vmatmul.mubr.bf16.gmra.mrb[0].mxu0 %v785
      %v2504 = vpop.f32.mrb[0].mxu0
      %v2505 = vadd.f32 0.0, %v2504
      %v2506 = vpop.f32.mrb[0].mxu0
      %v2507 = vpop.f32.mrb[0].mxu0
      %v2508 = vadd.f32 0.0, %v2507
      %v2509 = vpop.f32.mrb[0].mxu0
      %2510 = vmatprep.mubr.bf16.mxu0 0
      %2511 = vmatmul.mubr.bf16.gmra.mrb[0].mxu0 %v786
      %v2512 = vpop.f32.mrb[0].mxu0
      %v2513 = vadd.f32 0.0, %v2512
      %v2514 = vpop.f32.mrb[0].mxu0
      %v2515 = vpop.f32.mrb[0].mxu0
      %v2516 = vadd.f32 0.0, %v2515
      %v2517 = vpop.f32.mrb[0].mxu0
      %2518 = vmatprep.mubr.bf16.mxu0 0
      %2519 = vmatmul.mubr.bf16.gmra.mrb[0].mxu0 %v787
      %v2520 = vpop.f32.mrb[0].mxu0
      %v2521 = vadd.f32 0.0, %v2520
      %v2522 = vpop.f32.mrb[0].mxu0
      %v2523 = vpop.f32.mrb[0].mxu0
      %v2524 = vadd.f32 0.0, %v2523
      %v2525 = vpop.f32.mrb[0].mxu0
      %2526 = vmatprep.mubr.bf16.mxu0 0
      %2527 = vmatmul.mubr.bf16.gmra.mrb[0].mxu0 %v788
      %v2528 = vpop.f32.mrb[0].mxu0
      %v2529 = vadd.f32 0.0, %v2528
      %v2530 = vpop.f32.mrb[0].mxu0
      %v2531 = vpop.f32.mrb[0].mxu0
      %v2532 = vadd.f32 0.0, %v2531
      %v2533 = vpop.f32.mrb[0].mxu0
      %2534 = vmatprep.mubr.bf16.mxu0 0
      %2535 = vmatmul.mubr.bf16.gmra.mrb[0].mxu0 %v789
      %v2536 = vpop.f32.mrb[0].mxu0
      %v2537 = vadd.f32 0.0, %v2536
      %v2538 = vpop.f32.mrb[0].mxu0
      %v2539 = vpop.f32.mrb[0].mxu0
      %v2540 = vadd.f32 0.0, %v2539
      %v2541 = vpop.f32.mrb[0].mxu0
      %2542 = vmatprep.mubr.bf16.mxu0 0
      %2543 = vmatmul.mubr.bf16.gmra.mrb[0].mxu0 %v790
      %v2544 = vpop.f32.mrb[0].mxu0
      %v2545 = vadd.f32 0.0, %v2544
      %v2546 = vpop.f32.mrb[0].mxu0
      %v2547 = vpop.f32.mrb[0].mxu0
      %v2548 = vadd.f32 0.0, %v2547
      %v2549 = vpop.f32.mrb[0].mxu0
      %2550 = vmatprep.mubr.bf16.mxu0 0
      %2551 = vmatmul.mubr.bf16.gmra.mrb[0].mxu0 %v791
      %v2552 = vpop.f32.mrb[0].mxu0
      %v2553 = vadd.f32 0.0, %v2552
      %v2554 = vpop.f32.mrb[0].mxu0
      %v2555 = vpop.f32.mrb[0].mxu0
      %v2556 = vadd.f32 0.0, %v2555
      %v2557 = vpop.f32.mrb[0].mxu0
      %2558 = vmatprep.mubr.bf16.mxu0 0
      %2559 = vmatmul.mubr.bf16.gmra.mrb[0].mxu0 %v792
      %v2560 = vpop.f32.mrb[0].mxu0
      %v2561 = vadd.f32 0.0, %v2560
      %v2562 = vpop.f32.mrb[0].mxu0
      %v2563 = vpop.f32.mrb[0].mxu0
      %v2564 = vadd.f32 0.0, %v2563
      %v2565 = vpop.f32.mrb[0].mxu0
      %2566 = vmatprep.mubr.bf16.mxu0 0
      %2567 = vmatmul.mubr.bf16.gmra.mrb[0].mxu0 %v793
      %v2568 = vpop.f32.mrb[0].mxu0
      %v2569 = vadd.f32 0.0, %v2568
      %v2570 = vpop.f32.mrb[0].mxu0
      %v2571 = vpop.f32.mrb[0].mxu0
      %v2572 = vadd.f32 0.0, %v2571
      %v2573 = vpop.f32.mrb[0].mxu0
      %2574 = vmatprep.mubr.bf16.mxu0 0
      %2575 = vmatmul.mubr.bf16.gmra.mrb[0].mxu0 %v794
      %v2576 = vpop.f32.mrb[0].mxu0
      %v2577 = vadd.f32 0.0, %v2576
      %v2578 = vpop.f32.mrb[0].mxu0
      %v2579 = vpop.f32.mrb[0].mxu0
      %v2580 = vadd.f32 0.0, %v2579
      %v2581 = vpop.f32.mrb[0].mxu0
      %2582 = vmatprep.mubr.bf16.mxu0 0
      %2583 = vmatmul.mubr.bf16.gmra.mrb[0].mxu0 %v795
      %v2584 = vpop.f32.mrb[0].mxu0
      %v2585 = vadd.f32 0.0, %v2584
      %v2586 = vpop.f32.mrb[0].mxu0
      %v2587 = vpop.f32.mrb[0].mxu0
      %v2588 = vadd.f32 0.0, %v2587
      %v2589 = vpop.f32.mrb[0].mxu0
      %2590 = vdwg.mxu0
      %v2591 = vadd.f32 %v2334, %v2465
      %v2592 = vadd.f32 %v2335, %v2468
      %v2593 = vadd.f32 %v2336, %v2473
      %v2594 = vadd.f32 %v2337, %v2476
      %v2595 = vadd.f32 %v2338, %v2481
      %v2596 = vadd.f32 %v2339, %v2484
      %v2597 = vadd.f32 %v2340, %v2489
      %v2598 = vadd.f32 %v2341, %v2492
      %v2599 = vadd.f32 %v2342, %v2497
      %v2600 = vadd.f32 %v2343, %v2500
      %v2601 = vadd.f32 %v2344, %v2505
      %v2602 = vadd.f32 %v2345, %v2508
      %v2603 = vadd.f32 %v2346, %v2513
      %v2604 = vadd.f32 %v2347, %v2516
      %v2605 = vadd.f32 %v2348, %v2521
      %v2606 = vadd.f32 %v2349, %v2524
      %v2607 = vadd.f32 %v2350, %v2529
      %v2608 = vadd.f32 %v2351, %v2532
      %v2609 = vadd.f32 %v2352, %v2537
      %v2610 = vadd.f32 %v2353, %v2540
      %v2611 = vadd.f32 %v2354, %v2545
      %v2612 = vadd.f32 %v2355, %v2548
      %v2613 = vadd.f32 %v2356, %v2553
      %v2614 = vadd.f32 %v2357, %v2556
      %v2615 = vadd.f32 %v2358, %v2561
      %v2616 = vadd.f32 %v2359, %v2564
      %v2617 = vadd.f32 %v2360, %v2569
      %v2618 = vadd.f32 %v2361, %v2572
      %v2619 = vadd.f32 %v2362, %v2577
      %v2620 = vadd.f32 %v2363, %v2580
      %v2621 = vadd.f32 %v2364, %v2585
      %v2622 = vadd.f32 %v2365, %v2588
      %v2623 = vld [vmem:[%s3 + $0x1c0] sm:$0xf]
      %v2624 = vld [vmem:[%s3 + $0x1c4] sm:$0xf]
      %v2625 = vld [vmem:[%s3 + $0x1c8] sm:$0xf]
      %v2626 = vld [vmem:[%s3 + $0x1cc] sm:$0xf]
      %v2627 = vld [vmem:[%s3 + $0x1d0] sm:$0xf]
      %v2628 = vld [vmem:[%s3 + $0x1d4] sm:$0xf]
      %v2629 = vld [vmem:[%s3 + $0x1d8] sm:$0xf]
      %v2630 = vld [vmem:[%s3 + $0x1dc] sm:$0xf]
      %v2631 = vld [vmem:[%s3 + $0x1e0] sm:$0xf]
      %v2632 = vld [vmem:[%s3 + $0x1e4] sm:$0xf]
      %v2633 = vld [vmem:[%s3 + $0x1e8] sm:$0xf]
      %v2634 = vld [vmem:[%s3 + $0x1ec] sm:$0xf]
      %v2635 = vld [vmem:[%s3 + $0x1f0] sm:$0xf]
      %v2636 = vld [vmem:[%s3 + $0x1f4] sm:$0xf]
      %v2637 = vld [vmem:[%s3 + $0x1f8] sm:$0xf]
      %v2638 = vld [vmem:[%s3 + $0x1fc] sm:$0xf]
      %v2656 = vunpack.c.l.b16 %v2623
      %v2657 = vunpack.c.l.b16 %v2624
      %v2658 = vunpack.c.l.b16 %v2625
      %v2659 = vunpack.c.l.b16 %v2626
      %v2660 = vunpack.c.l.b16 %v2627
      %v2661 = vunpack.c.l.b16 %v2628
      %v2662 = vunpack.c.l.b16 %v2629
      %v2663 = vunpack.c.l.b16 %v2630
      %v2664 = vunpack.c.l.b16 %v2631
      %v2665 = vunpack.c.l.b16 %v2632
      %v2666 = vunpack.c.l.b16 %v2633
      %v2667 = vunpack.c.l.b16 %v2634
      %v2668 = vunpack.c.l.b16 %v2635
      %v2669 = vunpack.c.l.b16 %v2636
      %v2670 = vunpack.c.l.b16 %v2637
      %v2671 = vunpack.c.l.b16 %v2638
      %v2672 = vpack.c.b16 %v2657, %v2656
      %v2673 = vpack.c.b16 %v2659, %v2658
      %v2674 = vpack.c.b16 %v2661, %v2660
      %v2675 = vpack.c.b16 %v2663, %v2662
      %v2676 = vpack.c.b16 %v2665, %v2664
      %v2677 = vpack.c.b16 %v2667, %v2666
      %v2678 = vpack.c.b16 %v2669, %v2668
      %v2679 = vpack.c.b16 %v2671, %v2670
      %2688 = vmatprep.subr.bf16.mxu0 0
      %2689 = vmatpush1.bf16.msra.mxu0 %v2672
      %2690 = vmatprep.subr.bf16.mxu0 0
      %2691 = vmatpush1.bf16.msra.mxu0 %v2673
      %2692 = vmatprep.subr.bf16.mxu0 0
      %2693 = vmatpush1.bf16.msra.mxu0 %v2674
      %2694 = vmatprep.subr.bf16.mxu0 0
      %2695 = vmatpush1.bf16.msra.mxu0 %v2675
      %2696 = vmatprep.subr.bf16.mxu0 0
      %2697 = vmatpush1.bf16.msra.mxu0 %v2676
      %2698 = vmatprep.subr.bf16.mxu0 0
      %2699 = vmatpush1.bf16.msra.mxu0 %v2677
      %2700 = vmatprep.subr.bf16.mxu0 0
      %2701 = vmatpush1.bf16.msra.mxu0 %v2678
      %2702 = vmatprep.subr.bf16.mxu0 0
      %2703 = vmatpush1.bf16.msra.mxu0 %v2679
      %2704 = vmatprep.subr.bf16.mxu0 0
      %2705 = vmatpush1.bf16.msra.mxu0 0
      %2706 = vmatprep.subr.bf16.mxu0 0
      %2707 = vmatpush1.bf16.msra.mxu0 0
      %2708 = vmatprep.subr.bf16.mxu0 0
      %2709 = vmatpush1.bf16.msra.mxu0 0
      %2710 = vmatprep.subr.bf16.mxu0 0
      %2711 = vmatpush1.bf16.msra.mxu0 0
      %2712 = vmatprep.subr.bf16.mxu0 0
      %2713 = vmatpush1.bf16.msra.mxu0 0
      %2714 = vmatprep.subr.bf16.mxu0 0
      %2715 = vmatpush1.bf16.msra.mxu0 0
      %2716 = vmatprep.subr.bf16.mxu0 0
      %2717 = vmatpush1.bf16.msra.mxu0 0
      %2718 = vmatprep.subr.bf16.mxu0 0
      %2719 = vmatpush1.bf16.msra.mxu0 0
      %2720 = vmatprep.mubr.bf16.mxu0 0
      %2721 = vmatmul.mubr.bf16.gmra.mrb[0].mxu0 %v615
      %v2722 = vpop.f32.mrb[0].mxu0
      %v2723 = vadd.f32 0.0, %v2722
      %v2724 = vpop.f32.mrb[0].mxu0
      %v2725 = vpop.f32.mrb[0].mxu0
      %v2726 = vadd.f32 0.0, %v2725
      %v2727 = vpop.f32.mrb[0].mxu0
      %2728 = vmatprep.mubr.bf16.mxu0 0
      %2729 = vmatmul.mubr.bf16.gmra.mrb[0].mxu0 %v616
      %v2730 = vpop.f32.mrb[0].mxu0
      %v2731 = vadd.f32 0.0, %v2730
      %v2732 = vpop.f32.mrb[0].mxu0
      %v2733 = vpop.f32.mrb[0].mxu0
      %v2734 = vadd.f32 0.0, %v2733
      %v2735 = vpop.f32.mrb[0].mxu0
      %2736 = vmatprep.mubr.bf16.mxu0 0
      %2737 = vmatmul.mubr.bf16.gmra.mrb[0].mxu0 %v617
      %v2738 = vpop.f32.mrb[0].mxu0
      %v2739 = vadd.f32 0.0, %v2738
      %v2740 = vpop.f32.mrb[0].mxu0
      %v2741 = vpop.f32.mrb[0].mxu0
      %v2742 = vadd.f32 0.0, %v2741
      %v2743 = vpop.f32.mrb[0].mxu0
      %2744 = vmatprep.mubr.bf16.mxu0 0
      %2745 = vmatmul.mubr.bf16.gmra.mrb[0].mxu0 %v618
      %v2746 = vpop.f32.mrb[0].mxu0
      %v2747 = vadd.f32 0.0, %v2746
      %v2748 = vpop.f32.mrb[0].mxu0
      %v2749 = vpop.f32.mrb[0].mxu0
      %v2750 = vadd.f32 0.0, %v2749
      %v2751 = vpop.f32.mrb[0].mxu0
      %2752 = vmatprep.mubr.bf16.mxu0 0
      %2753 = vmatmul.mubr.bf16.gmra.mrb[0].mxu0 %v619
      %v2754 = vpop.f32.mrb[0].mxu0
      %v2755 = vadd.f32 0.0, %v2754
      %v2756 = vpop.f32.mrb[0].mxu0
      %v2757 = vpop.f32.mrb[0].mxu0
      %v2758 = vadd.f32 0.0, %v2757
      %v2759 = vpop.f32.mrb[0].mxu0
      %2760 = vmatprep.mubr.bf16.mxu0 0
      %2761 = vmatmul.mubr.bf16.gmra.mrb[0].mxu0 %v620
      %v2762 = vpop.f32.mrb[0].mxu0
      %v2763 = vadd.f32 0.0, %v2762
      %v2764 = vpop.f32.mrb[0].mxu0
      %v2765 = vpop.f32.mrb[0].mxu0
      %v2766 = vadd.f32 0.0, %v2765
      %v2767 = vpop.f32.mrb[0].mxu0
      %2768 = vmatprep.mubr.bf16.mxu0 0
      %2769 = vmatmul.mubr.bf16.gmra.mrb[0].mxu0 %v621
      %v2770 = vpop.f32.mrb[0].mxu0
      %v2771 = vadd.f32 0.0, %v2770
      %v2772 = vpop.f32.mrb[0].mxu0
      %v2773 = vpop.f32.mrb[0].mxu0
      %v2774 = vadd.f32 0.0, %v2773
      %v2775 = vpop.f32.mrb[0].mxu0
      %2776 = vmatprep.mubr.bf16.mxu0 0
      %2777 = vmatmul.mubr.bf16.gmra.mrb[0].mxu0 %v622
      %v2778 = vpop.f32.mrb[0].mxu0
      %v2779 = vadd.f32 0.0, %v2778
      %v2780 = vpop.f32.mrb[0].mxu0
      %v2781 = vpop.f32.mrb[0].mxu0
      %v2782 = vadd.f32 0.0, %v2781
      %v2783 = vpop.f32.mrb[0].mxu0
      %2784 = vmatprep.mubr.bf16.mxu0 0
      %2785 = vmatmul.mubr.bf16.gmra.mrb[0].mxu0 %v623
      %v2786 = vpop.f32.mrb[0].mxu0
      %v2787 = vadd.f32 0.0, %v2786
      %v2788 = vpop.f32.mrb[0].mxu0
      %v2789 = vpop.f32.mrb[0].mxu0
      %v2790 = vadd.f32 0.0, %v2789
      %v2791 = vpop.f32.mrb[0].mxu0
      %2792 = vmatprep.mubr.bf16.mxu0 0
      %2793 = vmatmul.mubr.bf16.gmra.mrb[0].mxu0 %v624
      %v2794 = vpop.f32.mrb[0].mxu0
      %v2795 = vadd.f32 0.0, %v2794
      %v2796 = vpop.f32.mrb[0].mxu0
      %v2797 = vpop.f32.mrb[0].mxu0
      %v2798 = vadd.f32 0.0, %v2797
      %v2799 = vpop.f32.mrb[0].mxu0
      %2800 = vmatprep.mubr.bf16.mxu0 0
      %2801 = vmatmul.mubr.bf16.gmra.mrb[0].mxu0 %v625
      %v2802 = vpop.f32.mrb[0].mxu0
      %v2803 = vadd.f32 0.0, %v2802
      %v2804 = vpop.f32.mrb[0].mxu0
      %v2805 = vpop.f32.mrb[0].mxu0
      %v2806 = vadd.f32 0.0, %v2805
      %v2807 = vpop.f32.mrb[0].mxu0
      %2808 = vmatprep.mubr.bf16.mxu0 0
      %2809 = vmatmul.mubr.bf16.gmra.mrb[0].mxu0 %v626
      %v2810 = vpop.f32.mrb[0].mxu0
      %v2811 = vadd.f32 0.0, %v2810
      %v2812 = vpop.f32.mrb[0].mxu0
      %v2813 = vpop.f32.mrb[0].mxu0
      %v2814 = vadd.f32 0.0, %v2813
      %v2815 = vpop.f32.mrb[0].mxu0
      %2816 = vmatprep.mubr.bf16.mxu0 0
      %2817 = vmatmul.mubr.bf16.gmra.mrb[0].mxu0 %v627
      %v2818 = vpop.f32.mrb[0].mxu0
      %v2819 = vadd.f32 0.0, %v2818
      %v2820 = vpop.f32.mrb[0].mxu0
      %v2821 = vpop.f32.mrb[0].mxu0
      %v2822 = vadd.f32 0.0, %v2821
      %v2823 = vpop.f32.mrb[0].mxu0
      %2824 = vmatprep.mubr.bf16.mxu0 0
      %2825 = vmatmul.mubr.bf16.gmra.mrb[0].mxu0 %v628
      %v2826 = vpop.f32.mrb[0].mxu0
      %v2827 = vadd.f32 0.0, %v2826
      %v2828 = vpop.f32.mrb[0].mxu0
      %v2829 = vpop.f32.mrb[0].mxu0
      %v2830 = vadd.f32 0.0, %v2829
      %v2831 = vpop.f32.mrb[0].mxu0
      %2832 = vmatprep.mubr.bf16.mxu0 0
      %2833 = vmatmul.mubr.bf16.gmra.mrb[0].mxu0 %v629
      %v2834 = vpop.f32.mrb[0].mxu0
      %v2835 = vadd.f32 0.0, %v2834
      %v2836 = vpop.f32.mrb[0].mxu0
      %v2837 = vpop.f32.mrb[0].mxu0
      %v2838 = vadd.f32 0.0, %v2837
      %v2839 = vpop.f32.mrb[0].mxu0
      %2840 = vmatprep.mubr.bf16.mxu0 0
      %2841 = vmatmul.mubr.bf16.gmra.mrb[0].mxu0 %v630
      %v2842 = vpop.f32.mrb[0].mxu0
      %v2843 = vadd.f32 0.0, %v2842
      %v2844 = vpop.f32.mrb[0].mxu0
      %v2845 = vpop.f32.mrb[0].mxu0
      %v2846 = vadd.f32 0.0, %v2845
      %v2847 = vpop.f32.mrb[0].mxu0
      %2848 = vdwg.mxu0
      %v2849 = vadd.f32 %v2591, %v2723
      %v2850 = vadd.f32 %v2592, %v2726
      %v2851 = vadd.f32 %v2593, %v2731
      %v2852 = vadd.f32 %v2594, %v2734
      %v2853 = vadd.f32 %v2595, %v2739
      %v2854 = vadd.f32 %v2596, %v2742
      %v2855 = vadd.f32 %v2597, %v2747
      %v2856 = vadd.f32 %v2598, %v2750
      %v2857 = vadd.f32 %v2599, %v2755
      %v2858 = vadd.f32 %v2600, %v2758
      %v2859 = vadd.f32 %v2601, %v2763
      %v2860 = vadd.f32 %v2602, %v2766
      %v2861 = vadd.f32 %v2603, %v2771
      %v2862 = vadd.f32 %v2604, %v2774
      %v2863 = vadd.f32 %v2605, %v2779
      %v2864 = vadd.f32 %v2606, %v2782
      %v2865 = vadd.f32 %v2607, %v2787
      %v2866 = vadd.f32 %v2608, %v2790
      %v2867 = vadd.f32 %v2609, %v2795
      %v2868 = vadd.f32 %v2610, %v2798
      %v2869 = vadd.f32 %v2611, %v2803
      %v2870 = vadd.f32 %v2612, %v2806
      %v2871 = vadd.f32 %v2613, %v2811
      %v2872 = vadd.f32 %v2614, %v2814
      %v2873 = vadd.f32 %v2615, %v2819
      %v2874 = vadd.f32 %v2616, %v2822
      %v2875 = vadd.f32 %v2617, %v2827
      %v2876 = vadd.f32 %v2618, %v2830
      %v2877 = vadd.f32 %v2619, %v2835
      %v2878 = vadd.f32 %v2620, %v2838
      %v2879 = vadd.f32 %v2621, %v2843
      %v2880 = vadd.f32 %v2622, %v2846
      %v2881 = vld [vmem:[%s3 + $0x200] sm:$0xf]
      %v2882 = vld [vmem:[%s3 + $0x204] sm:$0xf]
      %v2883 = vld [vmem:[%s3 + $0x208] sm:$0xf]
      %v2884 = vld [vmem:[%s3 + $0x20c] sm:$0xf]
      %v2885 = vld [vmem:[%s3 + $0x210] sm:$0xf]
      %v2886 = vld [vmem:[%s3 + $0x214] sm:$0xf]
      %v2887 = vld [vmem:[%s3 + $0x218] sm:$0xf]
      %v2888 = vld [vmem:[%s3 + $0x21c] sm:$0xf]
      %v2889 = vld [vmem:[%s3 + $0x220] sm:$0xf]
      %v2890 = vld [vmem:[%s3 + $0x224] sm:$0xf]
      %v2891 = vld [vmem:[%s3 + $0x228] sm:$0xf]
      %v2892 = vld [vmem:[%s3 + $0x22c] sm:$0xf]
      %v2893 = vld [vmem:[%s3 + $0x230] sm:$0xf]
      %v2894 = vld [vmem:[%s3 + $0x234] sm:$0xf]
      %v2895 = vld [vmem:[%s3 + $0x238] sm:$0xf]
      %v2896 = vld [vmem:[%s3 + $0x23c] sm:$0xf]
      %v2913 = vunpack.c.l.b16 %v2881
      %v2914 = vunpack.c.l.b16 %v2882
      %v2915 = vunpack.c.l.b16 %v2883
      %v2916 = vunpack.c.l.b16 %v2884
      %v2917 = vunpack.c.l.b16 %v2885
      %v2918 = vunpack.c.l.b16 %v2886
      %v2919 = vunpack.c.l.b16 %v2887
      %v2920 = vunpack.c.l.b16 %v2888
      %v2921 = vunpack.c.l.b16 %v2889
      %v2922 = vunpack.c.l.b16 %v2890
      %v2923 = vunpack.c.l.b16 %v2891
      %v2924 = vunpack.c.l.b16 %v2892
      %v2925 = vunpack.c.l.b16 %v2893
      %v2926 = vunpack.c.l.b16 %v2894
      %v2927 = vunpack.c.l.b16 %v2895
      %v2928 = vunpack.c.l.b16 %v2896
      %v2929 = vpack.c.b16 %v2914, %v2913
      %v2930 = vpack.c.b16 %v2916, %v2915
      %v2931 = vpack.c.b16 %v2918, %v2917
      %v2932 = vpack.c.b16 %v2920, %v2919
      %v2933 = vpack.c.b16 %v2922, %v2921
      %v2934 = vpack.c.b16 %v2924, %v2923
      %v2935 = vpack.c.b16 %v2926, %v2925
      %v2936 = vpack.c.b16 %v2928, %v2927
      %2945 = vmatprep.subr.bf16.mxu0 0
      %2946 = vmatpush1.bf16.msra.mxu0 %v2929
      %2947 = vmatprep.subr.bf16.mxu0 0
      %2948 = vmatpush1.bf16.msra.mxu0 %v2930
      %2949 = vmatprep.subr.bf16.mxu0 0
      %2950 = vmatpush1.bf16.msra.mxu0 %v2931
      %2951 = vmatprep.subr.bf16.mxu0 0
      %2952 = vmatpush1.bf16.msra.mxu0 %v2932
      %2953 = vmatprep.subr.bf16.mxu0 0
      %2954 = vmatpush1.bf16.msra.mxu0 %v2933
      %2955 = vmatprep.subr.bf16.mxu0 0
      %2956 = vmatpush1.bf16.msra.mxu0 %v2934
      %2957 = vmatprep.subr.bf16.mxu0 0
      %2958 = vmatpush1.bf16.msra.mxu0 %v2935
      %2959 = vmatprep.subr.bf16.mxu0 0
      %2960 = vmatpush1.bf16.msra.mxu0 %v2936
      %2961 = vmatprep.subr.bf16.mxu0 0
      %2962 = vmatpush1.bf16.msra.mxu0 0
      %2963 = vmatprep.subr.bf16.mxu0 0
      %2964 = vmatpush1.bf16.msra.mxu0 0
      %2965 = vmatprep.subr.bf16.mxu0 0
      %2966 = vmatpush1.bf16.msra.mxu0 0
      %2967 = vmatprep.subr.bf16.mxu0 0
      %2968 = vmatpush1.bf16.msra.mxu0 0
      %2969 = vmatprep.subr.bf16.mxu0 0
      %2970 = vmatpush1.bf16.msra.mxu0 0
      %2971 = vmatprep.subr.bf16.mxu0 0
      %2972 = vmatpush1.bf16.msra.mxu0 0
      %2973 = vmatprep.subr.bf16.mxu0 0
      %2974 = vmatpush1.bf16.msra.mxu0 0
      %2975 = vmatprep.subr.bf16.mxu0 0
      %2976 = vmatpush1.bf16.msra.mxu0 0
      %2977 = vmatprep.mubr.bf16.mxu0 0
      %2978 = vmatmul.mubr.bf16.gmra.mrb[0].mxu0 %v855
      %v2979 = vpop.f32.mrb[0].mxu0
      %v2980 = vadd.f32 0.0, %v2979
      %v2981 = vpop.f32.mrb[0].mxu0
      %v2982 = vpop.f32.mrb[0].mxu0
      %v2983 = vadd.f32 0.0, %v2982
      %v2984 = vpop.f32.mrb[0].mxu0
      %2985 = vmatprep.mubr.bf16.mxu0 0
      %2986 = vmatmul.mubr.bf16.gmra.mrb[0].mxu0 %v856
      %v2987 = vpop.f32.mrb[0].mxu0
      %v2988 = vadd.f32 0.0, %v2987
      %v2989 = vpop.f32.mrb[0].mxu0
      %v2990 = vpop.f32.mrb[0].mxu0
      %v2991 = vadd.f32 0.0, %v2990
      %v2992 = vpop.f32.mrb[0].mxu0
      %2993 = vmatprep.mubr.bf16.mxu0 0
      %2994 = vmatmul.mubr.bf16.gmra.mrb[0].mxu0 %v857
      %v2995 = vpop.f32.mrb[0].mxu0
      %v2996 = vadd.f32 0.0, %v2995
      %v2997 = vpop.f32.mrb[0].mxu0
      %v2998 = vpop.f32.mrb[0].mxu0
      %v2999 = vadd.f32 0.0, %v2998
      %v3000 = vpop.f32.mrb[0].mxu0
      %3001 = vmatprep.mubr.bf16.mxu0 0
      %3002 = vmatmul.mubr.bf16.gmra.mrb[0].mxu0 %v858
      %v3003 = vpop.f32.mrb[0].mxu0
      %v3004 = vadd.f32 0.0, %v3003
      %v3005 = vpop.f32.mrb[0].mxu0
      %v3006 = vpop.f32.mrb[0].mxu0
      %v3007 = vadd.f32 0.0, %v3006
      %v3008 = vpop.f32.mrb[0].mxu0
      %3009 = vmatprep.mubr.bf16.mxu0 0
      %3010 = vmatmul.mubr.bf16.gmra.mrb[0].mxu0 %v859
      %v3011 = vpop.f32.mrb[0].mxu0
      %v3012 = vadd.f32 0.0, %v3011
      %v3013 = vpop.f32.mrb[0].mxu0
      %v3014 = vpop.f32.mrb[0].mxu0
      %v3015 = vadd.f32 0.0, %v3014
      %v3016 = vpop.f32.mrb[0].mxu0
      %3017 = vmatprep.mubr.bf16.mxu0 0
      %3018 = vmatmul.mubr.bf16.gmra.mrb[0].mxu0 %v860
      %v3019 = vpop.f32.mrb[0].mxu0
      %v3020 = vadd.f32 0.0, %v3019
      %v3021 = vpop.f32.mrb[0].mxu0
      %v3022 = vpop.f32.mrb[0].mxu0
      %v3023 = vadd.f32 0.0, %v3022
      %v3024 = vpop.f32.mrb[0].mxu0
      %3025 = vmatprep.mubr.bf16.mxu0 0
      %3026 = vmatmul.mubr.bf16.gmra.mrb[0].mxu0 %v861
      %v3027 = vpop.f32.mrb[0].mxu0
      %v3028 = vadd.f32 0.0, %v3027
      %v3029 = vpop.f32.mrb[0].mxu0
      %v3030 = vpop.f32.mrb[0].mxu0
      %v3031 = vadd.f32 0.0, %v3030
      %v3032 = vpop.f32.mrb[0].mxu0
      %3033 = vmatprep.mubr.bf16.mxu0 0
      %3034 = vmatmul.mubr.bf16.gmra.mrb[0].mxu0 %v862
      %v3035 = vpop.f32.mrb[0].mxu0
      %v3036 = vadd.f32 0.0, %v3035
      %v3037 = vpop.f32.mrb[0].mxu0
      %v3038 = vpop.f32.mrb[0].mxu0
      %v3039 = vadd.f32 0.0, %v3038
      %v3040 = vpop.f32.mrb[0].mxu0
      %3041 = vmatprep.mubr.bf16.mxu0 0
      %3042 = vmatmul.mubr.bf16.gmra.mrb[0].mxu0 %v863
      %v3043 = vpop.f32.mrb[0].mxu0
      %v3044 = vadd.f32 0.0, %v3043
      %v3045 = vpop.f32.mrb[0].mxu0
      %v3046 = vpop.f32.mrb[0].mxu0
      %v3047 = vadd.f32 0.0, %v3046
      %v3048 = vpop.f32.mrb[0].mxu0
      %3049 = vmatprep.mubr.bf16.mxu0 0
      %3050 = vmatmul.mubr.bf16.gmra.mrb[0].mxu0 %v864
      %v3051 = vpop.f32.mrb[0].mxu0
      %v3052 = vadd.f32 0.0, %v3051
      %v3053 = vpop.f32.mrb[0].mxu0
      %v3054 = vpop.f32.mrb[0].mxu0
      %v3055 = vadd.f32 0.0, %v3054
      %v3056 = vpop.f32.mrb[0].mxu0
      %3057 = vmatprep.mubr.bf16.mxu0 0
      %3058 = vmatmul.mubr.bf16.gmra.mrb[0].mxu0 %v865
      %v3059 = vpop.f32.mrb[0].mxu0
      %v3060 = vadd.f32 0.0, %v3059
      %v3061 = vpop.f32.mrb[0].mxu0
      %v3062 = vpop.f32.mrb[0].mxu0
      %v3063 = vadd.f32 0.0, %v3062
      %v3064 = vpop.f32.mrb[0].mxu0
      %3065 = vmatprep.mubr.bf16.mxu0 0
      %3066 = vmatmul.mubr.bf16.gmra.mrb[0].mxu0 %v866
      %v3067 = vpop.f32.mrb[0].mxu0
      %v3068 = vadd.f32 0.0, %v3067
      %v3069 = vpop.f32.mrb[0].mxu0
      %v3070 = vpop.f32.mrb[0].mxu0
      %v3071 = vadd.f32 0.0, %v3070
      %v3072 = vpop.f32.mrb[0].mxu0
      %3073 = vmatprep.mubr.bf16.mxu0 0
      %3074 = vmatmul.mubr.bf16.gmra.mrb[0].mxu0 %v867
      %v3075 = vpop.f32.mrb[0].mxu0
      %v3076 = vadd.f32 0.0, %v3075
      %v3077 = vpop.f32.mrb[0].mxu0
      %v3078 = vpop.f32.mrb[0].mxu0
      %v3079 = vadd.f32 0.0, %v3078
      %v3080 = vpop.f32.mrb[0].mxu0
      %3081 = vmatprep.mubr.bf16.mxu0 0
      %3082 = vmatmul.mubr.bf16.gmra.mrb[0].mxu0 %v868
      %v3083 = vpop.f32.mrb[0].mxu0
      %v3084 = vadd.f32 0.0, %v3083
      %v3085 = vpop.f32.mrb[0].mxu0
      %v3086 = vpop.f32.mrb[0].mxu0
      %v3087 = vadd.f32 0.0, %v3086
      %v3088 = vpop.f32.mrb[0].mxu0
      %3089 = vmatprep.mubr.bf16.mxu0 0
      %3090 = vmatmul.mubr.bf16.gmra.mrb[0].mxu0 %v869
      %v3091 = vpop.f32.mrb[0].mxu0
      %v3092 = vadd.f32 0.0, %v3091
      %v3093 = vpop.f32.mrb[0].mxu0
      %v3094 = vpop.f32.mrb[0].mxu0
      %v3095 = vadd.f32 0.0, %v3094
      %v3096 = vpop.f32.mrb[0].mxu0
      %3097 = vmatprep.mubr.bf16.mxu0 0
      %3098 = vmatmul.mubr.bf16.gmra.mrb[0].mxu0 %v870
      %v3099 = vpop.f32.mrb[0].mxu0
      %v3100 = vadd.f32 0.0, %v3099
      %v3101 = vpop.f32.mrb[0].mxu0
      %v3102 = vpop.f32.mrb[0].mxu0
      %v3103 = vadd.f32 0.0, %v3102
      %v3104 = vpop.f32.mrb[0].mxu0
      %3105 = vdwg.mxu0
      %v3106 = vadd.f32 %v2849, %v2980
      %v3107 = vadd.f32 %v2850, %v2983
      %v3108 = vadd.f32 %v2851, %v2988
      %v3109 = vadd.f32 %v2852, %v2991
      %v3110 = vadd.f32 %v2853, %v2996
      %v3111 = vadd.f32 %v2854, %v2999
      %v3112 = vadd.f32 %v2855, %v3004
      %v3113 = vadd.f32 %v2856, %v3007
      %v3114 = vadd.f32 %v2857, %v3012
      %v3115 = vadd.f32 %v2858, %v3015
      %v3116 = vadd.f32 %v2859, %v3020
      %v3117 = vadd.f32 %v2860, %v3023
      %v3118 = vadd.f32 %v2861, %v3028
      %v3119 = vadd.f32 %v2862, %v3031
      %v3120 = vadd.f32 %v2863, %v3036
      %v3121 = vadd.f32 %v2864, %v3039
      %v3122 = vadd.f32 %v2865, %v3044
      %v3123 = vadd.f32 %v2866, %v3047
      %v3124 = vadd.f32 %v2867, %v3052
      %v3125 = vadd.f32 %v2868, %v3055
      %v3126 = vadd.f32 %v2869, %v3060
      %v3127 = vadd.f32 %v2870, %v3063
      %v3128 = vadd.f32 %v2871, %v3068
      %v3129 = vadd.f32 %v2872, %v3071
      %v3130 = vadd.f32 %v2873, %v3076
      %v3131 = vadd.f32 %v2874, %v3079
      %v3132 = vadd.f32 %v2875, %v3084
      %v3133 = vadd.f32 %v2876, %v3087
      %v3134 = vadd.f32 %v2877, %v3092
      %v3135 = vadd.f32 %v2878, %v3095
      %v3136 = vadd.f32 %v2879, %v3100
      %v3137 = vadd.f32 %v2880, %v3103
      %v3138 = vpack.c.bf16 %v3107, %v3106
      %v3139 = vpack.c.bf16 %v3109, %v3108
      %v3140 = vpack.c.bf16 %v3111, %v3110
      %v3141 = vpack.c.bf16 %v3113, %v3112
      %v3142 = vpack.c.bf16 %v3115, %v3114
      %v3143 = vpack.c.bf16 %v3117, %v3116
      %v3144 = vpack.c.bf16 %v3119, %v3118
      %v3145 = vpack.c.bf16 %v3121, %v3120
      %v3146 = vpack.c.bf16 %v3123, %v3122
      %v3147 = vpack.c.bf16 %v3125, %v3124
      %v3148 = vpack.c.bf16 %v3127, %v3126
      %v3149 = vpack.c.bf16 %v3129, %v3128
      %v3150 = vpack.c.bf16 %v3131, %v3130
      %v3151 = vpack.c.bf16 %v3133, %v3132
      %v3152 = vpack.c.bf16 %v3135, %v3134
      %v3153 = vpack.c.bf16 %v3137, %v3136
      %v3170 = vunpack.c.l.b16 %v3138
      %v3171 = vunpack.c.h.b16 %v3138
      %v3172 = vunpack.c.l.b16 %v3139
      %v3173 = vunpack.c.h.b16 %v3139
      %v3174 = vunpack.c.l.b16 %v3140
      %v3175 = vunpack.c.h.b16 %v3140
      %v3176 = vunpack.c.l.b16 %v3141
      %v3177 = vunpack.c.h.b16 %v3141
      %v3178 = vunpack.c.l.b16 %v3142
      %v3179 = vunpack.c.h.b16 %v3142
      %v3180 = vunpack.c.l.b16 %v3143
      %v3181 = vunpack.c.h.b16 %v3143
      %v3182 = vunpack.c.l.b16 %v3144
      %v3183 = vunpack.c.h.b16 %v3144
      %v3184 = vunpack.c.l.b16 %v3145
      %v3185 = vunpack.c.h.b16 %v3145
      %v3186 = vunpack.c.l.b16 %v3146
      %v3187 = vunpack.c.h.b16 %v3146
      %v3188 = vunpack.c.l.b16 %v3147
      %v3189 = vunpack.c.h.b16 %v3147
      %v3190 = vunpack.c.l.b16 %v3148
      %v3191 = vunpack.c.h.b16 %v3148
      %v3192 = vunpack.c.l.b16 %v3149
      %v3193 = vunpack.c.h.b16 %v3149
      %v3194 = vunpack.c.l.b16 %v3150
      %v3195 = vunpack.c.h.b16 %v3150
      %v3196 = vunpack.c.l.b16 %v3151
      %v3197 = vunpack.c.h.b16 %v3151
      %v3198 = vunpack.c.l.b16 %v3152
      %v3199 = vunpack.c.h.b16 %v3152
      %v3200 = vunpack.c.l.b16 %v3153
      %v3201 = vunpack.c.h.b16 %v3153
      %v3202 = vpack.c.b16 %v3170, %v3170
      %v3203 = vpack.c.b16 %v3171, %v3171
      %v3204 = vpack.c.b16 %v3172, %v3172
      %v3205 = vpack.c.b16 %v3173, %v3173
      %v3206 = vpack.c.b16 %v3174, %v3174
      %v3207 = vpack.c.b16 %v3175, %v3175
      %v3208 = vpack.c.b16 %v3176, %v3176
      %v3209 = vpack.c.b16 %v3177, %v3177
      %v3210 = vpack.c.b16 %v3178, %v3178
      %v3211 = vpack.c.b16 %v3179, %v3179
      %v3212 = vpack.c.b16 %v3180, %v3180
      %v3213 = vpack.c.b16 %v3181, %v3181
      %v3214 = vpack.c.b16 %v3182, %v3182
      %v3215 = vpack.c.b16 %v3183, %v3183
      %v3216 = vpack.c.b16 %v3184, %v3184
      %v3217 = vpack.c.b16 %v3185, %v3185
      %v3218 = vpack.c.b16 %v3186, %v3186
      %v3219 = vpack.c.b16 %v3187, %v3187
      %v3220 = vpack.c.b16 %v3188, %v3188
      %v3221 = vpack.c.b16 %v3189, %v3189
      %v3222 = vpack.c.b16 %v3190, %v3190
      %v3223 = vpack.c.b16 %v3191, %v3191
      %v3224 = vpack.c.b16 %v3192, %v3192
      %v3225 = vpack.c.b16 %v3193, %v3193
      %v3226 = vpack.c.b16 %v3194, %v3194
      %v3227 = vpack.c.b16 %v3195, %v3195
      %v3228 = vpack.c.b16 %v3196, %v3196
      %v3229 = vpack.c.b16 %v3197, %v3197
      %v3230 = vpack.c.b16 %v3198, %v3198
      %v3231 = vpack.c.b16 %v3199, %v3199
      %v3232 = vpack.c.b16 %v3200, %v3200
      %v3233 = vpack.c.b16 %v3201, %v3201
      %3266 = vst [vmem:[%s457] sm:$0xf] %v3202
      %3267 = vst [vmem:[%s457 + $0x4] sm:$0xf] %v3203
      %3268 = vst [vmem:[%s457 + $0x8] sm:$0xf] %v3204
      %3269 = vst [vmem:[%s457 + $0xc] sm:$0xf] %v3205
      %3270 = vst [vmem:[%s457 + $0x10] sm:$0xf] %v3206
      %3271 = vst [vmem:[%s457 + $0x14] sm:$0xf] %v3207
      %3272 = vst [vmem:[%s457 + $0x18] sm:$0xf] %v3208
      %3273 = vst [vmem:[%s457 + $0x1c] sm:$0xf] %v3209
      %3274 = vst [vmem:[%s457 + $0x20] sm:$0xf] %v3210
      %3275 = vst [vmem:[%s457 + $0x24] sm:$0xf] %v3211
      %3276 = vst [vmem:[%s457 + $0x28] sm:$0xf] %v3212
      %3277 = vst [vmem:[%s457 + $0x2c] sm:$0xf] %v3213
      %3278 = vst [vmem:[%s457 + $0x30] sm:$0xf] %v3214
      %3279 = vst [vmem:[%s457 + $0x34] sm:$0xf] %v3215
      %3280 = vst [vmem:[%s457 + $0x38] sm:$0xf] %v3216
      %3281 = vst [vmem:[%s457 + $0x3c] sm:$0xf] %v3217
      %3282 = vst [vmem:[%s457 + $0x40] sm:$0xf] %v3218
      %3283 = vst [vmem:[%s457 + $0x44] sm:$0xf] %v3219
      %3284 = vst [vmem:[%s457 + $0x48] sm:$0xf] %v3220
      %3285 = vst [vmem:[%s457 + $0x4c] sm:$0xf] %v3221
      %3286 = vst [vmem:[%s457 + $0x50] sm:$0xf] %v3222
      %3287 = vst [vmem:[%s457 + $0x54] sm:$0xf] %v3223
      %3288 = vst [vmem:[%s457 + $0x58] sm:$0xf] %v3224
      %3289 = vst [vmem:[%s457 + $0x5c] sm:$0xf] %v3225
      %3290 = vst [vmem:[%s457 + $0x60] sm:$0xf] %v3226
      %3291 = vst [vmem:[%s457 + $0x64] sm:$0xf] %v3227
      %3292 = vst [vmem:[%s457 + $0x68] sm:$0xf] %v3228
      %3293 = vst [vmem:[%s457 + $0x6c] sm:$0xf] %v3229
      %3294 = vst [vmem:[%s457 + $0x70] sm:$0xf] %v3230
      %3295 = vst [vmem:[%s457 + $0x74] sm:$0xf] %v3231
      %3296 = vst [vmem:[%s457 + $0x78] sm:$0xf] %v3232
      %3297 = vst [vmem:[%s457 + $0x7c] sm:$0xf] %v3233
      %v3298 = vadd.f32 %v3106, %v3107
      %v3299 = vadd.f32 %v3298, %v3108
      %v3300 = vadd.f32 %v3299, %v3109
      %v3301 = vadd.f32 %v3300, %v3110
      %v3302 = vadd.f32 %v3301, %v3111
      %v3303 = vadd.f32 %v3302, %v3112
      %v3304 = vadd.f32 %v3303, %v3113
      %v3305 = vadd.f32 %v3304, %v3114
      %v3306 = vadd.f32 %v3305, %v3115
      %v3307 = vadd.f32 %v3306, %v3116
      %v3308 = vadd.f32 %v3307, %v3117
      %v3309 = vadd.f32 %v3308, %v3118
      %v3310 = vadd.f32 %v3309, %v3119
      %v3311 = vadd.f32 %v3310, %v3120
      %v3312 = vadd.f32 %v3311, %v3121
      %v3313 = vadd.f32 %v3312, %v3122
      %v3314 = vadd.f32 %v3313, %v3123
      %v3315 = vadd.f32 %v3314, %v3124
      %v3316 = vadd.f32 %v3315, %v3125
      %v3317 = vadd.f32 %v3316, %v3126
      %v3318 = vadd.f32 %v3317, %v3127
      %v3319 = vadd.f32 %v3318, %v3128
      %v3320 = vadd.f32 %v3319, %v3129
      %v3321 = vadd.f32 %v3320, %v3130
      %v3322 = vadd.f32 %v3321, %v3131
      %v3323 = vadd.f32 %v3322, %v3132
      %v3324 = vadd.f32 %v3323, %v3133
      %v3325 = vadd.f32 %v3324, %v3134
      %v3326 = vadd.f32 %v3325, %v3135
      %v3327 = vadd.f32 %v3326, %v3136
      %v3328 = vadd.f32 %v3327, %v3137
      %v3329 = vrot.slane %v3328, 4
      %v3330 = vadd.f32 %v3328, %v3329
      %v3331 = vrot.slane %v3330, 2
      %v3332 = vadd.f32 %v3330, %v3331
      %v3333 = vrot.slane %v3332, 1
      %v3334 = vadd.f32 %v3332, %v3333
      %v3335 = vmul.f32 %v3106, %v3106
      %v3336 = vmul.f32 %v3107, %v3107
      %v3337 = vmul.f32 %v3108, %v3108
      %v3338 = vmul.f32 %v3109, %v3109
      %v3339 = vmul.f32 %v3110, %v3110
      %v3340 = vmul.f32 %v3111, %v3111
      %v3341 = vmul.f32 %v3112, %v3112
      %v3342 = vmul.f32 %v3113, %v3113
      %v3343 = vmul.f32 %v3114, %v3114
      %v3344 = vmul.f32 %v3115, %v3115
      %v3345 = vmul.f32 %v3116, %v3116
      %v3346 = vmul.f32 %v3117, %v3117
      %v3347 = vmul.f32 %v3118, %v3118
      %v3348 = vmul.f32 %v3119, %v3119
      %v3349 = vmul.f32 %v3120, %v3120
      %v3350 = vmul.f32 %v3121, %v3121
      %v3351 = vmul.f32 %v3122, %v3122
      %v3352 = vmul.f32 %v3123, %v3123
      %v3353 = vmul.f32 %v3124, %v3124
      %v3354 = vmul.f32 %v3125, %v3125
      %v3355 = vmul.f32 %v3126, %v3126
      %v3356 = vmul.f32 %v3127, %v3127
      %v3357 = vmul.f32 %v3128, %v3128
      %v3358 = vmul.f32 %v3129, %v3129
      %v3359 = vmul.f32 %v3130, %v3130
      %v3360 = vmul.f32 %v3131, %v3131
      %v3361 = vmul.f32 %v3132, %v3132
      %v3362 = vmul.f32 %v3133, %v3133
      %v3363 = vmul.f32 %v3134, %v3134
      %v3364 = vmul.f32 %v3135, %v3135
      %v3365 = vmul.f32 %v3136, %v3136
      %v3366 = vmul.f32 %v3137, %v3137
      %v3367 = vadd.f32 %v3335, %v3336
      %v3368 = vadd.f32 %v3367, %v3337
      %v3369 = vadd.f32 %v3368, %v3338
      %v3370 = vadd.f32 %v3369, %v3339
      %v3371 = vadd.f32 %v3370, %v3340
      %v3372 = vadd.f32 %v3371, %v3341
      %v3373 = vadd.f32 %v3372, %v3342
      %v3374 = vadd.f32 %v3373, %v3343
      %v3375 = vadd.f32 %v3374, %v3344
      %v3376 = vadd.f32 %v3375, %v3345
      %v3377 = vadd.f32 %v3376, %v3346
      %v3378 = vadd.f32 %v3377, %v3347
      %v3379 = vadd.f32 %v3378, %v3348
      %v3380 = vadd.f32 %v3379, %v3349
      %v3381 = vadd.f32 %v3380, %v3350
      %v3382 = vadd.f32 %v3381, %v3351
      %v3383 = vadd.f32 %v3382, %v3352
      %v3384 = vadd.f32 %v3383, %v3353
      %v3385 = vadd.f32 %v3384, %v3354
      %v3386 = vadd.f32 %v3385, %v3355
      %v3387 = vadd.f32 %v3386, %v3356
      %v3388 = vadd.f32 %v3387, %v3357
      %v3389 = vadd.f32 %v3388, %v3358
      %v3390 = vadd.f32 %v3389, %v3359
      %v3391 = vadd.f32 %v3390, %v3360
      %v3392 = vadd.f32 %v3391, %v3361
      %v3393 = vadd.f32 %v3392, %v3362
      %v3394 = vadd.f32 %v3393, %v3363
      %v3395 = vadd.f32 %v3394, %v3364
      %v3396 = vadd.f32 %v3395, %v3365
      %v3397 = vadd.f32 %v3396, %v3366
      %v3398 = vrot.slane %v3397, 4
      %v3399 = vadd.f32 %v3397, %v3398
      %v3400 = vrot.slane %v3399, 2
      %v3401 = vadd.f32 %v3399, %v3400
      %v3402 = vrot.slane %v3401, 1
      %v3403 = vadd.f32 %v3401, %v3402
      %vm3404 = vcmask 1040384
      %v3405 = vsel %vm3404, %v3334, %v3403
      %vm3406 = vcmask 1041408
      %v3407 = vsel %vm3406, %v3405, 0.0
      %3408 = vst [vmem:[%s465] sm:$0xff] %v3407
      %s3409 = smul.u32 16, %s24
      %p3410 = scmp.lt.s32.totalorder %s23, 1
      %s3411 = scalar_select %p3410, %s23, 1
      %p3412 = scmp.lt.s32.totalorder %s3409, 15
      %s3413 = scalar_select %p3412, %s3409, 15
      %s3414 = smul.addr %s3413, 2
      %s3415 = smul.addr %s3411, 32
      %s3416 = sadd.s32 %s3414, %s3415
      %s3417 = smul.addr %s3416, 4
      %s3418 = scalar_lea.vmem %s6, %s3417
      %p3419 = scmp.lt.s32.totalorder %s23, 1
      %s3420 = scalar_select %p3419, %s23, 1
      %p3421 = scmp.lt.s32.totalorder %s24, 0
      %s3422 = scalar_select %p3421, %s24, 0
      %s3423 = sadd.s32 %s3422, %s3420
      %s3424 = smul.addr %s3423, 8
      %s3425 = scalar_lea.vmem %s7, %s3424
      // Predicated region
      $region45: #{up_forward.3} parent=43 // pred_check
        %p3426 = pneg %p214
      $region46: #{up_forward.3} parent=43 // pred_check_branch
        %3428 = sbr.rel (%p3426) target = $region48
      $region47: #{up_forward.3} parent=43 // pred_region
        %s3429 = smul.u32 16, %s24
      $region48: #{up_forward.3} parent=43 // pred_fallthru
        _
      // Predicated region
      $region49: #{up_forward.3} parent=43 // pred_check
        %p3430 = pneg %p242
      $region50: #{up_forward.3} parent=43 // pred_check_branch
        %3432 = sbr.rel (%p3430) target = $region52
      $region51: #{up_forward.3} parent=43 // pred_region
        _
      $region52: #{up_forward.3} parent=43 // pred_fallthru
        _
    $region44: #{up_forward.3} parent=5 // pred_fallthru
      _
    %p3433 = scmp.le.s32.totalorder 2, %s14
    // Predicated region
    $region53: #{up_forward.3} parent=5 // pred_check
      %p3434 = pneg %p3433
    $region54: #{up_forward.3} parent=5 // pred_check_branch
      %3436 = sbr.rel (%p3434) target = $region56
    $region55: #{up_forward.3} parent=5 // pred_region
      %s3437 = ssub.s32 %s14, 2
      // Predicated region
      $region57: #{up_forward.3} parent=55 // pred_check
        %p3438 = pneg %p220
      $region58: #{up_forward.3} parent=55 // pred_check_branch
        %3440 = sbr.rel (%p3438) target = $region60
      $region59: #{up_forward.3} parent=55 // pred_region
        %s3441 = smul.u32 16, %s26
        %p3442 = scmp.lt.s32.totalorder %s25, 1
        %s3443 = scalar_select %p3442, %s25, 1
        %p3444 = scmp.lt.s32.totalorder %s3441, 15
        %s3445 = scalar_select %p3444, %s3441, 15
        %s3446 = smul.addr %s3445, 2
        %s3447 = smul.addr %s3443, 32
        %s3448 = sadd.s32 %s3446, %s3447
        %s3449 = smul.addr %s3448, 4
        %s3450 = scalar_lea.vmem %s6, %s3449
      $region60: #{up_forward.3} parent=55 // pred_fallthru
        _
      // Predicated region
      $region61: #{up_forward.3} parent=55 // pred_check
        %p3451 = pneg %p248
      $region62: #{up_forward.3} parent=55 // pred_check_branch
        %3453 = sbr.rel (%p3451) target = $region64
      $region63: #{up_forward.3} parent=55 // pred_region
        %p3454 = scmp.lt.s32.totalorder %s25, 1
        %s3455 = scalar_select %p3454, %s25, 1
        %p3456 = scmp.lt.s32.totalorder %s26, 0
        %s3457 = scalar_select %p3456, %s26, 0
        %s3458 = sadd.s32 %s3457, %s3455
        %s3459 = smul.addr %s3458, 8
        %s3460 = scalar_lea.vmem %s7, %s3459
      $region64: #{up_forward.3} parent=55 // pred_fallthru
        _
    $region56: #{up_forward.3} parent=5 // pred_fallthru
      _
  $region6: #{up_forward.3} parent=0 // loop_footer
    %s18 = sadd.s32 1, %s14
  $region7: #{up_forward.3} parent=0 // loop_footer_branch
    %13 = sbr.rel target = $region3
  $region8: #{up_forward.3} parent=0 // loop_exit
    _

// kernel: up_forward.4
$region0: #{up_forward.4}
  #allocation0 [shape = 'u32[]', space=smem, size = 0x4, offset = 0x4, fixed_abs, tag = 'smem constant byte address 0x4 - core index']
  #allocation1 [shape = 'u32[144,128]{1,0:T(1,128)}', space=vmem, size = 0x12000, scoped, tag = 'internal scratch']
  %s0 = inlined_call_operand.vmem [shape: bf16[2,16,16,128], index: 0, kind: input, shape index: {}, may-alias: {0,1,2}]
  %s1 = inlined_call_operand.vmem [shape: bf16[2,16,16,128], index: 1, kind: input, shape index: {}, may-alias: {0,1,2}]
  %s2 = inlined_call_operand.vmem [shape: bf16[2,16,16,128], index: 2, kind: input, shape index: {}, may-alias: {0,1,2}]
  %s3 = inlined_call_operand.vmem [shape: bf16[1152,128], index: 3, kind: input, shape index: {}]
  %s4 = inlined_call_operand.vmem [shape: f32[1,128], index: 4, kind: input, shape index: {}]
  %s5 = inlined_call_operand.vmem [shape: f32[1,128], index: 5, kind: input, shape index: {}]
  %s6 = inlined_call_operand.vmem [shape: bf16[2,16,16,128], index: 6, kind: output, shape index: {0}]
  %s7 = inlined_call_operand.vmem [shape: f32[2,1,8,128], index: 7, kind: output, shape index: {1}]
  %8 = xla_tuple %s6, %s7
  %s9 = sld [smem:[#allocation0]]
  $region65: #{up_forward.4} parent=0
    _
  %s11 = ssub.s32 1, %s9
  %s12 = scalar_select 0, %s11, %s9
  loop: start=0, step=1, limit=4
  $region2: #{up_forward.4} parent=0 // loop_pre_header
    _
  $region3: #{up_forward.4} parent=0 // loop_header
    %s14 = sphi 0, %s18
    %p15 = scmp.ge.s32.totalorder %s14, 4
    %s21 = sphi 0, %s33
    %s22 = sphi 0, %s29
    %s23 = sphi 0, %s21
    %s24 = sphi 0, %s22
    %s25 = sphi 0, %s23
    %s26 = sphi 0, %s24
    %s38 = sphi 0, %s40
    %s41 = sphi 0, %s38
    %s42 = sphi 0, %s41
    %s58 = sphi 0, %s42
    %s74 = sphi 0, %s76
    %s77 = sphi 0, %s74
    %s78 = sphi 0, %s77
    %s94 = sphi 0, %s78
    %s110 = sphi 0, %s112
    %s113 = sphi 0, %s110
    %s114 = sphi 0, %s113
    %s130 = sphi 0, %s114
    %s134 = sphi 0, %s134
    %s136 = sphi 0, %s134
    %s137 = sphi 0, %s136
    %s151 = sphi 0, %s137
    %s155 = sphi 0, %s155
    %s157 = sphi 0, %s155
    %s158 = sphi 0, %s157
    %s172 = sphi 0, %s158
    %s176 = sphi 0, %s176
    %s178 = sphi 0, %s176
    %s179 = sphi 0, %s178
    %s193 = sphi 0, %s179
    %s201 = sphi 0, %s203
    %s204 = sphi 0, %s201
    %s205 = sphi 0, %s204
    %s221 = sphi 0, %s205
    %s229 = sphi 0, %s231
    %s232 = sphi 0, %s229
    %s233 = sphi 0, %s232
    %s249 = sphi 0, %s233
  $region4: #{up_forward.4} parent=0 // loop_header_branch
    %17 = sbr.rel (%p15) target = $region8
  $region5: #{up_forward.4} parent=0 // loop_body
    %s19 = ssub.s32 %s14, 1
    %s20 = ssub.s32 %s14, 2
    %s27 = sadd.s32 1, %s22
    %p28 = scmp.ge.s32.totalorder %s27, 1
    %s29 = scalar_select %p28, 0, %s27
    %s30 = sadd.s32 1, %s21
    %s31 = scalar_select %p28, %s30, %s21
    %p32 = scmp.ge.s32.totalorder %s31, 2
    %s33 = scalar_select %p32, 0, %s31
    %s34 = ssub.s32 %s21, %s33
    %s35 = ssub.s32 %s22, %s29
    %s36 = sor.u32 %s34, %s35
    %p37 = scmp.eq.s32.totalorder %s36, 0
    %s39 = sadd.s32 %s38, 1
    %s40 = scalar_select %p37, %s38, %s39
    %p43 = pneg %p37
    %p44 = scmp.eq.s32.totalorder %s14, 1
    %p45 = por %p43, %p44
    %p46 = scmp.ne.s32.totalorder %s38, %s41
    %p47 = scmp.eq.s32.totalorder %s14, 0
    %p48 = por %p46, %p47
    %p49 = scmp.ne.s32.totalorder %s38, %s41
    %p50 = scmp.eq.s32.totalorder %s19, 1
    %p51 = por %p49, %p50
    %p52 = scmp.ne.s32.totalorder %s41, %s42
    %p53 = scmp.eq.s32.totalorder %s19, 0
    %p54 = por %p52, %p53
    %p55 = scmp.ne.s32.totalorder %s41, %s42
    %p56 = scmp.eq.s32.totalorder %s20, 1
    %p57 = por %p55, %p56
    %p59 = scmp.ne.s32.totalorder %s42, %s58
    %p60 = scmp.eq.s32.totalorder %s20, 0
    %p61 = por %p59, %p60
    %s62 = smul.u32 %s22, 16
    %s63 = ssub.s32 %s62, 1
    %p64 = scmp.gt.s32.totalorder %s63, 0
    %s65 = scalar_select %p64, %s63, 0
    %s66 = smul.u32 %s29, 16
    %s67 = ssub.s32 %s66, 1
    %p68 = scmp.gt.s32.totalorder %s67, 0
    %s69 = scalar_select %p68, %s67, 0
    %s70 = ssub.s32 %s21, %s33
    %s71 = ssub.s32 %s65, %s69
    %s72 = sor.u32 %s70, %s71
    %p73 = scmp.eq.s32.totalorder %s72, 0
    %s75 = sadd.s32 %s74, 1
    %s76 = scalar_select %p73, %s74, %s75
    %p79 = pneg %p73
    %p80 = scmp.eq.s32.totalorder %s14, 1
    %p81 = por %p79, %p80
    %p82 = scmp.ne.s32.totalorder %s74, %s77
    %p83 = scmp.eq.s32.totalorder %s14, 0
    %p84 = por %p82, %p83
    %p85 = scmp.ne.s32.totalorder %s74, %s77
    %p86 = scmp.eq.s32.totalorder %s19, 1
    %p87 = por %p85, %p86
    %p88 = scmp.ne.s32.totalorder %s77, %s78
    %p89 = scmp.eq.s32.totalorder %s19, 0
    %p90 = por %p88, %p89
    %p91 = scmp.ne.s32.totalorder %s77, %s78
    %p92 = scmp.eq.s32.totalorder %s20, 1
    %p93 = por %p91, %p92
    %p95 = scmp.ne.s32.totalorder %s78, %s94
    %p96 = scmp.eq.s32.totalorder %s20, 0
    %p97 = por %p95, %p96
    %s98 = sadd.s32 %s22, 1
    %s99 = smul.u32 %s98, 16
    %p100 = scmp.lt.s32.totalorder %s99, 15
    %s101 = scalar_select %p100, %s99, 15
    %s102 = sadd.s32 %s29, 1
    %s103 = smul.u32 %s102, 16
    %p104 = scmp.lt.s32.totalorder %s103, 15
    %s105 = scalar_select %p104, %s103, 15
    %s106 = ssub.s32 %s21, %s33
    %s107 = ssub.s32 %s101, %s105
    %s108 = sor.u32 %s106, %s107
    %p109 = scmp.eq.s32.totalorder %s108, 0
    %s111 = sadd.s32 %s110, 1
    %s112 = scalar_select %p109, %s110, %s111
    %p115 = pneg %p109
    %p116 = scmp.eq.s32.totalorder %s14, 1
    %p117 = por %p115, %p116
    %p118 = scmp.ne.s32.totalorder %s110, %s113
    %p119 = scmp.eq.s32.totalorder %s14, 0
    %p120 = por %p118, %p119
    %p121 = scmp.ne.s32.totalorder %s110, %s113
    %p122 = scmp.eq.s32.totalorder %s19, 1
    %p123 = por %p121, %p122
    %p124 = scmp.ne.s32.totalorder %s113, %s114
    %p125 = scmp.eq.s32.totalorder %s19, 0
    %p126 = por %p124, %p125
    %p127 = scmp.ne.s32.totalorder %s113, %s114
    %p128 = scmp.eq.s32.totalorder %s20, 1
    %p129 = por %p127, %p128
    %p131 = scmp.ne.s32.totalorder %s114, %s130
    %p132 = scmp.eq.s32.totalorder %s20, 0
    %p133 = por %p131, %p132
    %s135 = sadd.s32 %s134, 1
    %p138 = scmp.eq.s32.totalorder %s14, 1
    %p139 = scmp.ne.s32.totalorder %s134, %s136
    %p140 = scmp.eq.s32.totalorder %s14, 0
    %p141 = por %p139, %p140
    %p142 = scmp.ne.s32.totalorder %s134, %s136
    %p143 = scmp.eq.s32.totalorder %s19, 1
    %p144 = por %p142, %p143
    %p145 = scmp.ne.s32.totalorder %s136, %s137
    %p146 = scmp.eq.s32.totalorder %s19, 0
    %p147 = por %p145, %p146
    %p148 = scmp.ne.s32.totalorder %s136, %s137
    %p149 = scmp.eq.s32.totalorder %s20, 1
    %p150 = por %p148, %p149
    %p152 = scmp.ne.s32.totalorder %s137, %s151
    %p153 = scmp.eq.s32.totalorder %s20, 0
    %p154 = por %p152, %p153
    %s156 = sadd.s32 %s155, 1
    %p159 = scmp.eq.s32.totalorder %s14, 1
    %p160 = scmp.ne.s32.totalorder %s155, %s157
    %p161 = scmp.eq.s32.totalorder %s14, 0
    %p162 = por %p160, %p161
    %p163 = scmp.ne.s32.totalorder %s155, %s157
    %p164 = scmp.eq.s32.totalorder %s19, 1
    %p165 = por %p163, %p164
    %p166 = scmp.ne.s32.totalorder %s157, %s158
    %p167 = scmp.eq.s32.totalorder %s19, 0
    %p168 = por %p166, %p167
    %p169 = scmp.ne.s32.totalorder %s157, %s158
    %p170 = scmp.eq.s32.totalorder %s20, 1
    %p171 = por %p169, %p170
    %p173 = scmp.ne.s32.totalorder %s158, %s172
    %p174 = scmp.eq.s32.totalorder %s20, 0
    %p175 = por %p173, %p174
    %s177 = sadd.s32 %s176, 1
    %p180 = scmp.eq.s32.totalorder %s14, 1
    %p181 = scmp.ne.s32.totalorder %s176, %s178
    %p182 = scmp.eq.s32.totalorder %s14, 0
    %p183 = por %p181, %p182
    %p184 = scmp.ne.s32.totalorder %s176, %s178
    %p185 = scmp.eq.s32.totalorder %s19, 1
    %p186 = por %p184, %p185
    %p187 = scmp.ne.s32.totalorder %s178, %s179
    %p188 = scmp.eq.s32.totalorder %s19, 0
    %p189 = por %p187, %p188
    %p190 = scmp.ne.s32.totalorder %s178, %s179
    %p191 = scmp.eq.s32.totalorder %s20, 1
    %p192 = por %p190, %p191
    %p194 = scmp.ne.s32.totalorder %s179, %s193
    %p195 = scmp.eq.s32.totalorder %s20, 0
    %p196 = por %p194, %p195
    %s197 = ssub.s32 %s21, %s33
    %s198 = ssub.s32 %s22, %s29
    %s199 = sor.u32 %s197, %s198
    %p200 = scmp.eq.s32.totalorder %s199, 0
    %s202 = sadd.s32 %s201, 1
    %s203 = scalar_select %p200, %s201, %s202
    %p206 = pneg %p200
    %p207 = scmp.eq.s32.totalorder %s14, 1
    %p208 = por %p206, %p207
    %p209 = scmp.ne.s32.totalorder %s201, %s204
    %p210 = scmp.eq.s32.totalorder %s14, 0
    %p211 = por %p209, %p210
    %p212 = scmp.ne.s32.totalorder %s201, %s204
    %p213 = scmp.eq.s32.totalorder %s19, 1
    %p214 = por %p212, %p213
    %p215 = scmp.ne.s32.totalorder %s204, %s205
    %p216 = scmp.eq.s32.totalorder %s19, 0
    %p217 = por %p215, %p216
    %p218 = scmp.ne.s32.totalorder %s204, %s205
    %p219 = scmp.eq.s32.totalorder %s20, 1
    %p220 = por %p218, %p219
    %p222 = scmp.ne.s32.totalorder %s205, %s221
    %p223 = scmp.eq.s32.totalorder %s20, 0
    %p224 = por %p222, %p223
    %s225 = ssub.s32 %s21, %s33
    %s226 = ssub.s32 %s22, %s29
    %s227 = sor.u32 %s225, %s226
    %p228 = scmp.eq.s32.totalorder %s227, 0
    %s230 = sadd.s32 %s229, 1
    %s231 = scalar_select %p228, %s229, %s230
    %p234 = pneg %p228
    %p235 = scmp.eq.s32.totalorder %s14, 1
    %p236 = por %p234, %p235
    %p237 = scmp.ne.s32.totalorder %s229, %s232
    %p238 = scmp.eq.s32.totalorder %s14, 0
    %p239 = por %p237, %p238
    %p240 = scmp.ne.s32.totalorder %s229, %s232
    %p241 = scmp.eq.s32.totalorder %s19, 1
    %p242 = por %p240, %p241
    %p243 = scmp.ne.s32.totalorder %s232, %s233
    %p244 = scmp.eq.s32.totalorder %s19, 0
    %p245 = por %p243, %p244
    %p246 = scmp.ne.s32.totalorder %s232, %s233
    %p247 = scmp.eq.s32.totalorder %s20, 1
    %p248 = por %p246, %p247
    %p250 = scmp.ne.s32.totalorder %s233, %s249
    %p251 = scmp.eq.s32.totalorder %s20, 0
    %p252 = por %p250, %p251
    %p253 = scmp.le.s32.totalorder 1, %s14
    %p254 = scmp.lt.s32.totalorder %s14, 3
    %p255 = pnand %p253, %p254
    %p256 = pneg %p255
    // Predicated region
    $region9: #{up_forward.4} parent=5 // pred_check
      _
    $region10: #{up_forward.4} parent=5 // pred_check_branch
      %258 = sbr.rel (%p255) target = $region12
    $region11: #{up_forward.4} parent=5 // pred_region
      %s259 = ssub.s32 %s14, 1
      // Predicated region
      $region13: #{up_forward.4} parent=11 // pred_check
        %p260 = pneg %p147
      $region14: #{up_forward.4} parent=11 // pred_check_branch
        %262 = sbr.rel (%p260) target = $region16
      $region15: #{up_forward.4} parent=11 // pred_region
        _
      $region16: #{up_forward.4} parent=11 // pred_fallthru
        _
      // Predicated region
      $region17: #{up_forward.4} parent=11 // pred_check
        %p263 = pneg %p168
      $region18: #{up_forward.4} parent=11 // pred_check_branch
        %265 = sbr.rel (%p263) target = $region20
      $region19: #{up_forward.4} parent=11 // pred_region
        _
      $region20: #{up_forward.4} parent=11 // pred_fallthru
        _
      // Predicated region
      $region21: #{up_forward.4} parent=11 // pred_check
        %p266 = pneg %p189
      $region22: #{up_forward.4} parent=11 // pred_check_branch
        %268 = sbr.rel (%p266) target = $region24
      $region23: #{up_forward.4} parent=11 // pred_region
        _
      $region24: #{up_forward.4} parent=11 // pred_fallthru
        _
    $region12: #{up_forward.4} parent=5 // pred_fallthru
      _
    %p269 = scmp.lt.s32.totalorder %s14, 2
    // Predicated region
    $region25: #{up_forward.4} parent=5 // pred_check
      %p270 = pneg %p269
    $region26: #{up_forward.4} parent=5 // pred_check_branch
      %272 = sbr.rel (%p270) target = $region28
    $region27: #{up_forward.4} parent=5 // pred_region
      // Predicated region
      $region29: #{up_forward.4} parent=27 // pred_check
        %p273 = pneg %p48
      $region30: #{up_forward.4} parent=27 // pred_check_branch
        %275 = sbr.rel (%p273) target = $region32
      $region31: #{up_forward.4} parent=27 // pred_region
        %s276 = smul.u32 16, %s22
        %p277 = scmp.lt.s32.totalorder %s21, 1
        %s278 = scalar_select %p277, %s21, 1
        %p279 = scmp.lt.s32.totalorder %s276, 15
        %s280 = scalar_select %p279, %s276, 15
        %s281 = smul.addr %s280, 2
        %s282 = smul.addr %s278, 32
        %s283 = sadd.s32 %s281, %s282
        %s284 = smul.addr %s283, 4
        %s285 = scalar_lea.vmem %s0, %s284
        %s286 = smul.u32 16, %s22
      $region32: #{up_forward.4} parent=27 // pred_fallthru
        _
      // Predicated region
      $region33: #{up_forward.4} parent=27 // pred_check
        %p287 = pneg %p84
      $region34: #{up_forward.4} parent=27 // pred_check_branch
        %289 = sbr.rel (%p287) target = $region36
      $region35: #{up_forward.4} parent=27 // pred_region
        %s290 = smul.u32 %s22, 16
        %s291 = ssub.s32 %s290, 1
        %p292 = scmp.gt.s32.totalorder %s291, 0
        %s293 = scalar_select %p292, %s291, 0
        %p294 = scmp.lt.s32.totalorder %s21, 1
        %s295 = scalar_select %p294, %s21, 1
        %p296 = scmp.lt.s32.totalorder %s293, 15
        %s297 = scalar_select %p296, %s293, 15
        %s298 = smul.addr %s297, 2
        %s299 = smul.addr %s295, 32
        %s300 = sadd.s32 %s298, %s299
        %s301 = smul.addr %s300, 4
        %s302 = scalar_lea.vmem %s1, %s301
        %s303 = smul.u32 %s22, 16
        %s304 = ssub.s32 %s303, 1
        %p305 = scmp.gt.s32.totalorder %s304, 0
        %s306 = scalar_select %p305, %s304, 0
      $region36: #{up_forward.4} parent=27 // pred_fallthru
        _
      // Predicated region
      $region37: #{up_forward.4} parent=27 // pred_check
        %p307 = pneg %p120
      $region38: #{up_forward.4} parent=27 // pred_check_branch
        %309 = sbr.rel (%p307) target = $region40
      $region39: #{up_forward.4} parent=27 // pred_region
        %s310 = sadd.s32 %s22, 1
        %s311 = smul.u32 %s310, 16
        %p312 = scmp.lt.s32.totalorder %s311, 15
        %s313 = scalar_select %p312, %s311, 15
        %p314 = scmp.lt.s32.totalorder %s21, 1
        %s315 = scalar_select %p314, %s21, 1
        %p316 = scmp.lt.s32.totalorder %s313, 15
        %s317 = scalar_select %p316, %s313, 15
        %s318 = smul.addr %s317, 2
        %s319 = smul.addr %s315, 32
        %s320 = sadd.s32 %s318, %s319
        %s321 = smul.addr %s320, 4
        %s322 = scalar_lea.vmem %s2, %s321
        %s323 = sadd.s32 %s22, 1
        %s324 = smul.u32 %s323, 16
        %p325 = scmp.lt.s32.totalorder %s324, 15
        %s326 = scalar_select %p325, %s324, 15
      $region40: #{up_forward.4} parent=27 // pred_fallthru
        _
    $region28: #{up_forward.4} parent=5 // pred_fallthru
      _
    %p327 = scmp.le.s32.totalorder 1, %s14
    %p328 = scmp.lt.s32.totalorder %s14, 3
    %p329 = pnand %p327, %p328
    %p330 = pneg %p329
    // Predicated region
    $region41: #{up_forward.4} parent=5 // pred_check
      _
    $region42: #{up_forward.4} parent=5 // pred_check_branch
      %332 = sbr.rel (%p329) target = $region44
    $region43: #{up_forward.4} parent=5 // pred_region
      %s333 = ssub.s32 %s14, 1
      %s334 = smul.u32 16, %s24
      %p335 = scmp.lt.s32.totalorder %s23, 1
      %s336 = scalar_select %p335, %s23, 1
      %p337 = scmp.lt.s32.totalorder %s334, 15
      %s338 = scalar_select %p337, %s334, 15
      %s339 = smul.addr %s338, 2
      %s340 = smul.addr %s336, 32
      %s341 = sadd.s32 %s339, %s340
      %s342 = smul.addr %s341, 4
      %s343 = scalar_lea.vmem %s0, %s342
      %p344 = pneg %p54
      %p345 = pneg %p51
      %s346 = smul.u32 %s24, 16
      %s347 = ssub.s32 %s346, 1
      %p348 = scmp.gt.s32.totalorder %s347, 0
      %s349 = scalar_select %p348, %s347, 0
      %p350 = scmp.lt.s32.totalorder %s23, 1
      %s351 = scalar_select %p350, %s23, 1
      %p352 = scmp.lt.s32.totalorder %s349, 15
      %s353 = scalar_select %p352, %s349, 15
      %s354 = smul.addr %s353, 2
      %s355 = smul.addr %s351, 32
      %s356 = sadd.s32 %s354, %s355
      %s357 = smul.addr %s356, 4
      %s358 = scalar_lea.vmem %s1, %s357
      %p359 = pneg %p90
      %p360 = pneg %p87
      %s361 = sadd.s32 %s24, 1
      %s362 = smul.u32 %s361, 16
      %p363 = scmp.lt.s32.totalorder %s362, 15
      %s364 = scalar_select %p363, %s362, 15
      %p365 = scmp.lt.s32.totalorder %s23, 1
      %s366 = scalar_select %p365, %s23, 1
      %p367 = scmp.lt.s32.totalorder %s364, 15
      %s368 = scalar_select %p367, %s364, 15
      %s369 = smul.addr %s368, 2
      %s370 = smul.addr %s366, 32
      %s371 = sadd.s32 %s369, %s370
      %s372 = smul.addr %s371, 4
      %s373 = scalar_lea.vmem %s2, %s372
      %p374 = pneg %p126
      %p375 = pneg %p123
      %p376 = pneg %p147
      %p377 = pneg %p144
      %p378 = pneg %p168
      %p379 = pneg %p165
      %p380 = pneg %p189
      %p381 = pneg %p186
      %p382 = pneg %p217
      %p383 = pneg %p214
      %s384 = smul.u32 16, %s24
      %p385 = scmp.lt.s32.totalorder %s23, 1
      %s386 = scalar_select %p385, %s23, 1
      %p387 = scmp.lt.s32.totalorder %s384, 15
      %s388 = scalar_select %p387, %s384, 15
      %s389 = smul.addr %s388, 2
      %s390 = smul.addr %s386, 32
      %s391 = sadd.s32 %s389, %s390
      %s392 = smul.addr %s391, 4
      %s393 = scalar_lea.vmem %s6, %s392
      %p394 = pneg %p245
      %p395 = pneg %p242
      %p396 = scmp.lt.s32.totalorder %s23, 1
      %s397 = scalar_select %p396, %s23, 1
      %p398 = scmp.lt.s32.totalorder %s24, 0
      %s399 = scalar_select %p398, %s24, 0
      %s400 = sadd.s32 %s399, %s397
      %s401 = smul.addr %s400, 8
      %s402 = scalar_lea.vmem %s7, %s401
      %s403 = smul.u32 16, %s24
      %p404 = scmp.lt.s32.totalorder %s23, 1
      %s405 = scalar_select %p404, %s23, 1
      %p406 = scmp.lt.s32.totalorder %s403, 15
      %s407 = scalar_select %p406, %s403, 15
      %s408 = smul.addr %s407, 2
      %s409 = smul.addr %s405, 32
      %s410 = sadd.s32 %s408, %s409
      %s411 = smul.addr %s410, 4
      %s412 = scalar_lea.vmem %s0, %s411
      %s413 = smul.u32 16, %s24
      %s414 = smul.u32 %s24, 16
      %s415 = ssub.s32 %s414, 1
      %p416 = scmp.gt.s32.totalorder %s415, 0
      %s417 = scalar_select %p416, %s415, 0
      %p418 = scmp.lt.s32.totalorder %s23, 1
      %s419 = scalar_select %p418, %s23, 1
      %p420 = scmp.lt.s32.totalorder %s417, 15
      %s421 = scalar_select %p420, %s417, 15
      %s422 = smul.addr %s421, 2
      %s423 = smul.addr %s419, 32
      %s424 = sadd.s32 %s422, %s423
      %s425 = smul.addr %s424, 4
      %s426 = scalar_lea.vmem %s1, %s425
      %s427 = smul.u32 %s24, 16
      %s428 = ssub.s32 %s427, 1
      %p429 = scmp.gt.s32.totalorder %s428, 0
      %s430 = scalar_select %p429, %s428, 0
      %s431 = sadd.s32 %s24, 1
      %s432 = smul.u32 %s431, 16
      %p433 = scmp.lt.s32.totalorder %s432, 15
      %s434 = scalar_select %p433, %s432, 15
      %p435 = scmp.lt.s32.totalorder %s23, 1
      %s436 = scalar_select %p435, %s23, 1
      %p437 = scmp.lt.s32.totalorder %s434, 15
      %s438 = scalar_select %p437, %s434, 15
      %s439 = smul.addr %s438, 2
      %s440 = smul.addr %s436, 32
      %s441 = sadd.s32 %s439, %s440
      %s442 = smul.addr %s441, 4
      %s443 = scalar_lea.vmem %s2, %s442
      %s444 = sadd.s32 %s24, 1
      %s445 = smul.u32 %s444, 16
      %p446 = scmp.lt.s32.totalorder %s445, 15
      %s447 = scalar_select %p446, %s445, 15
      %s448 = smul.u32 16, %s24
      %p449 = scmp.lt.s32.totalorder %s23, 1
      %s450 = scalar_select %p449, %s23, 1
      %p451 = scmp.lt.s32.totalorder %s448, 15
      %s452 = scalar_select %p451, %s448, 15
      %s453 = smul.addr %s452, 2
      %s454 = smul.addr %s450, 32
      %s455 = sadd.s32 %s453, %s454
      %s456 = smul.addr %s455, 4
      %s457 = scalar_lea.vmem %s6, %s456
      %s458 = smul.u32 16, %s24
      %p459 = scmp.lt.s32.totalorder %s23, 1
      %s460 = scalar_select %p459, %s23, 1
      %p461 = scmp.lt.s32.totalorder %s24, 0
      %s462 = scalar_select %p461, %s24, 0
      %s463 = sadd.s32 %s462, %s460
      %s464 = smul.addr %s463, 8
      %s465 = scalar_lea.vmem %s7, %s464
      %v467 = vld [vmem:[%s4] sm:$0x1]
      %v468 = vld [vmem:[%s5] sm:$0x1]
      %v469 = vld [vmem:[%s412] sm:$0xf]
      %v470 = vld [vmem:[%s412 + $0x4] sm:$0xf]
      %v471 = vld [vmem:[%s412 + $0x8] sm:$0xf]
      %v472 = vld [vmem:[%s412 + $0xc] sm:$0xf]
      %v473 = vld [vmem:[%s412 + $0x10] sm:$0xf]
      %v474 = vld [vmem:[%s412 + $0x14] sm:$0xf]
      %v475 = vld [vmem:[%s412 + $0x18] sm:$0xf]
      %v476 = vld [vmem:[%s412 + $0x1c] sm:$0xf]
      %v477 = vld [vmem:[%s412 + $0x20] sm:$0xf]
      %v478 = vld [vmem:[%s412 + $0x24] sm:$0xf]
      %v479 = vld [vmem:[%s412 + $0x28] sm:$0xf]
      %v480 = vld [vmem:[%s412 + $0x2c] sm:$0xf]
      %v481 = vld [vmem:[%s412 + $0x30] sm:$0xf]
      %v482 = vld [vmem:[%s412 + $0x34] sm:$0xf]
      %v483 = vld [vmem:[%s412 + $0x38] sm:$0xf]
      %v484 = vld [vmem:[%s412 + $0x3c] sm:$0xf]
      %v485 = vld [vmem:[%s412 + $0x40] sm:$0xf]
      %v486 = vld [vmem:[%s412 + $0x44] sm:$0xf]
      %v487 = vld [vmem:[%s412 + $0x48] sm:$0xf]
      %v488 = vld [vmem:[%s412 + $0x4c] sm:$0xf]
      %v489 = vld [vmem:[%s412 + $0x50] sm:$0xf]
      %v490 = vld [vmem:[%s412 + $0x54] sm:$0xf]
      %v491 = vld [vmem:[%s412 + $0x58] sm:$0xf]
      %v492 = vld [vmem:[%s412 + $0x5c] sm:$0xf]
      %v493 = vld [vmem:[%s412 + $0x60] sm:$0xf]
      %v494 = vld [vmem:[%s412 + $0x64] sm:$0xf]
      %v495 = vld [vmem:[%s412 + $0x68] sm:$0xf]
      %v496 = vld [vmem:[%s412 + $0x6c] sm:$0xf]
      %v497 = vld [vmem:[%s412 + $0x70] sm:$0xf]
      %v498 = vld [vmem:[%s412 + $0x74] sm:$0xf]
      %v499 = vld [vmem:[%s412 + $0x78] sm:$0xf]
      %v500 = vld [vmem:[%s412 + $0x7c] sm:$0xf]
      %v501 = vunpack.c.l.bf16 %v469
      %v502 = vunpack.c.l.bf16 %v470
      %v503 = vunpack.c.l.bf16 %v471
      %v504 = vunpack.c.l.bf16 %v472
      %v505 = vunpack.c.l.bf16 %v473
      %v506 = vunpack.c.l.bf16 %v474
      %v507 = vunpack.c.l.bf16 %v475
      %v508 = vunpack.c.l.bf16 %v476
      %v509 = vunpack.c.l.bf16 %v477
      %v510 = vunpack.c.l.bf16 %v478
      %v511 = vunpack.c.l.bf16 %v479
      %v512 = vunpack.c.l.bf16 %v480
      %v513 = vunpack.c.l.bf16 %v481
      %v514 = vunpack.c.l.bf16 %v482
      %v515 = vunpack.c.l.bf16 %v483
      %v516 = vunpack.c.l.bf16 %v484
      %v517 = vunpack.c.l.bf16 %v485
      %v518 = vunpack.c.l.bf16 %v486
      %v519 = vunpack.c.l.bf16 %v487
      %v520 = vunpack.c.l.bf16 %v488
      %v521 = vunpack.c.l.bf16 %v489
      %v522 = vunpack.c.l.bf16 %v490
      %v523 = vunpack.c.l.bf16 %v491
      %v524 = vunpack.c.l.bf16 %v492
      %v525 = vunpack.c.l.bf16 %v493
      %v526 = vunpack.c.l.bf16 %v494
      %v527 = vunpack.c.l.bf16 %v495
      %v528 = vunpack.c.l.bf16 %v496
      %v529 = vunpack.c.l.bf16 %v497
      %v530 = vunpack.c.l.bf16 %v498
      %v531 = vunpack.c.l.bf16 %v499
      %v532 = vunpack.c.l.bf16 %v500
      %v534 = vlaneseq
      %v535 = vshrl.u32 %v534, 7
      %v536 = vsub.s32 0, %v535
      %v537 = vrot.slane %v467, %v536
      %v539 = vmul.f32 %v501, %v537
      %v540 = vmul.f32 %v502, %v537
      %v541 = vmul.f32 %v503, %v537
      %v542 = vmul.f32 %v504, %v537
      %v543 = vmul.f32 %v505, %v537
      %v544 = vmul.f32 %v506, %v537
      %v545 = vmul.f32 %v507, %v537
      %v546 = vmul.f32 %v508, %v537
      %v547 = vmul.f32 %v509, %v537
      %v548 = vmul.f32 %v510, %v537
      %v549 = vmul.f32 %v511, %v537
      %v550 = vmul.f32 %v512, %v537
      %v551 = vmul.f32 %v513, %v537
      %v552 = vmul.f32 %v514, %v537
      %v553 = vmul.f32 %v515, %v537
      %v554 = vmul.f32 %v516, %v537
      %v555 = vmul.f32 %v517, %v537
      %v556 = vmul.f32 %v518, %v537
      %v557 = vmul.f32 %v519, %v537
      %v558 = vmul.f32 %v520, %v537
      %v559 = vmul.f32 %v521, %v537
      %v560 = vmul.f32 %v522, %v537
      %v561 = vmul.f32 %v523, %v537
      %v562 = vmul.f32 %v524, %v537
      %v563 = vmul.f32 %v525, %v537
      %v564 = vmul.f32 %v526, %v537
      %v565 = vmul.f32 %v527, %v537
      %v566 = vmul.f32 %v528, %v537
      %v567 = vmul.f32 %v529, %v537
      %v568 = vmul.f32 %v530, %v537
      %v569 = vmul.f32 %v531, %v537
      %v570 = vmul.f32 %v532, %v537
      %v572 = vlaneseq
      %v573 = vshrl.u32 %v572, 7
      %v574 = vsub.s32 0, %v573
      %v575 = vrot.slane %v468, %v574
      %v577 = vadd.f32 %v539, %v575
      %v578 = vadd.f32 %v540, %v575
      %v579 = vadd.f32 %v541, %v575
      %v580 = vadd.f32 %v542, %v575
      %v581 = vadd.f32 %v543, %v575
      %v582 = vadd.f32 %v544, %v575
      %v583 = vadd.f32 %v545, %v575
      %v584 = vadd.f32 %v546, %v575
      %v585 = vadd.f32 %v547, %v575
      %v586 = vadd.f32 %v548, %v575
      %v587 = vadd.f32 %v549, %v575
      %v588 = vadd.f32 %v550, %v575
      %v589 = vadd.f32 %v551, %v575
      %v590 = vadd.f32 %v552, %v575
      %v591 = vadd.f32 %v553, %v575
      %v592 = vadd.f32 %v554, %v575
      %v593 = vadd.f32 %v555, %v575
      %v594 = vadd.f32 %v556, %v575
      %v595 = vadd.f32 %v557, %v575
      %v596 = vadd.f32 %v558, %v575
      %v597 = vadd.f32 %v559, %v575
      %v598 = vadd.f32 %v560, %v575
      %v599 = vadd.f32 %v561, %v575
      %v600 = vadd.f32 %v562, %v575
      %v601 = vadd.f32 %v563, %v575
      %v602 = vadd.f32 %v564, %v575
      %v603 = vadd.f32 %v565, %v575
      %v604 = vadd.f32 %v566, %v575
      %v605 = vadd.f32 %v567, %v575
      %v606 = vadd.f32 %v568, %v575
      %v607 = vadd.f32 %v569, %v575
      %v608 = vadd.f32 %v570, %v575
      %v609 = vmax.f32 %v577, 0.0
      %v610 = vmax.f32 %v578, 0.0
      %v611 = vmax.f32 %v579, 0.0
      %v612 = vmax.f32 %v580, 0.0
      %v613 = vmax.f32 %v581, 0.0
      %v614 = vmax.f32 %v582, 0.0
      %v615 = vmax.f32 %v583, 0.0
      %v616 = vmax.f32 %v584, 0.0
      %v617 = vmax.f32 %v585, 0.0
      %v618 = vmax.f32 %v586, 0.0
      %v619 = vmax.f32 %v587, 0.0
      %v620 = vmax.f32 %v588, 0.0
      %v621 = vmax.f32 %v589, 0.0
      %v622 = vmax.f32 %v590, 0.0
      %v623 = vmax.f32 %v591, 0.0
      %v624 = vmax.f32 %v592, 0.0
      %v625 = vmax.f32 %v593, 0.0
      %v626 = vmax.f32 %v594, 0.0
      %v627 = vmax.f32 %v595, 0.0
      %v628 = vmax.f32 %v596, 0.0
      %v629 = vmax.f32 %v597, 0.0
      %v630 = vmax.f32 %v598, 0.0
      %v631 = vmax.f32 %v599, 0.0
      %v632 = vmax.f32 %v600, 0.0
      %v633 = vmax.f32 %v601, 0.0
      %v634 = vmax.f32 %v602, 0.0
      %v635 = vmax.f32 %v603, 0.0
      %v636 = vmax.f32 %v604, 0.0
      %v637 = vmax.f32 %v605, 0.0
      %v638 = vmax.f32 %v606, 0.0
      %v639 = vmax.f32 %v607, 0.0
      %v640 = vmax.f32 %v608, 0.0
      %v641 = vpack.c.bf16 %v610, %v609
      %v642 = vpack.c.bf16 %v612, %v611
      %v643 = vpack.c.bf16 %v614, %v613
      %v644 = vpack.c.bf16 %v616, %v615
      %v645 = vpack.c.bf16 %v618, %v617
      %v646 = vpack.c.bf16 %v620, %v619
      %v647 = vpack.c.bf16 %v622, %v621
      %v648 = vpack.c.bf16 %v624, %v623
      %v649 = vpack.c.bf16 %v626, %v625
      %v650 = vpack.c.bf16 %v628, %v627
      %v651 = vpack.c.bf16 %v630, %v629
      %v652 = vpack.c.bf16 %v632, %v631
      %v653 = vpack.c.bf16 %v634, %v633
      %v654 = vpack.c.bf16 %v636, %v635
      %v655 = vpack.c.bf16 %v638, %v637
      %v656 = vpack.c.bf16 %v640, %v639
      %v657 = vld [vmem:[%s426] sm:$0xf]
      %v658 = vld [vmem:[%s426 + $0x4] sm:$0xf]
      %v659 = vunpack.c.l.bf16 %v657
      %v660 = vunpack.c.l.bf16 %v658
      %v661 = vmul.f32 %v659, %v537
      %v662 = vmul.f32 %v660, %v537
      %v663 = vadd.f32 %v661, %v575
      %v664 = vadd.f32 %v662, %v575
      %v665 = vmax.f32 %v663, 0.0
      %v666 = vmax.f32 %v664, 0.0
      %v667 = vpack.c.bf16 %v666, %v665
      %v668 = vld [vmem:[%s443] sm:$0xf]
      %v669 = vld [vmem:[%s443 + $0x4] sm:$0xf]
      %v670 = vunpack.c.l.bf16 %v668
      %v671 = vunpack.c.l.bf16 %v669
      %v672 = vmul.f32 %v670, %v537
      %v673 = vmul.f32 %v671, %v537
      %v674 = vadd.f32 %v672, %v575
      %v675 = vadd.f32 %v673, %v575
      %v676 = vmax.f32 %v674, 0.0
      %v677 = vmax.f32 %v675, 0.0
      %v678 = vpack.c.bf16 %v677, %v676
      %p679 = scmp.gt.s32.totalorder %s24, 0
      %s680 = scalar_select %p679, 1, 0
      %s681 = scvt.s32.f32 %s680
      %p683 = scmp.ne.f32.partialorder %s681, %s681
      %s684 = sshrl.u32 %s681, 16
      %s685 = sand.u32 %s684, 1
      %s686 = sadd.s32 32767, %s685
      %s687 = sadd.s32 %s681, %s686
      %s688 = sand.u32 %s687, 4294901760
      %s689 = scalar_select %p683, 2143289344, %s688
      %s691 = sshrl.u32 %s689, 16
      %s692 = sshll.u32 %s691, 16
      %s693 = sor.u32 %s691, %s692
      %v694 = vstv %s693
      %v696 = vmul.bf16 %v667, %v694
      %p697 = scmp.lt.s32.totalorder %s24, 0
      %s698 = scalar_select %p697, 1, 0
      %s699 = scvt.s32.f32 %s698
      %p701 = scmp.ne.f32.partialorder %s699, %s699
      %s702 = sshrl.u32 %s699, 16
      %s703 = sand.u32 %s702, 1
      %s704 = sadd.s32 32767, %s703
      %s705 = sadd.s32 %s699, %s704
      %s706 = sand.u32 %s705, 4294901760
      %s707 = scalar_select %p701, 2143289344, %s706
      %s709 = sshrl.u32 %s707, 16
      %s710 = sshll.u32 %s709, 16
      %s711 = sor.u32 %s709, %s710
      %v712 = vstv %s711
      %v714 = vmul.bf16 %v678, %v712
      %v716 = vshrl.u32 %v696, 16
      %v718 = vrot.slane %v716, 7
      %v719 = vshll.u32 %v696, 16
      %v721 = vor.u32 %v718, %v719
      %v723 = vshrl.u32 %v641, 16
      %v725 = vrot.slane %v723, 7
      %v726 = vshll.u32 %v641, 16
      %v728 = vor.u32 %v725, %v726
      %v730 = vshrl.u32 %v642, 16
      %v732 = vrot.slane %v730, 7
      %v733 = vshll.u32 %v642, 16
      %v735 = vor.u32 %v732, %v733
      %v737 = vshrl.u32 %v643, 16
      %v739 = vrot.slane %v737, 7
      %v740 = vshll.u32 %v643, 16
      %v742 = vor.u32 %v739, %v740
      %v744 = vshrl.u32 %v644, 16
      %v746 = vrot.slane %v744, 7
      %v747 = vshll.u32 %v644, 16
      %v749 = vor.u32 %v746, %v747
      %v751 = vshrl.u32 %v645, 16
      %v753 = vrot.slane %v751, 7
      %v754 = vshll.u32 %v645, 16
      %v756 = vor.u32 %v753, %v754
      %v758 = vshrl.u32 %v646, 16
      %v760 = vrot.slane %v758, 7
      %v761 = vshll.u32 %v646, 16
      %v763 = vor.u32 %v760, %v761
      %v765 = vshrl.u32 %v647, 16
      %v767 = vrot.slane %v765, 7
      %v768 = vshll.u32 %v647, 16
      %v770 = vor.u32 %v767, %v768
      %v772 = vshrl.u32 %v648, 16
      %v774 = vrot.slane %v772, 7
      %v775 = vshll.u32 %v648, 16
      %v777 = vor.u32 %v774, %v775
      %v779 = vshrl.u32 %v649, 16
      %v781 = vrot.slane %v779, 7
      %v782 = vshll.u32 %v649, 16
      %v784 = vor.u32 %v781, %v782
      %v786 = vshrl.u32 %v650, 16
      %v788 = vrot.slane %v786, 7
      %v789 = vshll.u32 %v650, 16
      %v791 = vor.u32 %v788, %v789
      %v793 = vshrl.u32 %v651, 16
      %v795 = vrot.slane %v793, 7
      %v796 = vshll.u32 %v651, 16
      %v798 = vor.u32 %v795, %v796
      %v800 = vshrl.u32 %v652, 16
      %v802 = vrot.slane %v800, 7
      %v803 = vshll.u32 %v652, 16
      %v805 = vor.u32 %v802, %v803
      %v807 = vshrl.u32 %v653, 16
      %v809 = vrot.slane %v807, 7
      %v810 = vshll.u32 %v653, 16
      %v812 = vor.u32 %v809, %v810
      %v814 = vshrl.u32 %v654, 16
      %v816 = vrot.slane %v814, 7
      %v817 = vshll.u32 %v654, 16
      %v819 = vor.u32 %v816, %v817
      %v821 = vshrl.u32 %v655, 16
      %v823 = vrot.slane %v821, 7
      %v824 = vshll.u32 %v655, 16
      %v826 = vor.u32 %v823, %v824
      %v828 = vshrl.u32 %v656, 16
      %v830 = vrot.slane %v828, 7
      %v831 = vshll.u32 %v656, 16
      %v833 = vor.u32 %v830, %v831
      %v835 = vshrl.u32 %v714, 16
      %v837 = vrot.slane %v835, 7
      %v838 = vshll.u32 %v714, 16
      %v840 = vor.u32 %v837, %v838
      %vm859 = vcmask 1040384
      %vm860 = vsmask.f32 256
      %vm861 = vmand %vm859, %vm860
      %v862 = vsel %vm861, 0, %v721
      %v863 = vsel %vm861, 0, %v728
      %v864 = vsel %vm861, 0, %v735
      %v865 = vsel %vm861, 0, %v742
      %v866 = vsel %vm861, 0, %v749
      %v867 = vsel %vm861, 0, %v756
      %v868 = vsel %vm861, 0, %v763
      %v869 = vsel %vm861, 0, %v770
      %v870 = vsel %vm861, 0, %v777
      %v871 = vsel %vm861, 0, %v784
      %v872 = vsel %vm861, 0, %v791
      %v873 = vsel %vm861, 0, %v798
      %v874 = vsel %vm861, 0, %v805
      %v875 = vsel %vm861, 0, %v812
      %v876 = vsel %vm861, 0, %v819
      %v877 = vsel %vm861, 0, %v826
      %v878 = vsel %vm861, 0, %v833
      %v879 = vsel %vm861, 0, %v840
      %v880 = vrot.slane %v719, 1
      %v881 = vor.u32 %v716, %v880
      %v882 = vrot.slane %v726, 1
      %v883 = vor.u32 %v723, %v882
      %v884 = vrot.slane %v733, 1
      %v885 = vor.u32 %v730, %v884
      %v886 = vrot.slane %v740, 1
      %v887 = vor.u32 %v737, %v886
      %v888 = vrot.slane %v747, 1
      %v889 = vor.u32 %v744, %v888
      %v890 = vrot.slane %v754, 1
      %v891 = vor.u32 %v751, %v890
      %v892 = vrot.slane %v761, 1
      %v893 = vor.u32 %v758, %v892
      %v894 = vrot.slane %v768, 1
      %v895 = vor.u32 %v765, %v894
      %v896 = vrot.slane %v775, 1
      %v897 = vor.u32 %v772, %v896
      %v898 = vrot.slane %v782, 1
      %v899 = vor.u32 %v779, %v898
      %v900 = vrot.slane %v789, 1
      %v901 = vor.u32 %v786, %v900
      %v902 = vrot.slane %v796, 1
      %v903 = vor.u32 %v793, %v902
      %v904 = vrot.slane %v803, 1
      %v905 = vor.u32 %v800, %v904
      %v906 = vrot.slane %v810, 1
      %v907 = vor.u32 %v807, %v906
      %v908 = vrot.slane %v817, 1
      %v909 = vor.u32 %v814, %v908
      %v910 = vrot.slane %v824, 1
      %v911 = vor.u32 %v821, %v910
      %v912 = vrot.slane %v831, 1
      %v913 = vor.u32 %v828, %v912
      %v914 = vrot.slane %v838, 1
      %v915 = vor.u32 %v835, %v914
      %vm934 = vcmask 1047552
      %vm935 = vsmask.f32 7424
      %vm936 = vmand %vm934, %vm935
      %v937 = vsel %vm936, %v881, 0
      %v938 = vsel %vm936, %v883, 0
      %v939 = vsel %vm936, %v885, 0
      %v940 = vsel %vm936, %v887, 0
      %v941 = vsel %vm936, %v889, 0
      %v942 = vsel %vm936, %v891, 0
      %v943 = vsel %vm936, %v893, 0
      %v944 = vsel %vm936, %v895, 0
      %v945 = vsel %vm936, %v897, 0
      %v946 = vsel %vm936, %v899, 0
      %v947 = vsel %vm936, %v901, 0
      %v948 = vsel %vm936, %v903, 0
      %v949 = vsel %vm936, %v905, 0
      %v950 = vsel %vm936, %v907, 0
      %v951 = vsel %vm936, %v909, 0
      %v952 = vsel %vm936, %v911, 0
      %v953 = vsel %vm936, %v913, 0
      %v954 = vsel %vm936, %v915, 0
      %v955 = vld [vmem:[%s3] sm:$0xf]
      %v956 = vld [vmem:[%s3 + $0x4] sm:$0xf]
      %v957 = vld [vmem:[%s3 + $0x8] sm:$0xf]
      %v958 = vld [vmem:[%s3 + $0xc] sm:$0xf]
      %v959 = vld [vmem:[%s3 + $0x10] sm:$0xf]
      %v960 = vld [vmem:[%s3 + $0x14] sm:$0xf]
      %v961 = vld [vmem:[%s3 + $0x18] sm:$0xf]
      %v962 = vld [vmem:[%s3 + $0x1c] sm:$0xf]
      %v963 = vld [vmem:[%s3 + $0x20] sm:$0xf]
      %v964 = vld [vmem:[%s3 + $0x24] sm:$0xf]
      %v965 = vld [vmem:[%s3 + $0x28] sm:$0xf]
      %v966 = vld [vmem:[%s3 + $0x2c] sm:$0xf]
      %v967 = vld [vmem:[%s3 + $0x30] sm:$0xf]
      %v968 = vld [vmem:[%s3 + $0x34] sm:$0xf]
      %v969 = vld [vmem:[%s3 + $0x38] sm:$0xf]
      %v970 = vld [vmem:[%s3 + $0x3c] sm:$0xf]
      %v971 = vld [vmem:[%s3 + $0x40] sm:$0xf]
      %v972 = vld [vmem:[%s3 + $0x44] sm:$0xf]
      %v973 = vld [vmem:[%s3 + $0x48] sm:$0xf]
      %v974 = vld [vmem:[%s3 + $0x4c] sm:$0xf]
      %v975 = vld [vmem:[%s3 + $0x50] sm:$0xf]
      %v976 = vld [vmem:[%s3 + $0x54] sm:$0xf]
      %v977 = vld [vmem:[%s3 + $0x58] sm:$0xf]
      %v978 = vld [vmem:[%s3 + $0x5c] sm:$0xf]
      %v979 = vld [vmem:[%s3 + $0x60] sm:$0xf]
      %v980 = vld [vmem:[%s3 + $0x64] sm:$0xf]
      %v981 = vld [vmem:[%s3 + $0x68] sm:$0xf]
      %v982 = vld [vmem:[%s3 + $0x6c] sm:$0xf]
      %v983 = vld [vmem:[%s3 + $0x70] sm:$0xf]
      %v984 = vld [vmem:[%s3 + $0x74] sm:$0xf]
      %v985 = vld [vmem:[%s3 + $0x78] sm:$0xf]
      %v986 = vld [vmem:[%s3 + $0x7c] sm:$0xf]
      %v1003 = vunpack.c.l.b16 %v971
      %v1004 = vunpack.c.l.b16 %v972
      %v1005 = vunpack.c.l.b16 %v973
      %v1006 = vunpack.c.l.b16 %v974
      %v1007 = vunpack.c.l.b16 %v975
      %v1008 = vunpack.c.l.b16 %v976
      %v1009 = vunpack.c.l.b16 %v977
      %v1010 = vunpack.c.l.b16 %v978
      %v1011 = vunpack.c.l.b16 %v979
      %v1012 = vunpack.c.l.b16 %v980
      %v1013 = vunpack.c.l.b16 %v981
      %v1014 = vunpack.c.l.b16 %v982
      %v1015 = vunpack.c.l.b16 %v983
      %v1016 = vunpack.c.l.b16 %v984
      %v1017 = vunpack.c.l.b16 %v985
      %v1018 = vunpack.c.l.b16 %v986
      %v1019 = vpack.c.b16 %v1004, %v1003
      %v1020 = vpack.c.b16 %v1006, %v1005
      %v1021 = vpack.c.b16 %v1008, %v1007
      %v1022 = vpack.c.b16 %v1010, %v1009
      %v1023 = vpack.c.b16 %v1012, %v1011
      %v1024 = vpack.c.b16 %v1014, %v1013
      %v1025 = vpack.c.b16 %v1016, %v1015
      %v1026 = vpack.c.b16 %v1018, %v1017
      %1035 = vmatprep.subr.bf16.mxu0 0
      %1036 = vmatpush1.bf16.msra.mxu0 %v1019
      %1037 = vmatprep.subr.bf16.mxu0 0
      %1038 = vmatpush1.bf16.msra.mxu0 %v1020
      %1039 = vmatprep.subr.bf16.mxu0 0
      %1040 = vmatpush1.bf16.msra.mxu0 %v1021
      %1041 = vmatprep.subr.bf16.mxu0 0
      %1042 = vmatpush1.bf16.msra.mxu0 %v1022
      %1043 = vmatprep.subr.bf16.mxu0 0
      %1044 = vmatpush1.bf16.msra.mxu0 %v1023
      %1045 = vmatprep.subr.bf16.mxu0 0
      %1046 = vmatpush1.bf16.msra.mxu0 %v1024
      %1047 = vmatprep.subr.bf16.mxu0 0
      %1048 = vmatpush1.bf16.msra.mxu0 %v1025
      %1049 = vmatprep.subr.bf16.mxu0 0
      %1050 = vmatpush1.bf16.msra.mxu0 %v1026
      %1051 = vmatprep.subr.bf16.mxu0 0
      %1052 = vmatpush1.bf16.msra.mxu0 0
      %1053 = vmatprep.subr.bf16.mxu0 0
      %1054 = vmatpush1.bf16.msra.mxu0 0
      %1055 = vmatprep.subr.bf16.mxu0 0
      %1056 = vmatpush1.bf16.msra.mxu0 0
      %1057 = vmatprep.subr.bf16.mxu0 0
      %1058 = vmatpush1.bf16.msra.mxu0 0
      %1059 = vmatprep.subr.bf16.mxu0 0
      %1060 = vmatpush1.bf16.msra.mxu0 0
      %1061 = vmatprep.subr.bf16.mxu0 0
      %1062 = vmatpush1.bf16.msra.mxu0 0
      %1063 = vmatprep.subr.bf16.mxu0 0
      %1064 = vmatpush1.bf16.msra.mxu0 0
      %1065 = vmatprep.subr.bf16.mxu0 0
      %1066 = vmatpush1.bf16.msra.mxu0 0
      %1067 = vmatprep.mubr.bf16.mxu0 0
      %1068 = vmatmul.mubr.bf16.gmra.mrb[0].mxu0 %v696
      %v1069 = vpop.f32.mrb[0].mxu0
      %v1070 = vadd.f32 0.0, %v1069
      %v1071 = vpop.f32.mrb[0].mxu0
      %v1072 = vpop.f32.mrb[0].mxu0
      %v1073 = vadd.f32 0.0, %v1072
      %v1074 = vpop.f32.mrb[0].mxu0
      %1075 = vmatprep.mubr.bf16.mxu0 0
      %1076 = vmatmul.mubr.bf16.gmra.mrb[0].mxu0 %v641
      %v1077 = vpop.f32.mrb[0].mxu0
      %v1078 = vadd.f32 0.0, %v1077
      %v1079 = vpop.f32.mrb[0].mxu0
      %v1080 = vpop.f32.mrb[0].mxu0
      %v1081 = vadd.f32 0.0, %v1080
      %v1082 = vpop.f32.mrb[0].mxu0
      %1083 = vmatprep.mubr.bf16.mxu0 0
      %1084 = vmatmul.mubr.bf16.gmra.mrb[0].mxu0 %v642
      %v1085 = vpop.f32.mrb[0].mxu0
      %v1086 = vadd.f32 0.0, %v1085
      %v1087 = vpop.f32.mrb[0].mxu0
      %v1088 = vpop.f32.mrb[0].mxu0
      %v1089 = vadd.f32 0.0, %v1088
      %v1090 = vpop.f32.mrb[0].mxu0
      %1091 = vmatprep.mubr.bf16.mxu0 0
      %1092 = vmatmul.mubr.bf16.gmra.mrb[0].mxu0 %v643
      %v1093 = vpop.f32.mrb[0].mxu0
      %v1094 = vadd.f32 0.0, %v1093
      %v1095 = vpop.f32.mrb[0].mxu0
      %v1096 = vpop.f32.mrb[0].mxu0
      %v1097 = vadd.f32 0.0, %v1096
      %v1098 = vpop.f32.mrb[0].mxu0
      %1099 = vmatprep.mubr.bf16.mxu0 0
      %1100 = vmatmul.mubr.bf16.gmra.mrb[0].mxu0 %v644
      %v1101 = vpop.f32.mrb[0].mxu0
      %v1102 = vadd.f32 0.0, %v1101
      %v1103 = vpop.f32.mrb[0].mxu0
      %v1104 = vpop.f32.mrb[0].mxu0
      %v1105 = vadd.f32 0.0, %v1104
      %v1106 = vpop.f32.mrb[0].mxu0
      %1107 = vmatprep.mubr.bf16.mxu0 0
      %1108 = vmatmul.mubr.bf16.gmra.mrb[0].mxu0 %v645
      %v1109 = vpop.f32.mrb[0].mxu0
      %v1110 = vadd.f32 0.0, %v1109
      %v1111 = vpop.f32.mrb[0].mxu0
      %v1112 = vpop.f32.mrb[0].mxu0
      %v1113 = vadd.f32 0.0, %v1112
      %v1114 = vpop.f32.mrb[0].mxu0
      %1115 = vmatprep.mubr.bf16.mxu0 0
      %1116 = vmatmul.mubr.bf16.gmra.mrb[0].mxu0 %v646
      %v1117 = vpop.f32.mrb[0].mxu0
      %v1118 = vadd.f32 0.0, %v1117
      %v1119 = vpop.f32.mrb[0].mxu0
      %v1120 = vpop.f32.mrb[0].mxu0
      %v1121 = vadd.f32 0.0, %v1120
      %v1122 = vpop.f32.mrb[0].mxu0
      %1123 = vmatprep.mubr.bf16.mxu0 0
      %1124 = vmatmul.mubr.bf16.gmra.mrb[0].mxu0 %v647
      %v1125 = vpop.f32.mrb[0].mxu0
      %v1126 = vadd.f32 0.0, %v1125
      %v1127 = vpop.f32.mrb[0].mxu0
      %v1128 = vpop.f32.mrb[0].mxu0
      %v1129 = vadd.f32 0.0, %v1128
      %v1130 = vpop.f32.mrb[0].mxu0
      %1131 = vmatprep.mubr.bf16.mxu0 0
      %1132 = vmatmul.mubr.bf16.gmra.mrb[0].mxu0 %v648
      %v1133 = vpop.f32.mrb[0].mxu0
      %v1134 = vadd.f32 0.0, %v1133
      %v1135 = vpop.f32.mrb[0].mxu0
      %v1136 = vpop.f32.mrb[0].mxu0
      %v1137 = vadd.f32 0.0, %v1136
      %v1138 = vpop.f32.mrb[0].mxu0
      %1139 = vmatprep.mubr.bf16.mxu0 0
      %1140 = vmatmul.mubr.bf16.gmra.mrb[0].mxu0 %v649
      %v1141 = vpop.f32.mrb[0].mxu0
      %v1142 = vadd.f32 0.0, %v1141
      %v1143 = vpop.f32.mrb[0].mxu0
      %v1144 = vpop.f32.mrb[0].mxu0
      %v1145 = vadd.f32 0.0, %v1144
      %v1146 = vpop.f32.mrb[0].mxu0
      %1147 = vmatprep.mubr.bf16.mxu0 0
      %1148 = vmatmul.mubr.bf16.gmra.mrb[0].mxu0 %v650
      %v1149 = vpop.f32.mrb[0].mxu0
      %v1150 = vadd.f32 0.0, %v1149
      %v1151 = vpop.f32.mrb[0].mxu0
      %v1152 = vpop.f32.mrb[0].mxu0
      %v1153 = vadd.f32 0.0, %v1152
      %v1154 = vpop.f32.mrb[0].mxu0
      %1155 = vmatprep.mubr.bf16.mxu0 0
      %1156 = vmatmul.mubr.bf16.gmra.mrb[0].mxu0 %v651
      %v1157 = vpop.f32.mrb[0].mxu0
      %v1158 = vadd.f32 0.0, %v1157
      %v1159 = vpop.f32.mrb[0].mxu0
      %v1160 = vpop.f32.mrb[0].mxu0
      %v1161 = vadd.f32 0.0, %v1160
      %v1162 = vpop.f32.mrb[0].mxu0
      %1163 = vmatprep.mubr.bf16.mxu0 0
      %1164 = vmatmul.mubr.bf16.gmra.mrb[0].mxu0 %v652
      %v1165 = vpop.f32.mrb[0].mxu0
      %v1166 = vadd.f32 0.0, %v1165
      %v1167 = vpop.f32.mrb[0].mxu0
      %v1168 = vpop.f32.mrb[0].mxu0
      %v1169 = vadd.f32 0.0, %v1168
      %v1170 = vpop.f32.mrb[0].mxu0
      %1171 = vmatprep.mubr.bf16.mxu0 0
      %1172 = vmatmul.mubr.bf16.gmra.mrb[0].mxu0 %v653
      %v1173 = vpop.f32.mrb[0].mxu0
      %v1174 = vadd.f32 0.0, %v1173
      %v1175 = vpop.f32.mrb[0].mxu0
      %v1176 = vpop.f32.mrb[0].mxu0
      %v1177 = vadd.f32 0.0, %v1176
      %v1178 = vpop.f32.mrb[0].mxu0
      %1179 = vmatprep.mubr.bf16.mxu0 0
      %1180 = vmatmul.mubr.bf16.gmra.mrb[0].mxu0 %v654
      %v1181 = vpop.f32.mrb[0].mxu0
      %v1182 = vadd.f32 0.0, %v1181
      %v1183 = vpop.f32.mrb[0].mxu0
      %v1184 = vpop.f32.mrb[0].mxu0
      %v1185 = vadd.f32 0.0, %v1184
      %v1186 = vpop.f32.mrb[0].mxu0
      %1187 = vmatprep.mubr.bf16.mxu0 0
      %1188 = vmatmul.mubr.bf16.gmra.mrb[0].mxu0 %v655
      %v1189 = vpop.f32.mrb[0].mxu0
      %v1190 = vadd.f32 0.0, %v1189
      %v1191 = vpop.f32.mrb[0].mxu0
      %v1192 = vpop.f32.mrb[0].mxu0
      %v1193 = vadd.f32 0.0, %v1192
      %v1194 = vpop.f32.mrb[0].mxu0
      %1195 = vdwg.mxu0
      %v1212 = vunpack.c.l.b16 %v955
      %v1213 = vunpack.c.l.b16 %v956
      %v1214 = vunpack.c.l.b16 %v957
      %v1215 = vunpack.c.l.b16 %v958
      %v1216 = vunpack.c.l.b16 %v959
      %v1217 = vunpack.c.l.b16 %v960
      %v1218 = vunpack.c.l.b16 %v961
      %v1219 = vunpack.c.l.b16 %v962
      %v1220 = vunpack.c.l.b16 %v963
      %v1221 = vunpack.c.l.b16 %v964
      %v1222 = vunpack.c.l.b16 %v965
      %v1223 = vunpack.c.l.b16 %v966
      %v1224 = vunpack.c.l.b16 %v967
      %v1225 = vunpack.c.l.b16 %v968
      %v1226 = vunpack.c.l.b16 %v969
      %v1227 = vunpack.c.l.b16 %v970
      %v1228 = vpack.c.b16 %v1213, %v1212
      %v1229 = vpack.c.b16 %v1215, %v1214
      %v1230 = vpack.c.b16 %v1217, %v1216
      %v1231 = vpack.c.b16 %v1219, %v1218
      %v1232 = vpack.c.b16 %v1221, %v1220
      %v1233 = vpack.c.b16 %v1223, %v1222
      %v1234 = vpack.c.b16 %v1225, %v1224
      %v1235 = vpack.c.b16 %v1227, %v1226
      %1244 = vmatprep.subr.bf16.mxu0 0
      %1245 = vmatpush1.bf16.msra.mxu0 %v1228
      %1246 = vmatprep.subr.bf16.mxu0 0
      %1247 = vmatpush1.bf16.msra.mxu0 %v1229
      %1248 = vmatprep.subr.bf16.mxu0 0
      %1249 = vmatpush1.bf16.msra.mxu0 %v1230
      %1250 = vmatprep.subr.bf16.mxu0 0
      %1251 = vmatpush1.bf16.msra.mxu0 %v1231
      %1252 = vmatprep.subr.bf16.mxu0 0
      %1253 = vmatpush1.bf16.msra.mxu0 %v1232
      %1254 = vmatprep.subr.bf16.mxu0 0
      %1255 = vmatpush1.bf16.msra.mxu0 %v1233
      %1256 = vmatprep.subr.bf16.mxu0 0
      %1257 = vmatpush1.bf16.msra.mxu0 %v1234
      %1258 = vmatprep.subr.bf16.mxu0 0
      %1259 = vmatpush1.bf16.msra.mxu0 %v1235
      %1260 = vmatprep.subr.bf16.mxu0 0
      %1261 = vmatpush1.bf16.msra.mxu0 0
      %1262 = vmatprep.subr.bf16.mxu0 0
      %1263 = vmatpush1.bf16.msra.mxu0 0
      %1264 = vmatprep.subr.bf16.mxu0 0
      %1265 = vmatpush1.bf16.msra.mxu0 0
      %1266 = vmatprep.subr.bf16.mxu0 0
      %1267 = vmatpush1.bf16.msra.mxu0 0
      %1268 = vmatprep.subr.bf16.mxu0 0
      %1269 = vmatpush1.bf16.msra.mxu0 0
      %1270 = vmatprep.subr.bf16.mxu0 0
      %1271 = vmatpush1.bf16.msra.mxu0 0
      %1272 = vmatprep.subr.bf16.mxu0 0
      %1273 = vmatpush1.bf16.msra.mxu0 0
      %1274 = vmatprep.subr.bf16.mxu0 0
      %1275 = vmatpush1.bf16.msra.mxu0 0
      %1276 = vmatprep.mubr.bf16.mxu0 0
      %1277 = vmatmul.mubr.bf16.gmra.mrb[0].mxu0 %v862
      %v1278 = vpop.f32.mrb[0].mxu0
      %v1279 = vadd.f32 %v1070, %v1278
      %v1280 = vpop.f32.mrb[0].mxu0
      %v1281 = vpop.f32.mrb[0].mxu0
      %v1282 = vadd.f32 %v1073, %v1281
      %v1283 = vpop.f32.mrb[0].mxu0
      %1284 = vmatprep.mubr.bf16.mxu0 0
      %1285 = vmatmul.mubr.bf16.gmra.mrb[0].mxu0 %v863
      %v1286 = vpop.f32.mrb[0].mxu0
      %v1287 = vadd.f32 %v1078, %v1286
      %v1288 = vpop.f32.mrb[0].mxu0
      %v1289 = vpop.f32.mrb[0].mxu0
      %v1290 = vadd.f32 %v1081, %v1289
      %v1291 = vpop.f32.mrb[0].mxu0
      %1292 = vmatprep.mubr.bf16.mxu0 0
      %1293 = vmatmul.mubr.bf16.gmra.mrb[0].mxu0 %v864
      %v1294 = vpop.f32.mrb[0].mxu0
      %v1295 = vadd.f32 %v1086, %v1294
      %v1296 = vpop.f32.mrb[0].mxu0
      %v1297 = vpop.f32.mrb[0].mxu0
      %v1298 = vadd.f32 %v1089, %v1297
      %v1299 = vpop.f32.mrb[0].mxu0
      %1300 = vmatprep.mubr.bf16.mxu0 0
      %1301 = vmatmul.mubr.bf16.gmra.mrb[0].mxu0 %v865
      %v1302 = vpop.f32.mrb[0].mxu0
      %v1303 = vadd.f32 %v1094, %v1302
      %v1304 = vpop.f32.mrb[0].mxu0
      %v1305 = vpop.f32.mrb[0].mxu0
      %v1306 = vadd.f32 %v1097, %v1305
      %v1307 = vpop.f32.mrb[0].mxu0
      %1308 = vmatprep.mubr.bf16.mxu0 0
      %1309 = vmatmul.mubr.bf16.gmra.mrb[0].mxu0 %v866
      %v1310 = vpop.f32.mrb[0].mxu0
      %v1311 = vadd.f32 %v1102, %v1310
      %v1312 = vpop.f32.mrb[0].mxu0
      %v1313 = vpop.f32.mrb[0].mxu0
      %v1314 = vadd.f32 %v1105, %v1313
      %v1315 = vpop.f32.mrb[0].mxu0
      %1316 = vmatprep.mubr.bf16.mxu0 0
      %1317 = vmatmul.mubr.bf16.gmra.mrb[0].mxu0 %v867
      %v1318 = vpop.f32.mrb[0].mxu0
      %v1319 = vadd.f32 %v1110, %v1318
      %v1320 = vpop.f32.mrb[0].mxu0
      %v1321 = vpop.f32.mrb[0].mxu0
      %v1322 = vadd.f32 %v1113, %v1321
      %v1323 = vpop.f32.mrb[0].mxu0
      %1324 = vmatprep.mubr.bf16.mxu0 0
      %1325 = vmatmul.mubr.bf16.gmra.mrb[0].mxu0 %v868
      %v1326 = vpop.f32.mrb[0].mxu0
      %v1327 = vadd.f32 %v1118, %v1326
      %v1328 = vpop.f32.mrb[0].mxu0
      %v1329 = vpop.f32.mrb[0].mxu0
      %v1330 = vadd.f32 %v1121, %v1329
      %v1331 = vpop.f32.mrb[0].mxu0
      %1332 = vmatprep.mubr.bf16.mxu0 0
      %1333 = vmatmul.mubr.bf16.gmra.mrb[0].mxu0 %v869
      %v1334 = vpop.f32.mrb[0].mxu0
      %v1335 = vadd.f32 %v1126, %v1334
      %v1336 = vpop.f32.mrb[0].mxu0
      %v1337 = vpop.f32.mrb[0].mxu0
      %v1338 = vadd.f32 %v1129, %v1337
      %v1339 = vpop.f32.mrb[0].mxu0
      %1340 = vmatprep.mubr.bf16.mxu0 0
      %1341 = vmatmul.mubr.bf16.gmra.mrb[0].mxu0 %v870
      %v1342 = vpop.f32.mrb[0].mxu0
      %v1343 = vadd.f32 %v1134, %v1342
      %v1344 = vpop.f32.mrb[0].mxu0
      %v1345 = vpop.f32.mrb[0].mxu0
      %v1346 = vadd.f32 %v1137, %v1345
      %v1347 = vpop.f32.mrb[0].mxu0
      %1348 = vmatprep.mubr.bf16.mxu0 0
      %1349 = vmatmul.mubr.bf16.gmra.mrb[0].mxu0 %v871
      %v1350 = vpop.f32.mrb[0].mxu0
      %v1351 = vadd.f32 %v1142, %v1350
      %v1352 = vpop.f32.mrb[0].mxu0
      %v1353 = vpop.f32.mrb[0].mxu0
      %v1354 = vadd.f32 %v1145, %v1353
      %v1355 = vpop.f32.mrb[0].mxu0
      %1356 = vmatprep.mubr.bf16.mxu0 0
      %1357 = vmatmul.mubr.bf16.gmra.mrb[0].mxu0 %v872
      %v1358 = vpop.f32.mrb[0].mxu0
      %v1359 = vadd.f32 %v1150, %v1358
      %v1360 = vpop.f32.mrb[0].mxu0
      %v1361 = vpop.f32.mrb[0].mxu0
      %v1362 = vadd.f32 %v1153, %v1361
      %v1363 = vpop.f32.mrb[0].mxu0
      %1364 = vmatprep.mubr.bf16.mxu0 0
      %1365 = vmatmul.mubr.bf16.gmra.mrb[0].mxu0 %v873
      %v1366 = vpop.f32.mrb[0].mxu0
      %v1367 = vadd.f32 %v1158, %v1366
      %v1368 = vpop.f32.mrb[0].mxu0
      %v1369 = vpop.f32.mrb[0].mxu0
      %v1370 = vadd.f32 %v1161, %v1369
      %v1371 = vpop.f32.mrb[0].mxu0
      %1372 = vmatprep.mubr.bf16.mxu0 0
      %1373 = vmatmul.mubr.bf16.gmra.mrb[0].mxu0 %v874
      %v1374 = vpop.f32.mrb[0].mxu0
      %v1375 = vadd.f32 %v1166, %v1374
      %v1376 = vpop.f32.mrb[0].mxu0
      %v1377 = vpop.f32.mrb[0].mxu0
      %v1378 = vadd.f32 %v1169, %v1377
      %v1379 = vpop.f32.mrb[0].mxu0
      %1380 = vmatprep.mubr.bf16.mxu0 0
      %1381 = vmatmul.mubr.bf16.gmra.mrb[0].mxu0 %v875
      %v1382 = vpop.f32.mrb[0].mxu0
      %v1383 = vadd.f32 %v1174, %v1382
      %v1384 = vpop.f32.mrb[0].mxu0
      %v1385 = vpop.f32.mrb[0].mxu0
      %v1386 = vadd.f32 %v1177, %v1385
      %v1387 = vpop.f32.mrb[0].mxu0
      %1388 = vmatprep.mubr.bf16.mxu0 0
      %1389 = vmatmul.mubr.bf16.gmra.mrb[0].mxu0 %v876
      %v1390 = vpop.f32.mrb[0].mxu0
      %v1391 = vadd.f32 %v1182, %v1390
      %v1392 = vpop.f32.mrb[0].mxu0
      %v1393 = vpop.f32.mrb[0].mxu0
      %v1394 = vadd.f32 %v1185, %v1393
      %v1395 = vpop.f32.mrb[0].mxu0
      %1396 = vmatprep.mubr.bf16.mxu0 0
      %1397 = vmatmul.mubr.bf16.gmra.mrb[0].mxu0 %v877
      %v1398 = vpop.f32.mrb[0].mxu0
      %v1399 = vadd.f32 %v1190, %v1398
      %v1400 = vpop.f32.mrb[0].mxu0
      %v1401 = vpop.f32.mrb[0].mxu0
      %v1402 = vadd.f32 %v1193, %v1401
      %v1403 = vpop.f32.mrb[0].mxu0
      %1404 = vdwg.mxu0
      %v1405 = vld [vmem:[%s3 + $0x80] sm:$0xf]
      %v1406 = vld [vmem:[%s3 + $0x84] sm:$0xf]
      %v1407 = vld [vmem:[%s3 + $0x88] sm:$0xf]
      %v1408 = vld [vmem:[%s3 + $0x8c] sm:$0xf]
      %v1409 = vld [vmem:[%s3 + $0x90] sm:$0xf]
      %v1410 = vld [vmem:[%s3 + $0x94] sm:$0xf]
      %v1411 = vld [vmem:[%s3 + $0x98] sm:$0xf]
      %v1412 = vld [vmem:[%s3 + $0x9c] sm:$0xf]
      %v1413 = vld [vmem:[%s3 + $0xa0] sm:$0xf]
      %v1414 = vld [vmem:[%s3 + $0xa4] sm:$0xf]
      %v1415 = vld [vmem:[%s3 + $0xa8] sm:$0xf]
      %v1416 = vld [vmem:[%s3 + $0xac] sm:$0xf]
      %v1417 = vld [vmem:[%s3 + $0xb0] sm:$0xf]
      %v1418 = vld [vmem:[%s3 + $0xb4] sm:$0xf]
      %v1419 = vld [vmem:[%s3 + $0xb8] sm:$0xf]
      %v1420 = vld [vmem:[%s3 + $0xbc] sm:$0xf]
      %v1437 = vunpack.c.l.b16 %v1405
      %v1438 = vunpack.c.l.b16 %v1406
      %v1439 = vunpack.c.l.b16 %v1407
      %v1440 = vunpack.c.l.b16 %v1408
      %v1441 = vunpack.c.l.b16 %v1409
      %v1442 = vunpack.c.l.b16 %v1410
      %v1443 = vunpack.c.l.b16 %v1411
      %v1444 = vunpack.c.l.b16 %v1412
      %v1445 = vunpack.c.l.b16 %v1413
      %v1446 = vunpack.c.l.b16 %v1414
      %v1447 = vunpack.c.l.b16 %v1415
      %v1448 = vunpack.c.l.b16 %v1416
      %v1449 = vunpack.c.l.b16 %v1417
      %v1450 = vunpack.c.l.b16 %v1418
      %v1451 = vunpack.c.l.b16 %v1419
      %v1452 = vunpack.c.l.b16 %v1420
      %v1453 = vpack.c.b16 %v1438, %v1437
      %v1454 = vpack.c.b16 %v1440, %v1439
      %v1455 = vpack.c.b16 %v1442, %v1441
      %v1456 = vpack.c.b16 %v1444, %v1443
      %v1457 = vpack.c.b16 %v1446, %v1445
      %v1458 = vpack.c.b16 %v1448, %v1447
      %v1459 = vpack.c.b16 %v1450, %v1449
      %v1460 = vpack.c.b16 %v1452, %v1451
      %1469 = vmatprep.subr.bf16.mxu0 0
      %1470 = vmatpush1.bf16.msra.mxu0 %v1453
      %1471 = vmatprep.subr.bf16.mxu0 0
      %1472 = vmatpush1.bf16.msra.mxu0 %v1454
      %1473 = vmatprep.subr.bf16.mxu0 0
      %1474 = vmatpush1.bf16.msra.mxu0 %v1455
      %1475 = vmatprep.subr.bf16.mxu0 0
      %1476 = vmatpush1.bf16.msra.mxu0 %v1456
      %1477 = vmatprep.subr.bf16.mxu0 0
      %1478 = vmatpush1.bf16.msra.mxu0 %v1457
      %1479 = vmatprep.subr.bf16.mxu0 0
      %1480 = vmatpush1.bf16.msra.mxu0 %v1458
      %1481 = vmatprep.subr.bf16.mxu0 0
      %1482 = vmatpush1.bf16.msra.mxu0 %v1459
      %1483 = vmatprep.subr.bf16.mxu0 0
      %1484 = vmatpush1.bf16.msra.mxu0 %v1460
      %1485 = vmatprep.subr.bf16.mxu0 0
      %1486 = vmatpush1.bf16.msra.mxu0 0
      %1487 = vmatprep.subr.bf16.mxu0 0
      %1488 = vmatpush1.bf16.msra.mxu0 0
      %1489 = vmatprep.subr.bf16.mxu0 0
      %1490 = vmatpush1.bf16.msra.mxu0 0
      %1491 = vmatprep.subr.bf16.mxu0 0
      %1492 = vmatpush1.bf16.msra.mxu0 0
      %1493 = vmatprep.subr.bf16.mxu0 0
      %1494 = vmatpush1.bf16.msra.mxu0 0
      %1495 = vmatprep.subr.bf16.mxu0 0
      %1496 = vmatpush1.bf16.msra.mxu0 0
      %1497 = vmatprep.subr.bf16.mxu0 0
      %1498 = vmatpush1.bf16.msra.mxu0 0
      %1499 = vmatprep.subr.bf16.mxu0 0
      %1500 = vmatpush1.bf16.msra.mxu0 0
      %1501 = vmatprep.mubr.bf16.mxu0 0
      %1502 = vmatmul.mubr.bf16.gmra.mrb[0].mxu0 %v937
      %v1503 = vpop.f32.mrb[0].mxu0
      %v1504 = vadd.f32 0.0, %v1503
      %v1505 = vpop.f32.mrb[0].mxu0
      %v1506 = vpop.f32.mrb[0].mxu0
      %v1507 = vadd.f32 0.0, %v1506
      %v1508 = vpop.f32.mrb[0].mxu0
      %1509 = vmatprep.mubr.bf16.mxu0 0
      %1510 = vmatmul.mubr.bf16.gmra.mrb[0].mxu0 %v938
      %v1511 = vpop.f32.mrb[0].mxu0
      %v1512 = vadd.f32 0.0, %v1511
      %v1513 = vpop.f32.mrb[0].mxu0
      %v1514 = vpop.f32.mrb[0].mxu0
      %v1515 = vadd.f32 0.0, %v1514
      %v1516 = vpop.f32.mrb[0].mxu0
      %1517 = vmatprep.mubr.bf16.mxu0 0
      %1518 = vmatmul.mubr.bf16.gmra.mrb[0].mxu0 %v939
      %v1519 = vpop.f32.mrb[0].mxu0
      %v1520 = vadd.f32 0.0, %v1519
      %v1521 = vpop.f32.mrb[0].mxu0
      %v1522 = vpop.f32.mrb[0].mxu0
      %v1523 = vadd.f32 0.0, %v1522
      %v1524 = vpop.f32.mrb[0].mxu0
      %1525 = vmatprep.mubr.bf16.mxu0 0
      %1526 = vmatmul.mubr.bf16.gmra.mrb[0].mxu0 %v940
      %v1527 = vpop.f32.mrb[0].mxu0
      %v1528 = vadd.f32 0.0, %v1527
      %v1529 = vpop.f32.mrb[0].mxu0
      %v1530 = vpop.f32.mrb[0].mxu0
      %v1531 = vadd.f32 0.0, %v1530
      %v1532 = vpop.f32.mrb[0].mxu0
      %1533 = vmatprep.mubr.bf16.mxu0 0
      %1534 = vmatmul.mubr.bf16.gmra.mrb[0].mxu0 %v941
      %v1535 = vpop.f32.mrb[0].mxu0
      %v1536 = vadd.f32 0.0, %v1535
      %v1537 = vpop.f32.mrb[0].mxu0
      %v1538 = vpop.f32.mrb[0].mxu0
      %v1539 = vadd.f32 0.0, %v1538
      %v1540 = vpop.f32.mrb[0].mxu0
      %1541 = vmatprep.mubr.bf16.mxu0 0
      %1542 = vmatmul.mubr.bf16.gmra.mrb[0].mxu0 %v942
      %v1543 = vpop.f32.mrb[0].mxu0
      %v1544 = vadd.f32 0.0, %v1543
      %v1545 = vpop.f32.mrb[0].mxu0
      %v1546 = vpop.f32.mrb[0].mxu0
      %v1547 = vadd.f32 0.0, %v1546
      %v1548 = vpop.f32.mrb[0].mxu0
      %1549 = vmatprep.mubr.bf16.mxu0 0
      %1550 = vmatmul.mubr.bf16.gmra.mrb[0].mxu0 %v943
      %v1551 = vpop.f32.mrb[0].mxu0
      %v1552 = vadd.f32 0.0, %v1551
      %v1553 = vpop.f32.mrb[0].mxu0
      %v1554 = vpop.f32.mrb[0].mxu0
      %v1555 = vadd.f32 0.0, %v1554
      %v1556 = vpop.f32.mrb[0].mxu0
      %1557 = vmatprep.mubr.bf16.mxu0 0
      %1558 = vmatmul.mubr.bf16.gmra.mrb[0].mxu0 %v944
      %v1559 = vpop.f32.mrb[0].mxu0
      %v1560 = vadd.f32 0.0, %v1559
      %v1561 = vpop.f32.mrb[0].mxu0
      %v1562 = vpop.f32.mrb[0].mxu0
      %v1563 = vadd.f32 0.0, %v1562
      %v1564 = vpop.f32.mrb[0].mxu0
      %1565 = vmatprep.mubr.bf16.mxu0 0
      %1566 = vmatmul.mubr.bf16.gmra.mrb[0].mxu0 %v945
      %v1567 = vpop.f32.mrb[0].mxu0
      %v1568 = vadd.f32 0.0, %v1567
      %v1569 = vpop.f32.mrb[0].mxu0
      %v1570 = vpop.f32.mrb[0].mxu0
      %v1571 = vadd.f32 0.0, %v1570
      %v1572 = vpop.f32.mrb[0].mxu0
      %1573 = vmatprep.mubr.bf16.mxu0 0
      %1574 = vmatmul.mubr.bf16.gmra.mrb[0].mxu0 %v946
      %v1575 = vpop.f32.mrb[0].mxu0
      %v1576 = vadd.f32 0.0, %v1575
      %v1577 = vpop.f32.mrb[0].mxu0
      %v1578 = vpop.f32.mrb[0].mxu0
      %v1579 = vadd.f32 0.0, %v1578
      %v1580 = vpop.f32.mrb[0].mxu0
      %1581 = vmatprep.mubr.bf16.mxu0 0
      %1582 = vmatmul.mubr.bf16.gmra.mrb[0].mxu0 %v947
      %v1583 = vpop.f32.mrb[0].mxu0
      %v1584 = vadd.f32 0.0, %v1583
      %v1585 = vpop.f32.mrb[0].mxu0
      %v1586 = vpop.f32.mrb[0].mxu0
      %v1587 = vadd.f32 0.0, %v1586
      %v1588 = vpop.f32.mrb[0].mxu0
      %1589 = vmatprep.mubr.bf16.mxu0 0
      %1590 = vmatmul.mubr.bf16.gmra.mrb[0].mxu0 %v948
      %v1591 = vpop.f32.mrb[0].mxu0
      %v1592 = vadd.f32 0.0, %v1591
      %v1593 = vpop.f32.mrb[0].mxu0
      %v1594 = vpop.f32.mrb[0].mxu0
      %v1595 = vadd.f32 0.0, %v1594
      %v1596 = vpop.f32.mrb[0].mxu0
      %1597 = vmatprep.mubr.bf16.mxu0 0
      %1598 = vmatmul.mubr.bf16.gmra.mrb[0].mxu0 %v949
      %v1599 = vpop.f32.mrb[0].mxu0
      %v1600 = vadd.f32 0.0, %v1599
      %v1601 = vpop.f32.mrb[0].mxu0
      %v1602 = vpop.f32.mrb[0].mxu0
      %v1603 = vadd.f32 0.0, %v1602
      %v1604 = vpop.f32.mrb[0].mxu0
      %1605 = vmatprep.mubr.bf16.mxu0 0
      %1606 = vmatmul.mubr.bf16.gmra.mrb[0].mxu0 %v950
      %v1607 = vpop.f32.mrb[0].mxu0
      %v1608 = vadd.f32 0.0, %v1607
      %v1609 = vpop.f32.mrb[0].mxu0
      %v1610 = vpop.f32.mrb[0].mxu0
      %v1611 = vadd.f32 0.0, %v1610
      %v1612 = vpop.f32.mrb[0].mxu0
      %1613 = vmatprep.mubr.bf16.mxu0 0
      %1614 = vmatmul.mubr.bf16.gmra.mrb[0].mxu0 %v951
      %v1615 = vpop.f32.mrb[0].mxu0
      %v1616 = vadd.f32 0.0, %v1615
      %v1617 = vpop.f32.mrb[0].mxu0
      %v1618 = vpop.f32.mrb[0].mxu0
      %v1619 = vadd.f32 0.0, %v1618
      %v1620 = vpop.f32.mrb[0].mxu0
      %1621 = vmatprep.mubr.bf16.mxu0 0
      %1622 = vmatmul.mubr.bf16.gmra.mrb[0].mxu0 %v952
      %v1623 = vpop.f32.mrb[0].mxu0
      %v1624 = vadd.f32 0.0, %v1623
      %v1625 = vpop.f32.mrb[0].mxu0
      %v1626 = vpop.f32.mrb[0].mxu0
      %v1627 = vadd.f32 0.0, %v1626
      %v1628 = vpop.f32.mrb[0].mxu0
      %1629 = vdwg.mxu0
      %v1630 = vadd.f32 %v1279, %v1504
      %v1631 = vadd.f32 %v1282, %v1507
      %v1632 = vadd.f32 %v1287, %v1512
      %v1633 = vadd.f32 %v1290, %v1515
      %v1634 = vadd.f32 %v1295, %v1520
      %v1635 = vadd.f32 %v1298, %v1523
      %v1636 = vadd.f32 %v1303, %v1528
      %v1637 = vadd.f32 %v1306, %v1531
      %v1638 = vadd.f32 %v1311, %v1536
      %v1639 = vadd.f32 %v1314, %v1539
      %v1640 = vadd.f32 %v1319, %v1544
      %v1641 = vadd.f32 %v1322, %v1547
      %v1642 = vadd.f32 %v1327, %v1552
      %v1643 = vadd.f32 %v1330, %v1555
      %v1644 = vadd.f32 %v1335, %v1560
      %v1645 = vadd.f32 %v1338, %v1563
      %v1646 = vadd.f32 %v1343, %v1568
      %v1647 = vadd.f32 %v1346, %v1571
      %v1648 = vadd.f32 %v1351, %v1576
      %v1649 = vadd.f32 %v1354, %v1579
      %v1650 = vadd.f32 %v1359, %v1584
      %v1651 = vadd.f32 %v1362, %v1587
      %v1652 = vadd.f32 %v1367, %v1592
      %v1653 = vadd.f32 %v1370, %v1595
      %v1654 = vadd.f32 %v1375, %v1600
      %v1655 = vadd.f32 %v1378, %v1603
      %v1656 = vadd.f32 %v1383, %v1608
      %v1657 = vadd.f32 %v1386, %v1611
      %v1658 = vadd.f32 %v1391, %v1616
      %v1659 = vadd.f32 %v1394, %v1619
      %v1660 = vadd.f32 %v1399, %v1624
      %v1661 = vadd.f32 %v1402, %v1627
      %v1662 = vld [vmem:[%s3 + $0xc0] sm:$0xf]
      %v1663 = vld [vmem:[%s3 + $0xc4] sm:$0xf]
      %v1664 = vld [vmem:[%s3 + $0xc8] sm:$0xf]
      %v1665 = vld [vmem:[%s3 + $0xcc] sm:$0xf]
      %v1666 = vld [vmem:[%s3 + $0xd0] sm:$0xf]
      %v1667 = vld [vmem:[%s3 + $0xd4] sm:$0xf]
      %v1668 = vld [vmem:[%s3 + $0xd8] sm:$0xf]
      %v1669 = vld [vmem:[%s3 + $0xdc] sm:$0xf]
      %v1670 = vld [vmem:[%s3 + $0xe0] sm:$0xf]
      %v1671 = vld [vmem:[%s3 + $0xe4] sm:$0xf]
      %v1672 = vld [vmem:[%s3 + $0xe8] sm:$0xf]
      %v1673 = vld [vmem:[%s3 + $0xec] sm:$0xf]
      %v1674 = vld [vmem:[%s3 + $0xf0] sm:$0xf]
      %v1675 = vld [vmem:[%s3 + $0xf4] sm:$0xf]
      %v1676 = vld [vmem:[%s3 + $0xf8] sm:$0xf]
      %v1677 = vld [vmem:[%s3 + $0xfc] sm:$0xf]
      %v1694 = vunpack.c.l.b16 %v1662
      %v1695 = vunpack.c.l.b16 %v1663
      %v1696 = vunpack.c.l.b16 %v1664
      %v1697 = vunpack.c.l.b16 %v1665
      %v1698 = vunpack.c.l.b16 %v1666
      %v1699 = vunpack.c.l.b16 %v1667
      %v1700 = vunpack.c.l.b16 %v1668
      %v1701 = vunpack.c.l.b16 %v1669
      %v1702 = vunpack.c.l.b16 %v1670
      %v1703 = vunpack.c.l.b16 %v1671
      %v1704 = vunpack.c.l.b16 %v1672
      %v1705 = vunpack.c.l.b16 %v1673
      %v1706 = vunpack.c.l.b16 %v1674
      %v1707 = vunpack.c.l.b16 %v1675
      %v1708 = vunpack.c.l.b16 %v1676
      %v1709 = vunpack.c.l.b16 %v1677
      %v1710 = vpack.c.b16 %v1695, %v1694
      %v1711 = vpack.c.b16 %v1697, %v1696
      %v1712 = vpack.c.b16 %v1699, %v1698
      %v1713 = vpack.c.b16 %v1701, %v1700
      %v1714 = vpack.c.b16 %v1703, %v1702
      %v1715 = vpack.c.b16 %v1705, %v1704
      %v1716 = vpack.c.b16 %v1707, %v1706
      %v1717 = vpack.c.b16 %v1709, %v1708
      %1726 = vmatprep.subr.bf16.mxu0 0
      %1727 = vmatpush1.bf16.msra.mxu0 %v1710
      %1728 = vmatprep.subr.bf16.mxu0 0
      %1729 = vmatpush1.bf16.msra.mxu0 %v1711
      %1730 = vmatprep.subr.bf16.mxu0 0
      %1731 = vmatpush1.bf16.msra.mxu0 %v1712
      %1732 = vmatprep.subr.bf16.mxu0 0
      %1733 = vmatpush1.bf16.msra.mxu0 %v1713
      %1734 = vmatprep.subr.bf16.mxu0 0
      %1735 = vmatpush1.bf16.msra.mxu0 %v1714
      %1736 = vmatprep.subr.bf16.mxu0 0
      %1737 = vmatpush1.bf16.msra.mxu0 %v1715
      %1738 = vmatprep.subr.bf16.mxu0 0
      %1739 = vmatpush1.bf16.msra.mxu0 %v1716
      %1740 = vmatprep.subr.bf16.mxu0 0
      %1741 = vmatpush1.bf16.msra.mxu0 %v1717
      %1742 = vmatprep.subr.bf16.mxu0 0
      %1743 = vmatpush1.bf16.msra.mxu0 0
      %1744 = vmatprep.subr.bf16.mxu0 0
      %1745 = vmatpush1.bf16.msra.mxu0 0
      %1746 = vmatprep.subr.bf16.mxu0 0
      %1747 = vmatpush1.bf16.msra.mxu0 0
      %1748 = vmatprep.subr.bf16.mxu0 0
      %1749 = vmatpush1.bf16.msra.mxu0 0
      %1750 = vmatprep.subr.bf16.mxu0 0
      %1751 = vmatpush1.bf16.msra.mxu0 0
      %1752 = vmatprep.subr.bf16.mxu0 0
      %1753 = vmatpush1.bf16.msra.mxu0 0
      %1754 = vmatprep.subr.bf16.mxu0 0
      %1755 = vmatpush1.bf16.msra.mxu0 0
      %1756 = vmatprep.subr.bf16.mxu0 0
      %1757 = vmatpush1.bf16.msra.mxu0 0
      %1758 = vmatprep.mubr.bf16.mxu0 0
      %1759 = vmatmul.mubr.bf16.gmra.mrb[0].mxu0 %v863
      %v1760 = vpop.f32.mrb[0].mxu0
      %v1761 = vadd.f32 0.0, %v1760
      %v1762 = vpop.f32.mrb[0].mxu0
      %v1763 = vpop.f32.mrb[0].mxu0
      %v1764 = vadd.f32 0.0, %v1763
      %v1765 = vpop.f32.mrb[0].mxu0
      %1766 = vmatprep.mubr.bf16.mxu0 0
      %1767 = vmatmul.mubr.bf16.gmra.mrb[0].mxu0 %v864
      %v1768 = vpop.f32.mrb[0].mxu0
      %v1769 = vadd.f32 0.0, %v1768
      %v1770 = vpop.f32.mrb[0].mxu0
      %v1771 = vpop.f32.mrb[0].mxu0
      %v1772 = vadd.f32 0.0, %v1771
      %v1773 = vpop.f32.mrb[0].mxu0
      %1774 = vmatprep.mubr.bf16.mxu0 0
      %1775 = vmatmul.mubr.bf16.gmra.mrb[0].mxu0 %v865
      %v1776 = vpop.f32.mrb[0].mxu0
      %v1777 = vadd.f32 0.0, %v1776
      %v1778 = vpop.f32.mrb[0].mxu0
      %v1779 = vpop.f32.mrb[0].mxu0
      %v1780 = vadd.f32 0.0, %v1779
      %v1781 = vpop.f32.mrb[0].mxu0
      %1782 = vmatprep.mubr.bf16.mxu0 0
      %1783 = vmatmul.mubr.bf16.gmra.mrb[0].mxu0 %v866
      %v1784 = vpop.f32.mrb[0].mxu0
      %v1785 = vadd.f32 0.0, %v1784
      %v1786 = vpop.f32.mrb[0].mxu0
      %v1787 = vpop.f32.mrb[0].mxu0
      %v1788 = vadd.f32 0.0, %v1787
      %v1789 = vpop.f32.mrb[0].mxu0
      %1790 = vmatprep.mubr.bf16.mxu0 0
      %1791 = vmatmul.mubr.bf16.gmra.mrb[0].mxu0 %v867
      %v1792 = vpop.f32.mrb[0].mxu0
      %v1793 = vadd.f32 0.0, %v1792
      %v1794 = vpop.f32.mrb[0].mxu0
      %v1795 = vpop.f32.mrb[0].mxu0
      %v1796 = vadd.f32 0.0, %v1795
      %v1797 = vpop.f32.mrb[0].mxu0
      %1798 = vmatprep.mubr.bf16.mxu0 0
      %1799 = vmatmul.mubr.bf16.gmra.mrb[0].mxu0 %v868
      %v1800 = vpop.f32.mrb[0].mxu0
      %v1801 = vadd.f32 0.0, %v1800
      %v1802 = vpop.f32.mrb[0].mxu0
      %v1803 = vpop.f32.mrb[0].mxu0
      %v1804 = vadd.f32 0.0, %v1803
      %v1805 = vpop.f32.mrb[0].mxu0
      %1806 = vmatprep.mubr.bf16.mxu0 0
      %1807 = vmatmul.mubr.bf16.gmra.mrb[0].mxu0 %v869
      %v1808 = vpop.f32.mrb[0].mxu0
      %v1809 = vadd.f32 0.0, %v1808
      %v1810 = vpop.f32.mrb[0].mxu0
      %v1811 = vpop.f32.mrb[0].mxu0
      %v1812 = vadd.f32 0.0, %v1811
      %v1813 = vpop.f32.mrb[0].mxu0
      %1814 = vmatprep.mubr.bf16.mxu0 0
      %1815 = vmatmul.mubr.bf16.gmra.mrb[0].mxu0 %v870
      %v1816 = vpop.f32.mrb[0].mxu0
      %v1817 = vadd.f32 0.0, %v1816
      %v1818 = vpop.f32.mrb[0].mxu0
      %v1819 = vpop.f32.mrb[0].mxu0
      %v1820 = vadd.f32 0.0, %v1819
      %v1821 = vpop.f32.mrb[0].mxu0
      %1822 = vmatprep.mubr.bf16.mxu0 0
      %1823 = vmatmul.mubr.bf16.gmra.mrb[0].mxu0 %v871
      %v1824 = vpop.f32.mrb[0].mxu0
      %v1825 = vadd.f32 0.0, %v1824
      %v1826 = vpop.f32.mrb[0].mxu0
      %v1827 = vpop.f32.mrb[0].mxu0
      %v1828 = vadd.f32 0.0, %v1827
      %v1829 = vpop.f32.mrb[0].mxu0
      %1830 = vmatprep.mubr.bf16.mxu0 0
      %1831 = vmatmul.mubr.bf16.gmra.mrb[0].mxu0 %v872
      %v1832 = vpop.f32.mrb[0].mxu0
      %v1833 = vadd.f32 0.0, %v1832
      %v1834 = vpop.f32.mrb[0].mxu0
      %v1835 = vpop.f32.mrb[0].mxu0
      %v1836 = vadd.f32 0.0, %v1835
      %v1837 = vpop.f32.mrb[0].mxu0
      %1838 = vmatprep.mubr.bf16.mxu0 0
      %1839 = vmatmul.mubr.bf16.gmra.mrb[0].mxu0 %v873
      %v1840 = vpop.f32.mrb[0].mxu0
      %v1841 = vadd.f32 0.0, %v1840
      %v1842 = vpop.f32.mrb[0].mxu0
      %v1843 = vpop.f32.mrb[0].mxu0
      %v1844 = vadd.f32 0.0, %v1843
      %v1845 = vpop.f32.mrb[0].mxu0
      %1846 = vmatprep.mubr.bf16.mxu0 0
      %1847 = vmatmul.mubr.bf16.gmra.mrb[0].mxu0 %v874
      %v1848 = vpop.f32.mrb[0].mxu0
      %v1849 = vadd.f32 0.0, %v1848
      %v1850 = vpop.f32.mrb[0].mxu0
      %v1851 = vpop.f32.mrb[0].mxu0
      %v1852 = vadd.f32 0.0, %v1851
      %v1853 = vpop.f32.mrb[0].mxu0
      %1854 = vmatprep.mubr.bf16.mxu0 0
      %1855 = vmatmul.mubr.bf16.gmra.mrb[0].mxu0 %v875
      %v1856 = vpop.f32.mrb[0].mxu0
      %v1857 = vadd.f32 0.0, %v1856
      %v1858 = vpop.f32.mrb[0].mxu0
      %v1859 = vpop.f32.mrb[0].mxu0
      %v1860 = vadd.f32 0.0, %v1859
      %v1861 = vpop.f32.mrb[0].mxu0
      %1862 = vmatprep.mubr.bf16.mxu0 0
      %1863 = vmatmul.mubr.bf16.gmra.mrb[0].mxu0 %v876
      %v1864 = vpop.f32.mrb[0].mxu0
      %v1865 = vadd.f32 0.0, %v1864
      %v1866 = vpop.f32.mrb[0].mxu0
      %v1867 = vpop.f32.mrb[0].mxu0
      %v1868 = vadd.f32 0.0, %v1867
      %v1869 = vpop.f32.mrb[0].mxu0
      %1870 = vmatprep.mubr.bf16.mxu0 0
      %1871 = vmatmul.mubr.bf16.gmra.mrb[0].mxu0 %v877
      %v1872 = vpop.f32.mrb[0].mxu0
      %v1873 = vadd.f32 0.0, %v1872
      %v1874 = vpop.f32.mrb[0].mxu0
      %v1875 = vpop.f32.mrb[0].mxu0
      %v1876 = vadd.f32 0.0, %v1875
      %v1877 = vpop.f32.mrb[0].mxu0
      %1878 = vmatprep.mubr.bf16.mxu0 0
      %1879 = vmatmul.mubr.bf16.gmra.mrb[0].mxu0 %v878
      %v1880 = vpop.f32.mrb[0].mxu0
      %v1881 = vadd.f32 0.0, %v1880
      %v1882 = vpop.f32.mrb[0].mxu0
      %v1883 = vpop.f32.mrb[0].mxu0
      %v1884 = vadd.f32 0.0, %v1883
      %v1885 = vpop.f32.mrb[0].mxu0
      %1886 = vdwg.mxu0
      %v1887 = vadd.f32 %v1630, %v1761
      %v1888 = vadd.f32 %v1631, %v1764
      %v1889 = vadd.f32 %v1632, %v1769
      %v1890 = vadd.f32 %v1633, %v1772
      %v1891 = vadd.f32 %v1634, %v1777
      %v1892 = vadd.f32 %v1635, %v1780
      %v1893 = vadd.f32 %v1636, %v1785
      %v1894 = vadd.f32 %v1637, %v1788
      %v1895 = vadd.f32 %v1638, %v1793
      %v1896 = vadd.f32 %v1639, %v1796
      %v1897 = vadd.f32 %v1640, %v1801
      %v1898 = vadd.f32 %v1641, %v1804
      %v1899 = vadd.f32 %v1642, %v1809
      %v1900 = vadd.f32 %v1643, %v1812
      %v1901 = vadd.f32 %v1644, %v1817
      %v1902 = vadd.f32 %v1645, %v1820
      %v1903 = vadd.f32 %v1646, %v1825
      %v1904 = vadd.f32 %v1647, %v1828
      %v1905 = vadd.f32 %v1648, %v1833
      %v1906 = vadd.f32 %v1649, %v1836
      %v1907 = vadd.f32 %v1650, %v1841
      %v1908 = vadd.f32 %v1651, %v1844
      %v1909 = vadd.f32 %v1652, %v1849
      %v1910 = vadd.f32 %v1653, %v1852
      %v1911 = vadd.f32 %v1654, %v1857
      %v1912 = vadd.f32 %v1655, %v1860
      %v1913 = vadd.f32 %v1656, %v1865
      %v1914 = vadd.f32 %v1657, %v1868
      %v1915 = vadd.f32 %v1658, %v1873
      %v1916 = vadd.f32 %v1659, %v1876
      %v1917 = vadd.f32 %v1660, %v1881
      %v1918 = vadd.f32 %v1661, %v1884
      %v1919 = vld [vmem:[%s3 + $0x100] sm:$0xf]
      %v1920 = vld [vmem:[%s3 + $0x104] sm:$0xf]
      %v1921 = vld [vmem:[%s3 + $0x108] sm:$0xf]
      %v1922 = vld [vmem:[%s3 + $0x10c] sm:$0xf]
      %v1923 = vld [vmem:[%s3 + $0x110] sm:$0xf]
      %v1924 = vld [vmem:[%s3 + $0x114] sm:$0xf]
      %v1925 = vld [vmem:[%s3 + $0x118] sm:$0xf]
      %v1926 = vld [vmem:[%s3 + $0x11c] sm:$0xf]
      %v1927 = vld [vmem:[%s3 + $0x120] sm:$0xf]
      %v1928 = vld [vmem:[%s3 + $0x124] sm:$0xf]
      %v1929 = vld [vmem:[%s3 + $0x128] sm:$0xf]
      %v1930 = vld [vmem:[%s3 + $0x12c] sm:$0xf]
      %v1931 = vld [vmem:[%s3 + $0x130] sm:$0xf]
      %v1932 = vld [vmem:[%s3 + $0x134] sm:$0xf]
      %v1933 = vld [vmem:[%s3 + $0x138] sm:$0xf]
      %v1934 = vld [vmem:[%s3 + $0x13c] sm:$0xf]
      %v1951 = vunpack.c.l.b16 %v1919
      %v1952 = vunpack.c.l.b16 %v1920
      %v1953 = vunpack.c.l.b16 %v1921
      %v1954 = vunpack.c.l.b16 %v1922
      %v1955 = vunpack.c.l.b16 %v1923
      %v1956 = vunpack.c.l.b16 %v1924
      %v1957 = vunpack.c.l.b16 %v1925
      %v1958 = vunpack.c.l.b16 %v1926
      %v1959 = vunpack.c.l.b16 %v1927
      %v1960 = vunpack.c.l.b16 %v1928
      %v1961 = vunpack.c.l.b16 %v1929
      %v1962 = vunpack.c.l.b16 %v1930
      %v1963 = vunpack.c.l.b16 %v1931
      %v1964 = vunpack.c.l.b16 %v1932
      %v1965 = vunpack.c.l.b16 %v1933
      %v1966 = vunpack.c.l.b16 %v1934
      %v1967 = vpack.c.b16 %v1952, %v1951
      %v1968 = vpack.c.b16 %v1954, %v1953
      %v1969 = vpack.c.b16 %v1956, %v1955
      %v1970 = vpack.c.b16 %v1958, %v1957
      %v1971 = vpack.c.b16 %v1960, %v1959
      %v1972 = vpack.c.b16 %v1962, %v1961
      %v1973 = vpack.c.b16 %v1964, %v1963
      %v1974 = vpack.c.b16 %v1966, %v1965
      %1983 = vmatprep.subr.bf16.mxu0 0
      %1984 = vmatpush1.bf16.msra.mxu0 %v1967
      %1985 = vmatprep.subr.bf16.mxu0 0
      %1986 = vmatpush1.bf16.msra.mxu0 %v1968
      %1987 = vmatprep.subr.bf16.mxu0 0
      %1988 = vmatpush1.bf16.msra.mxu0 %v1969
      %1989 = vmatprep.subr.bf16.mxu0 0
      %1990 = vmatpush1.bf16.msra.mxu0 %v1970
      %1991 = vmatprep.subr.bf16.mxu0 0
      %1992 = vmatpush1.bf16.msra.mxu0 %v1971
      %1993 = vmatprep.subr.bf16.mxu0 0
      %1994 = vmatpush1.bf16.msra.mxu0 %v1972
      %1995 = vmatprep.subr.bf16.mxu0 0
      %1996 = vmatpush1.bf16.msra.mxu0 %v1973
      %1997 = vmatprep.subr.bf16.mxu0 0
      %1998 = vmatpush1.bf16.msra.mxu0 %v1974
      %1999 = vmatprep.subr.bf16.mxu0 0
      %2000 = vmatpush1.bf16.msra.mxu0 0
      %2001 = vmatprep.subr.bf16.mxu0 0
      %2002 = vmatpush1.bf16.msra.mxu0 0
      %2003 = vmatprep.subr.bf16.mxu0 0
      %2004 = vmatpush1.bf16.msra.mxu0 0
      %2005 = vmatprep.subr.bf16.mxu0 0
      %2006 = vmatpush1.bf16.msra.mxu0 0
      %2007 = vmatprep.subr.bf16.mxu0 0
      %2008 = vmatpush1.bf16.msra.mxu0 0
      %2009 = vmatprep.subr.bf16.mxu0 0
      %2010 = vmatpush1.bf16.msra.mxu0 0
      %2011 = vmatprep.subr.bf16.mxu0 0
      %2012 = vmatpush1.bf16.msra.mxu0 0
      %2013 = vmatprep.subr.bf16.mxu0 0
      %2014 = vmatpush1.bf16.msra.mxu0 0
      %2015 = vmatprep.mubr.bf16.mxu0 0
      %2016 = vmatmul.mubr.bf16.gmra.mrb[0].mxu0 %v641
      %v2017 = vpop.f32.mrb[0].mxu0
      %v2018 = vadd.f32 0.0, %v2017
      %v2019 = vpop.f32.mrb[0].mxu0
      %v2020 = vpop.f32.mrb[0].mxu0
      %v2021 = vadd.f32 0.0, %v2020
      %v2022 = vpop.f32.mrb[0].mxu0
      %2023 = vmatprep.mubr.bf16.mxu0 0
      %2024 = vmatmul.mubr.bf16.gmra.mrb[0].mxu0 %v642
      %v2025 = vpop.f32.mrb[0].mxu0
      %v2026 = vadd.f32 0.0, %v2025
      %v2027 = vpop.f32.mrb[0].mxu0
      %v2028 = vpop.f32.mrb[0].mxu0
      %v2029 = vadd.f32 0.0, %v2028
      %v2030 = vpop.f32.mrb[0].mxu0
      %2031 = vmatprep.mubr.bf16.mxu0 0
      %2032 = vmatmul.mubr.bf16.gmra.mrb[0].mxu0 %v643
      %v2033 = vpop.f32.mrb[0].mxu0
      %v2034 = vadd.f32 0.0, %v2033
      %v2035 = vpop.f32.mrb[0].mxu0
      %v2036 = vpop.f32.mrb[0].mxu0
      %v2037 = vadd.f32 0.0, %v2036
      %v2038 = vpop.f32.mrb[0].mxu0
      %2039 = vmatprep.mubr.bf16.mxu0 0
      %2040 = vmatmul.mubr.bf16.gmra.mrb[0].mxu0 %v644
      %v2041 = vpop.f32.mrb[0].mxu0
      %v2042 = vadd.f32 0.0, %v2041
      %v2043 = vpop.f32.mrb[0].mxu0
      %v2044 = vpop.f32.mrb[0].mxu0
      %v2045 = vadd.f32 0.0, %v2044
      %v2046 = vpop.f32.mrb[0].mxu0
      %2047 = vmatprep.mubr.bf16.mxu0 0
      %2048 = vmatmul.mubr.bf16.gmra.mrb[0].mxu0 %v645
      %v2049 = vpop.f32.mrb[0].mxu0
      %v2050 = vadd.f32 0.0, %v2049
      %v2051 = vpop.f32.mrb[0].mxu0
      %v2052 = vpop.f32.mrb[0].mxu0
      %v2053 = vadd.f32 0.0, %v2052
      %v2054 = vpop.f32.mrb[0].mxu0
      %2055 = vmatprep.mubr.bf16.mxu0 0
      %2056 = vmatmul.mubr.bf16.gmra.mrb[0].mxu0 %v646
      %v2057 = vpop.f32.mrb[0].mxu0
      %v2058 = vadd.f32 0.0, %v2057
      %v2059 = vpop.f32.mrb[0].mxu0
      %v2060 = vpop.f32.mrb[0].mxu0
      %v2061 = vadd.f32 0.0, %v2060
      %v2062 = vpop.f32.mrb[0].mxu0
      %2063 = vmatprep.mubr.bf16.mxu0 0
      %2064 = vmatmul.mubr.bf16.gmra.mrb[0].mxu0 %v647
      %v2065 = vpop.f32.mrb[0].mxu0
      %v2066 = vadd.f32 0.0, %v2065
      %v2067 = vpop.f32.mrb[0].mxu0
      %v2068 = vpop.f32.mrb[0].mxu0
      %v2069 = vadd.f32 0.0, %v2068
      %v2070 = vpop.f32.mrb[0].mxu0
      %2071 = vmatprep.mubr.bf16.mxu0 0
      %2072 = vmatmul.mubr.bf16.gmra.mrb[0].mxu0 %v648
      %v2073 = vpop.f32.mrb[0].mxu0
      %v2074 = vadd.f32 0.0, %v2073
      %v2075 = vpop.f32.mrb[0].mxu0
      %v2076 = vpop.f32.mrb[0].mxu0
      %v2077 = vadd.f32 0.0, %v2076
      %v2078 = vpop.f32.mrb[0].mxu0
      %2079 = vmatprep.mubr.bf16.mxu0 0
      %2080 = vmatmul.mubr.bf16.gmra.mrb[0].mxu0 %v649
      %v2081 = vpop.f32.mrb[0].mxu0
      %v2082 = vadd.f32 0.0, %v2081
      %v2083 = vpop.f32.mrb[0].mxu0
      %v2084 = vpop.f32.mrb[0].mxu0
      %v2085 = vadd.f32 0.0, %v2084
      %v2086 = vpop.f32.mrb[0].mxu0
      %2087 = vmatprep.mubr.bf16.mxu0 0
      %2088 = vmatmul.mubr.bf16.gmra.mrb[0].mxu0 %v650
      %v2089 = vpop.f32.mrb[0].mxu0
      %v2090 = vadd.f32 0.0, %v2089
      %v2091 = vpop.f32.mrb[0].mxu0
      %v2092 = vpop.f32.mrb[0].mxu0
      %v2093 = vadd.f32 0.0, %v2092
      %v2094 = vpop.f32.mrb[0].mxu0
      %2095 = vmatprep.mubr.bf16.mxu0 0
      %2096 = vmatmul.mubr.bf16.gmra.mrb[0].mxu0 %v651
      %v2097 = vpop.f32.mrb[0].mxu0
      %v2098 = vadd.f32 0.0, %v2097
      %v2099 = vpop.f32.mrb[0].mxu0
      %v2100 = vpop.f32.mrb[0].mxu0
      %v2101 = vadd.f32 0.0, %v2100
      %v2102 = vpop.f32.mrb[0].mxu0
      %2103 = vmatprep.mubr.bf16.mxu0 0
      %2104 = vmatmul.mubr.bf16.gmra.mrb[0].mxu0 %v652
      %v2105 = vpop.f32.mrb[0].mxu0
      %v2106 = vadd.f32 0.0, %v2105
      %v2107 = vpop.f32.mrb[0].mxu0
      %v2108 = vpop.f32.mrb[0].mxu0
      %v2109 = vadd.f32 0.0, %v2108
      %v2110 = vpop.f32.mrb[0].mxu0
      %2111 = vmatprep.mubr.bf16.mxu0 0
      %2112 = vmatmul.mubr.bf16.gmra.mrb[0].mxu0 %v653
      %v2113 = vpop.f32.mrb[0].mxu0
      %v2114 = vadd.f32 0.0, %v2113
      %v2115 = vpop.f32.mrb[0].mxu0
      %v2116 = vpop.f32.mrb[0].mxu0
      %v2117 = vadd.f32 0.0, %v2116
      %v2118 = vpop.f32.mrb[0].mxu0
      %2119 = vmatprep.mubr.bf16.mxu0 0
      %2120 = vmatmul.mubr.bf16.gmra.mrb[0].mxu0 %v654
      %v2121 = vpop.f32.mrb[0].mxu0
      %v2122 = vadd.f32 0.0, %v2121
      %v2123 = vpop.f32.mrb[0].mxu0
      %v2124 = vpop.f32.mrb[0].mxu0
      %v2125 = vadd.f32 0.0, %v2124
      %v2126 = vpop.f32.mrb[0].mxu0
      %2127 = vmatprep.mubr.bf16.mxu0 0
      %2128 = vmatmul.mubr.bf16.gmra.mrb[0].mxu0 %v655
      %v2129 = vpop.f32.mrb[0].mxu0
      %v2130 = vadd.f32 0.0, %v2129
      %v2131 = vpop.f32.mrb[0].mxu0
      %v2132 = vpop.f32.mrb[0].mxu0
      %v2133 = vadd.f32 0.0, %v2132
      %v2134 = vpop.f32.mrb[0].mxu0
      %2135 = vmatprep.mubr.bf16.mxu0 0
      %2136 = vmatmul.mubr.bf16.gmra.mrb[0].mxu0 %v656
      %v2137 = vpop.f32.mrb[0].mxu0
      %v2138 = vadd.f32 0.0, %v2137
      %v2139 = vpop.f32.mrb[0].mxu0
      %v2140 = vpop.f32.mrb[0].mxu0
      %v2141 = vadd.f32 0.0, %v2140
      %v2142 = vpop.f32.mrb[0].mxu0
      %2143 = vdwg.mxu0
      %v2144 = vadd.f32 %v1887, %v2018
      %v2145 = vadd.f32 %v1888, %v2021
      %v2146 = vadd.f32 %v1889, %v2026
      %v2147 = vadd.f32 %v1890, %v2029
      %v2148 = vadd.f32 %v1891, %v2034
      %v2149 = vadd.f32 %v1892, %v2037
      %v2150 = vadd.f32 %v1893, %v2042
      %v2151 = vadd.f32 %v1894, %v2045
      %v2152 = vadd.f32 %v1895, %v2050
      %v2153 = vadd.f32 %v1896, %v2053
      %v2154 = vadd.f32 %v1897, %v2058
      %v2155 = vadd.f32 %v1898, %v2061
      %v2156 = vadd.f32 %v1899, %v2066
      %v2157 = vadd.f32 %v1900, %v2069
      %v2158 = vadd.f32 %v1901, %v2074
      %v2159 = vadd.f32 %v1902, %v2077
      %v2160 = vadd.f32 %v1903, %v2082
      %v2161 = vadd.f32 %v1904, %v2085
      %v2162 = vadd.f32 %v1905, %v2090
      %v2163 = vadd.f32 %v1906, %v2093
      %v2164 = vadd.f32 %v1907, %v2098
      %v2165 = vadd.f32 %v1908, %v2101
      %v2166 = vadd.f32 %v1909, %v2106
      %v2167 = vadd.f32 %v1910, %v2109
      %v2168 = vadd.f32 %v1911, %v2114
      %v2169 = vadd.f32 %v1912, %v2117
      %v2170 = vadd.f32 %v1913, %v2122
      %v2171 = vadd.f32 %v1914, %v2125
      %v2172 = vadd.f32 %v1915, %v2130
      %v2173 = vadd.f32 %v1916, %v2133
      %v2174 = vadd.f32 %v1917, %v2138
      %v2175 = vadd.f32 %v1918, %v2141
      %v2176 = vld [vmem:[%s3 + $0x140] sm:$0xf]
      %v2177 = vld [vmem:[%s3 + $0x144] sm:$0xf]
      %v2178 = vld [vmem:[%s3 + $0x148] sm:$0xf]
      %v2179 = vld [vmem:[%s3 + $0x14c] sm:$0xf]
      %v2180 = vld [vmem:[%s3 + $0x150] sm:$0xf]
      %v2181 = vld [vmem:[%s3 + $0x154] sm:$0xf]
      %v2182 = vld [vmem:[%s3 + $0x158] sm:$0xf]
      %v2183 = vld [vmem:[%s3 + $0x15c] sm:$0xf]
      %v2184 = vld [vmem:[%s3 + $0x160] sm:$0xf]
      %v2185 = vld [vmem:[%s3 + $0x164] sm:$0xf]
      %v2186 = vld [vmem:[%s3 + $0x168] sm:$0xf]
      %v2187 = vld [vmem:[%s3 + $0x16c] sm:$0xf]
      %v2188 = vld [vmem:[%s3 + $0x170] sm:$0xf]
      %v2189 = vld [vmem:[%s3 + $0x174] sm:$0xf]
      %v2190 = vld [vmem:[%s3 + $0x178] sm:$0xf]
      %v2191 = vld [vmem:[%s3 + $0x17c] sm:$0xf]
      %v2208 = vunpack.c.l.b16 %v2176
      %v2209 = vunpack.c.l.b16 %v2177
      %v2210 = vunpack.c.l.b16 %v2178
      %v2211 = vunpack.c.l.b16 %v2179
      %v2212 = vunpack.c.l.b16 %v2180
      %v2213 = vunpack.c.l.b16 %v2181
      %v2214 = vunpack.c.l.b16 %v2182
      %v2215 = vunpack.c.l.b16 %v2183
      %v2216 = vunpack.c.l.b16 %v2184
      %v2217 = vunpack.c.l.b16 %v2185
      %v2218 = vunpack.c.l.b16 %v2186
      %v2219 = vunpack.c.l.b16 %v2187
      %v2220 = vunpack.c.l.b16 %v2188
      %v2221 = vunpack.c.l.b16 %v2189
      %v2222 = vunpack.c.l.b16 %v2190
      %v2223 = vunpack.c.l.b16 %v2191
      %v2224 = vpack.c.b16 %v2209, %v2208
      %v2225 = vpack.c.b16 %v2211, %v2210
      %v2226 = vpack.c.b16 %v2213, %v2212
      %v2227 = vpack.c.b16 %v2215, %v2214
      %v2228 = vpack.c.b16 %v2217, %v2216
      %v2229 = vpack.c.b16 %v2219, %v2218
      %v2230 = vpack.c.b16 %v2221, %v2220
      %v2231 = vpack.c.b16 %v2223, %v2222
      %2240 = vmatprep.subr.bf16.mxu0 0
      %2241 = vmatpush1.bf16.msra.mxu0 %v2224
      %2242 = vmatprep.subr.bf16.mxu0 0
      %2243 = vmatpush1.bf16.msra.mxu0 %v2225
      %2244 = vmatprep.subr.bf16.mxu0 0
      %2245 = vmatpush1.bf16.msra.mxu0 %v2226
      %2246 = vmatprep.subr.bf16.mxu0 0
      %2247 = vmatpush1.bf16.msra.mxu0 %v2227
      %2248 = vmatprep.subr.bf16.mxu0 0
      %2249 = vmatpush1.bf16.msra.mxu0 %v2228
      %2250 = vmatprep.subr.bf16.mxu0 0
      %2251 = vmatpush1.bf16.msra.mxu0 %v2229
      %2252 = vmatprep.subr.bf16.mxu0 0
      %2253 = vmatpush1.bf16.msra.mxu0 %v2230
      %2254 = vmatprep.subr.bf16.mxu0 0
      %2255 = vmatpush1.bf16.msra.mxu0 %v2231
      %2256 = vmatprep.subr.bf16.mxu0 0
      %2257 = vmatpush1.bf16.msra.mxu0 0
      %2258 = vmatprep.subr.bf16.mxu0 0
      %2259 = vmatpush1.bf16.msra.mxu0 0
      %2260 = vmatprep.subr.bf16.mxu0 0
      %2261 = vmatpush1.bf16.msra.mxu0 0
      %2262 = vmatprep.subr.bf16.mxu0 0
      %2263 = vmatpush1.bf16.msra.mxu0 0
      %2264 = vmatprep.subr.bf16.mxu0 0
      %2265 = vmatpush1.bf16.msra.mxu0 0
      %2266 = vmatprep.subr.bf16.mxu0 0
      %2267 = vmatpush1.bf16.msra.mxu0 0
      %2268 = vmatprep.subr.bf16.mxu0 0
      %2269 = vmatpush1.bf16.msra.mxu0 0
      %2270 = vmatprep.subr.bf16.mxu0 0
      %2271 = vmatpush1.bf16.msra.mxu0 0
      %2272 = vmatprep.mubr.bf16.mxu0 0
      %2273 = vmatmul.mubr.bf16.gmra.mrb[0].mxu0 %v938
      %v2274 = vpop.f32.mrb[0].mxu0
      %v2275 = vadd.f32 0.0, %v2274
      %v2276 = vpop.f32.mrb[0].mxu0
      %v2277 = vpop.f32.mrb[0].mxu0
      %v2278 = vadd.f32 0.0, %v2277
      %v2279 = vpop.f32.mrb[0].mxu0
      %2280 = vmatprep.mubr.bf16.mxu0 0
      %2281 = vmatmul.mubr.bf16.gmra.mrb[0].mxu0 %v939
      %v2282 = vpop.f32.mrb[0].mxu0
      %v2283 = vadd.f32 0.0, %v2282
      %v2284 = vpop.f32.mrb[0].mxu0
      %v2285 = vpop.f32.mrb[0].mxu0
      %v2286 = vadd.f32 0.0, %v2285
      %v2287 = vpop.f32.mrb[0].mxu0
      %2288 = vmatprep.mubr.bf16.mxu0 0
      %2289 = vmatmul.mubr.bf16.gmra.mrb[0].mxu0 %v940
      %v2290 = vpop.f32.mrb[0].mxu0
      %v2291 = vadd.f32 0.0, %v2290
      %v2292 = vpop.f32.mrb[0].mxu0
      %v2293 = vpop.f32.mrb[0].mxu0
      %v2294 = vadd.f32 0.0, %v2293
      %v2295 = vpop.f32.mrb[0].mxu0
      %2296 = vmatprep.mubr.bf16.mxu0 0
      %2297 = vmatmul.mubr.bf16.gmra.mrb[0].mxu0 %v941
      %v2298 = vpop.f32.mrb[0].mxu0
      %v2299 = vadd.f32 0.0, %v2298
      %v2300 = vpop.f32.mrb[0].mxu0
      %v2301 = vpop.f32.mrb[0].mxu0
      %v2302 = vadd.f32 0.0, %v2301
      %v2303 = vpop.f32.mrb[0].mxu0
      %2304 = vmatprep.mubr.bf16.mxu0 0
      %2305 = vmatmul.mubr.bf16.gmra.mrb[0].mxu0 %v942
      %v2306 = vpop.f32.mrb[0].mxu0
      %v2307 = vadd.f32 0.0, %v2306
      %v2308 = vpop.f32.mrb[0].mxu0
      %v2309 = vpop.f32.mrb[0].mxu0
      %v2310 = vadd.f32 0.0, %v2309
      %v2311 = vpop.f32.mrb[0].mxu0
      %2312 = vmatprep.mubr.bf16.mxu0 0
      %2313 = vmatmul.mubr.bf16.gmra.mrb[0].mxu0 %v943
      %v2314 = vpop.f32.mrb[0].mxu0
      %v2315 = vadd.f32 0.0, %v2314
      %v2316 = vpop.f32.mrb[0].mxu0
      %v2317 = vpop.f32.mrb[0].mxu0
      %v2318 = vadd.f32 0.0, %v2317
      %v2319 = vpop.f32.mrb[0].mxu0
      %2320 = vmatprep.mubr.bf16.mxu0 0
      %2321 = vmatmul.mubr.bf16.gmra.mrb[0].mxu0 %v944
      %v2322 = vpop.f32.mrb[0].mxu0
      %v2323 = vadd.f32 0.0, %v2322
      %v2324 = vpop.f32.mrb[0].mxu0
      %v2325 = vpop.f32.mrb[0].mxu0
      %v2326 = vadd.f32 0.0, %v2325
      %v2327 = vpop.f32.mrb[0].mxu0
      %2328 = vmatprep.mubr.bf16.mxu0 0
      %2329 = vmatmul.mubr.bf16.gmra.mrb[0].mxu0 %v945
      %v2330 = vpop.f32.mrb[0].mxu0
      %v2331 = vadd.f32 0.0, %v2330
      %v2332 = vpop.f32.mrb[0].mxu0
      %v2333 = vpop.f32.mrb[0].mxu0
      %v2334 = vadd.f32 0.0, %v2333
      %v2335 = vpop.f32.mrb[0].mxu0
      %2336 = vmatprep.mubr.bf16.mxu0 0
      %2337 = vmatmul.mubr.bf16.gmra.mrb[0].mxu0 %v946
      %v2338 = vpop.f32.mrb[0].mxu0
      %v2339 = vadd.f32 0.0, %v2338
      %v2340 = vpop.f32.mrb[0].mxu0
      %v2341 = vpop.f32.mrb[0].mxu0
      %v2342 = vadd.f32 0.0, %v2341
      %v2343 = vpop.f32.mrb[0].mxu0
      %2344 = vmatprep.mubr.bf16.mxu0 0
      %2345 = vmatmul.mubr.bf16.gmra.mrb[0].mxu0 %v947
      %v2346 = vpop.f32.mrb[0].mxu0
      %v2347 = vadd.f32 0.0, %v2346
      %v2348 = vpop.f32.mrb[0].mxu0
      %v2349 = vpop.f32.mrb[0].mxu0
      %v2350 = vadd.f32 0.0, %v2349
      %v2351 = vpop.f32.mrb[0].mxu0
      %2352 = vmatprep.mubr.bf16.mxu0 0
      %2353 = vmatmul.mubr.bf16.gmra.mrb[0].mxu0 %v948
      %v2354 = vpop.f32.mrb[0].mxu0
      %v2355 = vadd.f32 0.0, %v2354
      %v2356 = vpop.f32.mrb[0].mxu0
      %v2357 = vpop.f32.mrb[0].mxu0
      %v2358 = vadd.f32 0.0, %v2357
      %v2359 = vpop.f32.mrb[0].mxu0
      %2360 = vmatprep.mubr.bf16.mxu0 0
      %2361 = vmatmul.mubr.bf16.gmra.mrb[0].mxu0 %v949
      %v2362 = vpop.f32.mrb[0].mxu0
      %v2363 = vadd.f32 0.0, %v2362
      %v2364 = vpop.f32.mrb[0].mxu0
      %v2365 = vpop.f32.mrb[0].mxu0
      %v2366 = vadd.f32 0.0, %v2365
      %v2367 = vpop.f32.mrb[0].mxu0
      %2368 = vmatprep.mubr.bf16.mxu0 0
      %2369 = vmatmul.mubr.bf16.gmra.mrb[0].mxu0 %v950
      %v2370 = vpop.f32.mrb[0].mxu0
      %v2371 = vadd.f32 0.0, %v2370
      %v2372 = vpop.f32.mrb[0].mxu0
      %v2373 = vpop.f32.mrb[0].mxu0
      %v2374 = vadd.f32 0.0, %v2373
      %v2375 = vpop.f32.mrb[0].mxu0
      %2376 = vmatprep.mubr.bf16.mxu0 0
      %2377 = vmatmul.mubr.bf16.gmra.mrb[0].mxu0 %v951
      %v2378 = vpop.f32.mrb[0].mxu0
      %v2379 = vadd.f32 0.0, %v2378
      %v2380 = vpop.f32.mrb[0].mxu0
      %v2381 = vpop.f32.mrb[0].mxu0
      %v2382 = vadd.f32 0.0, %v2381
      %v2383 = vpop.f32.mrb[0].mxu0
      %2384 = vmatprep.mubr.bf16.mxu0 0
      %2385 = vmatmul.mubr.bf16.gmra.mrb[0].mxu0 %v952
      %v2386 = vpop.f32.mrb[0].mxu0
      %v2387 = vadd.f32 0.0, %v2386
      %v2388 = vpop.f32.mrb[0].mxu0
      %v2389 = vpop.f32.mrb[0].mxu0
      %v2390 = vadd.f32 0.0, %v2389
      %v2391 = vpop.f32.mrb[0].mxu0
      %2392 = vmatprep.mubr.bf16.mxu0 0
      %2393 = vmatmul.mubr.bf16.gmra.mrb[0].mxu0 %v953
      %v2394 = vpop.f32.mrb[0].mxu0
      %v2395 = vadd.f32 0.0, %v2394
      %v2396 = vpop.f32.mrb[0].mxu0
      %v2397 = vpop.f32.mrb[0].mxu0
      %v2398 = vadd.f32 0.0, %v2397
      %v2399 = vpop.f32.mrb[0].mxu0
      %2400 = vdwg.mxu0
      %v2401 = vadd.f32 %v2144, %v2275
      %v2402 = vadd.f32 %v2145, %v2278
      %v2403 = vadd.f32 %v2146, %v2283
      %v2404 = vadd.f32 %v2147, %v2286
      %v2405 = vadd.f32 %v2148, %v2291
      %v2406 = vadd.f32 %v2149, %v2294
      %v2407 = vadd.f32 %v2150, %v2299
      %v2408 = vadd.f32 %v2151, %v2302
      %v2409 = vadd.f32 %v2152, %v2307
      %v2410 = vadd.f32 %v2153, %v2310
      %v2411 = vadd.f32 %v2154, %v2315
      %v2412 = vadd.f32 %v2155, %v2318
      %v2413 = vadd.f32 %v2156, %v2323
      %v2414 = vadd.f32 %v2157, %v2326
      %v2415 = vadd.f32 %v2158, %v2331
      %v2416 = vadd.f32 %v2159, %v2334
      %v2417 = vadd.f32 %v2160, %v2339
      %v2418 = vadd.f32 %v2161, %v2342
      %v2419 = vadd.f32 %v2162, %v2347
      %v2420 = vadd.f32 %v2163, %v2350
      %v2421 = vadd.f32 %v2164, %v2355
      %v2422 = vadd.f32 %v2165, %v2358
      %v2423 = vadd.f32 %v2166, %v2363
      %v2424 = vadd.f32 %v2167, %v2366
      %v2425 = vadd.f32 %v2168, %v2371
      %v2426 = vadd.f32 %v2169, %v2374
      %v2427 = vadd.f32 %v2170, %v2379
      %v2428 = vadd.f32 %v2171, %v2382
      %v2429 = vadd.f32 %v2172, %v2387
      %v2430 = vadd.f32 %v2173, %v2390
      %v2431 = vadd.f32 %v2174, %v2395
      %v2432 = vadd.f32 %v2175, %v2398
      %v2433 = vld [vmem:[%s3 + $0x180] sm:$0xf]
      %v2434 = vld [vmem:[%s3 + $0x184] sm:$0xf]
      %v2435 = vld [vmem:[%s3 + $0x188] sm:$0xf]
      %v2436 = vld [vmem:[%s3 + $0x18c] sm:$0xf]
      %v2437 = vld [vmem:[%s3 + $0x190] sm:$0xf]
      %v2438 = vld [vmem:[%s3 + $0x194] sm:$0xf]
      %v2439 = vld [vmem:[%s3 + $0x198] sm:$0xf]
      %v2440 = vld [vmem:[%s3 + $0x19c] sm:$0xf]
      %v2441 = vld [vmem:[%s3 + $0x1a0] sm:$0xf]
      %v2442 = vld [vmem:[%s3 + $0x1a4] sm:$0xf]
      %v2443 = vld [vmem:[%s3 + $0x1a8] sm:$0xf]
      %v2444 = vld [vmem:[%s3 + $0x1ac] sm:$0xf]
      %v2445 = vld [vmem:[%s3 + $0x1b0] sm:$0xf]
      %v2446 = vld [vmem:[%s3 + $0x1b4] sm:$0xf]
      %v2447 = vld [vmem:[%s3 + $0x1b8] sm:$0xf]
      %v2448 = vld [vmem:[%s3 + $0x1bc] sm:$0xf]
      %v2465 = vunpack.c.l.b16 %v2433
      %v2466 = vunpack.c.l.b16 %v2434
      %v2467 = vunpack.c.l.b16 %v2435
      %v2468 = vunpack.c.l.b16 %v2436
      %v2469 = vunpack.c.l.b16 %v2437
      %v2470 = vunpack.c.l.b16 %v2438
      %v2471 = vunpack.c.l.b16 %v2439
      %v2472 = vunpack.c.l.b16 %v2440
      %v2473 = vunpack.c.l.b16 %v2441
      %v2474 = vunpack.c.l.b16 %v2442
      %v2475 = vunpack.c.l.b16 %v2443
      %v2476 = vunpack.c.l.b16 %v2444
      %v2477 = vunpack.c.l.b16 %v2445
      %v2478 = vunpack.c.l.b16 %v2446
      %v2479 = vunpack.c.l.b16 %v2447
      %v2480 = vunpack.c.l.b16 %v2448
      %v2481 = vpack.c.b16 %v2466, %v2465
      %v2482 = vpack.c.b16 %v2468, %v2467
      %v2483 = vpack.c.b16 %v2470, %v2469
      %v2484 = vpack.c.b16 %v2472, %v2471
      %v2485 = vpack.c.b16 %v2474, %v2473
      %v2486 = vpack.c.b16 %v2476, %v2475
      %v2487 = vpack.c.b16 %v2478, %v2477
      %v2488 = vpack.c.b16 %v2480, %v2479
      %2497 = vmatprep.subr.bf16.mxu0 0
      %2498 = vmatpush1.bf16.msra.mxu0 %v2481
      %2499 = vmatprep.subr.bf16.mxu0 0
      %2500 = vmatpush1.bf16.msra.mxu0 %v2482
      %2501 = vmatprep.subr.bf16.mxu0 0
      %2502 = vmatpush1.bf16.msra.mxu0 %v2483
      %2503 = vmatprep.subr.bf16.mxu0 0
      %2504 = vmatpush1.bf16.msra.mxu0 %v2484
      %2505 = vmatprep.subr.bf16.mxu0 0
      %2506 = vmatpush1.bf16.msra.mxu0 %v2485
      %2507 = vmatprep.subr.bf16.mxu0 0
      %2508 = vmatpush1.bf16.msra.mxu0 %v2486
      %2509 = vmatprep.subr.bf16.mxu0 0
      %2510 = vmatpush1.bf16.msra.mxu0 %v2487
      %2511 = vmatprep.subr.bf16.mxu0 0
      %2512 = vmatpush1.bf16.msra.mxu0 %v2488
      %2513 = vmatprep.subr.bf16.mxu0 0
      %2514 = vmatpush1.bf16.msra.mxu0 0
      %2515 = vmatprep.subr.bf16.mxu0 0
      %2516 = vmatpush1.bf16.msra.mxu0 0
      %2517 = vmatprep.subr.bf16.mxu0 0
      %2518 = vmatpush1.bf16.msra.mxu0 0
      %2519 = vmatprep.subr.bf16.mxu0 0
      %2520 = vmatpush1.bf16.msra.mxu0 0
      %2521 = vmatprep.subr.bf16.mxu0 0
      %2522 = vmatpush1.bf16.msra.mxu0 0
      %2523 = vmatprep.subr.bf16.mxu0 0
      %2524 = vmatpush1.bf16.msra.mxu0 0
      %2525 = vmatprep.subr.bf16.mxu0 0
      %2526 = vmatpush1.bf16.msra.mxu0 0
      %2527 = vmatprep.subr.bf16.mxu0 0
      %2528 = vmatpush1.bf16.msra.mxu0 0
      %2529 = vmatprep.mubr.bf16.mxu0 0
      %2530 = vmatmul.mubr.bf16.gmra.mrb[0].mxu0 %v864
      %v2531 = vpop.f32.mrb[0].mxu0
      %v2532 = vadd.f32 0.0, %v2531
      %v2533 = vpop.f32.mrb[0].mxu0
      %v2534 = vpop.f32.mrb[0].mxu0
      %v2535 = vadd.f32 0.0, %v2534
      %v2536 = vpop.f32.mrb[0].mxu0
      %2537 = vmatprep.mubr.bf16.mxu0 0
      %2538 = vmatmul.mubr.bf16.gmra.mrb[0].mxu0 %v865
      %v2539 = vpop.f32.mrb[0].mxu0
      %v2540 = vadd.f32 0.0, %v2539
      %v2541 = vpop.f32.mrb[0].mxu0
      %v2542 = vpop.f32.mrb[0].mxu0
      %v2543 = vadd.f32 0.0, %v2542
      %v2544 = vpop.f32.mrb[0].mxu0
      %2545 = vmatprep.mubr.bf16.mxu0 0
      %2546 = vmatmul.mubr.bf16.gmra.mrb[0].mxu0 %v866
      %v2547 = vpop.f32.mrb[0].mxu0
      %v2548 = vadd.f32 0.0, %v2547
      %v2549 = vpop.f32.mrb[0].mxu0
      %v2550 = vpop.f32.mrb[0].mxu0
      %v2551 = vadd.f32 0.0, %v2550
      %v2552 = vpop.f32.mrb[0].mxu0
      %2553 = vmatprep.mubr.bf16.mxu0 0
      %2554 = vmatmul.mubr.bf16.gmra.mrb[0].mxu0 %v867
      %v2555 = vpop.f32.mrb[0].mxu0
      %v2556 = vadd.f32 0.0, %v2555
      %v2557 = vpop.f32.mrb[0].mxu0
      %v2558 = vpop.f32.mrb[0].mxu0
      %v2559 = vadd.f32 0.0, %v2558
      %v2560 = vpop.f32.mrb[0].mxu0
      %2561 = vmatprep.mubr.bf16.mxu0 0
      %2562 = vmatmul.mubr.bf16.gmra.mrb[0].mxu0 %v868
      %v2563 = vpop.f32.mrb[0].mxu0
      %v2564 = vadd.f32 0.0, %v2563
      %v2565 = vpop.f32.mrb[0].mxu0
      %v2566 = vpop.f32.mrb[0].mxu0
      %v2567 = vadd.f32 0.0, %v2566
      %v2568 = vpop.f32.mrb[0].mxu0
      %2569 = vmatprep.mubr.bf16.mxu0 0
      %2570 = vmatmul.mubr.bf16.gmra.mrb[0].mxu0 %v869
      %v2571 = vpop.f32.mrb[0].mxu0
      %v2572 = vadd.f32 0.0, %v2571
      %v2573 = vpop.f32.mrb[0].mxu0
      %v2574 = vpop.f32.mrb[0].mxu0
      %v2575 = vadd.f32 0.0, %v2574
      %v2576 = vpop.f32.mrb[0].mxu0
      %2577 = vmatprep.mubr.bf16.mxu0 0
      %2578 = vmatmul.mubr.bf16.gmra.mrb[0].mxu0 %v870
      %v2579 = vpop.f32.mrb[0].mxu0
      %v2580 = vadd.f32 0.0, %v2579
      %v2581 = vpop.f32.mrb[0].mxu0
      %v2582 = vpop.f32.mrb[0].mxu0
      %v2583 = vadd.f32 0.0, %v2582
      %v2584 = vpop.f32.mrb[0].mxu0
      %2585 = vmatprep.mubr.bf16.mxu0 0
      %2586 = vmatmul.mubr.bf16.gmra.mrb[0].mxu0 %v871
      %v2587 = vpop.f32.mrb[0].mxu0
      %v2588 = vadd.f32 0.0, %v2587
      %v2589 = vpop.f32.mrb[0].mxu0
      %v2590 = vpop.f32.mrb[0].mxu0
      %v2591 = vadd.f32 0.0, %v2590
      %v2592 = vpop.f32.mrb[0].mxu0
      %2593 = vmatprep.mubr.bf16.mxu0 0
      %2594 = vmatmul.mubr.bf16.gmra.mrb[0].mxu0 %v872
      %v2595 = vpop.f32.mrb[0].mxu0
      %v2596 = vadd.f32 0.0, %v2595
      %v2597 = vpop.f32.mrb[0].mxu0
      %v2598 = vpop.f32.mrb[0].mxu0
      %v2599 = vadd.f32 0.0, %v2598
      %v2600 = vpop.f32.mrb[0].mxu0
      %2601 = vmatprep.mubr.bf16.mxu0 0
      %2602 = vmatmul.mubr.bf16.gmra.mrb[0].mxu0 %v873
      %v2603 = vpop.f32.mrb[0].mxu0
      %v2604 = vadd.f32 0.0, %v2603
      %v2605 = vpop.f32.mrb[0].mxu0
      %v2606 = vpop.f32.mrb[0].mxu0
      %v2607 = vadd.f32 0.0, %v2606
      %v2608 = vpop.f32.mrb[0].mxu0
      %2609 = vmatprep.mubr.bf16.mxu0 0
      %2610 = vmatmul.mubr.bf16.gmra.mrb[0].mxu0 %v874
      %v2611 = vpop.f32.mrb[0].mxu0
      %v2612 = vadd.f32 0.0, %v2611
      %v2613 = vpop.f32.mrb[0].mxu0
      %v2614 = vpop.f32.mrb[0].mxu0
      %v2615 = vadd.f32 0.0, %v2614
      %v2616 = vpop.f32.mrb[0].mxu0
      %2617 = vmatprep.mubr.bf16.mxu0 0
      %2618 = vmatmul.mubr.bf16.gmra.mrb[0].mxu0 %v875
      %v2619 = vpop.f32.mrb[0].mxu0
      %v2620 = vadd.f32 0.0, %v2619
      %v2621 = vpop.f32.mrb[0].mxu0
      %v2622 = vpop.f32.mrb[0].mxu0
      %v2623 = vadd.f32 0.0, %v2622
      %v2624 = vpop.f32.mrb[0].mxu0
      %2625 = vmatprep.mubr.bf16.mxu0 0
      %2626 = vmatmul.mubr.bf16.gmra.mrb[0].mxu0 %v876
      %v2627 = vpop.f32.mrb[0].mxu0
      %v2628 = vadd.f32 0.0, %v2627
      %v2629 = vpop.f32.mrb[0].mxu0
      %v2630 = vpop.f32.mrb[0].mxu0
      %v2631 = vadd.f32 0.0, %v2630
      %v2632 = vpop.f32.mrb[0].mxu0
      %2633 = vmatprep.mubr.bf16.mxu0 0
      %2634 = vmatmul.mubr.bf16.gmra.mrb[0].mxu0 %v877
      %v2635 = vpop.f32.mrb[0].mxu0
      %v2636 = vadd.f32 0.0, %v2635
      %v2637 = vpop.f32.mrb[0].mxu0
      %v2638 = vpop.f32.mrb[0].mxu0
      %v2639 = vadd.f32 0.0, %v2638
      %v2640 = vpop.f32.mrb[0].mxu0
      %2641 = vmatprep.mubr.bf16.mxu0 0
      %2642 = vmatmul.mubr.bf16.gmra.mrb[0].mxu0 %v878
      %v2643 = vpop.f32.mrb[0].mxu0
      %v2644 = vadd.f32 0.0, %v2643
      %v2645 = vpop.f32.mrb[0].mxu0
      %v2646 = vpop.f32.mrb[0].mxu0
      %v2647 = vadd.f32 0.0, %v2646
      %v2648 = vpop.f32.mrb[0].mxu0
      %2649 = vmatprep.mubr.bf16.mxu0 0
      %2650 = vmatmul.mubr.bf16.gmra.mrb[0].mxu0 %v879
      %v2651 = vpop.f32.mrb[0].mxu0
      %v2652 = vadd.f32 0.0, %v2651
      %v2653 = vpop.f32.mrb[0].mxu0
      %v2654 = vpop.f32.mrb[0].mxu0
      %v2655 = vadd.f32 0.0, %v2654
      %v2656 = vpop.f32.mrb[0].mxu0
      %2657 = vdwg.mxu0
      %v2658 = vadd.f32 %v2401, %v2532
      %v2659 = vadd.f32 %v2402, %v2535
      %v2660 = vadd.f32 %v2403, %v2540
      %v2661 = vadd.f32 %v2404, %v2543
      %v2662 = vadd.f32 %v2405, %v2548
      %v2663 = vadd.f32 %v2406, %v2551
      %v2664 = vadd.f32 %v2407, %v2556
      %v2665 = vadd.f32 %v2408, %v2559
      %v2666 = vadd.f32 %v2409, %v2564
      %v2667 = vadd.f32 %v2410, %v2567
      %v2668 = vadd.f32 %v2411, %v2572
      %v2669 = vadd.f32 %v2412, %v2575
      %v2670 = vadd.f32 %v2413, %v2580
      %v2671 = vadd.f32 %v2414, %v2583
      %v2672 = vadd.f32 %v2415, %v2588
      %v2673 = vadd.f32 %v2416, %v2591
      %v2674 = vadd.f32 %v2417, %v2596
      %v2675 = vadd.f32 %v2418, %v2599
      %v2676 = vadd.f32 %v2419, %v2604
      %v2677 = vadd.f32 %v2420, %v2607
      %v2678 = vadd.f32 %v2421, %v2612
      %v2679 = vadd.f32 %v2422, %v2615
      %v2680 = vadd.f32 %v2423, %v2620
      %v2681 = vadd.f32 %v2424, %v2623
      %v2682 = vadd.f32 %v2425, %v2628
      %v2683 = vadd.f32 %v2426, %v2631
      %v2684 = vadd.f32 %v2427, %v2636
      %v2685 = vadd.f32 %v2428, %v2639
      %v2686 = vadd.f32 %v2429, %v2644
      %v2687 = vadd.f32 %v2430, %v2647
      %v2688 = vadd.f32 %v2431, %v2652
      %v2689 = vadd.f32 %v2432, %v2655
      %v2690 = vld [vmem:[%s3 + $0x1c0] sm:$0xf]
      %v2691 = vld [vmem:[%s3 + $0x1c4] sm:$0xf]
      %v2692 = vld [vmem:[%s3 + $0x1c8] sm:$0xf]
      %v2693 = vld [vmem:[%s3 + $0x1cc] sm:$0xf]
      %v2694 = vld [vmem:[%s3 + $0x1d0] sm:$0xf]
      %v2695 = vld [vmem:[%s3 + $0x1d4] sm:$0xf]
      %v2696 = vld [vmem:[%s3 + $0x1d8] sm:$0xf]
      %v2697 = vld [vmem:[%s3 + $0x1dc] sm:$0xf]
      %v2698 = vld [vmem:[%s3 + $0x1e0] sm:$0xf]
      %v2699 = vld [vmem:[%s3 + $0x1e4] sm:$0xf]
      %v2700 = vld [vmem:[%s3 + $0x1e8] sm:$0xf]
      %v2701 = vld [vmem:[%s3 + $0x1ec] sm:$0xf]
      %v2702 = vld [vmem:[%s3 + $0x1f0] sm:$0xf]
      %v2703 = vld [vmem:[%s3 + $0x1f4] sm:$0xf]
      %v2704 = vld [vmem:[%s3 + $0x1f8] sm:$0xf]
      %v2705 = vld [vmem:[%s3 + $0x1fc] sm:$0xf]
      %v2722 = vunpack.c.l.b16 %v2690
      %v2723 = vunpack.c.l.b16 %v2691
      %v2724 = vunpack.c.l.b16 %v2692
      %v2725 = vunpack.c.l.b16 %v2693
      %v2726 = vunpack.c.l.b16 %v2694
      %v2727 = vunpack.c.l.b16 %v2695
      %v2728 = vunpack.c.l.b16 %v2696
      %v2729 = vunpack.c.l.b16 %v2697
      %v2730 = vunpack.c.l.b16 %v2698
      %v2731 = vunpack.c.l.b16 %v2699
      %v2732 = vunpack.c.l.b16 %v2700
      %v2733 = vunpack.c.l.b16 %v2701
      %v2734 = vunpack.c.l.b16 %v2702
      %v2735 = vunpack.c.l.b16 %v2703
      %v2736 = vunpack.c.l.b16 %v2704
      %v2737 = vunpack.c.l.b16 %v2705
      %v2738 = vpack.c.b16 %v2723, %v2722
      %v2739 = vpack.c.b16 %v2725, %v2724
      %v2740 = vpack.c.b16 %v2727, %v2726
      %v2741 = vpack.c.b16 %v2729, %v2728
      %v2742 = vpack.c.b16 %v2731, %v2730
      %v2743 = vpack.c.b16 %v2733, %v2732
      %v2744 = vpack.c.b16 %v2735, %v2734
      %v2745 = vpack.c.b16 %v2737, %v2736
      %2754 = vmatprep.subr.bf16.mxu0 0
      %2755 = vmatpush1.bf16.msra.mxu0 %v2738
      %2756 = vmatprep.subr.bf16.mxu0 0
      %2757 = vmatpush1.bf16.msra.mxu0 %v2739
      %2758 = vmatprep.subr.bf16.mxu0 0
      %2759 = vmatpush1.bf16.msra.mxu0 %v2740
      %2760 = vmatprep.subr.bf16.mxu0 0
      %2761 = vmatpush1.bf16.msra.mxu0 %v2741
      %2762 = vmatprep.subr.bf16.mxu0 0
      %2763 = vmatpush1.bf16.msra.mxu0 %v2742
      %2764 = vmatprep.subr.bf16.mxu0 0
      %2765 = vmatpush1.bf16.msra.mxu0 %v2743
      %2766 = vmatprep.subr.bf16.mxu0 0
      %2767 = vmatpush1.bf16.msra.mxu0 %v2744
      %2768 = vmatprep.subr.bf16.mxu0 0
      %2769 = vmatpush1.bf16.msra.mxu0 %v2745
      %2770 = vmatprep.subr.bf16.mxu0 0
      %2771 = vmatpush1.bf16.msra.mxu0 0
      %2772 = vmatprep.subr.bf16.mxu0 0
      %2773 = vmatpush1.bf16.msra.mxu0 0
      %2774 = vmatprep.subr.bf16.mxu0 0
      %2775 = vmatpush1.bf16.msra.mxu0 0
      %2776 = vmatprep.subr.bf16.mxu0 0
      %2777 = vmatpush1.bf16.msra.mxu0 0
      %2778 = vmatprep.subr.bf16.mxu0 0
      %2779 = vmatpush1.bf16.msra.mxu0 0
      %2780 = vmatprep.subr.bf16.mxu0 0
      %2781 = vmatpush1.bf16.msra.mxu0 0
      %2782 = vmatprep.subr.bf16.mxu0 0
      %2783 = vmatpush1.bf16.msra.mxu0 0
      %2784 = vmatprep.subr.bf16.mxu0 0
      %2785 = vmatpush1.bf16.msra.mxu0 0
      %2786 = vmatprep.mubr.bf16.mxu0 0
      %2787 = vmatmul.mubr.bf16.gmra.mrb[0].mxu0 %v642
      %v2788 = vpop.f32.mrb[0].mxu0
      %v2789 = vadd.f32 0.0, %v2788
      %v2790 = vpop.f32.mrb[0].mxu0
      %v2791 = vpop.f32.mrb[0].mxu0
      %v2792 = vadd.f32 0.0, %v2791
      %v2793 = vpop.f32.mrb[0].mxu0
      %2794 = vmatprep.mubr.bf16.mxu0 0
      %2795 = vmatmul.mubr.bf16.gmra.mrb[0].mxu0 %v643
      %v2796 = vpop.f32.mrb[0].mxu0
      %v2797 = vadd.f32 0.0, %v2796
      %v2798 = vpop.f32.mrb[0].mxu0
      %v2799 = vpop.f32.mrb[0].mxu0
      %v2800 = vadd.f32 0.0, %v2799
      %v2801 = vpop.f32.mrb[0].mxu0
      %2802 = vmatprep.mubr.bf16.mxu0 0
      %2803 = vmatmul.mubr.bf16.gmra.mrb[0].mxu0 %v644
      %v2804 = vpop.f32.mrb[0].mxu0
      %v2805 = vadd.f32 0.0, %v2804
      %v2806 = vpop.f32.mrb[0].mxu0
      %v2807 = vpop.f32.mrb[0].mxu0
      %v2808 = vadd.f32 0.0, %v2807
      %v2809 = vpop.f32.mrb[0].mxu0
      %2810 = vmatprep.mubr.bf16.mxu0 0
      %2811 = vmatmul.mubr.bf16.gmra.mrb[0].mxu0 %v645
      %v2812 = vpop.f32.mrb[0].mxu0
      %v2813 = vadd.f32 0.0, %v2812
      %v2814 = vpop.f32.mrb[0].mxu0
      %v2815 = vpop.f32.mrb[0].mxu0
      %v2816 = vadd.f32 0.0, %v2815
      %v2817 = vpop.f32.mrb[0].mxu0
      %2818 = vmatprep.mubr.bf16.mxu0 0
      %2819 = vmatmul.mubr.bf16.gmra.mrb[0].mxu0 %v646
      %v2820 = vpop.f32.mrb[0].mxu0
      %v2821 = vadd.f32 0.0, %v2820
      %v2822 = vpop.f32.mrb[0].mxu0
      %v2823 = vpop.f32.mrb[0].mxu0
      %v2824 = vadd.f32 0.0, %v2823
      %v2825 = vpop.f32.mrb[0].mxu0
      %2826 = vmatprep.mubr.bf16.mxu0 0
      %2827 = vmatmul.mubr.bf16.gmra.mrb[0].mxu0 %v647
      %v2828 = vpop.f32.mrb[0].mxu0
      %v2829 = vadd.f32 0.0, %v2828
      %v2830 = vpop.f32.mrb[0].mxu0
      %v2831 = vpop.f32.mrb[0].mxu0
      %v2832 = vadd.f32 0.0, %v2831
      %v2833 = vpop.f32.mrb[0].mxu0
      %2834 = vmatprep.mubr.bf16.mxu0 0
      %2835 = vmatmul.mubr.bf16.gmra.mrb[0].mxu0 %v648
      %v2836 = vpop.f32.mrb[0].mxu0
      %v2837 = vadd.f32 0.0, %v2836
      %v2838 = vpop.f32.mrb[0].mxu0
      %v2839 = vpop.f32.mrb[0].mxu0
      %v2840 = vadd.f32 0.0, %v2839
      %v2841 = vpop.f32.mrb[0].mxu0
      %2842 = vmatprep.mubr.bf16.mxu0 0
      %2843 = vmatmul.mubr.bf16.gmra.mrb[0].mxu0 %v649
      %v2844 = vpop.f32.mrb[0].mxu0
      %v2845 = vadd.f32 0.0, %v2844
      %v2846 = vpop.f32.mrb[0].mxu0
      %v2847 = vpop.f32.mrb[0].mxu0
      %v2848 = vadd.f32 0.0, %v2847
      %v2849 = vpop.f32.mrb[0].mxu0
      %2850 = vmatprep.mubr.bf16.mxu0 0
      %2851 = vmatmul.mubr.bf16.gmra.mrb[0].mxu0 %v650
      %v2852 = vpop.f32.mrb[0].mxu0
      %v2853 = vadd.f32 0.0, %v2852
      %v2854 = vpop.f32.mrb[0].mxu0
      %v2855 = vpop.f32.mrb[0].mxu0
      %v2856 = vadd.f32 0.0, %v2855
      %v2857 = vpop.f32.mrb[0].mxu0
      %2858 = vmatprep.mubr.bf16.mxu0 0
      %2859 = vmatmul.mubr.bf16.gmra.mrb[0].mxu0 %v651
      %v2860 = vpop.f32.mrb[0].mxu0
      %v2861 = vadd.f32 0.0, %v2860
      %v2862 = vpop.f32.mrb[0].mxu0
      %v2863 = vpop.f32.mrb[0].mxu0
      %v2864 = vadd.f32 0.0, %v2863
      %v2865 = vpop.f32.mrb[0].mxu0
      %2866 = vmatprep.mubr.bf16.mxu0 0
      %2867 = vmatmul.mubr.bf16.gmra.mrb[0].mxu0 %v652
      %v2868 = vpop.f32.mrb[0].mxu0
      %v2869 = vadd.f32 0.0, %v2868
      %v2870 = vpop.f32.mrb[0].mxu0
      %v2871 = vpop.f32.mrb[0].mxu0
      %v2872 = vadd.f32 0.0, %v2871
      %v2873 = vpop.f32.mrb[0].mxu0
      %2874 = vmatprep.mubr.bf16.mxu0 0
      %2875 = vmatmul.mubr.bf16.gmra.mrb[0].mxu0 %v653
      %v2876 = vpop.f32.mrb[0].mxu0
      %v2877 = vadd.f32 0.0, %v2876
      %v2878 = vpop.f32.mrb[0].mxu0
      %v2879 = vpop.f32.mrb[0].mxu0
      %v2880 = vadd.f32 0.0, %v2879
      %v2881 = vpop.f32.mrb[0].mxu0
      %2882 = vmatprep.mubr.bf16.mxu0 0
      %2883 = vmatmul.mubr.bf16.gmra.mrb[0].mxu0 %v654
      %v2884 = vpop.f32.mrb[0].mxu0
      %v2885 = vadd.f32 0.0, %v2884
      %v2886 = vpop.f32.mrb[0].mxu0
      %v2887 = vpop.f32.mrb[0].mxu0
      %v2888 = vadd.f32 0.0, %v2887
      %v2889 = vpop.f32.mrb[0].mxu0
      %2890 = vmatprep.mubr.bf16.mxu0 0
      %2891 = vmatmul.mubr.bf16.gmra.mrb[0].mxu0 %v655
      %v2892 = vpop.f32.mrb[0].mxu0
      %v2893 = vadd.f32 0.0, %v2892
      %v2894 = vpop.f32.mrb[0].mxu0
      %v2895 = vpop.f32.mrb[0].mxu0
      %v2896 = vadd.f32 0.0, %v2895
      %v2897 = vpop.f32.mrb[0].mxu0
      %2898 = vmatprep.mubr.bf16.mxu0 0
      %2899 = vmatmul.mubr.bf16.gmra.mrb[0].mxu0 %v656
      %v2900 = vpop.f32.mrb[0].mxu0
      %v2901 = vadd.f32 0.0, %v2900
      %v2902 = vpop.f32.mrb[0].mxu0
      %v2903 = vpop.f32.mrb[0].mxu0
      %v2904 = vadd.f32 0.0, %v2903
      %v2905 = vpop.f32.mrb[0].mxu0
      %2906 = vmatprep.mubr.bf16.mxu0 0
      %2907 = vmatmul.mubr.bf16.gmra.mrb[0].mxu0 %v714
      %v2908 = vpop.f32.mrb[0].mxu0
      %v2909 = vadd.f32 0.0, %v2908
      %v2910 = vpop.f32.mrb[0].mxu0
      %v2911 = vpop.f32.mrb[0].mxu0
      %v2912 = vadd.f32 0.0, %v2911
      %v2913 = vpop.f32.mrb[0].mxu0
      %2914 = vdwg.mxu0
      %v2915 = vadd.f32 %v2658, %v2789
      %v2916 = vadd.f32 %v2659, %v2792
      %v2917 = vadd.f32 %v2660, %v2797
      %v2918 = vadd.f32 %v2661, %v2800
      %v2919 = vadd.f32 %v2662, %v2805
      %v2920 = vadd.f32 %v2663, %v2808
      %v2921 = vadd.f32 %v2664, %v2813
      %v2922 = vadd.f32 %v2665, %v2816
      %v2923 = vadd.f32 %v2666, %v2821
      %v2924 = vadd.f32 %v2667, %v2824
      %v2925 = vadd.f32 %v2668, %v2829
      %v2926 = vadd.f32 %v2669, %v2832
      %v2927 = vadd.f32 %v2670, %v2837
      %v2928 = vadd.f32 %v2671, %v2840
      %v2929 = vadd.f32 %v2672, %v2845
      %v2930 = vadd.f32 %v2673, %v2848
      %v2931 = vadd.f32 %v2674, %v2853
      %v2932 = vadd.f32 %v2675, %v2856
      %v2933 = vadd.f32 %v2676, %v2861
      %v2934 = vadd.f32 %v2677, %v2864
      %v2935 = vadd.f32 %v2678, %v2869
      %v2936 = vadd.f32 %v2679, %v2872
      %v2937 = vadd.f32 %v2680, %v2877
      %v2938 = vadd.f32 %v2681, %v2880
      %v2939 = vadd.f32 %v2682, %v2885
      %v2940 = vadd.f32 %v2683, %v2888
      %v2941 = vadd.f32 %v2684, %v2893
      %v2942 = vadd.f32 %v2685, %v2896
      %v2943 = vadd.f32 %v2686, %v2901
      %v2944 = vadd.f32 %v2687, %v2904
      %v2945 = vadd.f32 %v2688, %v2909
      %v2946 = vadd.f32 %v2689, %v2912
      %v2947 = vld [vmem:[%s3 + $0x200] sm:$0xf]
      %v2948 = vld [vmem:[%s3 + $0x204] sm:$0xf]
      %v2949 = vld [vmem:[%s3 + $0x208] sm:$0xf]
      %v2950 = vld [vmem:[%s3 + $0x20c] sm:$0xf]
      %v2951 = vld [vmem:[%s3 + $0x210] sm:$0xf]
      %v2952 = vld [vmem:[%s3 + $0x214] sm:$0xf]
      %v2953 = vld [vmem:[%s3 + $0x218] sm:$0xf]
      %v2954 = vld [vmem:[%s3 + $0x21c] sm:$0xf]
      %v2955 = vld [vmem:[%s3 + $0x220] sm:$0xf]
      %v2956 = vld [vmem:[%s3 + $0x224] sm:$0xf]
      %v2957 = vld [vmem:[%s3 + $0x228] sm:$0xf]
      %v2958 = vld [vmem:[%s3 + $0x22c] sm:$0xf]
      %v2959 = vld [vmem:[%s3 + $0x230] sm:$0xf]
      %v2960 = vld [vmem:[%s3 + $0x234] sm:$0xf]
      %v2961 = vld [vmem:[%s3 + $0x238] sm:$0xf]
      %v2962 = vld [vmem:[%s3 + $0x23c] sm:$0xf]
      %v2979 = vunpack.c.l.b16 %v2947
      %v2980 = vunpack.c.l.b16 %v2948
      %v2981 = vunpack.c.l.b16 %v2949
      %v2982 = vunpack.c.l.b16 %v2950
      %v2983 = vunpack.c.l.b16 %v2951
      %v2984 = vunpack.c.l.b16 %v2952
      %v2985 = vunpack.c.l.b16 %v2953
      %v2986 = vunpack.c.l.b16 %v2954
      %v2987 = vunpack.c.l.b16 %v2955
      %v2988 = vunpack.c.l.b16 %v2956
      %v2989 = vunpack.c.l.b16 %v2957
      %v2990 = vunpack.c.l.b16 %v2958
      %v2991 = vunpack.c.l.b16 %v2959
      %v2992 = vunpack.c.l.b16 %v2960
      %v2993 = vunpack.c.l.b16 %v2961
      %v2994 = vunpack.c.l.b16 %v2962
      %v2995 = vpack.c.b16 %v2980, %v2979
      %v2996 = vpack.c.b16 %v2982, %v2981
      %v2997 = vpack.c.b16 %v2984, %v2983
      %v2998 = vpack.c.b16 %v2986, %v2985
      %v2999 = vpack.c.b16 %v2988, %v2987
      %v3000 = vpack.c.b16 %v2990, %v2989
      %v3001 = vpack.c.b16 %v2992, %v2991
      %v3002 = vpack.c.b16 %v2994, %v2993
      %3011 = vmatprep.subr.bf16.mxu0 0
      %3012 = vmatpush1.bf16.msra.mxu0 %v2995
      %3013 = vmatprep.subr.bf16.mxu0 0
      %3014 = vmatpush1.bf16.msra.mxu0 %v2996
      %3015 = vmatprep.subr.bf16.mxu0 0
      %3016 = vmatpush1.bf16.msra.mxu0 %v2997
      %3017 = vmatprep.subr.bf16.mxu0 0
      %3018 = vmatpush1.bf16.msra.mxu0 %v2998
      %3019 = vmatprep.subr.bf16.mxu0 0
      %3020 = vmatpush1.bf16.msra.mxu0 %v2999
      %3021 = vmatprep.subr.bf16.mxu0 0
      %3022 = vmatpush1.bf16.msra.mxu0 %v3000
      %3023 = vmatprep.subr.bf16.mxu0 0
      %3024 = vmatpush1.bf16.msra.mxu0 %v3001
      %3025 = vmatprep.subr.bf16.mxu0 0
      %3026 = vmatpush1.bf16.msra.mxu0 %v3002
      %3027 = vmatprep.subr.bf16.mxu0 0
      %3028 = vmatpush1.bf16.msra.mxu0 0
      %3029 = vmatprep.subr.bf16.mxu0 0
      %3030 = vmatpush1.bf16.msra.mxu0 0
      %3031 = vmatprep.subr.bf16.mxu0 0
      %3032 = vmatpush1.bf16.msra.mxu0 0
      %3033 = vmatprep.subr.bf16.mxu0 0
      %3034 = vmatpush1.bf16.msra.mxu0 0
      %3035 = vmatprep.subr.bf16.mxu0 0
      %3036 = vmatpush1.bf16.msra.mxu0 0
      %3037 = vmatprep.subr.bf16.mxu0 0
      %3038 = vmatpush1.bf16.msra.mxu0 0
      %3039 = vmatprep.subr.bf16.mxu0 0
      %3040 = vmatpush1.bf16.msra.mxu0 0
      %3041 = vmatprep.subr.bf16.mxu0 0
      %3042 = vmatpush1.bf16.msra.mxu0 0
      %3043 = vmatprep.mubr.bf16.mxu0 0
      %3044 = vmatmul.mubr.bf16.gmra.mrb[0].mxu0 %v939
      %v3045 = vpop.f32.mrb[0].mxu0
      %v3046 = vadd.f32 0.0, %v3045
      %v3047 = vpop.f32.mrb[0].mxu0
      %v3048 = vpop.f32.mrb[0].mxu0
      %v3049 = vadd.f32 0.0, %v3048
      %v3050 = vpop.f32.mrb[0].mxu0
      %3051 = vmatprep.mubr.bf16.mxu0 0
      %3052 = vmatmul.mubr.bf16.gmra.mrb[0].mxu0 %v940
      %v3053 = vpop.f32.mrb[0].mxu0
      %v3054 = vadd.f32 0.0, %v3053
      %v3055 = vpop.f32.mrb[0].mxu0
      %v3056 = vpop.f32.mrb[0].mxu0
      %v3057 = vadd.f32 0.0, %v3056
      %v3058 = vpop.f32.mrb[0].mxu0
      %3059 = vmatprep.mubr.bf16.mxu0 0
      %3060 = vmatmul.mubr.bf16.gmra.mrb[0].mxu0 %v941
      %v3061 = vpop.f32.mrb[0].mxu0
      %v3062 = vadd.f32 0.0, %v3061
      %v3063 = vpop.f32.mrb[0].mxu0
      %v3064 = vpop.f32.mrb[0].mxu0
      %v3065 = vadd.f32 0.0, %v3064
      %v3066 = vpop.f32.mrb[0].mxu0
      %3067 = vmatprep.mubr.bf16.mxu0 0
      %3068 = vmatmul.mubr.bf16.gmra.mrb[0].mxu0 %v942
      %v3069 = vpop.f32.mrb[0].mxu0
      %v3070 = vadd.f32 0.0, %v3069
      %v3071 = vpop.f32.mrb[0].mxu0
      %v3072 = vpop.f32.mrb[0].mxu0
      %v3073 = vadd.f32 0.0, %v3072
      %v3074 = vpop.f32.mrb[0].mxu0
      %3075 = vmatprep.mubr.bf16.mxu0 0
      %3076 = vmatmul.mubr.bf16.gmra.mrb[0].mxu0 %v943
      %v3077 = vpop.f32.mrb[0].mxu0
      %v3078 = vadd.f32 0.0, %v3077
      %v3079 = vpop.f32.mrb[0].mxu0
      %v3080 = vpop.f32.mrb[0].mxu0
      %v3081 = vadd.f32 0.0, %v3080
      %v3082 = vpop.f32.mrb[0].mxu0
      %3083 = vmatprep.mubr.bf16.mxu0 0
      %3084 = vmatmul.mubr.bf16.gmra.mrb[0].mxu0 %v944
      %v3085 = vpop.f32.mrb[0].mxu0
      %v3086 = vadd.f32 0.0, %v3085
      %v3087 = vpop.f32.mrb[0].mxu0
      %v3088 = vpop.f32.mrb[0].mxu0
      %v3089 = vadd.f32 0.0, %v3088
      %v3090 = vpop.f32.mrb[0].mxu0
      %3091 = vmatprep.mubr.bf16.mxu0 0
      %3092 = vmatmul.mubr.bf16.gmra.mrb[0].mxu0 %v945
      %v3093 = vpop.f32.mrb[0].mxu0
      %v3094 = vadd.f32 0.0, %v3093
      %v3095 = vpop.f32.mrb[0].mxu0
      %v3096 = vpop.f32.mrb[0].mxu0
      %v3097 = vadd.f32 0.0, %v3096
      %v3098 = vpop.f32.mrb[0].mxu0
      %3099 = vmatprep.mubr.bf16.mxu0 0
      %3100 = vmatmul.mubr.bf16.gmra.mrb[0].mxu0 %v946
      %v3101 = vpop.f32.mrb[0].mxu0
      %v3102 = vadd.f32 0.0, %v3101
      %v3103 = vpop.f32.mrb[0].mxu0
      %v3104 = vpop.f32.mrb[0].mxu0
      %v3105 = vadd.f32 0.0, %v3104
      %v3106 = vpop.f32.mrb[0].mxu0
      %3107 = vmatprep.mubr.bf16.mxu0 0
      %3108 = vmatmul.mubr.bf16.gmra.mrb[0].mxu0 %v947
      %v3109 = vpop.f32.mrb[0].mxu0
      %v3110 = vadd.f32 0.0, %v3109
      %v3111 = vpop.f32.mrb[0].mxu0
      %v3112 = vpop.f32.mrb[0].mxu0
      %v3113 = vadd.f32 0.0, %v3112
      %v3114 = vpop.f32.mrb[0].mxu0
      %3115 = vmatprep.mubr.bf16.mxu0 0
      %3116 = vmatmul.mubr.bf16.gmra.mrb[0].mxu0 %v948
      %v3117 = vpop.f32.mrb[0].mxu0
      %v3118 = vadd.f32 0.0, %v3117
      %v3119 = vpop.f32.mrb[0].mxu0
      %v3120 = vpop.f32.mrb[0].mxu0
      %v3121 = vadd.f32 0.0, %v3120
      %v3122 = vpop.f32.mrb[0].mxu0
      %3123 = vmatprep.mubr.bf16.mxu0 0
      %3124 = vmatmul.mubr.bf16.gmra.mrb[0].mxu0 %v949
      %v3125 = vpop.f32.mrb[0].mxu0
      %v3126 = vadd.f32 0.0, %v3125
      %v3127 = vpop.f32.mrb[0].mxu0
      %v3128 = vpop.f32.mrb[0].mxu0
      %v3129 = vadd.f32 0.0, %v3128
      %v3130 = vpop.f32.mrb[0].mxu0
      %3131 = vmatprep.mubr.bf16.mxu0 0
      %3132 = vmatmul.mubr.bf16.gmra.mrb[0].mxu0 %v950
      %v3133 = vpop.f32.mrb[0].mxu0
      %v3134 = vadd.f32 0.0, %v3133
      %v3135 = vpop.f32.mrb[0].mxu0
      %v3136 = vpop.f32.mrb[0].mxu0
      %v3137 = vadd.f32 0.0, %v3136
      %v3138 = vpop.f32.mrb[0].mxu0
      %3139 = vmatprep.mubr.bf16.mxu0 0
      %3140 = vmatmul.mubr.bf16.gmra.mrb[0].mxu0 %v951
      %v3141 = vpop.f32.mrb[0].mxu0
      %v3142 = vadd.f32 0.0, %v3141
      %v3143 = vpop.f32.mrb[0].mxu0
      %v3144 = vpop.f32.mrb[0].mxu0
      %v3145 = vadd.f32 0.0, %v3144
      %v3146 = vpop.f32.mrb[0].mxu0
      %3147 = vmatprep.mubr.bf16.mxu0 0
      %3148 = vmatmul.mubr.bf16.gmra.mrb[0].mxu0 %v952
      %v3149 = vpop.f32.mrb[0].mxu0
      %v3150 = vadd.f32 0.0, %v3149
      %v3151 = vpop.f32.mrb[0].mxu0
      %v3152 = vpop.f32.mrb[0].mxu0
      %v3153 = vadd.f32 0.0, %v3152
      %v3154 = vpop.f32.mrb[0].mxu0
      %3155 = vmatprep.mubr.bf16.mxu0 0
      %3156 = vmatmul.mubr.bf16.gmra.mrb[0].mxu0 %v953
      %v3157 = vpop.f32.mrb[0].mxu0
      %v3158 = vadd.f32 0.0, %v3157
      %v3159 = vpop.f32.mrb[0].mxu0
      %v3160 = vpop.f32.mrb[0].mxu0
      %v3161 = vadd.f32 0.0, %v3160
      %v3162 = vpop.f32.mrb[0].mxu0
      %3163 = vmatprep.mubr.bf16.mxu0 0
      %3164 = vmatmul.mubr.bf16.gmra.mrb[0].mxu0 %v954
      %v3165 = vpop.f32.mrb[0].mxu0
      %v3166 = vadd.f32 0.0, %v3165
      %v3167 = vpop.f32.mrb[0].mxu0
      %v3168 = vpop.f32.mrb[0].mxu0
      %v3169 = vadd.f32 0.0, %v3168
      %v3170 = vpop.f32.mrb[0].mxu0
      %3171 = vdwg.mxu0
      %v3172 = vadd.f32 %v2915, %v3046
      %v3173 = vadd.f32 %v2916, %v3049
      %v3174 = vadd.f32 %v2917, %v3054
      %v3175 = vadd.f32 %v2918, %v3057
      %v3176 = vadd.f32 %v2919, %v3062
      %v3177 = vadd.f32 %v2920, %v3065
      %v3178 = vadd.f32 %v2921, %v3070
      %v3179 = vadd.f32 %v2922, %v3073
      %v3180 = vadd.f32 %v2923, %v3078
      %v3181 = vadd.f32 %v2924, %v3081
      %v3182 = vadd.f32 %v2925, %v3086
      %v3183 = vadd.f32 %v2926, %v3089
      %v3184 = vadd.f32 %v2927, %v3094
      %v3185 = vadd.f32 %v2928, %v3097
      %v3186 = vadd.f32 %v2929, %v3102
      %v3187 = vadd.f32 %v2930, %v3105
      %v3188 = vadd.f32 %v2931, %v3110
      %v3189 = vadd.f32 %v2932, %v3113
      %v3190 = vadd.f32 %v2933, %v3118
      %v3191 = vadd.f32 %v2934, %v3121
      %v3192 = vadd.f32 %v2935, %v3126
      %v3193 = vadd.f32 %v2936, %v3129
      %v3194 = vadd.f32 %v2937, %v3134
      %v3195 = vadd.f32 %v2938, %v3137
      %v3196 = vadd.f32 %v2939, %v3142
      %v3197 = vadd.f32 %v2940, %v3145
      %v3198 = vadd.f32 %v2941, %v3150
      %v3199 = vadd.f32 %v2942, %v3153
      %v3200 = vadd.f32 %v2943, %v3158
      %v3201 = vadd.f32 %v2944, %v3161
      %v3202 = vadd.f32 %v2945, %v3166
      %v3203 = vadd.f32 %v2946, %v3169
      %v3204 = vpack.c.bf16 %v3173, %v3172
      %v3205 = vpack.c.bf16 %v3175, %v3174
      %v3206 = vpack.c.bf16 %v3177, %v3176
      %v3207 = vpack.c.bf16 %v3179, %v3178
      %v3208 = vpack.c.bf16 %v3181, %v3180
      %v3209 = vpack.c.bf16 %v3183, %v3182
      %v3210 = vpack.c.bf16 %v3185, %v3184
      %v3211 = vpack.c.bf16 %v3187, %v3186
      %v3212 = vpack.c.bf16 %v3189, %v3188
      %v3213 = vpack.c.bf16 %v3191, %v3190
      %v3214 = vpack.c.bf16 %v3193, %v3192
      %v3215 = vpack.c.bf16 %v3195, %v3194
      %v3216 = vpack.c.bf16 %v3197, %v3196
      %v3217 = vpack.c.bf16 %v3199, %v3198
      %v3218 = vpack.c.bf16 %v3201, %v3200
      %v3219 = vpack.c.bf16 %v3203, %v3202
      %v3236 = vunpack.c.l.b16 %v3204
      %v3237 = vunpack.c.h.b16 %v3204
      %v3238 = vunpack.c.l.b16 %v3205
      %v3239 = vunpack.c.h.b16 %v3205
      %v3240 = vunpack.c.l.b16 %v3206
      %v3241 = vunpack.c.h.b16 %v3206
      %v3242 = vunpack.c.l.b16 %v3207
      %v3243 = vunpack.c.h.b16 %v3207
      %v3244 = vunpack.c.l.b16 %v3208
      %v3245 = vunpack.c.h.b16 %v3208
      %v3246 = vunpack.c.l.b16 %v3209
      %v3247 = vunpack.c.h.b16 %v3209
      %v3248 = vunpack.c.l.b16 %v3210
      %v3249 = vunpack.c.h.b16 %v3210
      %v3250 = vunpack.c.l.b16 %v3211
      %v3251 = vunpack.c.h.b16 %v3211
      %v3252 = vunpack.c.l.b16 %v3212
      %v3253 = vunpack.c.h.b16 %v3212
      %v3254 = vunpack.c.l.b16 %v3213
      %v3255 = vunpack.c.h.b16 %v3213
      %v3256 = vunpack.c.l.b16 %v3214
      %v3257 = vunpack.c.h.b16 %v3214
      %v3258 = vunpack.c.l.b16 %v3215
      %v3259 = vunpack.c.h.b16 %v3215
      %v3260 = vunpack.c.l.b16 %v3216
      %v3261 = vunpack.c.h.b16 %v3216
      %v3262 = vunpack.c.l.b16 %v3217
      %v3263 = vunpack.c.h.b16 %v3217
      %v3264 = vunpack.c.l.b16 %v3218
      %v3265 = vunpack.c.h.b16 %v3218
      %v3266 = vunpack.c.l.b16 %v3219
      %v3267 = vunpack.c.h.b16 %v3219
      %v3268 = vpack.c.b16 %v3236, %v3236
      %v3269 = vpack.c.b16 %v3237, %v3237
      %v3270 = vpack.c.b16 %v3238, %v3238
      %v3271 = vpack.c.b16 %v3239, %v3239
      %v3272 = vpack.c.b16 %v3240, %v3240
      %v3273 = vpack.c.b16 %v3241, %v3241
      %v3274 = vpack.c.b16 %v3242, %v3242
      %v3275 = vpack.c.b16 %v3243, %v3243
      %v3276 = vpack.c.b16 %v3244, %v3244
      %v3277 = vpack.c.b16 %v3245, %v3245
      %v3278 = vpack.c.b16 %v3246, %v3246
      %v3279 = vpack.c.b16 %v3247, %v3247
      %v3280 = vpack.c.b16 %v3248, %v3248
      %v3281 = vpack.c.b16 %v3249, %v3249
      %v3282 = vpack.c.b16 %v3250, %v3250
      %v3283 = vpack.c.b16 %v3251, %v3251
      %v3284 = vpack.c.b16 %v3252, %v3252
      %v3285 = vpack.c.b16 %v3253, %v3253
      %v3286 = vpack.c.b16 %v3254, %v3254
      %v3287 = vpack.c.b16 %v3255, %v3255
      %v3288 = vpack.c.b16 %v3256, %v3256
      %v3289 = vpack.c.b16 %v3257, %v3257
      %v3290 = vpack.c.b16 %v3258, %v3258
      %v3291 = vpack.c.b16 %v3259, %v3259
      %v3292 = vpack.c.b16 %v3260, %v3260
      %v3293 = vpack.c.b16 %v3261, %v3261
      %v3294 = vpack.c.b16 %v3262, %v3262
      %v3295 = vpack.c.b16 %v3263, %v3263
      %v3296 = vpack.c.b16 %v3264, %v3264
      %v3297 = vpack.c.b16 %v3265, %v3265
      %v3298 = vpack.c.b16 %v3266, %v3266
      %v3299 = vpack.c.b16 %v3267, %v3267
      %3332 = vst [vmem:[%s457] sm:$0xf] %v3268
      %3333 = vst [vmem:[%s457 + $0x4] sm:$0xf] %v3269
      %3334 = vst [vmem:[%s457 + $0x8] sm:$0xf] %v3270
      %3335 = vst [vmem:[%s457 + $0xc] sm:$0xf] %v3271
      %3336 = vst [vmem:[%s457 + $0x10] sm:$0xf] %v3272
      %3337 = vst [vmem:[%s457 + $0x14] sm:$0xf] %v3273
      %3338 = vst [vmem:[%s457 + $0x18] sm:$0xf] %v3274
      %3339 = vst [vmem:[%s457 + $0x1c] sm:$0xf] %v3275
      %3340 = vst [vmem:[%s457 + $0x20] sm:$0xf] %v3276
      %3341 = vst [vmem:[%s457 + $0x24] sm:$0xf] %v3277
      %3342 = vst [vmem:[%s457 + $0x28] sm:$0xf] %v3278
      %3343 = vst [vmem:[%s457 + $0x2c] sm:$0xf] %v3279
      %3344 = vst [vmem:[%s457 + $0x30] sm:$0xf] %v3280
      %3345 = vst [vmem:[%s457 + $0x34] sm:$0xf] %v3281
      %3346 = vst [vmem:[%s457 + $0x38] sm:$0xf] %v3282
      %3347 = vst [vmem:[%s457 + $0x3c] sm:$0xf] %v3283
      %3348 = vst [vmem:[%s457 + $0x40] sm:$0xf] %v3284
      %3349 = vst [vmem:[%s457 + $0x44] sm:$0xf] %v3285
      %3350 = vst [vmem:[%s457 + $0x48] sm:$0xf] %v3286
      %3351 = vst [vmem:[%s457 + $0x4c] sm:$0xf] %v3287
      %3352 = vst [vmem:[%s457 + $0x50] sm:$0xf] %v3288
      %3353 = vst [vmem:[%s457 + $0x54] sm:$0xf] %v3289
      %3354 = vst [vmem:[%s457 + $0x58] sm:$0xf] %v3290
      %3355 = vst [vmem:[%s457 + $0x5c] sm:$0xf] %v3291
      %3356 = vst [vmem:[%s457 + $0x60] sm:$0xf] %v3292
      %3357 = vst [vmem:[%s457 + $0x64] sm:$0xf] %v3293
      %3358 = vst [vmem:[%s457 + $0x68] sm:$0xf] %v3294
      %3359 = vst [vmem:[%s457 + $0x6c] sm:$0xf] %v3295
      %3360 = vst [vmem:[%s457 + $0x70] sm:$0xf] %v3296
      %3361 = vst [vmem:[%s457 + $0x74] sm:$0xf] %v3297
      %3362 = vst [vmem:[%s457 + $0x78] sm:$0xf] %v3298
      %3363 = vst [vmem:[%s457 + $0x7c] sm:$0xf] %v3299
      %v3364 = vadd.f32 %v3172, %v3173
      %v3365 = vadd.f32 %v3364, %v3174
      %v3366 = vadd.f32 %v3365, %v3175
      %v3367 = vadd.f32 %v3366, %v3176
      %v3368 = vadd.f32 %v3367, %v3177
      %v3369 = vadd.f32 %v3368, %v3178
      %v3370 = vadd.f32 %v3369, %v3179
      %v3371 = vadd.f32 %v3370, %v3180
      %v3372 = vadd.f32 %v3371, %v3181
      %v3373 = vadd.f32 %v3372, %v3182
      %v3374 = vadd.f32 %v3373, %v3183
      %v3375 = vadd.f32 %v3374, %v3184
      %v3376 = vadd.f32 %v3375, %v3185
      %v3377 = vadd.f32 %v3376, %v3186
      %v3378 = vadd.f32 %v3377, %v3187
      %v3379 = vadd.f32 %v3378, %v3188
      %v3380 = vadd.f32 %v3379, %v3189
      %v3381 = vadd.f32 %v3380, %v3190
      %v3382 = vadd.f32 %v3381, %v3191
      %v3383 = vadd.f32 %v3382, %v3192
      %v3384 = vadd.f32 %v3383, %v3193
      %v3385 = vadd.f32 %v3384, %v3194
      %v3386 = vadd.f32 %v3385, %v3195
      %v3387 = vadd.f32 %v3386, %v3196
      %v3388 = vadd.f32 %v3387, %v3197
      %v3389 = vadd.f32 %v3388, %v3198
      %v3390 = vadd.f32 %v3389, %v3199
      %v3391 = vadd.f32 %v3390, %v3200
      %v3392 = vadd.f32 %v3391, %v3201
      %v3393 = vadd.f32 %v3392, %v3202
      %v3394 = vadd.f32 %v3393, %v3203
      %v3395 = vrot.slane %v3394, 4
      %v3396 = vadd.f32 %v3394, %v3395
      %v3397 = vrot.slane %v3396, 2
      %v3398 = vadd.f32 %v3396, %v3397
      %v3399 = vrot.slane %v3398, 1
      %v3400 = vadd.f32 %v3398, %v3399
      %v3401 = vmul.f32 %v3172, %v3172
      %v3402 = vmul.f32 %v3173, %v3173
      %v3403 = vmul.f32 %v3174, %v3174
      %v3404 = vmul.f32 %v3175, %v3175
      %v3405 = vmul.f32 %v3176, %v3176
      %v3406 = vmul.f32 %v3177, %v3177
      %v3407 = vmul.f32 %v3178, %v3178
      %v3408 = vmul.f32 %v3179, %v3179
      %v3409 = vmul.f32 %v3180, %v3180
      %v3410 = vmul.f32 %v3181, %v3181
      %v3411 = vmul.f32 %v3182, %v3182
      %v3412 = vmul.f32 %v3183, %v3183
      %v3413 = vmul.f32 %v3184, %v3184
      %v3414 = vmul.f32 %v3185, %v3185
      %v3415 = vmul.f32 %v3186, %v3186
      %v3416 = vmul.f32 %v3187, %v3187
      %v3417 = vmul.f32 %v3188, %v3188
      %v3418 = vmul.f32 %v3189, %v3189
      %v3419 = vmul.f32 %v3190, %v3190
      %v3420 = vmul.f32 %v3191, %v3191
      %v3421 = vmul.f32 %v3192, %v3192
      %v3422 = vmul.f32 %v3193, %v3193
      %v3423 = vmul.f32 %v3194, %v3194
      %v3424 = vmul.f32 %v3195, %v3195
      %v3425 = vmul.f32 %v3196, %v3196
      %v3426 = vmul.f32 %v3197, %v3197
      %v3427 = vmul.f32 %v3198, %v3198
      %v3428 = vmul.f32 %v3199, %v3199
      %v3429 = vmul.f32 %v3200, %v3200
      %v3430 = vmul.f32 %v3201, %v3201
      %v3431 = vmul.f32 %v3202, %v3202
      %v3432 = vmul.f32 %v3203, %v3203
      %v3433 = vadd.f32 %v3401, %v3402
      %v3434 = vadd.f32 %v3433, %v3403
      %v3435 = vadd.f32 %v3434, %v3404
      %v3436 = vadd.f32 %v3435, %v3405
      %v3437 = vadd.f32 %v3436, %v3406
      %v3438 = vadd.f32 %v3437, %v3407
      %v3439 = vadd.f32 %v3438, %v3408
      %v3440 = vadd.f32 %v3439, %v3409
      %v3441 = vadd.f32 %v3440, %v3410
      %v3442 = vadd.f32 %v3441, %v3411
      %v3443 = vadd.f32 %v3442, %v3412
      %v3444 = vadd.f32 %v3443, %v3413
      %v3445 = vadd.f32 %v3444, %v3414
      %v3446 = vadd.f32 %v3445, %v3415
      %v3447 = vadd.f32 %v3446, %v3416
      %v3448 = vadd.f32 %v3447, %v3417
      %v3449 = vadd.f32 %v3448, %v3418
      %v3450 = vadd.f32 %v3449, %v3419
      %v3451 = vadd.f32 %v3450, %v3420
      %v3452 = vadd.f32 %v3451, %v3421
      %v3453 = vadd.f32 %v3452, %v3422
      %v3454 = vadd.f32 %v3453, %v3423
      %v3455 = vadd.f32 %v3454, %v3424
      %v3456 = vadd.f32 %v3455, %v3425
      %v3457 = vadd.f32 %v3456, %v3426
      %v3458 = vadd.f32 %v3457, %v3427
      %v3459 = vadd.f32 %v3458, %v3428
      %v3460 = vadd.f32 %v3459, %v3429
      %v3461 = vadd.f32 %v3460, %v3430
      %v3462 = vadd.f32 %v3461, %v3431
      %v3463 = vadd.f32 %v3462, %v3432
      %v3464 = vrot.slane %v3463, 4
      %v3465 = vadd.f32 %v3463, %v3464
      %v3466 = vrot.slane %v3465, 2
      %v3467 = vadd.f32 %v3465, %v3466
      %v3468 = vrot.slane %v3467, 1
      %v3469 = vadd.f32 %v3467, %v3468
      %vm3470 = vcmask 1040384
      %v3471 = vsel %vm3470, %v3400, %v3469
      %vm3472 = vcmask 1041408
      %v3473 = vsel %vm3472, %v3471, 0.0
      %3474 = vst [vmem:[%s465] sm:$0xff] %v3473
      %s3475 = smul.u32 16, %s24
      %p3476 = scmp.lt.s32.totalorder %s23, 1
      %s3477 = scalar_select %p3476, %s23, 1
      %p3478 = scmp.lt.s32.totalorder %s3475, 15
      %s3479 = scalar_select %p3478, %s3475, 15
      %s3480 = smul.addr %s3479, 2
      %s3481 = smul.addr %s3477, 32
      %s3482 = sadd.s32 %s3480, %s3481
      %s3483 = smul.addr %s3482, 4
      %s3484 = scalar_lea.vmem %s6, %s3483
      %p3485 = scmp.lt.s32.totalorder %s23, 1
      %s3486 = scalar_select %p3485, %s23, 1
      %p3487 = scmp.lt.s32.totalorder %s24, 0
      %s3488 = scalar_select %p3487, %s24, 0
      %s3489 = sadd.s32 %s3488, %s3486
      %s3490 = smul.addr %s3489, 8
      %s3491 = scalar_lea.vmem %s7, %s3490
      // Predicated region
      $region45: #{up_forward.4} parent=43 // pred_check
        %p3492 = pneg %p214
      $region46: #{up_forward.4} parent=43 // pred_check_branch
        %3494 = sbr.rel (%p3492) target = $region48
      $region47: #{up_forward.4} parent=43 // pred_region
        %s3495 = smul.u32 16, %s24
      $region48: #{up_forward.4} parent=43 // pred_fallthru
        _
      // Predicated region
      $region49: #{up_forward.4} parent=43 // pred_check
        %p3496 = pneg %p242
      $region50: #{up_forward.4} parent=43 // pred_check_branch
        %3498 = sbr.rel (%p3496) target = $region52
      $region51: #{up_forward.4} parent=43 // pred_region
        _
      $region52: #{up_forward.4} parent=43 // pred_fallthru
        _
    $region44: #{up_forward.4} parent=5 // pred_fallthru
      _
    %p3499 = scmp.le.s32.totalorder 2, %s14
    // Predicated region
    $region53: #{up_forward.4} parent=5 // pred_check
      %p3500 = pneg %p3499
    $region54: #{up_forward.4} parent=5 // pred_check_branch
      %3502 = sbr.rel (%p3500) target = $region56
    $region55: #{up_forward.4} parent=5 // pred_region
      %s3503 = ssub.s32 %s14, 2
      // Predicated region
      $region57: #{up_forward.4} parent=55 // pred_check
        %p3504 = pneg %p220
      $region58: #{up_forward.4} parent=55 // pred_check_branch
        %3506 = sbr.rel (%p3504) target = $region60
      $region59: #{up_forward.4} parent=55 // pred_region
        %s3507 = smul.u32 16, %s26
        %p3508 = scmp.lt.s32.totalorder %s25, 1
        %s3509 = scalar_select %p3508, %s25, 1
        %p3510 = scmp.lt.s32.totalorder %s3507, 15
        %s3511 = scalar_select %p3510, %s3507, 15
        %s3512 = smul.addr %s3511, 2
        %s3513 = smul.addr %s3509, 32
        %s3514 = sadd.s32 %s3512, %s3513
        %s3515 = smul.addr %s3514, 4
        %s3516 = scalar_lea.vmem %s6, %s3515
      $region60: #{up_forward.4} parent=55 // pred_fallthru
        _
      // Predicated region
      $region61: #{up_forward.4} parent=55 // pred_check
        %p3517 = pneg %p248
      $region62: #{up_forward.4} parent=55 // pred_check_branch
        %3519 = sbr.rel (%p3517) target = $region64
      $region63: #{up_forward.4} parent=55 // pred_region
        %p3520 = scmp.lt.s32.totalorder %s25, 1
        %s3521 = scalar_select %p3520, %s25, 1
        %p3522 = scmp.lt.s32.totalorder %s26, 0
        %s3523 = scalar_select %p3522, %s26, 0
        %s3524 = sadd.s32 %s3523, %s3521
        %s3525 = smul.addr %s3524, 8
        %s3526 = scalar_lea.vmem %s7, %s3525
      $region64: #{up_forward.4} parent=55 // pred_fallthru
        _
    $region56: #{up_forward.4} parent=5 // pred_fallthru
      _
  $region6: #{up_forward.4} parent=0 // loop_footer
    %s18 = sadd.s32 1, %s14
  $region7: #{up_forward.4} parent=0 // loop_footer_branch
    %13 = sbr.rel target = $region3
  $region8: #{up_forward.4} parent=0 // loop_exit
    _

</llo_original>
